<compile_context>
chip_gen: v7x
topology: tpu7x:2x2x1
jax: 0.10.0
libtpu: 0.0.40
codegen_flags: <defaults>
</compile_context>

<pallas_src>
import functools

import jax
import jax.numpy as jnp
from jax.experimental import pallas as pl
from jax.experimental.pallas import tpu as pltpu


# ----------------------------------------------------------------------------
# Fused Inception kernel
# ----------------------------------------------------------------------------
def _inception_kernel(x_ref, w1_ref, b1_ref, w2_ref, b2_ref, w3_ref, b3_ref,
                      w4_ref, b4_ref, o_ref,
                      t2pad_ref, col2_ref, t3pad_ref, col3_ref, xpool_ref,
                      *, c1, c2, c3, c4):
    del c4  # implied by the output slab width
    _, H, W, Cin = x_ref.shape
    HW = H * W
    c2_0, c2_1 = c2
    c3_0, c3_1 = c3

    x = x_ref[0]                      # (H, W, Cin)
    x2d = x.reshape(HW, Cin)          # one reshape per grid step

    # ---- branches 1/2/3: the three 1x1 convs fused into one matmul --------
    y = jnp.dot(x2d, w1_ref[...], preferred_element_type=jnp.float32)
    y = jnp.maximum(y + b1_ref[...], 0.0)          # (HW, c1 + c2_0 + c3_0)

    # branch 1 goes straight into its channel range of the concat slab
    o_ref[0, :, 0:c1] = y[:, 0:c1]

    # ---- branch 2: 3x3 conv (pad=1) on the 1x1 output, via im2col ---------
    t2pad_ref[...] = jnp.zeros(t2pad_ref.shape, t2pad_ref.dtype)
    t2pad_ref[1:H + 1, 1:W + 1, :] = y[:, c1:c1 + c2_0].reshape(H, W, c2_0)
    i = 0
    for dy in range(3):
        for dx in range(3):
            col2_ref[:, :, i * c2_0:(i + 1) * c2_0] = \
                t2pad_ref[dy:dy + H, dx:dx + W, :]
            i += 1
    p2 = jnp.dot(col2_ref[...].reshape(HW, 9 * c2_0), w2_ref[...],
                 preferred_element_type=jnp.float32)
    o_ref[0, :, c1:c1 + c2_1] = jnp.maximum(p2 + b2_ref[...], 0.0)

    # ---- branch 3: 5x5 conv (pad=2) on the 1x1 output, via im2col ---------
    t3pad_ref[...] = jnp.zeros(t3pad_ref.shape, t3pad_ref.dtype)
    t3pad_ref[2:H + 2, 2:W + 2, :] = y[:, c1 + c2_0:].reshape(H, W, c3_0)
    i = 0
    for dy in range(5):
        for dx in range(5):
            col3_ref[:, :, i * c3_0:(i + 1) * c3_0] = \
                t3pad_ref[dy:dy + H, dx:dx + W, :]
            i += 1
    p3 = jnp.dot(col3_ref[...].reshape(HW, 25 * c3_0), w3_ref[...],
                 preferred_element_type=jnp.float32)
    o_ref[0, :, c1 + c2_1:c1 + c2_1 + c3_1] = jnp.maximum(p3 + b3_ref[...], 0.0)

    # ---- branch 4: 3x3 max-pool (stride 1, pad 1) then fused 1x1 conv ------
    neg = float(jnp.finfo(jnp.float32).min)
    xpool_ref[...] = jnp.full(xpool_ref.shape, neg, xpool_ref.dtype)
    xpool_ref[1:H + 1, 1:W + 1, :] = x
    pooled = xpool_ref[0:H, 0:W, :]
    for dy in range(3):
        for dx in range(3):
            if dy == 0 and dx == 0:
                continue
            pooled = jnp.maximum(pooled, xpool_ref[dy:dy + H, dx:dx + W, :])
    p4 = jnp.dot(pooled.reshape(HW, Cin), w4_ref[...],
                 preferred_element_type=jnp.float32)
    o_ref[0, :, c1 + c2_1 + c3_1:] = jnp.maximum(p4 + b4_ref[...], 0.0)


# ----------------------------------------------------------------------------
# Wrapper
# ----------------------------------------------------------------------------
def inception_nhwc(params, x_nhwc):
    N, H, W, Cin = x_nhwc.shape
    HW = H * W

    w11, b11 = params["p1_1"]; c1 = w11.shape[-1]
    w21, b21 = params["p2_1"]; c2_0 = w21.shape[-1]
    w22, b22 = params["p2_2"]; c2_1 = w22.shape[-1]
    w31, b31 = params["p3_1"]; c3_0 = w31.shape[-1]
    w32, b32 = params["p3_2"]; c3_1 = w32.shape[-1]
    w42, b42 = params["p4_2"]; c4 = w42.shape[-1]
    Ctot = c1 + c2_1 + c3_1 + c4

    # Fuse the three 1x1 convs that read x into one (Cin, c1+c2_0+c3_0) matmul.
    w1cat = jnp.concatenate([w11.reshape(Cin, c1),
                             w21.reshape(Cin, c2_0),
                             w31.reshape(Cin, c3_0)], axis=1)
    b1cat = jnp.concatenate([b11, b21, b31]).reshape(1, c1 + c2_0 + c3_0)
    w2f = w22.reshape(3 * 3 * c2_0, c2_1)   # (dy, dx, cin) row order == im2col
    w3f = w32.reshape(5 * 5 * c3_0, c3_1)
    w4f = w42.reshape(Cin, c4)
    b2f = b22.reshape(1, c2_1)
    b3f = b32.reshape(1, c3_1)
    b4f = b42.reshape(1, c4)

    kern = functools.partial(_inception_kernel, c1=c1, c2=(c2_0, c2_1),
                             c3=(c3_0, c3_1), c4=c4)

    def full_spec(a):
        rank = a.ndim
        return pl.BlockSpec(a.shape, lambda n, _r=rank: (0,) * _r)

    in_specs = [pl.BlockSpec((1, H, W, Cin), lambda n: (n, 0, 0, 0))]
    in_specs += [full_spec(a) for a in (w1cat, b1cat, w2f, b2f, w3f, b3f, w4f, b4f)]
    out_spec = pl.BlockSpec((1, HW, Ctot), lambda n: (n, 0, 0))

    # Explicit VMEM budget: double-buffered blocks + weights + scratch + temps.
    f32 = 4
    need = f32 * (2 * HW * Cin + 2 * HW * Ctot
                  + 2 * (w1cat.size + w2f.size + w3f.size + w4f.size)
                  + (H + 2) * (W + 2) * (c2_0 + Cin) + (H + 4) * (W + 4) * c3_0
                  + HW * (9 * c2_0 + 25 * c3_0)
                  + 2 * HW * (c1 + c2_0 + c3_0 + Ctot + Cin))
    vmem_limit = int(min(max(2 * need, 32 * 2**20), 60 * 2**20))  # <= v7x 64 MiB

    out2d = pl.pallas_call(
        kern,
        out_shape=jax.ShapeDtypeStruct((N, HW, Ctot), jnp.float32),
        grid_spec=pltpu.PrefetchScalarGridSpec(
            num_scalar_prefetch=0,
            grid=(N,),
            in_specs=in_specs,
            out_specs=out_spec,
            scratch_shapes=[
                pltpu.VMEM((H + 2, W + 2, c2_0), jnp.float32),   # zero-padded t2
                pltpu.VMEM((H, W, 9 * c2_0), jnp.float32),       # im2col (3x3)
                pltpu.VMEM((H + 4, W + 4, c3_0), jnp.float32),   # zero-padded t3
                pltpu.VMEM((H, W, 25 * c3_0), jnp.float32),      # im2col (5x5)
                pltpu.VMEM((H + 2, W + 2, Cin), jnp.float32),    # -inf padded x
            ]),
        compiler_params=pltpu.CompilerParams(
            dimension_semantics=("parallel",),
            vmem_limit_bytes=vmem_limit),
    )(x_nhwc, w1cat, b1cat, w2f, b2f, w3f, b3f, w4f, b4f)

    return out2d.reshape(N, H, W, Ctot)


@jax.jit
def inception_forward(params, x_nchw):
    """PyTorch-compatible entry point: NCHW in, NCHW out."""
    x_nhwc = jnp.transpose(x_nchw, (0, 2, 3, 1)).astype(jnp.float32)
    out_nhwc = inception_nhwc(params, x_nhwc)
    return jnp.transpose(out_nhwc, (0, 3, 1, 2))


# ----------------------------------------------------------------------------
# Params + pure-JAX reference (for a correctness smoke test)
# ----------------------------------------------------------------------------
def init_inception_params(key, in_c, c1, c2, c3, c4):
    def conv_param(k, ksize, cin, cout):
        kw, kb = jax.random.split(k)
        w = jax.random.normal(kw, (ksize, ksize, cin, cout), jnp.float32) * 0.1
        b = jax.random.normal(kb, (cout,), jnp.float32) * 0.1
        return w, b

    keys = jax.random.split(key, 6)
    return {
        "p1_1": conv_param(keys[0], 1, in_c, c1),
        "p2_1": conv_param(keys[1], 1, in_c, c2[0]),
        "p2_2": conv_param(keys[2], 3, c2[0], c2[1]),
        "p3_1": conv_param(keys[3], 1, in_c, c3[0]),
        "p3_2": conv_param(keys[4], 5, c3[0], c3[1]),
        "p4_2": conv_param(keys[5], 1, in_c, c4),
    }


@jax.jit
def reference_forward_nhwc(params, x):
    dn = ("NHWC", "HWIO", "NHWC")

    def conv(v, w, b, pad):
        y = jax.lax.conv_general_dilated(
            v, w, window_strides=(1, 1), padding=[(pad, pad), (pad, pad)],
            dimension_numbers=dn, precision=jax.lax.Precision.HIGHEST)
        return y + b.reshape(1, 1, 1, -1)

    relu = lambda v: jnp.maximum(v, 0.0)
    p1 = relu(conv(x, *params["p1_1"], 0))
    p2 = relu(conv(relu(conv(x, *params["p2_1"], 0)), *params["p2_2"], 1))
    p3 = relu(conv(relu(conv(x, *params["p3_1"], 0)), *params["p3_2"], 2))
    pooled = jax.lax.reduce_window(x, -jnp.inf, jax.lax.max,
                                   (1, 3, 3, 1), (1, 1, 1, 1),
                                   [(0, 0), (1, 1), (1, 1), (0, 0)])
    p4 = relu(conv(pooled, *params["p4_2"], 0))
    return jnp.concatenate([p1, p2, p3, p4], axis=-1)


if __name__ == "__main__":
    key = jax.random.PRNGKey(0)
    k_param, k_x = jax.random.split(key)

    # small shapes consistent with the module: batch=2, in_c=4, spatial=16
    in_c, c1, c2, c3, c4 = 4, 8, (4, 8), (4, 8), 8
    params = init_inception_params(k_param, in_c, c1, c2, c3, c4)

    x = jax.random.normal(k_x, (2, in_c, 16, 16), jnp.float32)  # NCHW

    out = inception_forward(params, x)
    jax.block_until_ready(out)

    expected_channels = c1 + c2[1] + c3[1] + c4
    assert out.shape == (2, expected_channels, 16, 16), out.shape

    # correctness check against the pure-JAX/XLA reference of the same module
    x_nhwc = jnp.transpose(x, (0, 2, 3, 1))
    ref = jnp.transpose(reference_forward_nhwc(params, x_nhwc), (0, 3, 1, 2))
    err = float(jnp.max(jnp.abs(out - ref)))
    assert err < 1e-2, f"max abs error vs reference: {err}"

    print("KERNEL_OK")
</pallas_src>

<mosaic_0001>
module attributes {stable_mosaic.version = 11 : i64} {
  func.func @_inception_kernel(%arg0: i32, %arg1: memref<1x16x16x4xf32, #tpu.memory_space<vmem>>, %arg2: memref<4x16xf32, #tpu.memory_space<vmem>>, %arg3: memref<1x16xf32, #tpu.memory_space<vmem>>, %arg4: memref<36x8xf32, #tpu.memory_space<vmem>>, %arg5: memref<1x8xf32, #tpu.memory_space<vmem>>, %arg6: memref<100x8xf32, #tpu.memory_space<vmem>>, %arg7: memref<1x8xf32, #tpu.memory_space<vmem>>, %arg8: memref<4x8xf32, #tpu.memory_space<vmem>>, %arg9: memref<1x8xf32, #tpu.memory_space<vmem>>, %arg10: memref<1x256x32xf32, #tpu.memory_space<vmem>>, %arg11: memref<18x18x4xf32, #tpu.memory_space<vmem>>, %arg12: memref<16x16x36xf32, #tpu.memory_space<vmem>>, %arg13: memref<20x20x4xf32, #tpu.memory_space<vmem>>, %arg14: memref<16x16x100xf32, #tpu.memory_space<vmem>>, %arg15: memref<18x18x4xf32, #tpu.memory_space<vmem>>) attributes {dimension_semantics = [#tpu.dimension_semantics<parallel>], iteration_bounds = array<i64: 2>, scalar_prefetch = 0 : i64, scratch_operands = 5 : i64, tpu.core_type = #tpu.core_type<tc>, window_params = [{transform_indices = @transform_0, window_bounds = array<i64: 1, 16, 16, 4>}, {pipeline_mode = #tpu.pipeline_mode<synchronous>, transform_indices = @transform_1, window_bounds = array<i64: 4, 16>}, {pipeline_mode = #tpu.pipeline_mode<synchronous>, transform_indices = @transform_2, window_bounds = array<i64: 1, 16>}, {pipeline_mode = #tpu.pipeline_mode<synchronous>, transform_indices = @transform_3, window_bounds = array<i64: 36, 8>}, {pipeline_mode = #tpu.pipeline_mode<synchronous>, transform_indices = @transform_4, window_bounds = array<i64: 1, 8>}, {pipeline_mode = #tpu.pipeline_mode<synchronous>, transform_indices = @transform_5, window_bounds = array<i64: 100, 8>}, {pipeline_mode = #tpu.pipeline_mode<synchronous>, transform_indices = @transform_6, window_bounds = array<i64: 1, 8>}, {pipeline_mode = #tpu.pipeline_mode<synchronous>, transform_indices = @transform_7, window_bounds = array<i64: 4, 8>}, {pipeline_mode = #tpu.pipeline_mode<synchronous>, transform_indices = @transform_8, window_bounds = array<i64: 1, 8>}, {transform_indices = @transform_9, window_bounds = array<i64: 1, 256, 32>}]} {
    %c0 = arith.constant 0 : index
    %c0_0 = arith.constant 0 : index
    %c0_1 = arith.constant 0 : index
    %c0_2 = arith.constant 0 : index
    %0 = vector.load %arg1[%c0, %c0_0, %c0_1, %c0_2] : memref<1x16x16x4xf32, #tpu.memory_space<vmem>>, vector<1x16x16x4xf32>
    %1 = vector.shape_cast %0 : vector<1x16x16x4xf32> to vector<16x16x4xf32>
    %2 = vector.shape_cast %1 : vector<16x16x4xf32> to vector<256x4xf32>
    %c0_3 = arith.constant 0 : index
    %c0_4 = arith.constant 0 : index
    %3 = vector.load %arg2[%c0_3, %c0_4] : memref<4x16xf32, #tpu.memory_space<vmem>>, vector<4x16xf32>
    %cst = arith.constant dense<0.000000e+00> : vector<256x16xf32>
    %4 = tpu.matmul %2, %3, %cst {dimension_numbers = #tpu.dot_dimension_numbers<[1], [0], [0], [1], [0, 0, 1, 1], [], []>} : vector<256x4xf32>, vector<4x16xf32>, vector<256x16xf32> -> vector<256x16xf32>
    %c0_5 = arith.constant 0 : index
    %c0_6 = arith.constant 0 : index
    %5 = vector.load %arg3[%c0_5, %c0_6] : memref<1x16xf32, #tpu.memory_space<vmem>>, vector<1x16xf32>
    %6 = vector.broadcast %5 : vector<1x16xf32> to vector<256x16xf32>
    %7 = arith.addf %4, %6 : vector<256x16xf32>
    %cst_7 = arith.constant 0.000000e+00 : f32
    %8 = vector.broadcast %cst_7 : f32 to vector<256x16xf32>
    %9 = arith.maximumf %7, %8 : vector<256x16xf32>
    %10 = vector.extract_strided_slice %9 {offsets = [0, 0], sizes = [256, 8], strides = [1, 1]} : vector<256x16xf32> to vector<256x8xf32>
    %c0_8 = arith.constant 0 : index
    %c0_9 = arith.constant 0 : index
    %c0_10 = arith.constant 0 : index
    %11 = vector.load %arg10[%c0_8, %c0_9, %c0_10] : memref<1x256x32xf32, #tpu.memory_space<vmem>>, vector<1x256x8xf32>
    %12 = vector.shape_cast %11 : vector<1x256x8xf32> to vector<256x8xf32>
    %13 = vector.shape_cast %10 : vector<256x8xf32> to vector<1x256x8xf32>
    tpu.vector_store %arg10[%c0_8, %c0_9, %c0_10], %13 {strides = array<i32>} : memref<1x256x32xf32, #tpu.memory_space<vmem>>, vector<1x256x8xf32>,
    %cst_11 = arith.constant 0.000000e+00 : f32
    %14 = vector.broadcast %cst_11 : f32 to vector<18x18x4xf32>
    %c0_12 = arith.constant 0 : index
    %c0_13 = arith.constant 0 : index
    %c0_14 = arith.constant 0 : index
    %15 = vector.load %arg11[%c0_12, %c0_13, %c0_14] : memref<18x18x4xf32, #tpu.memory_space<vmem>>, vector<18x18x4xf32>
    tpu.vector_store %arg11[%c0_12, %c0_13, %c0_14], %14 {strides = array<i32>} : memref<18x18x4xf32, #tpu.memory_space<vmem>>, vector<18x18x4xf32>,
    %16 = vector.extract_strided_slice %9 {offsets = [0, 8], sizes = [256, 4], strides = [1, 1]} : vector<256x16xf32> to vector<256x4xf32>
    %17 = vector.shape_cast %16 : vector<256x4xf32> to vector<16x16x4xf32>
    %c1 = arith.constant 1 : index
    %c1_15 = arith.constant 1 : index
    %c0_16 = arith.constant 0 : index
    %18 = vector.load %arg11[%c1, %c1_15, %c0_16] : memref<18x18x4xf32, #tpu.memory_space<vmem>>, vector<16x16x4xf32>
    tpu.vector_store %arg11[%c1, %c1_15, %c0_16], %17 {strides = array<i32>} : memref<18x18x4xf32, #tpu.memory_space<vmem>>, vector<16x16x4xf32>,
    %c0_17 = arith.constant 0 : index
    %c0_18 = arith.constant 0 : index
    %c0_19 = arith.constant 0 : index
    %19 = vector.load %arg11[%c0_17, %c0_18, %c0_19] : memref<18x18x4xf32, #tpu.memory_space<vmem>>, vector<16x16x4xf32>
    %c0_20 = arith.constant 0 : index
    %c0_21 = arith.constant 0 : index
    %c0_22 = arith.constant 0 : index
    %20 = vector.load %arg12[%c0_20, %c0_21, %c0_22] : memref<16x16x36xf32, #tpu.memory_space<vmem>>, vector<16x16x4xf32>
    tpu.vector_store %arg12[%c0_20, %c0_21, %c0_22], %19 {strides = array<i32>} : memref<16x16x36xf32, #tpu.memory_space<vmem>>, vector<16x16x4xf32>,
    %c0_23 = arith.constant 0 : index
    %c1_24 = arith.constant 1 : index
    %c0_25 = arith.constant 0 : index
    %21 = vector.load %arg11[%c0_23, %c1_24, %c0_25] : memref<18x18x4xf32, #tpu.memory_space<vmem>>, vector<16x16x4xf32>
    %c0_26 = arith.constant 0 : index
    %c0_27 = arith.constant 0 : index
    %c4 = arith.constant 4 : index
    %22 = vector.load %arg12[%c0_26, %c0_27, %c4] : memref<16x16x36xf32, #tpu.memory_space<vmem>>, vector<16x16x4xf32>
    tpu.vector_store %arg12[%c0_26, %c0_27, %c4], %21 {strides = array<i32>} : memref<16x16x36xf32, #tpu.memory_space<vmem>>, vector<16x16x4xf32>,
    %c0_28 = arith.constant 0 : index
    %c2 = arith.constant 2 : index
    %c0_29 = arith.constant 0 : index
    %23 = vector.load %arg11[%c0_28, %c2, %c0_29] : memref<18x18x4xf32, #tpu.memory_space<vmem>>, vector<16x16x4xf32>
    %c0_30 = arith.constant 0 : index
    %c0_31 = arith.constant 0 : index
    %c8 = arith.constant 8 : index
    %24 = vector.load %arg12[%c0_30, %c0_31, %c8] : memref<16x16x36xf32, #tpu.memory_space<vmem>>, vector<16x16x4xf32>
    tpu.vector_store %arg12[%c0_30, %c0_31, %c8], %23 {strides = array<i32>} : memref<16x16x36xf32, #tpu.memory_space<vmem>>, vector<16x16x4xf32>,
    %c1_32 = arith.constant 1 : index
    %c0_33 = arith.constant 0 : index
    %c0_34 = arith.constant 0 : index
    %25 = vector.load %arg11[%c1_32, %c0_33, %c0_34] : memref<18x18x4xf32, #tpu.memory_space<vmem>>, vector<16x16x4xf32>
    %c0_35 = arith.constant 0 : index
    %c0_36 = arith.constant 0 : index
    %c12 = arith.constant 12 : index
    %26 = vector.load %arg12[%c0_35, %c0_36, %c12] : memref<16x16x36xf32, #tpu.memory_space<vmem>>, vector<16x16x4xf32>
    tpu.vector_store %arg12[%c0_35, %c0_36, %c12], %25 {strides = array<i32>} : memref<16x16x36xf32, #tpu.memory_space<vmem>>, vector<16x16x4xf32>,
    %c1_37 = arith.constant 1 : index
    %c1_38 = arith.constant 1 : index
    %c0_39 = arith.constant 0 : index
    %27 = vector.load %arg11[%c1_37, %c1_38, %c0_39] : memref<18x18x4xf32, #tpu.memory_space<vmem>>, vector<16x16x4xf32>
    %c0_40 = arith.constant 0 : index
    %c0_41 = arith.constant 0 : index
    %c16 = arith.constant 16 : index
    %28 = vector.load %arg12[%c0_40, %c0_41, %c16] : memref<16x16x36xf32, #tpu.memory_space<vmem>>, vector<16x16x4xf32>
    tpu.vector_store %arg12[%c0_40, %c0_41, %c16], %27 {strides = array<i32>} : memref<16x16x36xf32, #tpu.memory_space<vmem>>, vector<16x16x4xf32>,
    %c1_42 = arith.constant 1 : index
    %c2_43 = arith.constant 2 : index
    %c0_44 = arith.constant 0 : index
    %29 = vector.load %arg11[%c1_42, %c2_43, %c0_44] : memref<18x18x4xf32, #tpu.memory_space<vmem>>, vector<16x16x4xf32>
    %c0_45 = arith.constant 0 : index
    %c0_46 = arith.constant 0 : index
    %c20 = arith.constant 20 : index
    %30 = vector.load %arg12[%c0_45, %c0_46, %c20] : memref<16x16x36xf32, #tpu.memory_space<vmem>>, vector<16x16x4xf32>
    tpu.vector_store %arg12[%c0_45, %c0_46, %c20], %29 {strides = array<i32>} : memref<16x16x36xf32, #tpu.memory_space<vmem>>, vector<16x16x4xf32>,
    %c2_47 = arith.constant 2 : index
    %c0_48 = arith.constant 0 : index
    %c0_49 = arith.constant 0 : index
    %31 = vector.load %arg11[%c2_47, %c0_48, %c0_49] : memref<18x18x4xf32, #tpu.memory_space<vmem>>, vector<16x16x4xf32>
    %c0_50 = arith.constant 0 : index
    %c0_51 = arith.constant 0 : index
    %c24 = arith.constant 24 : index
    %32 = vector.load %arg12[%c0_50, %c0_51, %c24] : memref<16x16x36xf32, #tpu.memory_space<vmem>>, vector<16x16x4xf32>
    tpu.vector_store %arg12[%c0_50, %c0_51, %c24], %31 {strides = array<i32>} : memref<16x16x36xf32, #tpu.memory_space<vmem>>, vector<16x16x4xf32>,
    %c2_52 = arith.constant 2 : index
    %c1_53 = arith.constant 1 : index
    %c0_54 = arith.constant 0 : index
    %33 = vector.load %arg11[%c2_52, %c1_53, %c0_54] : memref<18x18x4xf32, #tpu.memory_space<vmem>>, vector<16x16x4xf32>
    %c0_55 = arith.constant 0 : index
    %c0_56 = arith.constant 0 : index
    %c28 = arith.constant 28 : index
    %34 = vector.load %arg12[%c0_55, %c0_56, %c28] : memref<16x16x36xf32, #tpu.memory_space<vmem>>, vector<16x16x4xf32>
    tpu.vector_store %arg12[%c0_55, %c0_56, %c28], %33 {strides = array<i32>} : memref<16x16x36xf32, #tpu.memory_space<vmem>>, vector<16x16x4xf32>,
    %c2_57 = arith.constant 2 : index
    %c2_58 = arith.constant 2 : index
    %c0_59 = arith.constant 0 : index
    %35 = vector.load %arg11[%c2_57, %c2_58, %c0_59] : memref<18x18x4xf32, #tpu.memory_space<vmem>>, vector<16x16x4xf32>
    %c0_60 = arith.constant 0 : index
    %c0_61 = arith.constant 0 : index
    %c32 = arith.constant 32 : index
    %36 = vector.load %arg12[%c0_60, %c0_61, %c32] : memref<16x16x36xf32, #tpu.memory_space<vmem>>, vector<16x16x4xf32>
    tpu.vector_store %arg12[%c0_60, %c0_61, %c32], %35 {strides = array<i32>} : memref<16x16x36xf32, #tpu.memory_space<vmem>>, vector<16x16x4xf32>,
    %c0_62 = arith.constant 0 : index
    %c0_63 = arith.constant 0 : index
    %c0_64 = arith.constant 0 : index
    %37 = vector.load %arg12[%c0_62, %c0_63, %c0_64] : memref<16x16x36xf32, #tpu.memory_space<vmem>>, vector<16x16x36xf32>
    %38 = vector.shape_cast %37 : vector<16x16x36xf32> to vector<256x36xf32>
    %c0_65 = arith.constant 0 : index
    %c0_66 = arith.constant 0 : index
    %39 = vector.load %arg4[%c0_65, %c0_66] : memref<36x8xf32, #tpu.memory_space<vmem>>, vector<36x8xf32>
    %cst_67 = arith.constant dense<0.000000e+00> : vector<256x8xf32>
    %40 = tpu.matmul %38, %39, %cst_67 {dimension_numbers = #tpu.dot_dimension_numbers<[1], [0], [0], [1], [0, 0, 1, 1], [], []>} : vector<256x36xf32>, vector<36x8xf32>, vector<256x8xf32> -> vector<256x8xf32>
    %c0_68 = arith.constant 0 : index
    %c0_69 = arith.constant 0 : index
    %41 = vector.load %arg5[%c0_68, %c0_69] : memref<1x8xf32, #tpu.memory_space<vmem>>, vector<1x8xf32>
    %42 = vector.broadcast %41 : vector<1x8xf32> to vector<256x8xf32>
    %43 = arith.addf %40, %42 : vector<256x8xf32>
    %cst_70 = arith.constant 0.000000e+00 : f32
    %44 = vector.broadcast %cst_70 : f32 to vector<256x8xf32>
    %45 = arith.maximumf %43, %44 : vector<256x8xf32>
    %c0_71 = arith.constant 0 : index
    %c0_72 = arith.constant 0 : index
    %c8_73 = arith.constant 8 : index
    %46 = vector.load %arg10[%c0_71, %c0_72, %c8_73] : memref<1x256x32xf32, #tpu.memory_space<vmem>>, vector<1x256x8xf32>
    %47 = vector.shape_cast %46 : vector<1x256x8xf32> to vector<256x8xf32>
    %48 = vector.shape_cast %45 : vector<256x8xf32> to vector<1x256x8xf32>
    tpu.vector_store %arg10[%c0_71, %c0_72, %c8_73], %48 {strides = array<i32>} : memref<1x256x32xf32, #tpu.memory_space<vmem>>, vector<1x256x8xf32>,
    %cst_74 = arith.constant 0.000000e+00 : f32
    %49 = vector.broadcast %cst_74 : f32 to vector<20x20x4xf32>
    %c0_75 = arith.constant 0 : index
    %c0_76 = arith.constant 0 : index
    %c0_77 = arith.constant 0 : index
    %50 = vector.load %arg13[%c0_75, %c0_76, %c0_77] : memref<20x20x4xf32, #tpu.memory_space<vmem>>, vector<20x20x4xf32>
    tpu.vector_store %arg13[%c0_75, %c0_76, %c0_77], %49 {strides = array<i32>} : memref<20x20x4xf32, #tpu.memory_space<vmem>>, vector<20x20x4xf32>,
    %51 = vector.extract_strided_slice %9 {offsets = [0, 12], sizes = [256, 4], strides = [1, 1]} : vector<256x16xf32> to vector<256x4xf32>
    %52 = vector.shape_cast %51 : vector<256x4xf32> to vector<16x16x4xf32>
    %c2_78 = arith.constant 2 : index
    %c2_79 = arith.constant 2 : index
    %c0_80 = arith.constant 0 : index
    %53 = vector.load %arg13[%c2_78, %c2_79, %c0_80] : memref<20x20x4xf32, #tpu.memory_space<vmem>>, vector<16x16x4xf32>
    tpu.vector_store %arg13[%c2_78, %c2_79, %c0_80], %52 {strides = array<i32>} : memref<20x20x4xf32, #tpu.memory_space<vmem>>, vector<16x16x4xf32>,
    %c0_81 = arith.constant 0 : index
    %c0_82 = arith.constant 0 : index
    %c0_83 = arith.constant 0 : index
    %54 = vector.load %arg13[%c0_81, %c0_82, %c0_83] : memref<20x20x4xf32, #tpu.memory_space<vmem>>, vector<16x16x4xf32>
    %c0_84 = arith.constant 0 : index
    %c0_85 = arith.constant 0 : index
    %c0_86 = arith.constant 0 : index
    %55 = vector.load %arg14[%c0_84, %c0_85, %c0_86] : memref<16x16x100xf32, #tpu.memory_space<vmem>>, vector<16x16x4xf32>
    tpu.vector_store %arg14[%c0_84, %c0_85, %c0_86], %54 {strides = array<i32>} : memref<16x16x100xf32, #tpu.memory_space<vmem>>, vector<16x16x4xf32>,
    %c0_87 = arith.constant 0 : index
    %c1_88 = arith.constant 1 : index
    %c0_89 = arith.constant 0 : index
    %56 = vector.load %arg13[%c0_87, %c1_88, %c0_89] : memref<20x20x4xf32, #tpu.memory_space<vmem>>, vector<16x16x4xf32>
    %c0_90 = arith.constant 0 : index
    %c0_91 = arith.constant 0 : index
    %c4_92 = arith.constant 4 : index
    %57 = vector.load %arg14[%c0_90, %c0_91, %c4_92] : memref<16x16x100xf32, #tpu.memory_space<vmem>>, vector<16x16x4xf32>
    tpu.vector_store %arg14[%c0_90, %c0_91, %c4_92], %56 {strides = array<i32>} : memref<16x16x100xf32, #tpu.memory_space<vmem>>, vector<16x16x4xf32>,
    %c0_93 = arith.constant 0 : index
    %c2_94 = arith.constant 2 : index
    %c0_95 = arith.constant 0 : index
    %58 = vector.load %arg13[%c0_93, %c2_94, %c0_95] : memref<20x20x4xf32, #tpu.memory_space<vmem>>, vector<16x16x4xf32>
    %c0_96 = arith.constant 0 : index
    %c0_97 = arith.constant 0 : index
    %c8_98 = arith.constant 8 : index
    %59 = vector.load %arg14[%c0_96, %c0_97, %c8_98] : memref<16x16x100xf32, #tpu.memory_space<vmem>>, vector<16x16x4xf32>
    tpu.vector_store %arg14[%c0_96, %c0_97, %c8_98], %58 {strides = array<i32>} : memref<16x16x100xf32, #tpu.memory_space<vmem>>, vector<16x16x4xf32>,
    %c0_99 = arith.constant 0 : index
    %c3 = arith.constant 3 : index
    %c0_100 = arith.constant 0 : index
    %60 = vector.load %arg13[%c0_99, %c3, %c0_100] : memref<20x20x4xf32, #tpu.memory_space<vmem>>, vector<16x16x4xf32>
    %c0_101 = arith.constant 0 : index
    %c0_102 = arith.constant 0 : index
    %c12_103 = arith.constant 12 : index
    %61 = vector.load %arg14[%c0_101, %c0_102, %c12_103] : memref<16x16x100xf32, #tpu.memory_space<vmem>>, vector<16x16x4xf32>
    tpu.vector_store %arg14[%c0_101, %c0_102, %c12_103], %60 {strides = array<i32>} : memref<16x16x100xf32, #tpu.memory_space<vmem>>, vector<16x16x4xf32>,
    %c0_104 = arith.constant 0 : index
    %c4_105 = arith.constant 4 : index
    %c0_106 = arith.constant 0 : index
    %62 = vector.load %arg13[%c0_104, %c4_105, %c0_106] : memref<20x20x4xf32, #tpu.memory_space<vmem>>, vector<16x16x4xf32>
    %c0_107 = arith.constant 0 : index
    %c0_108 = arith.constant 0 : index
    %c16_109 = arith.constant 16 : index
    %63 = vector.load %arg14[%c0_107, %c0_108, %c16_109] : memref<16x16x100xf32, #tpu.memory_space<vmem>>, vector<16x16x4xf32>
    tpu.vector_store %arg14[%c0_107, %c0_108, %c16_109], %62 {strides = array<i32>} : memref<16x16x100xf32, #tpu.memory_space<vmem>>, vector<16x16x4xf32>,
    %c1_110 = arith.constant 1 : index
    %c0_111 = arith.constant 0 : index
    %c0_112 = arith.constant 0 : index
    %64 = vector.load %arg13[%c1_110, %c0_111, %c0_112] : memref<20x20x4xf32, #tpu.memory_space<vmem>>, vector<16x16x4xf32>
    %c0_113 = arith.constant 0 : index
    %c0_114 = arith.constant 0 : index
    %c20_115 = arith.constant 20 : index
    %65 = vector.load %arg14[%c0_113, %c0_114, %c20_115] : memref<16x16x100xf32, #tpu.memory_space<vmem>>, vector<16x16x4xf32>
    tpu.vector_store %arg14[%c0_113, %c0_114, %c20_115], %64 {strides = array<i32>} : memref<16x16x100xf32, #tpu.memory_space<vmem>>, vector<16x16x4xf32>,
    %c1_116 = arith.constant 1 : index
    %c1_117 = arith.constant 1 : index
    %c0_118 = arith.constant 0 : index
    %66 = vector.load %arg13[%c1_116, %c1_117, %c0_118] : memref<20x20x4xf32, #tpu.memory_space<vmem>>, vector<16x16x4xf32>
    %c0_119 = arith.constant 0 : index
    %c0_120 = arith.constant 0 : index
    %c24_121 = arith.constant 24 : index
    %67 = vector.load %arg14[%c0_119, %c0_120, %c24_121] : memref<16x16x100xf32, #tpu.memory_space<vmem>>, vector<16x16x4xf32>
    tpu.vector_store %arg14[%c0_119, %c0_120, %c24_121], %66 {strides = array<i32>} : memref<16x16x100xf32, #tpu.memory_space<vmem>>, vector<16x16x4xf32>,
    %c1_122 = arith.constant 1 : index
    %c2_123 = arith.constant 2 : index
    %c0_124 = arith.constant 0 : index
    %68 = vector.load %arg13[%c1_122, %c2_123, %c0_124] : memref<20x20x4xf32, #tpu.memory_space<vmem>>, vector<16x16x4xf32>
    %c0_125 = arith.constant 0 : index
    %c0_126 = arith.constant 0 : index
    %c28_127 = arith.constant 28 : index
    %69 = vector.load %arg14[%c0_125, %c0_126, %c28_127] : memref<16x16x100xf32, #tpu.memory_space<vmem>>, vector<16x16x4xf32>
    tpu.vector_store %arg14[%c0_125, %c0_126, %c28_127], %68 {strides = array<i32>} : memref<16x16x100xf32, #tpu.memory_space<vmem>>, vector<16x16x4xf32>,
    %c1_128 = arith.constant 1 : index
    %c3_129 = arith.constant 3 : index
    %c0_130 = arith.constant 0 : index
    %70 = vector.load %arg13[%c1_128, %c3_129, %c0_130] : memref<20x20x4xf32, #tpu.memory_space<vmem>>, vector<16x16x4xf32>
    %c0_131 = arith.constant 0 : index
    %c0_132 = arith.constant 0 : index
    %c32_133 = arith.constant 32 : index
    %71 = vector.load %arg14[%c0_131, %c0_132, %c32_133] : memref<16x16x100xf32, #tpu.memory_space<vmem>>, vector<16x16x4xf32>
    tpu.vector_store %arg14[%c0_131, %c0_132, %c32_133], %70 {strides = array<i32>} : memref<16x16x100xf32, #tpu.memory_space<vmem>>, vector<16x16x4xf32>,
    %c1_134 = arith.constant 1 : index
    %c4_135 = arith.constant 4 : index
    %c0_136 = arith.constant 0 : index
    %72 = vector.load %arg13[%c1_134, %c4_135, %c0_136] : memref<20x20x4xf32, #tpu.memory_space<vmem>>, vector<16x16x4xf32>
    %c0_137 = arith.constant 0 : index
    %c0_138 = arith.constant 0 : index
    %c36 = arith.constant 36 : index
    %73 = vector.load %arg14[%c0_137, %c0_138, %c36] : memref<16x16x100xf32, #tpu.memory_space<vmem>>, vector<16x16x4xf32>
    tpu.vector_store %arg14[%c0_137, %c0_138, %c36], %72 {strides = array<i32>} : memref<16x16x100xf32, #tpu.memory_space<vmem>>, vector<16x16x4xf32>,
    %c2_139 = arith.constant 2 : index
    %c0_140 = arith.constant 0 : index
    %c0_141 = arith.constant 0 : index
    %74 = vector.load %arg13[%c2_139, %c0_140, %c0_141] : memref<20x20x4xf32, #tpu.memory_space<vmem>>, vector<16x16x4xf32>
    %c0_142 = arith.constant 0 : index
    %c0_143 = arith.constant 0 : index
    %c40 = arith.constant 40 : index
    %75 = vector.load %arg14[%c0_142, %c0_143, %c40] : memref<16x16x100xf32, #tpu.memory_space<vmem>>, vector<16x16x4xf32>
    tpu.vector_store %arg14[%c0_142, %c0_143, %c40], %74 {strides = array<i32>} : memref<16x16x100xf32, #tpu.memory_space<vmem>>, vector<16x16x4xf32>,
    %c2_144 = arith.constant 2 : index
    %c1_145 = arith.constant 1 : index
    %c0_146 = arith.constant 0 : index
    %76 = vector.load %arg13[%c2_144, %c1_145, %c0_146] : memref<20x20x4xf32, #tpu.memory_space<vmem>>, vector<16x16x4xf32>
    %c0_147 = arith.constant 0 : index
    %c0_148 = arith.constant 0 : index
    %c44 = arith.constant 44 : index
    %77 = vector.load %arg14[%c0_147, %c0_148, %c44] : memref<16x16x100xf32, #tpu.memory_space<vmem>>, vector<16x16x4xf32>
    tpu.vector_store %arg14[%c0_147, %c0_148, %c44], %76 {strides = array<i32>} : memref<16x16x100xf32, #tpu.memory_space<vmem>>, vector<16x16x4xf32>,
    %c2_149 = arith.constant 2 : index
    %c2_150 = arith.constant 2 : index
    %c0_151 = arith.constant 0 : index
    %78 = vector.load %arg13[%c2_149, %c2_150, %c0_151] : memref<20x20x4xf32, #tpu.memory_space<vmem>>, vector<16x16x4xf32>
    %c0_152 = arith.constant 0 : index
    %c0_153 = arith.constant 0 : index
    %c48 = arith.constant 48 : index
    %79 = vector.load %arg14[%c0_152, %c0_153, %c48] : memref<16x16x100xf32, #tpu.memory_space<vmem>>, vector<16x16x4xf32>
    tpu.vector_store %arg14[%c0_152, %c0_153, %c48], %78 {strides = array<i32>} : memref<16x16x100xf32, #tpu.memory_space<vmem>>, vector<16x16x4xf32>,
    %c2_154 = arith.constant 2 : index
    %c3_155 = arith.constant 3 : index
    %c0_156 = arith.constant 0 : index
    %80 = vector.load %arg13[%c2_154, %c3_155, %c0_156] : memref<20x20x4xf32, #tpu.memory_space<vmem>>, vector<16x16x4xf32>
    %c0_157 = arith.constant 0 : index
    %c0_158 = arith.constant 0 : index
    %c52 = arith.constant 52 : index
    %81 = vector.load %arg14[%c0_157, %c0_158, %c52] : memref<16x16x100xf32, #tpu.memory_space<vmem>>, vector<16x16x4xf32>
    tpu.vector_store %arg14[%c0_157, %c0_158, %c52], %80 {strides = array<i32>} : memref<16x16x100xf32, #tpu.memory_space<vmem>>, vector<16x16x4xf32>,
    %c2_159 = arith.constant 2 : index
    %c4_160 = arith.constant 4 : index
    %c0_161 = arith.constant 0 : index
    %82 = vector.load %arg13[%c2_159, %c4_160, %c0_161] : memref<20x20x4xf32, #tpu.memory_space<vmem>>, vector<16x16x4xf32>
    %c0_162 = arith.constant 0 : index
    %c0_163 = arith.constant 0 : index
    %c56 = arith.constant 56 : index
    %83 = vector.load %arg14[%c0_162, %c0_163, %c56] : memref<16x16x100xf32, #tpu.memory_space<vmem>>, vector<16x16x4xf32>
    tpu.vector_store %arg14[%c0_162, %c0_163, %c56], %82 {strides = array<i32>} : memref<16x16x100xf32, #tpu.memory_space<vmem>>, vector<16x16x4xf32>,
    %c3_164 = arith.constant 3 : index
    %c0_165 = arith.constant 0 : index
    %c0_166 = arith.constant 0 : index
    %84 = vector.load %arg13[%c3_164, %c0_165, %c0_166] : memref<20x20x4xf32, #tpu.memory_space<vmem>>, vector<16x16x4xf32>
    %c0_167 = arith.constant 0 : index
    %c0_168 = arith.constant 0 : index
    %c60 = arith.constant 60 : index
    %85 = vector.load %arg14[%c0_167, %c0_168, %c60] : memref<16x16x100xf32, #tpu.memory_space<vmem>>, vector<16x16x4xf32>
    tpu.vector_store %arg14[%c0_167, %c0_168, %c60], %84 {strides = array<i32>} : memref<16x16x100xf32, #tpu.memory_space<vmem>>, vector<16x16x4xf32>,
    %c3_169 = arith.constant 3 : index
    %c1_170 = arith.constant 1 : index
    %c0_171 = arith.constant 0 : index
    %86 = vector.load %arg13[%c3_169, %c1_170, %c0_171] : memref<20x20x4xf32, #tpu.memory_space<vmem>>, vector<16x16x4xf32>
    %c0_172 = arith.constant 0 : index
    %c0_173 = arith.constant 0 : index
    %c64 = arith.constant 64 : index
    %87 = vector.load %arg14[%c0_172, %c0_173, %c64] : memref<16x16x100xf32, #tpu.memory_space<vmem>>, vector<16x16x4xf32>
    tpu.vector_store %arg14[%c0_172, %c0_173, %c64], %86 {strides = array<i32>} : memref<16x16x100xf32, #tpu.memory_space<vmem>>, vector<16x16x4xf32>,
    %c3_174 = arith.constant 3 : index
    %c2_175 = arith.constant 2 : index
    %c0_176 = arith.constant 0 : index
    %88 = vector.load %arg13[%c3_174, %c2_175, %c0_176] : memref<20x20x4xf32, #tpu.memory_space<vmem>>, vector<16x16x4xf32>
    %c0_177 = arith.constant 0 : index
    %c0_178 = arith.constant 0 : index
    %c68 = arith.constant 68 : index
    %89 = vector.load %arg14[%c0_177, %c0_178, %c68] : memref<16x16x100xf32, #tpu.memory_space<vmem>>, vector<16x16x4xf32>
    tpu.vector_store %arg14[%c0_177, %c0_178, %c68], %88 {strides = array<i32>} : memref<16x16x100xf32, #tpu.memory_space<vmem>>, vector<16x16x4xf32>,
    %c3_179 = arith.constant 3 : index
    %c3_180 = arith.constant 3 : index
    %c0_181 = arith.constant 0 : index
    %90 = vector.load %arg13[%c3_179, %c3_180, %c0_181] : memref<20x20x4xf32, #tpu.memory_space<vmem>>, vector<16x16x4xf32>
    %c0_182 = arith.constant 0 : index
    %c0_183 = arith.constant 0 : index
    %c72 = arith.constant 72 : index
    %91 = vector.load %arg14[%c0_182, %c0_183, %c72] : memref<16x16x100xf32, #tpu.memory_space<vmem>>, vector<16x16x4xf32>
    tpu.vector_store %arg14[%c0_182, %c0_183, %c72], %90 {strides = array<i32>} : memref<16x16x100xf32, #tpu.memory_space<vmem>>, vector<16x16x4xf32>,
    %c3_184 = arith.constant 3 : index
    %c4_185 = arith.constant 4 : index
    %c0_186 = arith.constant 0 : index
    %92 = vector.load %arg13[%c3_184, %c4_185, %c0_186] : memref<20x20x4xf32, #tpu.memory_space<vmem>>, vector<16x16x4xf32>
    %c0_187 = arith.constant 0 : index
    %c0_188 = arith.constant 0 : index
    %c76 = arith.constant 76 : index
    %93 = vector.load %arg14[%c0_187, %c0_188, %c76] : memref<16x16x100xf32, #tpu.memory_space<vmem>>, vector<16x16x4xf32>
    tpu.vector_store %arg14[%c0_187, %c0_188, %c76], %92 {strides = array<i32>} : memref<16x16x100xf32, #tpu.memory_space<vmem>>, vector<16x16x4xf32>,
    %c4_189 = arith.constant 4 : index
    %c0_190 = arith.constant 0 : index
    %c0_191 = arith.constant 0 : index
    %94 = vector.load %arg13[%c4_189, %c0_190, %c0_191] : memref<20x20x4xf32, #tpu.memory_space<vmem>>, vector<16x16x4xf32>
    %c0_192 = arith.constant 0 : index
    %c0_193 = arith.constant 0 : index
    %c80 = arith.constant 80 : index
    %95 = vector.load %arg14[%c0_192, %c0_193, %c80] : memref<16x16x100xf32, #tpu.memory_space<vmem>>, vector<16x16x4xf32>
    tpu.vector_store %arg14[%c0_192, %c0_193, %c80], %94 {strides = array<i32>} : memref<16x16x100xf32, #tpu.memory_space<vmem>>, vector<16x16x4xf32>,
    %c4_194 = arith.constant 4 : index
    %c1_195 = arith.constant 1 : index
    %c0_196 = arith.constant 0 : index
    %96 = vector.load %arg13[%c4_194, %c1_195, %c0_196] : memref<20x20x4xf32, #tpu.memory_space<vmem>>, vector<16x16x4xf32>
    %c0_197 = arith.constant 0 : index
    %c0_198 = arith.constant 0 : index
    %c84 = arith.constant 84 : index
    %97 = vector.load %arg14[%c0_197, %c0_198, %c84] : memref<16x16x100xf32, #tpu.memory_space<vmem>>, vector<16x16x4xf32>
    tpu.vector_store %arg14[%c0_197, %c0_198, %c84], %96 {strides = array<i32>} : memref<16x16x100xf32, #tpu.memory_space<vmem>>, vector<16x16x4xf32>,
    %c4_199 = arith.constant 4 : index
    %c2_200 = arith.constant 2 : index
    %c0_201 = arith.constant 0 : index
    %98 = vector.load %arg13[%c4_199, %c2_200, %c0_201] : memref<20x20x4xf32, #tpu.memory_space<vmem>>, vector<16x16x4xf32>
    %c0_202 = arith.constant 0 : index
    %c0_203 = arith.constant 0 : index
    %c88 = arith.constant 88 : index
    %99 = vector.load %arg14[%c0_202, %c0_203, %c88] : memref<16x16x100xf32, #tpu.memory_space<vmem>>, vector<16x16x4xf32>
    tpu.vector_store %arg14[%c0_202, %c0_203, %c88], %98 {strides = array<i32>} : memref<16x16x100xf32, #tpu.memory_space<vmem>>, vector<16x16x4xf32>,
    %c4_204 = arith.constant 4 : index
    %c3_205 = arith.constant 3 : index
    %c0_206 = arith.constant 0 : index
    %100 = vector.load %arg13[%c4_204, %c3_205, %c0_206] : memref<20x20x4xf32, #tpu.memory_space<vmem>>, vector<16x16x4xf32>
    %c0_207 = arith.constant 0 : index
    %c0_208 = arith.constant 0 : index
    %c92 = arith.constant 92 : index
    %101 = vector.load %arg14[%c0_207, %c0_208, %c92] : memref<16x16x100xf32, #tpu.memory_space<vmem>>, vector<16x16x4xf32>
    tpu.vector_store %arg14[%c0_207, %c0_208, %c92], %100 {strides = array<i32>} : memref<16x16x100xf32, #tpu.memory_space<vmem>>, vector<16x16x4xf32>,
    %c4_209 = arith.constant 4 : index
    %c4_210 = arith.constant 4 : index
    %c0_211 = arith.constant 0 : index
    %102 = vector.load %arg13[%c4_209, %c4_210, %c0_211] : memref<20x20x4xf32, #tpu.memory_space<vmem>>, vector<16x16x4xf32>
    %c0_212 = arith.constant 0 : index
    %c0_213 = arith.constant 0 : index
    %c96 = arith.constant 96 : index
    %103 = vector.load %arg14[%c0_212, %c0_213, %c96] : memref<16x16x100xf32, #tpu.memory_space<vmem>>, vector<16x16x4xf32>
    tpu.vector_store %arg14[%c0_212, %c0_213, %c96], %102 {strides = array<i32>} : memref<16x16x100xf32, #tpu.memory_space<vmem>>, vector<16x16x4xf32>,
    %c0_214 = arith.constant 0 : index
    %c0_215 = arith.constant 0 : index
    %c0_216 = arith.constant 0 : index
    %104 = vector.load %arg14[%c0_214, %c0_215, %c0_216] : memref<16x16x100xf32, #tpu.memory_space<vmem>>, vector<16x16x100xf32>
    %105 = vector.shape_cast %104 : vector<16x16x100xf32> to vector<256x100xf32>
    %c0_217 = arith.constant 0 : index
    %c0_218 = arith.constant 0 : index
    %106 = vector.load %arg6[%c0_217, %c0_218] : memref<100x8xf32, #tpu.memory_space<vmem>>, vector<100x8xf32>
    %cst_219 = arith.constant dense<0.000000e+00> : vector<256x8xf32>
    %107 = tpu.matmul %105, %106, %cst_219 {dimension_numbers = #tpu.dot_dimension_numbers<[1], [0], [0], [1], [0, 0, 1, 1], [], []>} : vector<256x100xf32>, vector<100x8xf32>, vector<256x8xf32> -> vector<256x8xf32>
    %c0_220 = arith.constant 0 : index
    %c0_221 = arith.constant 0 : index
    %108 = vector.load %arg7[%c0_220, %c0_221] : memref<1x8xf32, #tpu.memory_space<vmem>>, vector<1x8xf32>
    %109 = vector.broadcast %108 : vector<1x8xf32> to vector<256x8xf32>
    %110 = arith.addf %107, %109 : vector<256x8xf32>
    %cst_222 = arith.constant 0.000000e+00 : f32
    %111 = vector.broadcast %cst_222 : f32 to vector<256x8xf32>
    %112 = arith.maximumf %110, %111 : vector<256x8xf32>
    %c0_223 = arith.constant 0 : index
    %c0_224 = arith.constant 0 : index
    %c16_225 = arith.constant 16 : index
    %113 = vector.load %arg10[%c0_223, %c0_224, %c16_225] : memref<1x256x32xf32, #tpu.memory_space<vmem>>, vector<1x256x8xf32>
    %114 = vector.shape_cast %113 : vector<1x256x8xf32> to vector<256x8xf32>
    %115 = vector.shape_cast %112 : vector<256x8xf32> to vector<1x256x8xf32>
    tpu.vector_store %arg10[%c0_223, %c0_224, %c16_225], %115 {strides = array<i32>} : memref<1x256x32xf32, #tpu.memory_space<vmem>>, vector<1x256x8xf32>,
    %cst_226 = arith.constant -3.40282347E+38 : f32
    %116 = vector.broadcast %cst_226 : f32 to vector<18x18x4xf32>
    %c0_227 = arith.constant 0 : index
    %c0_228 = arith.constant 0 : index
    %c0_229 = arith.constant 0 : index
    %117 = vector.load %arg15[%c0_227, %c0_228, %c0_229] : memref<18x18x4xf32, #tpu.memory_space<vmem>>, vector<18x18x4xf32>
    tpu.vector_store %arg15[%c0_227, %c0_228, %c0_229], %116 {strides = array<i32>} : memref<18x18x4xf32, #tpu.memory_space<vmem>>, vector<18x18x4xf32>,
    %c1_230 = arith.constant 1 : index
    %c1_231 = arith.constant 1 : index
    %c0_232 = arith.constant 0 : index
    %118 = vector.load %arg15[%c1_230, %c1_231, %c0_232] : memref<18x18x4xf32, #tpu.memory_space<vmem>>, vector<16x16x4xf32>
    tpu.vector_store %arg15[%c1_230, %c1_231, %c0_232], %1 {strides = array<i32>} : memref<18x18x4xf32, #tpu.memory_space<vmem>>, vector<16x16x4xf32>,
    %c0_233 = arith.constant 0 : index
    %c0_234 = arith.constant 0 : index
    %c0_235 = arith.constant 0 : index
    %119 = vector.load %arg15[%c0_233, %c0_234, %c0_235] : memref<18x18x4xf32, #tpu.memory_space<vmem>>, vector<16x16x4xf32>
    %c0_236 = arith.constant 0 : index
    %c1_237 = arith.constant 1 : index
    %c0_238 = arith.constant 0 : index
    %120 = vector.load %arg15[%c0_236, %c1_237, %c0_238] : memref<18x18x4xf32, #tpu.memory_space<vmem>>, vector<16x16x4xf32>
    %121 = arith.maximumf %119, %120 : vector<16x16x4xf32>
    %c0_239 = arith.constant 0 : index
    %c2_240 = arith.constant 2 : index
    %c0_241 = arith.constant 0 : index
    %122 = vector.load %arg15[%c0_239, %c2_240, %c0_241] : memref<18x18x4xf32, #tpu.memory_space<vmem>>, vector<16x16x4xf32>
    %123 = arith.maximumf %121, %122 : vector<16x16x4xf32>
    %c1_242 = arith.constant 1 : index
    %c0_243 = arith.constant 0 : index
    %c0_244 = arith.constant 0 : index
    %124 = vector.load %arg15[%c1_242, %c0_243, %c0_244] : memref<18x18x4xf32, #tpu.memory_space<vmem>>, vector<16x16x4xf32>
    %125 = arith.maximumf %123, %124 : vector<16x16x4xf32>
    %c1_245 = arith.constant 1 : index
    %c1_246 = arith.constant 1 : index
    %c0_247 = arith.constant 0 : index
    %126 = vector.load %arg15[%c1_245, %c1_246, %c0_247] : memref<18x18x4xf32, #tpu.memory_space<vmem>>, vector<16x16x4xf32>
    %127 = arith.maximumf %125, %126 : vector<16x16x4xf32>
    %c1_248 = arith.constant 1 : index
    %c2_249 = arith.constant 2 : index
    %c0_250 = arith.constant 0 : index
    %128 = vector.load %arg15[%c1_248, %c2_249, %c0_250] : memref<18x18x4xf32, #tpu.memory_space<vmem>>, vector<16x16x4xf32>
    %129 = arith.maximumf %127, %128 : vector<16x16x4xf32>
    %c2_251 = arith.constant 2 : index
    %c0_252 = arith.constant 0 : index
    %c0_253 = arith.constant 0 : index
    %130 = vector.load %arg15[%c2_251, %c0_252, %c0_253] : memref<18x18x4xf32, #tpu.memory_space<vmem>>, vector<16x16x4xf32>
    %131 = arith.maximumf %129, %130 : vector<16x16x4xf32>
    %c2_254 = arith.constant 2 : index
    %c1_255 = arith.constant 1 : index
    %c0_256 = arith.constant 0 : index
    %132 = vector.load %arg15[%c2_254, %c1_255, %c0_256] : memref<18x18x4xf32, #tpu.memory_space<vmem>>, vector<16x16x4xf32>
    %133 = arith.maximumf %131, %132 : vector<16x16x4xf32>
    %c2_257 = arith.constant 2 : index
    %c2_258 = arith.constant 2 : index
    %c0_259 = arith.constant 0 : index
    %134 = vector.load %arg15[%c2_257, %c2_258, %c0_259] : memref<18x18x4xf32, #tpu.memory_space<vmem>>, vector<16x16x4xf32>
    %135 = arith.maximumf %133, %134 : vector<16x16x4xf32>
    %136 = vector.shape_cast %135 : vector<16x16x4xf32> to vector<256x4xf32>
    %c0_260 = arith.constant 0 : index
    %c0_261 = arith.constant 0 : index
    %137 = vector.load %arg8[%c0_260, %c0_261] : memref<4x8xf32, #tpu.memory_space<vmem>>, vector<4x8xf32>
    %cst_262 = arith.constant dense<0.000000e+00> : vector<256x8xf32>
    %138 = tpu.matmul %136, %137, %cst_262 {dimension_numbers = #tpu.dot_dimension_numbers<[1], [0], [0], [1], [0, 0, 1, 1], [], []>} : vector<256x4xf32>, vector<4x8xf32>, vector<256x8xf32> -> vector<256x8xf32>
    %c0_263 = arith.constant 0 : index
    %c0_264 = arith.constant 0 : index
    %139 = vector.load %arg9[%c0_263, %c0_264] : memref<1x8xf32, #tpu.memory_space<vmem>>, vector<1x8xf32>
    %140 = vector.broadcast %139 : vector<1x8xf32> to vector<256x8xf32>
    %141 = arith.addf %138, %140 : vector<256x8xf32>
    %cst_265 = arith.constant 0.000000e+00 : f32
    %142 = vector.broadcast %cst_265 : f32 to vector<256x8xf32>
    %143 = arith.maximumf %141, %142 : vector<256x8xf32>
    %c0_266 = arith.constant 0 : index
    %c0_267 = arith.constant 0 : index
    %c24_268 = arith.constant 24 : index
    %144 = vector.load %arg10[%c0_266, %c0_267, %c24_268] : memref<1x256x32xf32, #tpu.memory_space<vmem>>, vector<1x256x8xf32>
    %145 = vector.shape_cast %144 : vector<1x256x8xf32> to vector<256x8xf32>
    %146 = vector.shape_cast %143 : vector<256x8xf32> to vector<1x256x8xf32>
    tpu.vector_store %arg10[%c0_266, %c0_267, %c24_268], %146 {strides = array<i32>} : memref<1x256x32xf32, #tpu.memory_space<vmem>>, vector<1x256x8xf32>,
    return
  }
  func.func @transform_0(%arg0: i32) -> (i32, i32, i32, i32) {
    %c0_i32 = arith.constant 0 : i32
    %c0_i32_0 = arith.constant 0 : i32
    %c0_i32_1 = arith.constant 0 : i32
    %c0_i32_2 = arith.constant 0 : i32
    return %arg0, %c0_i32, %c0_i32_0, %c0_i32_1 : i32, i32, i32, i32
  }
  func.func @transform_1(%arg0: i32) -> (i32, i32) {
    %c0_i32 = arith.constant 0 : i32
    %c0_i32_0 = arith.constant 0 : i32
    %c0_i32_1 = arith.constant 0 : i32
    return %c0_i32, %c0_i32_0 : i32, i32
  }
  func.func @transform_2(%arg0: i32) -> (i32, i32) {
    %c0_i32 = arith.constant 0 : i32
    %c0_i32_0 = arith.constant 0 : i32
    %c0_i32_1 = arith.constant 0 : i32
    return %c0_i32, %c0_i32_0 : i32, i32
  }
  func.func @transform_3(%arg0: i32) -> (i32, i32) {
    %c0_i32 = arith.constant 0 : i32
    %c0_i32_0 = arith.constant 0 : i32
    %c0_i32_1 = arith.constant 0 : i32
    return %c0_i32, %c0_i32_0 : i32, i32
  }
  func.func @transform_4(%arg0: i32) -> (i32, i32) {
    %c0_i32 = arith.constant 0 : i32
    %c0_i32_0 = arith.constant 0 : i32
    %c0_i32_1 = arith.constant 0 : i32
    return %c0_i32, %c0_i32_0 : i32, i32
  }
  func.func @transform_5(%arg0: i32) -> (i32, i32) {
    %c0_i32 = arith.constant 0 : i32
    %c0_i32_0 = arith.constant 0 : i32
    %c0_i32_1 = arith.constant 0 : i32
    return %c0_i32, %c0_i32_0 : i32, i32
  }
  func.func @transform_6(%arg0: i32) -> (i32, i32) {
    %c0_i32 = arith.constant 0 : i32
    %c0_i32_0 = arith.constant 0 : i32
    %c0_i32_1 = arith.constant 0 : i32
    return %c0_i32, %c0_i32_0 : i32, i32
  }
  func.func @transform_7(%arg0: i32) -> (i32, i32) {
    %c0_i32 = arith.constant 0 : i32
    %c0_i32_0 = arith.constant 0 : i32
    %c0_i32_1 = arith.constant 0 : i32
    return %c0_i32, %c0_i32_0 : i32, i32
  }
  func.func @transform_8(%arg0: i32) -> (i32, i32) {
    %c0_i32 = arith.constant 0 : i32
    %c0_i32_0 = arith.constant 0 : i32
    %c0_i32_1 = arith.constant 0 : i32
    return %c0_i32, %c0_i32_0 : i32, i32
  }
  func.func @transform_9(%arg0: i32) -> (i32, i32, i32) {
    %c0_i32 = arith.constant 0 : i32
    %c0_i32_0 = arith.constant 0 : i32
    %c0_i32_1 = arith.constant 0 : i32
    return %arg0, %c0_i32, %c0_i32_0 : i32, i32, i32
  }
}

</mosaic_0001>

<llo_original>
// kernel: inception_forward.1
$region0: #{inception_forward.1}
  #allocation0 [shape = 'u32[]', space=smem, size = 0x4, offset = 0x4, fixed_abs, tag = 'smem constant byte address 0x4 - core index']
  #allocation1 [shape = 'u32[144,128]{1,0:T(1,128)}', space=vmem, size = 0x12000, scoped, tag = 'internal scratch']
  #allocation2 [shape = 'f32[18,18,4]{2,1,0:T(8,128)}', space=vmem, size = 0x36000, scoped, tag = 'scratch operand']
  #allocation3 [shape = 'f32[16,16,36]{2,1,0:T(8,128)}', space=vmem, size = 0x20000, scoped, tag = 'scratch operand']
  #allocation4 [shape = 'f32[20,20,4]{2,1,0:T(8,128)}', space=vmem, size = 0x3c000, scoped, tag = 'scratch operand']
  #allocation5 [shape = 'f32[16,16,100]{2,1,0:T(8,128)}', space=vmem, size = 0x20000, scoped, tag = 'scratch operand']
  #allocation6 [shape = 'f32[18,18,4]{2,1,0:T(8,128)}', space=vmem, size = 0x36000, scoped, tag = 'scratch operand']
  %s0 = inlined_call_operand.vmem [shape: f32[2,16,16,4], index: 0, kind: input, shape index: {}]
  %s1 = inlined_call_operand.vmem [shape: f32[4,16], index: 1, kind: input, shape index: {}]
  %s2 = inlined_call_operand.vmem [shape: f32[1,16], index: 2, kind: input, shape index: {}]
  %s3 = inlined_call_operand.vmem [shape: f32[36,8], index: 3, kind: input, shape index: {}]
  %s4 = inlined_call_operand.vmem [shape: f32[1,8], index: 4, kind: input, shape index: {}]
  %s5 = inlined_call_operand.vmem [shape: f32[100,8], index: 5, kind: input, shape index: {}]
  %s6 = inlined_call_operand.vmem [shape: f32[1,8], index: 6, kind: input, shape index: {}]
  %s7 = inlined_call_operand.vmem [shape: f32[4,8], index: 7, kind: input, shape index: {}]
  %s8 = inlined_call_operand.vmem [shape: f32[1,8], index: 8, kind: input, shape index: {}]
  %s9 = inlined_call_operand.hbm [shape: f32[2,256,32], index: 9, kind: output, shape index: {}]
  %s10 = sld [smem:[#allocation0]]
  $region69: #{inception_forward.1} parent=0
    _
  %s12 = ssub.s32 1, %s10
  %s13 = scalar_select 0, %s12, %s10
  $region1: #{inception_forward.1} parent=0
    #allocation7 [shape = 'u8[262144]{0}', space=vmem, size = 0x40000, scoped, tag = 'output window, operand 0']
    #allocation8 [shape = 's32[2]{0}', space=sflag, size = 0x8, scoped, tag = 'scoped memory for inception_forward.1']
    %14 = vsyncpa [#allocation8], 0
    %s15 = scalar_lea.sflag [#allocation8], 1
    %16 = vsyncpa %s15, 0
    loop: start=0, step=1, limit=4
    $region2: #{inception_forward.1} parent=1 // loop_pre_header
      _
    $region3: #{inception_forward.1} parent=1 // loop_header
      %s18 = sphi 0, %s22
      %p19 = scmp.ge.s32.totalorder %s18, 4
      %s28 = sphi 0, %s30
      %s31 = sphi 0, %s28
      %s32 = sphi 0, %s31
      %s48 = sphi 0, %s32
      %s52 = sphi 0, %s52
      %s54 = sphi 0, %s52
      %s55 = sphi 0, %s54
      %s69 = sphi 0, %s55
      %s73 = sphi 0, %s73
      %s75 = sphi 0, %s73
      %s76 = sphi 0, %s75
      %s90 = sphi 0, %s76
      %s94 = sphi 0, %s94
      %s96 = sphi 0, %s94
      %s97 = sphi 0, %s96
      %s111 = sphi 0, %s97
      %s115 = sphi 0, %s115
      %s117 = sphi 0, %s115
      %s118 = sphi 0, %s117
      %s132 = sphi 0, %s118
      %s136 = sphi 0, %s136
      %s138 = sphi 0, %s136
      %s139 = sphi 0, %s138
      %s153 = sphi 0, %s139
      %s157 = sphi 0, %s157
      %s159 = sphi 0, %s157
      %s160 = sphi 0, %s159
      %s174 = sphi 0, %s160
      %s178 = sphi 0, %s178
      %s180 = sphi 0, %s178
      %s181 = sphi 0, %s180
      %s195 = sphi 0, %s181
      %s199 = sphi 0, %s199
      %s201 = sphi 0, %s199
      %s202 = sphi 0, %s201
      %s216 = sphi 0, %s202
      %s222 = sphi 0, %s224
      %s225 = sphi 0, %s222
      %s226 = sphi 0, %s225
      %s242 = sphi 0, %s226
    $region4: #{inception_forward.1} parent=1 // loop_header_branch
      %21 = sbr.rel (%p19) target = $region8
    $region5: #{inception_forward.1} parent=1 // loop_body
      %s23 = ssub.s32 %s18, 1
      %s24 = ssub.s32 %s18, 2
      %s25 = sadd.s32 %s18, 1
      %s26 = ssub.s32 %s18, %s25
      %p27 = scmp.eq.s32.totalorder %s26, 0
      %s29 = sadd.s32 %s28, 1
      %s30 = scalar_select %p27, %s28, %s29
      %p33 = pneg %p27
      %p34 = scmp.eq.s32.totalorder %s18, 1
      %p35 = por %p33, %p34
      %p36 = scmp.ne.s32.totalorder %s28, %s31
      %p37 = scmp.eq.s32.totalorder %s18, 0
      %p38 = por %p36, %p37
      %p39 = scmp.ne.s32.totalorder %s28, %s31
      %p40 = scmp.eq.s32.totalorder %s23, 1
      %p41 = por %p39, %p40
      %p42 = scmp.ne.s32.totalorder %s31, %s32
      %p43 = scmp.eq.s32.totalorder %s23, 0
      %p44 = por %p42, %p43
      %p45 = scmp.ne.s32.totalorder %s31, %s32
      %p46 = scmp.eq.s32.totalorder %s24, 1
      %p47 = por %p45, %p46
      %p49 = scmp.ne.s32.totalorder %s32, %s48
      %p50 = scmp.eq.s32.totalorder %s24, 0
      %p51 = por %p49, %p50
      %s53 = sadd.s32 %s52, 1
      %p56 = scmp.eq.s32.totalorder %s18, 1
      %p57 = scmp.ne.s32.totalorder %s52, %s54
      %p58 = scmp.eq.s32.totalorder %s18, 0
      %p59 = por %p57, %p58
      %p60 = scmp.ne.s32.totalorder %s52, %s54
      %p61 = scmp.eq.s32.totalorder %s23, 1
      %p62 = por %p60, %p61
      %p63 = scmp.ne.s32.totalorder %s54, %s55
      %p64 = scmp.eq.s32.totalorder %s23, 0
      %p65 = por %p63, %p64
      %p66 = scmp.ne.s32.totalorder %s54, %s55
      %p67 = scmp.eq.s32.totalorder %s24, 1
      %p68 = por %p66, %p67
      %p70 = scmp.ne.s32.totalorder %s55, %s69
      %p71 = scmp.eq.s32.totalorder %s24, 0
      %p72 = por %p70, %p71
      %s74 = sadd.s32 %s73, 1
      %p77 = scmp.eq.s32.totalorder %s18, 1
      %p78 = scmp.ne.s32.totalorder %s73, %s75
      %p79 = scmp.eq.s32.totalorder %s18, 0
      %p80 = por %p78, %p79
      %p81 = scmp.ne.s32.totalorder %s73, %s75
      %p82 = scmp.eq.s32.totalorder %s23, 1
      %p83 = por %p81, %p82
      %p84 = scmp.ne.s32.totalorder %s75, %s76
      %p85 = scmp.eq.s32.totalorder %s23, 0
      %p86 = por %p84, %p85
      %p87 = scmp.ne.s32.totalorder %s75, %s76
      %p88 = scmp.eq.s32.totalorder %s24, 1
      %p89 = por %p87, %p88
      %p91 = scmp.ne.s32.totalorder %s76, %s90
      %p92 = scmp.eq.s32.totalorder %s24, 0
      %p93 = por %p91, %p92
      %s95 = sadd.s32 %s94, 1
      %p98 = scmp.eq.s32.totalorder %s18, 1
      %p99 = scmp.ne.s32.totalorder %s94, %s96
      %p100 = scmp.eq.s32.totalorder %s18, 0
      %p101 = por %p99, %p100
      %p102 = scmp.ne.s32.totalorder %s94, %s96
      %p103 = scmp.eq.s32.totalorder %s23, 1
      %p104 = por %p102, %p103
      %p105 = scmp.ne.s32.totalorder %s96, %s97
      %p106 = scmp.eq.s32.totalorder %s23, 0
      %p107 = por %p105, %p106
      %p108 = scmp.ne.s32.totalorder %s96, %s97
      %p109 = scmp.eq.s32.totalorder %s24, 1
      %p110 = por %p108, %p109
      %p112 = scmp.ne.s32.totalorder %s97, %s111
      %p113 = scmp.eq.s32.totalorder %s24, 0
      %p114 = por %p112, %p113
      %s116 = sadd.s32 %s115, 1
      %p119 = scmp.eq.s32.totalorder %s18, 1
      %p120 = scmp.ne.s32.totalorder %s115, %s117
      %p121 = scmp.eq.s32.totalorder %s18, 0
      %p122 = por %p120, %p121
      %p123 = scmp.ne.s32.totalorder %s115, %s117
      %p124 = scmp.eq.s32.totalorder %s23, 1
      %p125 = por %p123, %p124
      %p126 = scmp.ne.s32.totalorder %s117, %s118
      %p127 = scmp.eq.s32.totalorder %s23, 0
      %p128 = por %p126, %p127
      %p129 = scmp.ne.s32.totalorder %s117, %s118
      %p130 = scmp.eq.s32.totalorder %s24, 1
      %p131 = por %p129, %p130
      %p133 = scmp.ne.s32.totalorder %s118, %s132
      %p134 = scmp.eq.s32.totalorder %s24, 0
      %p135 = por %p133, %p134
      %s137 = sadd.s32 %s136, 1
      %p140 = scmp.eq.s32.totalorder %s18, 1
      %p141 = scmp.ne.s32.totalorder %s136, %s138
      %p142 = scmp.eq.s32.totalorder %s18, 0
      %p143 = por %p141, %p142
      %p144 = scmp.ne.s32.totalorder %s136, %s138
      %p145 = scmp.eq.s32.totalorder %s23, 1
      %p146 = por %p144, %p145
      %p147 = scmp.ne.s32.totalorder %s138, %s139
      %p148 = scmp.eq.s32.totalorder %s23, 0
      %p149 = por %p147, %p148
      %p150 = scmp.ne.s32.totalorder %s138, %s139
      %p151 = scmp.eq.s32.totalorder %s24, 1
      %p152 = por %p150, %p151
      %p154 = scmp.ne.s32.totalorder %s139, %s153
      %p155 = scmp.eq.s32.totalorder %s24, 0
      %p156 = por %p154, %p155
      %s158 = sadd.s32 %s157, 1
      %p161 = scmp.eq.s32.totalorder %s18, 1
      %p162 = scmp.ne.s32.totalorder %s157, %s159
      %p163 = scmp.eq.s32.totalorder %s18, 0
      %p164 = por %p162, %p163
      %p165 = scmp.ne.s32.totalorder %s157, %s159
      %p166 = scmp.eq.s32.totalorder %s23, 1
      %p167 = por %p165, %p166
      %p168 = scmp.ne.s32.totalorder %s159, %s160
      %p169 = scmp.eq.s32.totalorder %s23, 0
      %p170 = por %p168, %p169
      %p171 = scmp.ne.s32.totalorder %s159, %s160
      %p172 = scmp.eq.s32.totalorder %s24, 1
      %p173 = por %p171, %p172
      %p175 = scmp.ne.s32.totalorder %s160, %s174
      %p176 = scmp.eq.s32.totalorder %s24, 0
      %p177 = por %p175, %p176
      %s179 = sadd.s32 %s178, 1
      %p182 = scmp.eq.s32.totalorder %s18, 1
      %p183 = scmp.ne.s32.totalorder %s178, %s180
      %p184 = scmp.eq.s32.totalorder %s18, 0
      %p185 = por %p183, %p184
      %p186 = scmp.ne.s32.totalorder %s178, %s180
      %p187 = scmp.eq.s32.totalorder %s23, 1
      %p188 = por %p186, %p187
      %p189 = scmp.ne.s32.totalorder %s180, %s181
      %p190 = scmp.eq.s32.totalorder %s23, 0
      %p191 = por %p189, %p190
      %p192 = scmp.ne.s32.totalorder %s180, %s181
      %p193 = scmp.eq.s32.totalorder %s24, 1
      %p194 = por %p192, %p193
      %p196 = scmp.ne.s32.totalorder %s181, %s195
      %p197 = scmp.eq.s32.totalorder %s24, 0
      %p198 = por %p196, %p197
      %s200 = sadd.s32 %s199, 1
      %p203 = scmp.eq.s32.totalorder %s18, 1
      %p204 = scmp.ne.s32.totalorder %s199, %s201
      %p205 = scmp.eq.s32.totalorder %s18, 0
      %p206 = por %p204, %p205
      %p207 = scmp.ne.s32.totalorder %s199, %s201
      %p208 = scmp.eq.s32.totalorder %s23, 1
      %p209 = por %p207, %p208
      %p210 = scmp.ne.s32.totalorder %s201, %s202
      %p211 = scmp.eq.s32.totalorder %s23, 0
      %p212 = por %p210, %p211
      %p213 = scmp.ne.s32.totalorder %s201, %s202
      %p214 = scmp.eq.s32.totalorder %s24, 1
      %p215 = por %p213, %p214
      %p217 = scmp.ne.s32.totalorder %s202, %s216
      %p218 = scmp.eq.s32.totalorder %s24, 0
      %p219 = por %p217, %p218
      %s220 = ssub.s32 %s18, %s25
      %p221 = scmp.eq.s32.totalorder %s220, 0
      %s223 = sadd.s32 %s222, 1
      %s224 = scalar_select %p221, %s222, %s223
      %p227 = pneg %p221
      %p228 = scmp.eq.s32.totalorder %s18, 1
      %p229 = por %p227, %p228
      %p230 = scmp.ne.s32.totalorder %s222, %s225
      %p231 = scmp.eq.s32.totalorder %s18, 0
      %p232 = por %p230, %p231
      %p233 = scmp.ne.s32.totalorder %s222, %s225
      %p234 = scmp.eq.s32.totalorder %s23, 1
      %p235 = por %p233, %p234
      %p236 = scmp.ne.s32.totalorder %s225, %s226
      %p237 = scmp.eq.s32.totalorder %s23, 0
      %p238 = por %p236, %p237
      %p239 = scmp.ne.s32.totalorder %s225, %s226
      %p240 = scmp.eq.s32.totalorder %s24, 1
      %p241 = por %p239, %p240
      %p243 = scmp.ne.s32.totalorder %s226, %s242
      %p244 = scmp.eq.s32.totalorder %s24, 0
      %p245 = por %p243, %p244
      %p246 = scmp.le.s32.totalorder 1, %s18
      %p247 = scmp.lt.s32.totalorder %s18, 3
      %p248 = pnand %p246, %p247
      %p249 = pneg %p248
      // Predicated region
      $region9: #{inception_forward.1} parent=5 // pred_check
        _
      $region10: #{inception_forward.1} parent=5 // pred_check_branch
        %251 = sbr.rel (%p248) target = $region12
      $region11: #{inception_forward.1} parent=5 // pred_region
        %s252 = ssub.s32 %s18, 1
        // Predicated region
        $region13: #{inception_forward.1} parent=11 // pred_check
          %p253 = pneg %p65
        $region14: #{inception_forward.1} parent=11 // pred_check_branch
          %255 = sbr.rel (%p253) target = $region16
        $region15: #{inception_forward.1} parent=11 // pred_region
          _
        $region16: #{inception_forward.1} parent=11 // pred_fallthru
          _
        // Predicated region
        $region17: #{inception_forward.1} parent=11 // pred_check
          %p256 = pneg %p86
        $region18: #{inception_forward.1} parent=11 // pred_check_branch
          %258 = sbr.rel (%p256) target = $region20
        $region19: #{inception_forward.1} parent=11 // pred_region
          _
        $region20: #{inception_forward.1} parent=11 // pred_fallthru
          _
        // Predicated region
        $region21: #{inception_forward.1} parent=11 // pred_check
          %p259 = pneg %p107
        $region22: #{inception_forward.1} parent=11 // pred_check_branch
          %261 = sbr.rel (%p259) target = $region24
        $region23: #{inception_forward.1} parent=11 // pred_region
          _
        $region24: #{inception_forward.1} parent=11 // pred_fallthru
          _
        // Predicated region
        $region25: #{inception_forward.1} parent=11 // pred_check
          %p262 = pneg %p128
        $region26: #{inception_forward.1} parent=11 // pred_check_branch
          %264 = sbr.rel (%p262) target = $region28
        $region27: #{inception_forward.1} parent=11 // pred_region
          _
        $region28: #{inception_forward.1} parent=11 // pred_fallthru
          _
        // Predicated region
        $region29: #{inception_forward.1} parent=11 // pred_check
          %p265 = pneg %p149
        $region30: #{inception_forward.1} parent=11 // pred_check_branch
          %267 = sbr.rel (%p265) target = $region32
        $region31: #{inception_forward.1} parent=11 // pred_region
          _
        $region32: #{inception_forward.1} parent=11 // pred_fallthru
          _
        // Predicated region
        $region33: #{inception_forward.1} parent=11 // pred_check
          %p268 = pneg %p170
        $region34: #{inception_forward.1} parent=11 // pred_check_branch
          %270 = sbr.rel (%p268) target = $region36
        $region35: #{inception_forward.1} parent=11 // pred_region
          _
        $region36: #{inception_forward.1} parent=11 // pred_fallthru
          _
        // Predicated region
        $region37: #{inception_forward.1} parent=11 // pred_check
          %p271 = pneg %p191
        $region38: #{inception_forward.1} parent=11 // pred_check_branch
          %273 = sbr.rel (%p271) target = $region40
        $region39: #{inception_forward.1} parent=11 // pred_region
          _
        $region40: #{inception_forward.1} parent=11 // pred_fallthru
          _
        // Predicated region
        $region41: #{inception_forward.1} parent=11 // pred_check
          %p274 = pneg %p212
        $region42: #{inception_forward.1} parent=11 // pred_check_branch
          %276 = sbr.rel (%p274) target = $region44
        $region43: #{inception_forward.1} parent=11 // pred_region
          _
        $region44: #{inception_forward.1} parent=11 // pred_fallthru
          _
      $region12: #{inception_forward.1} parent=5 // pred_fallthru
        _
      %p277 = scmp.lt.s32.totalorder %s18, 2
      // Predicated region
      $region45: #{inception_forward.1} parent=5 // pred_check
        %p278 = pneg %p277
      $region46: #{inception_forward.1} parent=5 // pred_check_branch
        %280 = sbr.rel (%p278) target = $region48
      $region47: #{inception_forward.1} parent=5 // pred_region
        // Predicated region
        $region49: #{inception_forward.1} parent=47 // pred_check
          %p281 = pneg %p38
        $region50: #{inception_forward.1} parent=47 // pred_check_branch
          %283 = sbr.rel (%p281) target = $region52
        $region51: #{inception_forward.1} parent=47 // pred_region
          %p284 = scmp.lt.s32.totalorder %s18, 1
          %s285 = scalar_select %p284, %s18, 1
          %s286 = smul.addr %s285, 32
          %s287 = smul.addr %s286, 8
          %s288 = scalar_lea.vmem %s0, %s287
        $region52: #{inception_forward.1} parent=47 // pred_fallthru
          _
      $region48: #{inception_forward.1} parent=5 // pred_fallthru
        _
      %p289 = scmp.le.s32.totalorder 1, %s18
      %p290 = scmp.lt.s32.totalorder %s18, 3
      %p291 = pnand %p289, %p290
      %p292 = pneg %p291
      // Predicated region
      $region53: #{inception_forward.1} parent=5 // pred_check
        _
      $region54: #{inception_forward.1} parent=5 // pred_check_branch
        %294 = sbr.rel (%p291) target = $region56
      $region55: #{inception_forward.1} parent=5 // pred_region
        %s295 = ssub.s32 %s18, 1
        %p296 = scmp.lt.s32.totalorder %s23, 1
        %s297 = scalar_select %p296, %s23, 1
        %s298 = smul.addr %s297, 32
        %s299 = smul.addr %s298, 8
        %s300 = scalar_lea.vmem %s0, %s299
        %p301 = pneg %p44
        %p302 = pneg %p41
        %p303 = pneg %p65
        %p304 = pneg %p62
        %p305 = pneg %p86
        %p306 = pneg %p83
        %p307 = pneg %p107
        %p308 = pneg %p104
        %p309 = pneg %p128
        %p310 = pneg %p125
        %p311 = pneg %p149
        %p312 = pneg %p146
        %p313 = pneg %p170
        %p314 = pneg %p167
        %p315 = pneg %p191
        %p316 = pneg %p188
        %p317 = pneg %p212
        %p318 = pneg %p209
        %p319 = pneg %p238
        %p320 = pneg %p235
        %s321 = sand.u32 %s225, 1
        %s322 = scalar_lea.sflag [#allocation8], %s321
        %s323 = sand.u32 %s225, 1
        %s324 = smul.addr %s323, 256
        %s325 = scalar_lea.vmem [#allocation7], %s324
        %p326 = scmp.lt.s32.totalorder %s23, 1
        %s327 = scalar_select %p326, %s23, 1
        %s328 = smul.addr %s327, 32
        %s329 = smul.addr %s328, 8
        %s330 = scalar_lea.vmem %s0, %s329
        %v331 = vld [vmem:[%s330] sm:$0xff]
        %v332 = vld [vmem:[%s330 + $0x8] sm:$0xff]
        %v333 = vld [vmem:[%s330 + $0x10] sm:$0xff]
        %v334 = vld [vmem:[%s330 + $0x18] sm:$0xff]
        %v335 = vld [vmem:[%s330 + $0x20] sm:$0xff]
        %v336 = vld [vmem:[%s330 + $0x28] sm:$0xff]
        %v337 = vld [vmem:[%s330 + $0x30] sm:$0xff]
        %v338 = vld [vmem:[%s330 + $0x38] sm:$0xff]
        %v339 = vld [vmem:[%s330 + $0x40] sm:$0xff]
        %v340 = vld [vmem:[%s330 + $0x48] sm:$0xff]
        %v341 = vld [vmem:[%s330 + $0x50] sm:$0xff]
        %v342 = vld [vmem:[%s330 + $0x58] sm:$0xff]
        %v343 = vld [vmem:[%s330 + $0x60] sm:$0xff]
        %v344 = vld [vmem:[%s330 + $0x68] sm:$0xff]
        %v345 = vld [vmem:[%s330 + $0x70] sm:$0xff]
        %v346 = vld [vmem:[%s330 + $0x78] sm:$0xff]
        %v347 = vld [vmem:[%s330 + $0x80] sm:$0xff]
        %v348 = vld [vmem:[%s330 + $0x88] sm:$0xff]
        %v349 = vld [vmem:[%s330 + $0x90] sm:$0xff]
        %v350 = vld [vmem:[%s330 + $0x98] sm:$0xff]
        %v351 = vld [vmem:[%s330 + $0xa0] sm:$0xff]
        %v352 = vld [vmem:[%s330 + $0xa8] sm:$0xff]
        %v353 = vld [vmem:[%s330 + $0xb0] sm:$0xff]
        %v354 = vld [vmem:[%s330 + $0xb8] sm:$0xff]
        %v355 = vld [vmem:[%s330 + $0xc0] sm:$0xff]
        %v356 = vld [vmem:[%s330 + $0xc8] sm:$0xff]
        %v357 = vld [vmem:[%s330 + $0xd0] sm:$0xff]
        %v358 = vld [vmem:[%s330 + $0xd8] sm:$0xff]
        %v359 = vld [vmem:[%s330 + $0xe0] sm:$0xff]
        %v360 = vld [vmem:[%s330 + $0xe8] sm:$0xff]
        %v361 = vld [vmem:[%s330 + $0xf0] sm:$0xff]
        %v362 = vld [vmem:[%s330 + $0xf8] sm:$0xff]
        %v363 = vld [vmem:[%s1] sm:$0xf]
        %v364 = vld [vmem:[%s2] sm:$0x1]
        %v366 = vlaneseq
        %v367 = vshrl.u32 %v366, 7
        %v368 = vsub.s32 0, %v367
        %v369 = vrot.slane %v364, %v368
        %vm371 = vcmask 31744
        %v373 = vsel %vm371, %v331, 0
        %v376 = vsel %vm371, %v332, 0
        %v379 = vsel %vm371, %v333, 0
        %v382 = vsel %vm371, %v334, 0
        %v385 = vsel %vm371, %v335, 0
        %v388 = vsel %vm371, %v336, 0
        %v391 = vsel %vm371, %v337, 0
        %v394 = vsel %vm371, %v338, 0
        %v397 = vsel %vm371, %v339, 0
        %v400 = vsel %vm371, %v340, 0
        %v403 = vsel %vm371, %v341, 0
        %v406 = vsel %vm371, %v342, 0
        %v409 = vsel %vm371, %v343, 0
        %v412 = vsel %vm371, %v344, 0
        %v415 = vsel %vm371, %v345, 0
        %v418 = vsel %vm371, %v346, 0
        %v421 = vsel %vm371, %v347, 0
        %v424 = vsel %vm371, %v348, 0
        %v427 = vsel %vm371, %v349, 0
        %v430 = vsel %vm371, %v350, 0
        %v433 = vsel %vm371, %v351, 0
        %v436 = vsel %vm371, %v352, 0
        %v439 = vsel %vm371, %v353, 0
        %v442 = vsel %vm371, %v354, 0
        %v445 = vsel %vm371, %v355, 0
        %v448 = vsel %vm371, %v356, 0
        %v451 = vsel %vm371, %v357, 0
        %v454 = vsel %vm371, %v358, 0
        %v457 = vsel %vm371, %v359, 0
        %v460 = vsel %vm371, %v360, 0
        %v463 = vsel %vm371, %v361, 0
        %v466 = vsel %vm371, %v362, 0
        %vm468 = vcmask 1043456
        %v470 = vsel %vm468, %v363, 0
        %472 = vmatprep.subr.mxu0 0.0
        %473 = vmatpush1.msra.mxu0 %v470
        %474 = vmatprep.subr.mxu0 0.0
        %475 = vmatpush1.msra.mxu0 0.0
        %476 = vmatprep.subr.mxu0 0.0
        %477 = vmatpush1.msra.mxu0 0.0
        %478 = vmatprep.subr.mxu0 0.0
        %479 = vmatpush1.msra.mxu0 0.0
        %480 = vmatprep.subr.mxu0 0.0
        %481 = vmatpush1.msra.mxu0 0.0
        %482 = vmatprep.subr.mxu0 0.0
        %483 = vmatpush1.msra.mxu0 0.0
        %484 = vmatprep.subr.mxu0 0.0
        %485 = vmatpush1.msra.mxu0 0.0
        %486 = vmatprep.subr.mxu0 0.0
        %487 = vmatpush1.msra.mxu0 0.0
        %488 = vmatprep.subr.mxu0 0.0
        %489 = vmatpush1.msra.mxu0 0.0
        %490 = vmatprep.subr.mxu0 0.0
        %491 = vmatpush1.msra.mxu0 0.0
        %492 = vmatprep.subr.mxu0 0.0
        %493 = vmatpush1.msra.mxu0 0.0
        %494 = vmatprep.subr.mxu0 0.0
        %495 = vmatpush1.msra.mxu0 0.0
        %496 = vmatprep.subr.mxu0 0.0
        %497 = vmatpush1.msra.mxu0 0.0
        %498 = vmatprep.subr.mxu0 0.0
        %499 = vmatpush1.msra.mxu0 0.0
        %500 = vmatprep.subr.mxu0 0.0
        %501 = vmatpush1.msra.mxu0 0.0
        %502 = vmatprep.subr.mxu0 0.0
        %503 = vmatpush1.msra.mxu0 0.0
        %504 = vmatprep.subr.mxu0 0.0
        %505 = vmatpush1.msra.mxu0 0.0
        %506 = vmatprep.subr.mxu0 0.0
        %507 = vmatpush1.msra.mxu0 0.0
        %508 = vmatprep.subr.mxu0 0.0
        %509 = vmatpush1.msra.mxu0 0.0
        %510 = vmatprep.subr.mxu0 0.0
        %511 = vmatpush1.msra.mxu0 0.0
        %512 = vmatprep.subr.mxu0 0.0
        %513 = vmatpush1.msra.mxu0 0.0
        %514 = vmatprep.subr.mxu0 0.0
        %515 = vmatpush1.msra.mxu0 0.0
        %516 = vmatprep.subr.mxu0 0.0
        %517 = vmatpush1.msra.mxu0 0.0
        %518 = vmatprep.subr.mxu0 0.0
        %519 = vmatpush1.msra.mxu0 0.0
        %520 = vmatprep.subr.mxu0 0.0
        %521 = vmatpush1.msra.mxu0 0.0
        %522 = vmatprep.subr.mxu0 0.0
        %523 = vmatpush1.msra.mxu0 0.0
        %524 = vmatprep.subr.mxu0 0.0
        %525 = vmatpush1.msra.mxu0 0.0
        %526 = vmatprep.subr.mxu0 0.0
        %527 = vmatpush1.msra.mxu0 0.0
        %528 = vmatprep.subr.mxu0 0.0
        %529 = vmatpush1.msra.mxu0 0.0
        %530 = vmatprep.subr.mxu0 0.0
        %531 = vmatpush1.msra.mxu0 0.0
        %532 = vmatprep.subr.mxu0 0.0
        %533 = vmatpush1.msra.mxu0 0.0
        %534 = vmatprep.subr.mxu0 0.0
        %535 = vmatpush1.msra.mxu0 0.0
        %536 = vmatprep.mubr.f32.mxu0 0.0
        %537 = vmatmul.mubr.f32.gmra.mrb[0].mxu0 %v373
        %v538 = vpop.f32.mrb[0].mxu0
        %v539 = vadd.f32 %v369, %v538
        %v540 = vpop.f32.mrb[0].mxu0
        %541 = vmatprep.mubr.f32.mxu0 0.0
        %542 = vmatmul.mubr.f32.gmra.mrb[0].mxu0 %v376
        %v543 = vpop.f32.mrb[0].mxu0
        %v544 = vadd.f32 %v369, %v543
        %v545 = vpop.f32.mrb[0].mxu0
        %546 = vmatprep.mubr.f32.mxu0 0.0
        %547 = vmatmul.mubr.f32.gmra.mrb[0].mxu0 %v379
        %v548 = vpop.f32.mrb[0].mxu0
        %v549 = vadd.f32 %v369, %v548
        %v550 = vpop.f32.mrb[0].mxu0
        %551 = vmatprep.mubr.f32.mxu0 0.0
        %552 = vmatmul.mubr.f32.gmra.mrb[0].mxu0 %v382
        %v553 = vpop.f32.mrb[0].mxu0
        %v554 = vadd.f32 %v369, %v553
        %v555 = vpop.f32.mrb[0].mxu0
        %556 = vmatprep.mubr.f32.mxu0 0.0
        %557 = vmatmul.mubr.f32.gmra.mrb[0].mxu0 %v385
        %v558 = vpop.f32.mrb[0].mxu0
        %v559 = vadd.f32 %v369, %v558
        %v560 = vpop.f32.mrb[0].mxu0
        %561 = vmatprep.mubr.f32.mxu0 0.0
        %562 = vmatmul.mubr.f32.gmra.mrb[0].mxu0 %v388
        %v563 = vpop.f32.mrb[0].mxu0
        %v564 = vadd.f32 %v369, %v563
        %v565 = vpop.f32.mrb[0].mxu0
        %566 = vmatprep.mubr.f32.mxu0 0.0
        %567 = vmatmul.mubr.f32.gmra.mrb[0].mxu0 %v391
        %v568 = vpop.f32.mrb[0].mxu0
        %v569 = vadd.f32 %v369, %v568
        %v570 = vpop.f32.mrb[0].mxu0
        %571 = vmatprep.mubr.f32.mxu0 0.0
        %572 = vmatmul.mubr.f32.gmra.mrb[0].mxu0 %v394
        %v573 = vpop.f32.mrb[0].mxu0
        %v574 = vadd.f32 %v369, %v573
        %v575 = vpop.f32.mrb[0].mxu0
        %576 = vmatprep.mubr.f32.mxu0 0.0
        %577 = vmatmul.mubr.f32.gmra.mrb[0].mxu0 %v397
        %v578 = vpop.f32.mrb[0].mxu0
        %v579 = vadd.f32 %v369, %v578
        %v580 = vpop.f32.mrb[0].mxu0
        %581 = vmatprep.mubr.f32.mxu0 0.0
        %582 = vmatmul.mubr.f32.gmra.mrb[0].mxu0 %v400
        %v583 = vpop.f32.mrb[0].mxu0
        %v584 = vadd.f32 %v369, %v583
        %v585 = vpop.f32.mrb[0].mxu0
        %586 = vmatprep.mubr.f32.mxu0 0.0
        %587 = vmatmul.mubr.f32.gmra.mrb[0].mxu0 %v403
        %v588 = vpop.f32.mrb[0].mxu0
        %v589 = vadd.f32 %v369, %v588
        %v590 = vpop.f32.mrb[0].mxu0
        %591 = vmatprep.mubr.f32.mxu0 0.0
        %592 = vmatmul.mubr.f32.gmra.mrb[0].mxu0 %v406
        %v593 = vpop.f32.mrb[0].mxu0
        %v594 = vadd.f32 %v369, %v593
        %v595 = vpop.f32.mrb[0].mxu0
        %596 = vmatprep.mubr.f32.mxu0 0.0
        %597 = vmatmul.mubr.f32.gmra.mrb[0].mxu0 %v409
        %v598 = vpop.f32.mrb[0].mxu0
        %v599 = vadd.f32 %v369, %v598
        %v600 = vpop.f32.mrb[0].mxu0
        %601 = vmatprep.mubr.f32.mxu0 0.0
        %602 = vmatmul.mubr.f32.gmra.mrb[0].mxu0 %v412
        %v603 = vpop.f32.mrb[0].mxu0
        %v604 = vadd.f32 %v369, %v603
        %v605 = vpop.f32.mrb[0].mxu0
        %606 = vmatprep.mubr.f32.mxu0 0.0
        %607 = vmatmul.mubr.f32.gmra.mrb[0].mxu0 %v415
        %v608 = vpop.f32.mrb[0].mxu0
        %v609 = vadd.f32 %v369, %v608
        %v610 = vpop.f32.mrb[0].mxu0
        %611 = vmatprep.mubr.f32.mxu0 0.0
        %612 = vmatmul.mubr.f32.gmra.mrb[0].mxu0 %v418
        %v613 = vpop.f32.mrb[0].mxu0
        %v614 = vadd.f32 %v369, %v613
        %v615 = vpop.f32.mrb[0].mxu0
        %616 = vmatprep.mubr.f32.mxu0 0.0
        %617 = vmatmul.mubr.f32.gmra.mrb[0].mxu0 %v421
        %v618 = vpop.f32.mrb[0].mxu0
        %v619 = vadd.f32 %v369, %v618
        %v620 = vpop.f32.mrb[0].mxu0
        %621 = vmatprep.mubr.f32.mxu0 0.0
        %622 = vmatmul.mubr.f32.gmra.mrb[0].mxu0 %v424
        %v623 = vpop.f32.mrb[0].mxu0
        %v624 = vadd.f32 %v369, %v623
        %v625 = vpop.f32.mrb[0].mxu0
        %626 = vmatprep.mubr.f32.mxu0 0.0
        %627 = vmatmul.mubr.f32.gmra.mrb[0].mxu0 %v427
        %v628 = vpop.f32.mrb[0].mxu0
        %v629 = vadd.f32 %v369, %v628
        %v630 = vpop.f32.mrb[0].mxu0
        %631 = vmatprep.mubr.f32.mxu0 0.0
        %632 = vmatmul.mubr.f32.gmra.mrb[0].mxu0 %v430
        %v633 = vpop.f32.mrb[0].mxu0
        %v634 = vadd.f32 %v369, %v633
        %v635 = vpop.f32.mrb[0].mxu0
        %636 = vmatprep.mubr.f32.mxu0 0.0
        %637 = vmatmul.mubr.f32.gmra.mrb[0].mxu0 %v433
        %v638 = vpop.f32.mrb[0].mxu0
        %v639 = vadd.f32 %v369, %v638
        %v640 = vpop.f32.mrb[0].mxu0
        %641 = vmatprep.mubr.f32.mxu0 0.0
        %642 = vmatmul.mubr.f32.gmra.mrb[0].mxu0 %v436
        %v643 = vpop.f32.mrb[0].mxu0
        %v644 = vadd.f32 %v369, %v643
        %v645 = vpop.f32.mrb[0].mxu0
        %646 = vmatprep.mubr.f32.mxu0 0.0
        %647 = vmatmul.mubr.f32.gmra.mrb[0].mxu0 %v439
        %v648 = vpop.f32.mrb[0].mxu0
        %v649 = vadd.f32 %v369, %v648
        %v650 = vpop.f32.mrb[0].mxu0
        %651 = vmatprep.mubr.f32.mxu0 0.0
        %652 = vmatmul.mubr.f32.gmra.mrb[0].mxu0 %v442
        %v653 = vpop.f32.mrb[0].mxu0
        %v654 = vadd.f32 %v369, %v653
        %v655 = vpop.f32.mrb[0].mxu0
        %656 = vmatprep.mubr.f32.mxu0 0.0
        %657 = vmatmul.mubr.f32.gmra.mrb[0].mxu0 %v445
        %v658 = vpop.f32.mrb[0].mxu0
        %v659 = vadd.f32 %v369, %v658
        %v660 = vpop.f32.mrb[0].mxu0
        %661 = vmatprep.mubr.f32.mxu0 0.0
        %662 = vmatmul.mubr.f32.gmra.mrb[0].mxu0 %v448
        %v663 = vpop.f32.mrb[0].mxu0
        %v664 = vadd.f32 %v369, %v663
        %v665 = vpop.f32.mrb[0].mxu0
        %666 = vmatprep.mubr.f32.mxu0 0.0
        %667 = vmatmul.mubr.f32.gmra.mrb[0].mxu0 %v451
        %v668 = vpop.f32.mrb[0].mxu0
        %v669 = vadd.f32 %v369, %v668
        %v670 = vpop.f32.mrb[0].mxu0
        %671 = vmatprep.mubr.f32.mxu0 0.0
        %672 = vmatmul.mubr.f32.gmra.mrb[0].mxu0 %v454
        %v673 = vpop.f32.mrb[0].mxu0
        %v674 = vadd.f32 %v369, %v673
        %v675 = vpop.f32.mrb[0].mxu0
        %676 = vmatprep.mubr.f32.mxu0 0.0
        %677 = vmatmul.mubr.f32.gmra.mrb[0].mxu0 %v457
        %v678 = vpop.f32.mrb[0].mxu0
        %v679 = vadd.f32 %v369, %v678
        %v680 = vpop.f32.mrb[0].mxu0
        %681 = vmatprep.mubr.f32.mxu0 0.0
        %682 = vmatmul.mubr.f32.gmra.mrb[0].mxu0 %v460
        %v683 = vpop.f32.mrb[0].mxu0
        %v684 = vadd.f32 %v369, %v683
        %v685 = vpop.f32.mrb[0].mxu0
        %686 = vmatprep.mubr.f32.mxu0 0.0
        %687 = vmatmul.mubr.f32.gmra.mrb[0].mxu0 %v463
        %v688 = vpop.f32.mrb[0].mxu0
        %v689 = vadd.f32 %v369, %v688
        %v690 = vpop.f32.mrb[0].mxu0
        %691 = vmatprep.mubr.f32.mxu0 0.0
        %692 = vmatmul.mubr.f32.gmra.mrb[0].mxu0 %v466
        %v693 = vpop.f32.mrb[0].mxu0
        %v694 = vadd.f32 %v369, %v693
        %v695 = vpop.f32.mrb[0].mxu0
        %696 = vdwg.mxu0
        %v697 = vmax.f32 %v539, 0.0
        %v698 = vmax.f32 %v544, 0.0
        %v699 = vmax.f32 %v549, 0.0
        %v700 = vmax.f32 %v554, 0.0
        %v701 = vmax.f32 %v559, 0.0
        %v702 = vmax.f32 %v564, 0.0
        %v703 = vmax.f32 %v569, 0.0
        %v704 = vmax.f32 %v574, 0.0
        %v705 = vmax.f32 %v579, 0.0
        %v706 = vmax.f32 %v584, 0.0
        %v707 = vmax.f32 %v589, 0.0
        %v708 = vmax.f32 %v594, 0.0
        %v709 = vmax.f32 %v599, 0.0
        %v710 = vmax.f32 %v604, 0.0
        %v711 = vmax.f32 %v609, 0.0
        %v712 = vmax.f32 %v614, 0.0
        %v713 = vmax.f32 %v619, 0.0
        %v714 = vmax.f32 %v624, 0.0
        %v715 = vmax.f32 %v629, 0.0
        %v716 = vmax.f32 %v634, 0.0
        %v717 = vmax.f32 %v639, 0.0
        %v718 = vmax.f32 %v644, 0.0
        %v719 = vmax.f32 %v649, 0.0
        %v720 = vmax.f32 %v654, 0.0
        %v721 = vmax.f32 %v659, 0.0
        %v722 = vmax.f32 %v664, 0.0
        %v723 = vmax.f32 %v669, 0.0
        %v724 = vmax.f32 %v674, 0.0
        %v725 = vmax.f32 %v679, 0.0
        %v726 = vmax.f32 %v684, 0.0
        %v727 = vmax.f32 %v689, 0.0
        %v728 = vmax.f32 %v694, 0.0
        %vm729 = vcmask 64512
        %730 = vst.msk [vmem:[%s325] sm:$0xff] %vm729, %v697
        %731 = vst.msk [vmem:[%s325 + $0x8] sm:$0xff] %vm729, %v698
        %732 = vst.msk [vmem:[%s325 + $0x10] sm:$0xff] %vm729, %v699
        %733 = vst.msk [vmem:[%s325 + $0x18] sm:$0xff] %vm729, %v700
        %734 = vst.msk [vmem:[%s325 + $0x20] sm:$0xff] %vm729, %v701
        %735 = vst.msk [vmem:[%s325 + $0x28] sm:$0xff] %vm729, %v702
        %736 = vst.msk [vmem:[%s325 + $0x30] sm:$0xff] %vm729, %v703
        %737 = vst.msk [vmem:[%s325 + $0x38] sm:$0xff] %vm729, %v704
        %738 = vst.msk [vmem:[%s325 + $0x40] sm:$0xff] %vm729, %v705
        %739 = vst.msk [vmem:[%s325 + $0x48] sm:$0xff] %vm729, %v706
        %740 = vst.msk [vmem:[%s325 + $0x50] sm:$0xff] %vm729, %v707
        %741 = vst.msk [vmem:[%s325 + $0x58] sm:$0xff] %vm729, %v708
        %742 = vst.msk [vmem:[%s325 + $0x60] sm:$0xff] %vm729, %v709
        %743 = vst.msk [vmem:[%s325 + $0x68] sm:$0xff] %vm729, %v710
        %744 = vst.msk [vmem:[%s325 + $0x70] sm:$0xff] %vm729, %v711
        %745 = vst.msk [vmem:[%s325 + $0x78] sm:$0xff] %vm729, %v712
        %746 = vst.msk [vmem:[%s325 + $0x80] sm:$0xff] %vm729, %v713
        %747 = vst.msk [vmem:[%s325 + $0x88] sm:$0xff] %vm729, %v714
        %748 = vst.msk [vmem:[%s325 + $0x90] sm:$0xff] %vm729, %v715
        %749 = vst.msk [vmem:[%s325 + $0x98] sm:$0xff] %vm729, %v716
        %750 = vst.msk [vmem:[%s325 + $0xa0] sm:$0xff] %vm729, %v717
        %751 = vst.msk [vmem:[%s325 + $0xa8] sm:$0xff] %vm729, %v718
        %752 = vst.msk [vmem:[%s325 + $0xb0] sm:$0xff] %vm729, %v719
        %753 = vst.msk [vmem:[%s325 + $0xb8] sm:$0xff] %vm729, %v720
        %754 = vst.msk [vmem:[%s325 + $0xc0] sm:$0xff] %vm729, %v721
        %755 = vst.msk [vmem:[%s325 + $0xc8] sm:$0xff] %vm729, %v722
        %756 = vst.msk [vmem:[%s325 + $0xd0] sm:$0xff] %vm729, %v723
        %757 = vst.msk [vmem:[%s325 + $0xd8] sm:$0xff] %vm729, %v724
        %758 = vst.msk [vmem:[%s325 + $0xe0] sm:$0xff] %vm729, %v725
        %759 = vst.msk [vmem:[%s325 + $0xe8] sm:$0xff] %vm729, %v726
        %760 = vst.msk [vmem:[%s325 + $0xf0] sm:$0xff] %vm729, %v727
        %761 = vst.msk [vmem:[%s325 + $0xf8] sm:$0xff] %vm729, %v728
        %762 = vst.msk [vmem:[#allocation2] sm:$0xff] %vm371, 0.0
        %763 = vst.msk [vmem:[#allocation2 + $0x8] sm:$0xff] %vm371, 0.0
        %vm764 = vcmask 25600
        %765 = vst.msk [vmem:[#allocation2 + $0x10] sm:$0x3] %vm764, 0.0
        %766 = vst.msk [vmem:[#allocation2 + $0x18] sm:$0xff] %vm371, 0.0
        %767 = vst.msk [vmem:[#allocation2 + $0x20] sm:$0xff] %vm371, 0.0
        %768 = vst.msk [vmem:[#allocation2 + $0x28] sm:$0x3] %vm764, 0.0
        %769 = vst.msk [vmem:[#allocation2 + $0x30] sm:$0xff] %vm371, 0.0
        %770 = vst.msk [vmem:[#allocation2 + $0x38] sm:$0xff] %vm371, 0.0
        %771 = vst.msk [vmem:[#allocation2 + $0x40] sm:$0x3] %vm764, 0.0
        %772 = vst.msk [vmem:[#allocation2 + $0x48] sm:$0xff] %vm371, 0.0
        %773 = vst.msk [vmem:[#allocation2 + $0x50] sm:$0xff] %vm371, 0.0
        %774 = vst.msk [vmem:[#allocation2 + $0x58] sm:$0x3] %vm764, 0.0
        %775 = vst.msk [vmem:[#allocation2 + $0x60] sm:$0xff] %vm371, 0.0
        %776 = vst.msk [vmem:[#allocation2 + $0x68] sm:$0xff] %vm371, 0.0
        %777 = vst.msk [vmem:[#allocation2 + $0x70] sm:$0x3] %vm764, 0.0
        %778 = vst.msk [vmem:[#allocation2 + $0x78] sm:$0xff] %vm371, 0.0
        %779 = vst.msk [vmem:[#allocation2 + $0x80] sm:$0xff] %vm371, 0.0
        %780 = vst.msk [vmem:[#allocation2 + $0x88] sm:$0x3] %vm764, 0.0
        %781 = vst.msk [vmem:[#allocation2 + $0x90] sm:$0xff] %vm371, 0.0
        %782 = vst.msk [vmem:[#allocation2 + $0x98] sm:$0xff] %vm371, 0.0
        %783 = vst.msk [vmem:[#allocation2 + $0xa0] sm:$0x3] %vm764, 0.0
        %784 = vst.msk [vmem:[#allocation2 + $0xa8] sm:$0xff] %vm371, 0.0
        %785 = vst.msk [vmem:[#allocation2 + $0xb0] sm:$0xff] %vm371, 0.0
        %786 = vst.msk [vmem:[#allocation2 + $0xb8] sm:$0x3] %vm764, 0.0
        %787 = vst.msk [vmem:[#allocation2 + $0xc0] sm:$0xff] %vm371, 0.0
        %788 = vst.msk [vmem:[#allocation2 + $0xc8] sm:$0xff] %vm371, 0.0
        %789 = vst.msk [vmem:[#allocation2 + $0xd0] sm:$0x3] %vm764, 0.0
        %790 = vst.msk [vmem:[#allocation2 + $0xd8] sm:$0xff] %vm371, 0.0
        %791 = vst.msk [vmem:[#allocation2 + $0xe0] sm:$0xff] %vm371, 0.0
        %792 = vst.msk [vmem:[#allocation2 + $0xe8] sm:$0x3] %vm764, 0.0
        %793 = vst.msk [vmem:[#allocation2 + $0xf0] sm:$0xff] %vm371, 0.0
        %794 = vst.msk [vmem:[#allocation2 + $0xf8] sm:$0xff] %vm371, 0.0
        %795 = vst.msk [vmem:[#allocation2 + $0x100] sm:$0x3] %vm764, 0.0
        %796 = vst.msk [vmem:[#allocation2 + $0x108] sm:$0xff] %vm371, 0.0
        %797 = vst.msk [vmem:[#allocation2 + $0x110] sm:$0xff] %vm371, 0.0
        %798 = vst.msk [vmem:[#allocation2 + $0x118] sm:$0x3] %vm764, 0.0
        %799 = vst.msk [vmem:[#allocation2 + $0x120] sm:$0xff] %vm371, 0.0
        %800 = vst.msk [vmem:[#allocation2 + $0x128] sm:$0xff] %vm371, 0.0
        %801 = vst.msk [vmem:[#allocation2 + $0x130] sm:$0x3] %vm764, 0.0
        %802 = vst.msk [vmem:[#allocation2 + $0x138] sm:$0xff] %vm371, 0.0
        %803 = vst.msk [vmem:[#allocation2 + $0x140] sm:$0xff] %vm371, 0.0
        %804 = vst.msk [vmem:[#allocation2 + $0x148] sm:$0x3] %vm764, 0.0
        %805 = vst.msk [vmem:[#allocation2 + $0x150] sm:$0xff] %vm371, 0.0
        %806 = vst.msk [vmem:[#allocation2 + $0x158] sm:$0xff] %vm371, 0.0
        %807 = vst.msk [vmem:[#allocation2 + $0x160] sm:$0x3] %vm764, 0.0
        %808 = vst.msk [vmem:[#allocation2 + $0x168] sm:$0xff] %vm371, 0.0
        %809 = vst.msk [vmem:[#allocation2 + $0x170] sm:$0xff] %vm371, 0.0
        %810 = vst.msk [vmem:[#allocation2 + $0x178] sm:$0x3] %vm764, 0.0
        %811 = vst.msk [vmem:[#allocation2 + $0x180] sm:$0xff] %vm371, 0.0
        %812 = vst.msk [vmem:[#allocation2 + $0x188] sm:$0xff] %vm371, 0.0
        %813 = vst.msk [vmem:[#allocation2 + $0x190] sm:$0x3] %vm764, 0.0
        %814 = vst.msk [vmem:[#allocation2 + $0x198] sm:$0xff] %vm371, 0.0
        %815 = vst.msk [vmem:[#allocation2 + $0x1a0] sm:$0xff] %vm371, 0.0
        %816 = vst.msk [vmem:[#allocation2 + $0x1a8] sm:$0x3] %vm764, 0.0
        %849 = vrot.lane.b32.xlu0 %v697, 120
        %v850 = vpop.permute.xlu0 %849
        %851 = vrot.lane.b32.xlu0 %v698, 120
        %v852 = vpop.permute.xlu0 %851
        %853 = vrot.lane.b32.xlu0 %v699, 120
        %v854 = vpop.permute.xlu0 %853
        %855 = vrot.lane.b32.xlu0 %v700, 120
        %v856 = vpop.permute.xlu0 %855
        %857 = vrot.lane.b32.xlu0 %v701, 120
        %v858 = vpop.permute.xlu0 %857
        %859 = vrot.lane.b32.xlu0 %v702, 120
        %v860 = vpop.permute.xlu0 %859
        %861 = vrot.lane.b32.xlu0 %v703, 120
        %v862 = vpop.permute.xlu0 %861
        %863 = vrot.lane.b32.xlu0 %v704, 120
        %v864 = vpop.permute.xlu0 %863
        %865 = vrot.lane.b32.xlu0 %v705, 120
        %v866 = vpop.permute.xlu0 %865
        %867 = vrot.lane.b32.xlu0 %v706, 120
        %v868 = vpop.permute.xlu0 %867
        %869 = vrot.lane.b32.xlu0 %v707, 120
        %v870 = vpop.permute.xlu0 %869
        %871 = vrot.lane.b32.xlu0 %v708, 120
        %v872 = vpop.permute.xlu0 %871
        %873 = vrot.lane.b32.xlu0 %v709, 120
        %v874 = vpop.permute.xlu0 %873
        %875 = vrot.lane.b32.xlu0 %v710, 120
        %v876 = vpop.permute.xlu0 %875
        %877 = vrot.lane.b32.xlu0 %v711, 120
        %v878 = vpop.permute.xlu0 %877
        %879 = vrot.lane.b32.xlu0 %v712, 120
        %v880 = vpop.permute.xlu0 %879
        %881 = vrot.lane.b32.xlu0 %v713, 120
        %v882 = vpop.permute.xlu0 %881
        %883 = vrot.lane.b32.xlu0 %v714, 120
        %v884 = vpop.permute.xlu0 %883
        %885 = vrot.lane.b32.xlu0 %v715, 120
        %v886 = vpop.permute.xlu0 %885
        %887 = vrot.lane.b32.xlu0 %v716, 120
        %v888 = vpop.permute.xlu0 %887
        %889 = vrot.lane.b32.xlu0 %v717, 120
        %v890 = vpop.permute.xlu0 %889
        %891 = vrot.lane.b32.xlu0 %v718, 120
        %v892 = vpop.permute.xlu0 %891
        %893 = vrot.lane.b32.xlu0 %v719, 120
        %v894 = vpop.permute.xlu0 %893
        %895 = vrot.lane.b32.xlu0 %v720, 120
        %v896 = vpop.permute.xlu0 %895
        %897 = vrot.lane.b32.xlu0 %v721, 120
        %v898 = vpop.permute.xlu0 %897
        %899 = vrot.lane.b32.xlu0 %v722, 120
        %v900 = vpop.permute.xlu0 %899
        %901 = vrot.lane.b32.xlu0 %v723, 120
        %v902 = vpop.permute.xlu0 %901
        %903 = vrot.lane.b32.xlu0 %v724, 120
        %v904 = vpop.permute.xlu0 %903
        %905 = vrot.lane.b32.xlu0 %v725, 120
        %v906 = vpop.permute.xlu0 %905
        %907 = vrot.lane.b32.xlu0 %v726, 120
        %v908 = vpop.permute.xlu0 %907
        %909 = vrot.lane.b32.xlu0 %v727, 120
        %v910 = vpop.permute.xlu0 %909
        %911 = vrot.lane.b32.xlu0 %v728, 120
        %v912 = vpop.permute.xlu0 %911
        %s945 = scalar_lea.vmem [#allocation2], 24
        %946 = vst.msk [vmem:[%s945 + $0x1] sm:$0xff] %vm371, %v850
        %947 = vst.msk [vmem:[%s945 + $0x9] sm:$0xff] %vm371, %v852
        %948 = vst.msk [vmem:[%s945 + $0x19] sm:$0xff] %vm371, %v854
        %949 = vst.msk [vmem:[%s945 + $0x21] sm:$0xff] %vm371, %v856
        %950 = vst.msk [vmem:[%s945 + $0x31] sm:$0xff] %vm371, %v858
        %951 = vst.msk [vmem:[%s945 + $0x39] sm:$0xff] %vm371, %v860
        %952 = vst.msk [vmem:[%s945 + $0x49] sm:$0xff] %vm371, %v862
        %953 = vst.msk [vmem:[%s945 + $0x51] sm:$0xff] %vm371, %v864
        %954 = vst.msk [vmem:[%s945 + $0x61] sm:$0xff] %vm371, %v866
        %955 = vst.msk [vmem:[%s945 + $0x69] sm:$0xff] %vm371, %v868
        %956 = vst.msk [vmem:[%s945 + $0x79] sm:$0xff] %vm371, %v870
        %957 = vst.msk [vmem:[%s945 + $0x81] sm:$0xff] %vm371, %v872
        %958 = vst.msk [vmem:[%s945 + $0x91] sm:$0xff] %vm371, %v874
        %959 = vst.msk [vmem:[%s945 + $0x99] sm:$0xff] %vm371, %v876
        %960 = vst.msk [vmem:[%s945 + $0xa9] sm:$0xff] %vm371, %v878
        %961 = vst.msk [vmem:[%s945 + $0xb1] sm:$0xff] %vm371, %v880
        %962 = vst.msk [vmem:[%s945 + $0xc1] sm:$0xff] %vm371, %v882
        %963 = vst.msk [vmem:[%s945 + $0xc9] sm:$0xff] %vm371, %v884
        %964 = vst.msk [vmem:[%s945 + $0xd9] sm:$0xff] %vm371, %v886
        %965 = vst.msk [vmem:[%s945 + $0xe1] sm:$0xff] %vm371, %v888
        %966 = vst.msk [vmem:[%s945 + $0xf1] sm:$0xff] %vm371, %v890
        %967 = vst.msk [vmem:[%s945 + $0xf9] sm:$0xff] %vm371, %v892
        %968 = vst.msk [vmem:[%s945 + $0x109] sm:$0xff] %vm371, %v894
        %969 = vst.msk [vmem:[%s945 + $0x111] sm:$0xff] %vm371, %v896
        %970 = vst.msk [vmem:[%s945 + $0x121] sm:$0xff] %vm371, %v898
        %971 = vst.msk [vmem:[%s945 + $0x129] sm:$0xff] %vm371, %v900
        %972 = vst.msk [vmem:[%s945 + $0x139] sm:$0xff] %vm371, %v902
        %973 = vst.msk [vmem:[%s945 + $0x141] sm:$0xff] %vm371, %v904
        %974 = vst.msk [vmem:[%s945 + $0x151] sm:$0xff] %vm371, %v906
        %975 = vst.msk [vmem:[%s945 + $0x159] sm:$0xff] %vm371, %v908
        %976 = vst.msk [vmem:[%s945 + $0x169] sm:$0xff] %vm371, %v910
        %977 = vst.msk [vmem:[%s945 + $0x171] sm:$0xff] %vm371, %v912
        %v978 = vld [vmem:[#allocation2] sm:$0xff]
        %v979 = vld [vmem:[#allocation2 + $0x8] sm:$0xff]
        %v980 = vld [vmem:[#allocation2 + $0x18] sm:$0xff]
        %v981 = vld [vmem:[#allocation2 + $0x20] sm:$0xff]
        %v982 = vld [vmem:[#allocation2 + $0x30] sm:$0xff]
        %v983 = vld [vmem:[#allocation2 + $0x38] sm:$0xff]
        %v984 = vld [vmem:[#allocation2 + $0x48] sm:$0xff]
        %v985 = vld [vmem:[#allocation2 + $0x50] sm:$0xff]
        %v986 = vld [vmem:[#allocation2 + $0x60] sm:$0xff]
        %v987 = vld [vmem:[#allocation2 + $0x68] sm:$0xff]
        %v988 = vld [vmem:[#allocation2 + $0x78] sm:$0xff]
        %v989 = vld [vmem:[#allocation2 + $0x80] sm:$0xff]
        %v990 = vld [vmem:[#allocation2 + $0x90] sm:$0xff]
        %v991 = vld [vmem:[#allocation2 + $0x98] sm:$0xff]
        %v992 = vld [vmem:[#allocation2 + $0xa8] sm:$0xff]
        %v993 = vld [vmem:[#allocation2 + $0xb0] sm:$0xff]
        %v994 = vld [vmem:[#allocation2 + $0xc0] sm:$0xff]
        %v995 = vld [vmem:[#allocation2 + $0xc8] sm:$0xff]
        %v996 = vld [vmem:[#allocation2 + $0xd8] sm:$0xff]
        %v997 = vld [vmem:[#allocation2 + $0xe0] sm:$0xff]
        %v998 = vld [vmem:[#allocation2 + $0xf0] sm:$0xff]
        %v999 = vld [vmem:[#allocation2 + $0xf8] sm:$0xff]
        %v1000 = vld [vmem:[#allocation2 + $0x108] sm:$0xff]
        %v1001 = vld [vmem:[#allocation2 + $0x110] sm:$0xff]
        %v1002 = vld [vmem:[#allocation2 + $0x120] sm:$0xff]
        %v1003 = vld [vmem:[#allocation2 + $0x128] sm:$0xff]
        %v1004 = vld [vmem:[#allocation2 + $0x138] sm:$0xff]
        %v1005 = vld [vmem:[#allocation2 + $0x140] sm:$0xff]
        %v1006 = vld [vmem:[#allocation2 + $0x150] sm:$0xff]
        %v1007 = vld [vmem:[#allocation2 + $0x158] sm:$0xff]
        %v1008 = vld [vmem:[#allocation2 + $0x168] sm:$0xff]
        %v1009 = vld [vmem:[#allocation2 + $0x170] sm:$0xff]
        %1010 = vst.msk [vmem:[#allocation3] sm:$0xff] %vm371, %v978
        %1011 = vst.msk [vmem:[#allocation3 + $0x8] sm:$0xff] %vm371, %v979
        %1012 = vst.msk [vmem:[#allocation3 + $0x10] sm:$0xff] %vm371, %v980
        %1013 = vst.msk [vmem:[#allocation3 + $0x18] sm:$0xff] %vm371, %v981
        %1014 = vst.msk [vmem:[#allocation3 + $0x20] sm:$0xff] %vm371, %v982
        %1015 = vst.msk [vmem:[#allocation3 + $0x28] sm:$0xff] %vm371, %v983
        %1016 = vst.msk [vmem:[#allocation3 + $0x30] sm:$0xff] %vm371, %v984
        %1017 = vst.msk [vmem:[#allocation3 + $0x38] sm:$0xff] %vm371, %v985
        %1018 = vst.msk [vmem:[#allocation3 + $0x40] sm:$0xff] %vm371, %v986
        %1019 = vst.msk [vmem:[#allocation3 + $0x48] sm:$0xff] %vm371, %v987
        %1020 = vst.msk [vmem:[#allocation3 + $0x50] sm:$0xff] %vm371, %v988
        %1021 = vst.msk [vmem:[#allocation3 + $0x58] sm:$0xff] %vm371, %v989
        %1022 = vst.msk [vmem:[#allocation3 + $0x60] sm:$0xff] %vm371, %v990
        %1023 = vst.msk [vmem:[#allocation3 + $0x68] sm:$0xff] %vm371, %v991
        %1024 = vst.msk [vmem:[#allocation3 + $0x70] sm:$0xff] %vm371, %v992
        %1025 = vst.msk [vmem:[#allocation3 + $0x78] sm:$0xff] %vm371, %v993
        %1026 = vst.msk [vmem:[#allocation3 + $0x80] sm:$0xff] %vm371, %v994
        %1027 = vst.msk [vmem:[#allocation3 + $0x88] sm:$0xff] %vm371, %v995
        %1028 = vst.msk [vmem:[#allocation3 + $0x90] sm:$0xff] %vm371, %v996
        %1029 = vst.msk [vmem:[#allocation3 + $0x98] sm:$0xff] %vm371, %v997
        %1030 = vst.msk [vmem:[#allocation3 + $0xa0] sm:$0xff] %vm371, %v998
        %1031 = vst.msk [vmem:[#allocation3 + $0xa8] sm:$0xff] %vm371, %v999
        %1032 = vst.msk [vmem:[#allocation3 + $0xb0] sm:$0xff] %vm371, %v1000
        %1033 = vst.msk [vmem:[#allocation3 + $0xb8] sm:$0xff] %vm371, %v1001
        %1034 = vst.msk [vmem:[#allocation3 + $0xc0] sm:$0xff] %vm371, %v1002
        %1035 = vst.msk [vmem:[#allocation3 + $0xc8] sm:$0xff] %vm371, %v1003
        %1036 = vst.msk [vmem:[#allocation3 + $0xd0] sm:$0xff] %vm371, %v1004
        %1037 = vst.msk [vmem:[#allocation3 + $0xd8] sm:$0xff] %vm371, %v1005
        %1038 = vst.msk [vmem:[#allocation3 + $0xe0] sm:$0xff] %vm371, %v1006
        %1039 = vst.msk [vmem:[#allocation3 + $0xe8] sm:$0xff] %vm371, %v1007
        %1040 = vst.msk [vmem:[#allocation3 + $0xf0] sm:$0xff] %vm371, %v1008
        %1041 = vst.msk [vmem:[#allocation3 + $0xf8] sm:$0xff] %vm371, %v1009
        %v1042 = vld [vmem:[#allocation2 + $0x1] sm:$0xff]
        %v1043 = vld [vmem:[#allocation2 + $0x9] sm:$0xff]
        %v1044 = vld [vmem:[#allocation2 + $0x19] sm:$0xff]
        %v1045 = vld [vmem:[#allocation2 + $0x21] sm:$0xff]
        %v1046 = vld [vmem:[#allocation2 + $0x31] sm:$0xff]
        %v1047 = vld [vmem:[#allocation2 + $0x39] sm:$0xff]
        %v1048 = vld [vmem:[#allocation2 + $0x49] sm:$0xff]
        %v1049 = vld [vmem:[#allocation2 + $0x51] sm:$0xff]
        %v1050 = vld [vmem:[#allocation2 + $0x61] sm:$0xff]
        %v1051 = vld [vmem:[#allocation2 + $0x69] sm:$0xff]
        %v1052 = vld [vmem:[#allocation2 + $0x79] sm:$0xff]
        %v1053 = vld [vmem:[#allocation2 + $0x81] sm:$0xff]
        %v1054 = vld [vmem:[#allocation2 + $0x91] sm:$0xff]
        %v1055 = vld [vmem:[#allocation2 + $0x99] sm:$0xff]
        %v1056 = vld [vmem:[#allocation2 + $0xa9] sm:$0xff]
        %v1057 = vld [vmem:[#allocation2 + $0xb1] sm:$0xff]
        %v1058 = vld [vmem:[#allocation2 + $0xc1] sm:$0xff]
        %v1059 = vld [vmem:[#allocation2 + $0xc9] sm:$0xff]
        %v1060 = vld [vmem:[#allocation2 + $0xd9] sm:$0xff]
        %v1061 = vld [vmem:[#allocation2 + $0xe1] sm:$0xff]
        %v1062 = vld [vmem:[#allocation2 + $0xf1] sm:$0xff]
        %v1063 = vld [vmem:[#allocation2 + $0xf9] sm:$0xff]
        %v1064 = vld [vmem:[#allocation2 + $0x109] sm:$0xff]
        %v1065 = vld [vmem:[#allocation2 + $0x111] sm:$0xff]
        %v1066 = vld [vmem:[#allocation2 + $0x121] sm:$0xff]
        %v1067 = vld [vmem:[#allocation2 + $0x129] sm:$0xff]
        %v1068 = vld [vmem:[#allocation2 + $0x139] sm:$0xff]
        %v1069 = vld [vmem:[#allocation2 + $0x141] sm:$0xff]
        %v1070 = vld [vmem:[#allocation2 + $0x151] sm:$0xff]
        %v1071 = vld [vmem:[#allocation2 + $0x159] sm:$0xff]
        %v1072 = vld [vmem:[#allocation2 + $0x169] sm:$0xff]
        %v1073 = vld [vmem:[#allocation2 + $0x171] sm:$0xff]
        %1106 = vrot.lane.b32.xlu0 %v1042, 4
        %v1107 = vpop.permute.xlu0 %1106
        %1108 = vrot.lane.b32.xlu0 %v1043, 4
        %v1109 = vpop.permute.xlu0 %1108
        %1110 = vrot.lane.b32.xlu0 %v1044, 4
        %v1111 = vpop.permute.xlu0 %1110
        %1112 = vrot.lane.b32.xlu0 %v1045, 4
        %v1113 = vpop.permute.xlu0 %1112
        %1114 = vrot.lane.b32.xlu0 %v1046, 4
        %v1115 = vpop.permute.xlu0 %1114
        %1116 = vrot.lane.b32.xlu0 %v1047, 4
        %v1117 = vpop.permute.xlu0 %1116
        %1118 = vrot.lane.b32.xlu0 %v1048, 4
        %v1119 = vpop.permute.xlu0 %1118
        %1120 = vrot.lane.b32.xlu0 %v1049, 4
        %v1121 = vpop.permute.xlu0 %1120
        %1122 = vrot.lane.b32.xlu0 %v1050, 4
        %v1123 = vpop.permute.xlu0 %1122
        %1124 = vrot.lane.b32.xlu0 %v1051, 4
        %v1125 = vpop.permute.xlu0 %1124
        %1126 = vrot.lane.b32.xlu0 %v1052, 4
        %v1127 = vpop.permute.xlu0 %1126
        %1128 = vrot.lane.b32.xlu0 %v1053, 4
        %v1129 = vpop.permute.xlu0 %1128
        %1130 = vrot.lane.b32.xlu0 %v1054, 4
        %v1131 = vpop.permute.xlu0 %1130
        %1132 = vrot.lane.b32.xlu0 %v1055, 4
        %v1133 = vpop.permute.xlu0 %1132
        %1134 = vrot.lane.b32.xlu0 %v1056, 4
        %v1135 = vpop.permute.xlu0 %1134
        %1136 = vrot.lane.b32.xlu0 %v1057, 4
        %v1137 = vpop.permute.xlu0 %1136
        %1138 = vrot.lane.b32.xlu0 %v1058, 4
        %v1139 = vpop.permute.xlu0 %1138
        %1140 = vrot.lane.b32.xlu0 %v1059, 4
        %v1141 = vpop.permute.xlu0 %1140
        %1142 = vrot.lane.b32.xlu0 %v1060, 4
        %v1143 = vpop.permute.xlu0 %1142
        %1144 = vrot.lane.b32.xlu0 %v1061, 4
        %v1145 = vpop.permute.xlu0 %1144
        %1146 = vrot.lane.b32.xlu0 %v1062, 4
        %v1147 = vpop.permute.xlu0 %1146
        %1148 = vrot.lane.b32.xlu0 %v1063, 4
        %v1149 = vpop.permute.xlu0 %1148
        %1150 = vrot.lane.b32.xlu0 %v1064, 4
        %v1151 = vpop.permute.xlu0 %1150
        %1152 = vrot.lane.b32.xlu0 %v1065, 4
        %v1153 = vpop.permute.xlu0 %1152
        %1154 = vrot.lane.b32.xlu0 %v1066, 4
        %v1155 = vpop.permute.xlu0 %1154
        %1156 = vrot.lane.b32.xlu0 %v1067, 4
        %v1157 = vpop.permute.xlu0 %1156
        %1158 = vrot.lane.b32.xlu0 %v1068, 4
        %v1159 = vpop.permute.xlu0 %1158
        %1160 = vrot.lane.b32.xlu0 %v1069, 4
        %v1161 = vpop.permute.xlu0 %1160
        %1162 = vrot.lane.b32.xlu0 %v1070, 4
        %v1163 = vpop.permute.xlu0 %1162
        %1164 = vrot.lane.b32.xlu0 %v1071, 4
        %v1165 = vpop.permute.xlu0 %1164
        %1166 = vrot.lane.b32.xlu0 %v1072, 4
        %v1167 = vpop.permute.xlu0 %1166
        %1168 = vrot.lane.b32.xlu0 %v1073, 4
        %v1169 = vpop.permute.xlu0 %1168
        %vm1202 = vcmask 64544
        %1203 = vst.msk [vmem:[#allocation3] sm:$0xff] %vm1202, %v1107
        %1204 = vst.msk [vmem:[#allocation3 + $0x8] sm:$0xff] %vm1202, %v1109
        %1205 = vst.msk [vmem:[#allocation3 + $0x10] sm:$0xff] %vm1202, %v1111
        %1206 = vst.msk [vmem:[#allocation3 + $0x18] sm:$0xff] %vm1202, %v1113
        %1207 = vst.msk [vmem:[#allocation3 + $0x20] sm:$0xff] %vm1202, %v1115
        %1208 = vst.msk [vmem:[#allocation3 + $0x28] sm:$0xff] %vm1202, %v1117
        %1209 = vst.msk [vmem:[#allocation3 + $0x30] sm:$0xff] %vm1202, %v1119
        %1210 = vst.msk [vmem:[#allocation3 + $0x38] sm:$0xff] %vm1202, %v1121
        %1211 = vst.msk [vmem:[#allocation3 + $0x40] sm:$0xff] %vm1202, %v1123
        %1212 = vst.msk [vmem:[#allocation3 + $0x48] sm:$0xff] %vm1202, %v1125
        %1213 = vst.msk [vmem:[#allocation3 + $0x50] sm:$0xff] %vm1202, %v1127
        %1214 = vst.msk [vmem:[#allocation3 + $0x58] sm:$0xff] %vm1202, %v1129
        %1215 = vst.msk [vmem:[#allocation3 + $0x60] sm:$0xff] %vm1202, %v1131
        %1216 = vst.msk [vmem:[#allocation3 + $0x68] sm:$0xff] %vm1202, %v1133
        %1217 = vst.msk [vmem:[#allocation3 + $0x70] sm:$0xff] %vm1202, %v1135
        %1218 = vst.msk [vmem:[#allocation3 + $0x78] sm:$0xff] %vm1202, %v1137
        %1219 = vst.msk [vmem:[#allocation3 + $0x80] sm:$0xff] %vm1202, %v1139
        %1220 = vst.msk [vmem:[#allocation3 + $0x88] sm:$0xff] %vm1202, %v1141
        %1221 = vst.msk [vmem:[#allocation3 + $0x90] sm:$0xff] %vm1202, %v1143
        %1222 = vst.msk [vmem:[#allocation3 + $0x98] sm:$0xff] %vm1202, %v1145
        %1223 = vst.msk [vmem:[#allocation3 + $0xa0] sm:$0xff] %vm1202, %v1147
        %1224 = vst.msk [vmem:[#allocation3 + $0xa8] sm:$0xff] %vm1202, %v1149
        %1225 = vst.msk [vmem:[#allocation3 + $0xb0] sm:$0xff] %vm1202, %v1151
        %1226 = vst.msk [vmem:[#allocation3 + $0xb8] sm:$0xff] %vm1202, %v1153
        %1227 = vst.msk [vmem:[#allocation3 + $0xc0] sm:$0xff] %vm1202, %v1155
        %1228 = vst.msk [vmem:[#allocation3 + $0xc8] sm:$0xff] %vm1202, %v1157
        %1229 = vst.msk [vmem:[#allocation3 + $0xd0] sm:$0xff] %vm1202, %v1159
        %1230 = vst.msk [vmem:[#allocation3 + $0xd8] sm:$0xff] %vm1202, %v1161
        %1231 = vst.msk [vmem:[#allocation3 + $0xe0] sm:$0xff] %vm1202, %v1163
        %1232 = vst.msk [vmem:[#allocation3 + $0xe8] sm:$0xff] %vm1202, %v1165
        %1233 = vst.msk [vmem:[#allocation3 + $0xf0] sm:$0xff] %vm1202, %v1167
        %1234 = vst.msk [vmem:[#allocation3 + $0xf8] sm:$0xff] %vm1202, %v1169
        %v1235 = vld [vmem:[#allocation2 + $0x2] sm:$0xff]
        %v1236 = vld [vmem:[#allocation2 + $0xa] sm:$0xff]
        %v1237 = vld [vmem:[#allocation2 + $0x1a] sm:$0xff]
        %v1238 = vld [vmem:[#allocation2 + $0x22] sm:$0xff]
        %v1239 = vld [vmem:[#allocation2 + $0x32] sm:$0xff]
        %v1240 = vld [vmem:[#allocation2 + $0x3a] sm:$0xff]
        %v1241 = vld [vmem:[#allocation2 + $0x4a] sm:$0xff]
        %v1242 = vld [vmem:[#allocation2 + $0x52] sm:$0xff]
        %v1243 = vld [vmem:[#allocation2 + $0x62] sm:$0xff]
        %v1244 = vld [vmem:[#allocation2 + $0x6a] sm:$0xff]
        %v1245 = vld [vmem:[#allocation2 + $0x7a] sm:$0xff]
        %v1246 = vld [vmem:[#allocation2 + $0x82] sm:$0xff]
        %v1247 = vld [vmem:[#allocation2 + $0x92] sm:$0xff]
        %v1248 = vld [vmem:[#allocation2 + $0x9a] sm:$0xff]
        %v1249 = vld [vmem:[#allocation2 + $0xaa] sm:$0xff]
        %v1250 = vld [vmem:[#allocation2 + $0xb2] sm:$0xff]
        %v1251 = vld [vmem:[#allocation2 + $0xc2] sm:$0xff]
        %v1252 = vld [vmem:[#allocation2 + $0xca] sm:$0xff]
        %v1253 = vld [vmem:[#allocation2 + $0xda] sm:$0xff]
        %v1254 = vld [vmem:[#allocation2 + $0xe2] sm:$0xff]
        %v1255 = vld [vmem:[#allocation2 + $0xf2] sm:$0xff]
        %v1256 = vld [vmem:[#allocation2 + $0xfa] sm:$0xff]
        %v1257 = vld [vmem:[#allocation2 + $0x10a] sm:$0xff]
        %v1258 = vld [vmem:[#allocation2 + $0x112] sm:$0xff]
        %v1259 = vld [vmem:[#allocation2 + $0x122] sm:$0xff]
        %v1260 = vld [vmem:[#allocation2 + $0x12a] sm:$0xff]
        %v1261 = vld [vmem:[#allocation2 + $0x13a] sm:$0xff]
        %v1262 = vld [vmem:[#allocation2 + $0x142] sm:$0xff]
        %v1263 = vld [vmem:[#allocation2 + $0x152] sm:$0xff]
        %v1264 = vld [vmem:[#allocation2 + $0x15a] sm:$0xff]
        %v1265 = vld [vmem:[#allocation2 + $0x16a] sm:$0xff]
        %v1266 = vld [vmem:[#allocation2 + $0x172] sm:$0xff]
        %1299 = vrot.lane.b32.xlu0 %v1235, 8
        %v1300 = vpop.permute.xlu0 %1299
        %1301 = vrot.lane.b32.xlu0 %v1236, 8
        %v1302 = vpop.permute.xlu0 %1301
        %1303 = vrot.lane.b32.xlu0 %v1237, 8
        %v1304 = vpop.permute.xlu0 %1303
        %1305 = vrot.lane.b32.xlu0 %v1238, 8
        %v1306 = vpop.permute.xlu0 %1305
        %1307 = vrot.lane.b32.xlu0 %v1239, 8
        %v1308 = vpop.permute.xlu0 %1307
        %1309 = vrot.lane.b32.xlu0 %v1240, 8
        %v1310 = vpop.permute.xlu0 %1309
        %1311 = vrot.lane.b32.xlu0 %v1241, 8
        %v1312 = vpop.permute.xlu0 %1311
        %1313 = vrot.lane.b32.xlu0 %v1242, 8
        %v1314 = vpop.permute.xlu0 %1313
        %1315 = vrot.lane.b32.xlu0 %v1243, 8
        %v1316 = vpop.permute.xlu0 %1315
        %1317 = vrot.lane.b32.xlu0 %v1244, 8
        %v1318 = vpop.permute.xlu0 %1317
        %1319 = vrot.lane.b32.xlu0 %v1245, 8
        %v1320 = vpop.permute.xlu0 %1319
        %1321 = vrot.lane.b32.xlu0 %v1246, 8
        %v1322 = vpop.permute.xlu0 %1321
        %1323 = vrot.lane.b32.xlu0 %v1247, 8
        %v1324 = vpop.permute.xlu0 %1323
        %1325 = vrot.lane.b32.xlu0 %v1248, 8
        %v1326 = vpop.permute.xlu0 %1325
        %1327 = vrot.lane.b32.xlu0 %v1249, 8
        %v1328 = vpop.permute.xlu0 %1327
        %1329 = vrot.lane.b32.xlu0 %v1250, 8
        %v1330 = vpop.permute.xlu0 %1329
        %1331 = vrot.lane.b32.xlu0 %v1251, 8
        %v1332 = vpop.permute.xlu0 %1331
        %1333 = vrot.lane.b32.xlu0 %v1252, 8
        %v1334 = vpop.permute.xlu0 %1333
        %1335 = vrot.lane.b32.xlu0 %v1253, 8
        %v1336 = vpop.permute.xlu0 %1335
        %1337 = vrot.lane.b32.xlu0 %v1254, 8
        %v1338 = vpop.permute.xlu0 %1337
        %1339 = vrot.lane.b32.xlu0 %v1255, 8
        %v1340 = vpop.permute.xlu0 %1339
        %1341 = vrot.lane.b32.xlu0 %v1256, 8
        %v1342 = vpop.permute.xlu0 %1341
        %1343 = vrot.lane.b32.xlu0 %v1257, 8
        %v1344 = vpop.permute.xlu0 %1343
        %1345 = vrot.lane.b32.xlu0 %v1258, 8
        %v1346 = vpop.permute.xlu0 %1345
        %1347 = vrot.lane.b32.xlu0 %v1259, 8
        %v1348 = vpop.permute.xlu0 %1347
        %1349 = vrot.lane.b32.xlu0 %v1260, 8
        %v1350 = vpop.permute.xlu0 %1349
        %1351 = vrot.lane.b32.xlu0 %v1261, 8
        %v1352 = vpop.permute.xlu0 %1351
        %1353 = vrot.lane.b32.xlu0 %v1262, 8
        %v1354 = vpop.permute.xlu0 %1353
        %1355 = vrot.lane.b32.xlu0 %v1263, 8
        %v1356 = vpop.permute.xlu0 %1355
        %1357 = vrot.lane.b32.xlu0 %v1264, 8
        %v1358 = vpop.permute.xlu0 %1357
        %1359 = vrot.lane.b32.xlu0 %v1265, 8
        %v1360 = vpop.permute.xlu0 %1359
        %1361 = vrot.lane.b32.xlu0 %v1266, 8
        %v1362 = vpop.permute.xlu0 %1361
        %vm1395 = vcmask 97344
        %1396 = vst.msk [vmem:[#allocation3] sm:$0xff] %vm1395, %v1300
        %1397 = vst.msk [vmem:[#allocation3 + $0x8] sm:$0xff] %vm1395, %v1302
        %1398 = vst.msk [vmem:[#allocation3 + $0x10] sm:$0xff] %vm1395, %v1304
        %1399 = vst.msk [vmem:[#allocation3 + $0x18] sm:$0xff] %vm1395, %v1306
        %1400 = vst.msk [vmem:[#allocation3 + $0x20] sm:$0xff] %vm1395, %v1308
        %1401 = vst.msk [vmem:[#allocation3 + $0x28] sm:$0xff] %vm1395, %v1310
        %1402 = vst.msk [vmem:[#allocation3 + $0x30] sm:$0xff] %vm1395, %v1312
        %1403 = vst.msk [vmem:[#allocation3 + $0x38] sm:$0xff] %vm1395, %v1314
        %1404 = vst.msk [vmem:[#allocation3 + $0x40] sm:$0xff] %vm1395, %v1316
        %1405 = vst.msk [vmem:[#allocation3 + $0x48] sm:$0xff] %vm1395, %v1318
        %1406 = vst.msk [vmem:[#allocation3 + $0x50] sm:$0xff] %vm1395, %v1320
        %1407 = vst.msk [vmem:[#allocation3 + $0x58] sm:$0xff] %vm1395, %v1322
        %1408 = vst.msk [vmem:[#allocation3 + $0x60] sm:$0xff] %vm1395, %v1324
        %1409 = vst.msk [vmem:[#allocation3 + $0x68] sm:$0xff] %vm1395, %v1326
        %1410 = vst.msk [vmem:[#allocation3 + $0x70] sm:$0xff] %vm1395, %v1328
        %1411 = vst.msk [vmem:[#allocation3 + $0x78] sm:$0xff] %vm1395, %v1330
        %1412 = vst.msk [vmem:[#allocation3 + $0x80] sm:$0xff] %vm1395, %v1332
        %1413 = vst.msk [vmem:[#allocation3 + $0x88] sm:$0xff] %vm1395, %v1334
        %1414 = vst.msk [vmem:[#allocation3 + $0x90] sm:$0xff] %vm1395, %v1336
        %1415 = vst.msk [vmem:[#allocation3 + $0x98] sm:$0xff] %vm1395, %v1338
        %1416 = vst.msk [vmem:[#allocation3 + $0xa0] sm:$0xff] %vm1395, %v1340
        %1417 = vst.msk [vmem:[#allocation3 + $0xa8] sm:$0xff] %vm1395, %v1342
        %1418 = vst.msk [vmem:[#allocation3 + $0xb0] sm:$0xff] %vm1395, %v1344
        %1419 = vst.msk [vmem:[#allocation3 + $0xb8] sm:$0xff] %vm1395, %v1346
        %1420 = vst.msk [vmem:[#allocation3 + $0xc0] sm:$0xff] %vm1395, %v1348
        %1421 = vst.msk [vmem:[#allocation3 + $0xc8] sm:$0xff] %vm1395, %v1350
        %1422 = vst.msk [vmem:[#allocation3 + $0xd0] sm:$0xff] %vm1395, %v1352
        %1423 = vst.msk [vmem:[#allocation3 + $0xd8] sm:$0xff] %vm1395, %v1354
        %1424 = vst.msk [vmem:[#allocation3 + $0xe0] sm:$0xff] %vm1395, %v1356
        %1425 = vst.msk [vmem:[#allocation3 + $0xe8] sm:$0xff] %vm1395, %v1358
        %1426 = vst.msk [vmem:[#allocation3 + $0xf0] sm:$0xff] %vm1395, %v1360
        %1427 = vst.msk [vmem:[#allocation3 + $0xf8] sm:$0xff] %vm1395, %v1362
        %v1428 = vld [vmem:[%s945] sm:$0xff]
        %v1429 = vld [vmem:[%s945 + $0x8] sm:$0xff]
        %v1430 = vld [vmem:[%s945 + $0x18] sm:$0xff]
        %v1431 = vld [vmem:[%s945 + $0x20] sm:$0xff]
        %v1432 = vld [vmem:[%s945 + $0x30] sm:$0xff]
        %v1433 = vld [vmem:[%s945 + $0x38] sm:$0xff]
        %v1434 = vld [vmem:[%s945 + $0x48] sm:$0xff]
        %v1435 = vld [vmem:[%s945 + $0x50] sm:$0xff]
        %v1436 = vld [vmem:[%s945 + $0x60] sm:$0xff]
        %v1437 = vld [vmem:[%s945 + $0x68] sm:$0xff]
        %v1438 = vld [vmem:[%s945 + $0x78] sm:$0xff]
        %v1439 = vld [vmem:[%s945 + $0x80] sm:$0xff]
        %v1440 = vld [vmem:[%s945 + $0x90] sm:$0xff]
        %v1441 = vld [vmem:[%s945 + $0x98] sm:$0xff]
        %v1442 = vld [vmem:[%s945 + $0xa8] sm:$0xff]
        %v1443 = vld [vmem:[%s945 + $0xb0] sm:$0xff]
        %v1444 = vld [vmem:[%s945 + $0xc0] sm:$0xff]
        %v1445 = vld [vmem:[%s945 + $0xc8] sm:$0xff]
        %v1446 = vld [vmem:[%s945 + $0xd8] sm:$0xff]
        %v1447 = vld [vmem:[%s945 + $0xe0] sm:$0xff]
        %v1448 = vld [vmem:[%s945 + $0xf0] sm:$0xff]
        %v1449 = vld [vmem:[%s945 + $0xf8] sm:$0xff]
        %v1450 = vld [vmem:[%s945 + $0x108] sm:$0xff]
        %v1451 = vld [vmem:[%s945 + $0x110] sm:$0xff]
        %v1452 = vld [vmem:[%s945 + $0x120] sm:$0xff]
        %v1453 = vld [vmem:[%s945 + $0x128] sm:$0xff]
        %v1454 = vld [vmem:[%s945 + $0x138] sm:$0xff]
        %v1455 = vld [vmem:[%s945 + $0x140] sm:$0xff]
        %v1456 = vld [vmem:[%s945 + $0x150] sm:$0xff]
        %v1457 = vld [vmem:[%s945 + $0x158] sm:$0xff]
        %v1458 = vld [vmem:[%s945 + $0x168] sm:$0xff]
        %v1459 = vld [vmem:[%s945 + $0x170] sm:$0xff]
        %1492 = vrot.lane.b32.xlu0 %v1428, 12
        %v1493 = vpop.permute.xlu0 %1492
        %1494 = vrot.lane.b32.xlu0 %v1429, 12
        %v1495 = vpop.permute.xlu0 %1494
        %1496 = vrot.lane.b32.xlu0 %v1430, 12
        %v1497 = vpop.permute.xlu0 %1496
        %1498 = vrot.lane.b32.xlu0 %v1431, 12
        %v1499 = vpop.permute.xlu0 %1498
        %1500 = vrot.lane.b32.xlu0 %v1432, 12
        %v1501 = vpop.permute.xlu0 %1500
        %1502 = vrot.lane.b32.xlu0 %v1433, 12
        %v1503 = vpop.permute.xlu0 %1502
        %1504 = vrot.lane.b32.xlu0 %v1434, 12
        %v1505 = vpop.permute.xlu0 %1504
        %1506 = vrot.lane.b32.xlu0 %v1435, 12
        %v1507 = vpop.permute.xlu0 %1506
        %1508 = vrot.lane.b32.xlu0 %v1436, 12
        %v1509 = vpop.permute.xlu0 %1508
        %1510 = vrot.lane.b32.xlu0 %v1437, 12
        %v1511 = vpop.permute.xlu0 %1510
        %1512 = vrot.lane.b32.xlu0 %v1438, 12
        %v1513 = vpop.permute.xlu0 %1512
        %1514 = vrot.lane.b32.xlu0 %v1439, 12
        %v1515 = vpop.permute.xlu0 %1514
        %1516 = vrot.lane.b32.xlu0 %v1440, 12
        %v1517 = vpop.permute.xlu0 %1516
        %1518 = vrot.lane.b32.xlu0 %v1441, 12
        %v1519 = vpop.permute.xlu0 %1518
        %1520 = vrot.lane.b32.xlu0 %v1442, 12
        %v1521 = vpop.permute.xlu0 %1520
        %1522 = vrot.lane.b32.xlu0 %v1443, 12
        %v1523 = vpop.permute.xlu0 %1522
        %1524 = vrot.lane.b32.xlu0 %v1444, 12
        %v1525 = vpop.permute.xlu0 %1524
        %1526 = vrot.lane.b32.xlu0 %v1445, 12
        %v1527 = vpop.permute.xlu0 %1526
        %1528 = vrot.lane.b32.xlu0 %v1446, 12
        %v1529 = vpop.permute.xlu0 %1528
        %1530 = vrot.lane.b32.xlu0 %v1447, 12
        %v1531 = vpop.permute.xlu0 %1530
        %1532 = vrot.lane.b32.xlu0 %v1448, 12
        %v1533 = vpop.permute.xlu0 %1532
        %1534 = vrot.lane.b32.xlu0 %v1449, 12
        %v1535 = vpop.permute.xlu0 %1534
        %1536 = vrot.lane.b32.xlu0 %v1450, 12
        %v1537 = vpop.permute.xlu0 %1536
        %1538 = vrot.lane.b32.xlu0 %v1451, 12
        %v1539 = vpop.permute.xlu0 %1538
        %1540 = vrot.lane.b32.xlu0 %v1452, 12
        %v1541 = vpop.permute.xlu0 %1540
        %1542 = vrot.lane.b32.xlu0 %v1453, 12
        %v1543 = vpop.permute.xlu0 %1542
        %1544 = vrot.lane.b32.xlu0 %v1454, 12
        %v1545 = vpop.permute.xlu0 %1544
        %1546 = vrot.lane.b32.xlu0 %v1455, 12
        %v1547 = vpop.permute.xlu0 %1546
        %1548 = vrot.lane.b32.xlu0 %v1456, 12
        %v1549 = vpop.permute.xlu0 %1548
        %1550 = vrot.lane.b32.xlu0 %v1457, 12
        %v1551 = vpop.permute.xlu0 %1550
        %1552 = vrot.lane.b32.xlu0 %v1458, 12
        %v1553 = vpop.permute.xlu0 %1552
        %1554 = vrot.lane.b32.xlu0 %v1459, 12
        %v1555 = vpop.permute.xlu0 %1554
        %vm1588 = vcmask 130144
        %1589 = vst.msk [vmem:[#allocation3] sm:$0xff] %vm1588, %v1493
        %1590 = vst.msk [vmem:[#allocation3 + $0x8] sm:$0xff] %vm1588, %v1495
        %1591 = vst.msk [vmem:[#allocation3 + $0x10] sm:$0xff] %vm1588, %v1497
        %1592 = vst.msk [vmem:[#allocation3 + $0x18] sm:$0xff] %vm1588, %v1499
        %1593 = vst.msk [vmem:[#allocation3 + $0x20] sm:$0xff] %vm1588, %v1501
        %1594 = vst.msk [vmem:[#allocation3 + $0x28] sm:$0xff] %vm1588, %v1503
        %1595 = vst.msk [vmem:[#allocation3 + $0x30] sm:$0xff] %vm1588, %v1505
        %1596 = vst.msk [vmem:[#allocation3 + $0x38] sm:$0xff] %vm1588, %v1507
        %1597 = vst.msk [vmem:[#allocation3 + $0x40] sm:$0xff] %vm1588, %v1509
        %1598 = vst.msk [vmem:[#allocation3 + $0x48] sm:$0xff] %vm1588, %v1511
        %1599 = vst.msk [vmem:[#allocation3 + $0x50] sm:$0xff] %vm1588, %v1513
        %1600 = vst.msk [vmem:[#allocation3 + $0x58] sm:$0xff] %vm1588, %v1515
        %1601 = vst.msk [vmem:[#allocation3 + $0x60] sm:$0xff] %vm1588, %v1517
        %1602 = vst.msk [vmem:[#allocation3 + $0x68] sm:$0xff] %vm1588, %v1519
        %1603 = vst.msk [vmem:[#allocation3 + $0x70] sm:$0xff] %vm1588, %v1521
        %1604 = vst.msk [vmem:[#allocation3 + $0x78] sm:$0xff] %vm1588, %v1523
        %1605 = vst.msk [vmem:[#allocation3 + $0x80] sm:$0xff] %vm1588, %v1525
        %1606 = vst.msk [vmem:[#allocation3 + $0x88] sm:$0xff] %vm1588, %v1527
        %1607 = vst.msk [vmem:[#allocation3 + $0x90] sm:$0xff] %vm1588, %v1529
        %1608 = vst.msk [vmem:[#allocation3 + $0x98] sm:$0xff] %vm1588, %v1531
        %1609 = vst.msk [vmem:[#allocation3 + $0xa0] sm:$0xff] %vm1588, %v1533
        %1610 = vst.msk [vmem:[#allocation3 + $0xa8] sm:$0xff] %vm1588, %v1535
        %1611 = vst.msk [vmem:[#allocation3 + $0xb0] sm:$0xff] %vm1588, %v1537
        %1612 = vst.msk [vmem:[#allocation3 + $0xb8] sm:$0xff] %vm1588, %v1539
        %1613 = vst.msk [vmem:[#allocation3 + $0xc0] sm:$0xff] %vm1588, %v1541
        %1614 = vst.msk [vmem:[#allocation3 + $0xc8] sm:$0xff] %vm1588, %v1543
        %1615 = vst.msk [vmem:[#allocation3 + $0xd0] sm:$0xff] %vm1588, %v1545
        %1616 = vst.msk [vmem:[#allocation3 + $0xd8] sm:$0xff] %vm1588, %v1547
        %1617 = vst.msk [vmem:[#allocation3 + $0xe0] sm:$0xff] %vm1588, %v1549
        %1618 = vst.msk [vmem:[#allocation3 + $0xe8] sm:$0xff] %vm1588, %v1551
        %1619 = vst.msk [vmem:[#allocation3 + $0xf0] sm:$0xff] %vm1588, %v1553
        %1620 = vst.msk [vmem:[#allocation3 + $0xf8] sm:$0xff] %vm1588, %v1555
        %v1621 = vld [vmem:[%s945 + $0x1] sm:$0xff]
        %v1622 = vld [vmem:[%s945 + $0x9] sm:$0xff]
        %v1623 = vld [vmem:[%s945 + $0x19] sm:$0xff]
        %v1624 = vld [vmem:[%s945 + $0x21] sm:$0xff]
        %v1625 = vld [vmem:[%s945 + $0x31] sm:$0xff]
        %v1626 = vld [vmem:[%s945 + $0x39] sm:$0xff]
        %v1627 = vld [vmem:[%s945 + $0x49] sm:$0xff]
        %v1628 = vld [vmem:[%s945 + $0x51] sm:$0xff]
        %v1629 = vld [vmem:[%s945 + $0x61] sm:$0xff]
        %v1630 = vld [vmem:[%s945 + $0x69] sm:$0xff]
        %v1631 = vld [vmem:[%s945 + $0x79] sm:$0xff]
        %v1632 = vld [vmem:[%s945 + $0x81] sm:$0xff]
        %v1633 = vld [vmem:[%s945 + $0x91] sm:$0xff]
        %v1634 = vld [vmem:[%s945 + $0x99] sm:$0xff]
        %v1635 = vld [vmem:[%s945 + $0xa9] sm:$0xff]
        %v1636 = vld [vmem:[%s945 + $0xb1] sm:$0xff]
        %v1637 = vld [vmem:[%s945 + $0xc1] sm:$0xff]
        %v1638 = vld [vmem:[%s945 + $0xc9] sm:$0xff]
        %v1639 = vld [vmem:[%s945 + $0xd9] sm:$0xff]
        %v1640 = vld [vmem:[%s945 + $0xe1] sm:$0xff]
        %v1641 = vld [vmem:[%s945 + $0xf1] sm:$0xff]
        %v1642 = vld [vmem:[%s945 + $0xf9] sm:$0xff]
        %v1643 = vld [vmem:[%s945 + $0x109] sm:$0xff]
        %v1644 = vld [vmem:[%s945 + $0x111] sm:$0xff]
        %v1645 = vld [vmem:[%s945 + $0x121] sm:$0xff]
        %v1646 = vld [vmem:[%s945 + $0x129] sm:$0xff]
        %v1647 = vld [vmem:[%s945 + $0x139] sm:$0xff]
        %v1648 = vld [vmem:[%s945 + $0x141] sm:$0xff]
        %v1649 = vld [vmem:[%s945 + $0x151] sm:$0xff]
        %v1650 = vld [vmem:[%s945 + $0x159] sm:$0xff]
        %v1651 = vld [vmem:[%s945 + $0x169] sm:$0xff]
        %v1652 = vld [vmem:[%s945 + $0x171] sm:$0xff]
        %1685 = vrot.lane.b32.xlu0 %v1621, 16
        %v1686 = vpop.permute.xlu0 %1685
        %1687 = vrot.lane.b32.xlu0 %v1622, 16
        %v1688 = vpop.permute.xlu0 %1687
        %1689 = vrot.lane.b32.xlu0 %v1623, 16
        %v1690 = vpop.permute.xlu0 %1689
        %1691 = vrot.lane.b32.xlu0 %v1624, 16
        %v1692 = vpop.permute.xlu0 %1691
        %1693 = vrot.lane.b32.xlu0 %v1625, 16
        %v1694 = vpop.permute.xlu0 %1693
        %1695 = vrot.lane.b32.xlu0 %v1626, 16
        %v1696 = vpop.permute.xlu0 %1695
        %1697 = vrot.lane.b32.xlu0 %v1627, 16
        %v1698 = vpop.permute.xlu0 %1697
        %1699 = vrot.lane.b32.xlu0 %v1628, 16
        %v1700 = vpop.permute.xlu0 %1699
        %1701 = vrot.lane.b32.xlu0 %v1629, 16
        %v1702 = vpop.permute.xlu0 %1701
        %1703 = vrot.lane.b32.xlu0 %v1630, 16
        %v1704 = vpop.permute.xlu0 %1703
        %1705 = vrot.lane.b32.xlu0 %v1631, 16
        %v1706 = vpop.permute.xlu0 %1705
        %1707 = vrot.lane.b32.xlu0 %v1632, 16
        %v1708 = vpop.permute.xlu0 %1707
        %1709 = vrot.lane.b32.xlu0 %v1633, 16
        %v1710 = vpop.permute.xlu0 %1709
        %1711 = vrot.lane.b32.xlu0 %v1634, 16
        %v1712 = vpop.permute.xlu0 %1711
        %1713 = vrot.lane.b32.xlu0 %v1635, 16
        %v1714 = vpop.permute.xlu0 %1713
        %1715 = vrot.lane.b32.xlu0 %v1636, 16
        %v1716 = vpop.permute.xlu0 %1715
        %1717 = vrot.lane.b32.xlu0 %v1637, 16
        %v1718 = vpop.permute.xlu0 %1717
        %1719 = vrot.lane.b32.xlu0 %v1638, 16
        %v1720 = vpop.permute.xlu0 %1719
        %1721 = vrot.lane.b32.xlu0 %v1639, 16
        %v1722 = vpop.permute.xlu0 %1721
        %1723 = vrot.lane.b32.xlu0 %v1640, 16
        %v1724 = vpop.permute.xlu0 %1723
        %1725 = vrot.lane.b32.xlu0 %v1641, 16
        %v1726 = vpop.permute.xlu0 %1725
        %1727 = vrot.lane.b32.xlu0 %v1642, 16
        %v1728 = vpop.permute.xlu0 %1727
        %1729 = vrot.lane.b32.xlu0 %v1643, 16
        %v1730 = vpop.permute.xlu0 %1729
        %1731 = vrot.lane.b32.xlu0 %v1644, 16
        %v1732 = vpop.permute.xlu0 %1731
        %1733 = vrot.lane.b32.xlu0 %v1645, 16
        %v1734 = vpop.permute.xlu0 %1733
        %1735 = vrot.lane.b32.xlu0 %v1646, 16
        %v1736 = vpop.permute.xlu0 %1735
        %1737 = vrot.lane.b32.xlu0 %v1647, 16
        %v1738 = vpop.permute.xlu0 %1737
        %1739 = vrot.lane.b32.xlu0 %v1648, 16
        %v1740 = vpop.permute.xlu0 %1739
        %1741 = vrot.lane.b32.xlu0 %v1649, 16
        %v1742 = vpop.permute.xlu0 %1741
        %1743 = vrot.lane.b32.xlu0 %v1650, 16
        %v1744 = vpop.permute.xlu0 %1743
        %1745 = vrot.lane.b32.xlu0 %v1651, 16
        %v1746 = vpop.permute.xlu0 %1745
        %1747 = vrot.lane.b32.xlu0 %v1652, 16
        %v1748 = vpop.permute.xlu0 %1747
        %vm1781 = vcmask 162944
        %1782 = vst.msk [vmem:[#allocation3] sm:$0xff] %vm1781, %v1686
        %1783 = vst.msk [vmem:[#allocation3 + $0x8] sm:$0xff] %vm1781, %v1688
        %1784 = vst.msk [vmem:[#allocation3 + $0x10] sm:$0xff] %vm1781, %v1690
        %1785 = vst.msk [vmem:[#allocation3 + $0x18] sm:$0xff] %vm1781, %v1692
        %1786 = vst.msk [vmem:[#allocation3 + $0x20] sm:$0xff] %vm1781, %v1694
        %1787 = vst.msk [vmem:[#allocation3 + $0x28] sm:$0xff] %vm1781, %v1696
        %1788 = vst.msk [vmem:[#allocation3 + $0x30] sm:$0xff] %vm1781, %v1698
        %1789 = vst.msk [vmem:[#allocation3 + $0x38] sm:$0xff] %vm1781, %v1700
        %1790 = vst.msk [vmem:[#allocation3 + $0x40] sm:$0xff] %vm1781, %v1702
        %1791 = vst.msk [vmem:[#allocation3 + $0x48] sm:$0xff] %vm1781, %v1704
        %1792 = vst.msk [vmem:[#allocation3 + $0x50] sm:$0xff] %vm1781, %v1706
        %1793 = vst.msk [vmem:[#allocation3 + $0x58] sm:$0xff] %vm1781, %v1708
        %1794 = vst.msk [vmem:[#allocation3 + $0x60] sm:$0xff] %vm1781, %v1710
        %1795 = vst.msk [vmem:[#allocation3 + $0x68] sm:$0xff] %vm1781, %v1712
        %1796 = vst.msk [vmem:[#allocation3 + $0x70] sm:$0xff] %vm1781, %v1714
        %1797 = vst.msk [vmem:[#allocation3 + $0x78] sm:$0xff] %vm1781, %v1716
        %1798 = vst.msk [vmem:[#allocation3 + $0x80] sm:$0xff] %vm1781, %v1718
        %1799 = vst.msk [vmem:[#allocation3 + $0x88] sm:$0xff] %vm1781, %v1720
        %1800 = vst.msk [vmem:[#allocation3 + $0x90] sm:$0xff] %vm1781, %v1722
        %1801 = vst.msk [vmem:[#allocation3 + $0x98] sm:$0xff] %vm1781, %v1724
        %1802 = vst.msk [vmem:[#allocation3 + $0xa0] sm:$0xff] %vm1781, %v1726
        %1803 = vst.msk [vmem:[#allocation3 + $0xa8] sm:$0xff] %vm1781, %v1728
        %1804 = vst.msk [vmem:[#allocation3 + $0xb0] sm:$0xff] %vm1781, %v1730
        %1805 = vst.msk [vmem:[#allocation3 + $0xb8] sm:$0xff] %vm1781, %v1732
        %1806 = vst.msk [vmem:[#allocation3 + $0xc0] sm:$0xff] %vm1781, %v1734
        %1807 = vst.msk [vmem:[#allocation3 + $0xc8] sm:$0xff] %vm1781, %v1736
        %1808 = vst.msk [vmem:[#allocation3 + $0xd0] sm:$0xff] %vm1781, %v1738
        %1809 = vst.msk [vmem:[#allocation3 + $0xd8] sm:$0xff] %vm1781, %v1740
        %1810 = vst.msk [vmem:[#allocation3 + $0xe0] sm:$0xff] %vm1781, %v1742
        %1811 = vst.msk [vmem:[#allocation3 + $0xe8] sm:$0xff] %vm1781, %v1744
        %1812 = vst.msk [vmem:[#allocation3 + $0xf0] sm:$0xff] %vm1781, %v1746
        %1813 = vst.msk [vmem:[#allocation3 + $0xf8] sm:$0xff] %vm1781, %v1748
        %v1814 = vld [vmem:[%s945 + $0x2] sm:$0xff]
        %v1815 = vld [vmem:[%s945 + $0xa] sm:$0xff]
        %v1816 = vld [vmem:[%s945 + $0x1a] sm:$0xff]
        %v1817 = vld [vmem:[%s945 + $0x22] sm:$0xff]
        %v1818 = vld [vmem:[%s945 + $0x32] sm:$0xff]
        %v1819 = vld [vmem:[%s945 + $0x3a] sm:$0xff]
        %v1820 = vld [vmem:[%s945 + $0x4a] sm:$0xff]
        %v1821 = vld [vmem:[%s945 + $0x52] sm:$0xff]
        %v1822 = vld [vmem:[%s945 + $0x62] sm:$0xff]
        %v1823 = vld [vmem:[%s945 + $0x6a] sm:$0xff]
        %v1824 = vld [vmem:[%s945 + $0x7a] sm:$0xff]
        %v1825 = vld [vmem:[%s945 + $0x82] sm:$0xff]
        %v1826 = vld [vmem:[%s945 + $0x92] sm:$0xff]
        %v1827 = vld [vmem:[%s945 + $0x9a] sm:$0xff]
        %v1828 = vld [vmem:[%s945 + $0xaa] sm:$0xff]
        %v1829 = vld [vmem:[%s945 + $0xb2] sm:$0xff]
        %v1830 = vld [vmem:[%s945 + $0xc2] sm:$0xff]
        %v1831 = vld [vmem:[%s945 + $0xca] sm:$0xff]
        %v1832 = vld [vmem:[%s945 + $0xda] sm:$0xff]
        %v1833 = vld [vmem:[%s945 + $0xe2] sm:$0xff]
        %v1834 = vld [vmem:[%s945 + $0xf2] sm:$0xff]
        %v1835 = vld [vmem:[%s945 + $0xfa] sm:$0xff]
        %v1836 = vld [vmem:[%s945 + $0x10a] sm:$0xff]
        %v1837 = vld [vmem:[%s945 + $0x112] sm:$0xff]
        %v1838 = vld [vmem:[%s945 + $0x122] sm:$0xff]
        %v1839 = vld [vmem:[%s945 + $0x12a] sm:$0xff]
        %v1840 = vld [vmem:[%s945 + $0x13a] sm:$0xff]
        %v1841 = vld [vmem:[%s945 + $0x142] sm:$0xff]
        %v1842 = vld [vmem:[%s945 + $0x152] sm:$0xff]
        %v1843 = vld [vmem:[%s945 + $0x15a] sm:$0xff]
        %v1844 = vld [vmem:[%s945 + $0x16a] sm:$0xff]
        %v1845 = vld [vmem:[%s945 + $0x172] sm:$0xff]
        %1878 = vrot.lane.b32.xlu0 %v1814, 20
        %v1879 = vpop.permute.xlu0 %1878
        %1880 = vrot.lane.b32.xlu0 %v1815, 20
        %v1881 = vpop.permute.xlu0 %1880
        %1882 = vrot.lane.b32.xlu0 %v1816, 20
        %v1883 = vpop.permute.xlu0 %1882
        %1884 = vrot.lane.b32.xlu0 %v1817, 20
        %v1885 = vpop.permute.xlu0 %1884
        %1886 = vrot.lane.b32.xlu0 %v1818, 20
        %v1887 = vpop.permute.xlu0 %1886
        %1888 = vrot.lane.b32.xlu0 %v1819, 20
        %v1889 = vpop.permute.xlu0 %1888
        %1890 = vrot.lane.b32.xlu0 %v1820, 20
        %v1891 = vpop.permute.xlu0 %1890
        %1892 = vrot.lane.b32.xlu0 %v1821, 20
        %v1893 = vpop.permute.xlu0 %1892
        %1894 = vrot.lane.b32.xlu0 %v1822, 20
        %v1895 = vpop.permute.xlu0 %1894
        %1896 = vrot.lane.b32.xlu0 %v1823, 20
        %v1897 = vpop.permute.xlu0 %1896
        %1898 = vrot.lane.b32.xlu0 %v1824, 20
        %v1899 = vpop.permute.xlu0 %1898
        %1900 = vrot.lane.b32.xlu0 %v1825, 20
        %v1901 = vpop.permute.xlu0 %1900
        %1902 = vrot.lane.b32.xlu0 %v1826, 20
        %v1903 = vpop.permute.xlu0 %1902
        %1904 = vrot.lane.b32.xlu0 %v1827, 20
        %v1905 = vpop.permute.xlu0 %1904
        %1906 = vrot.lane.b32.xlu0 %v1828, 20
        %v1907 = vpop.permute.xlu0 %1906
        %1908 = vrot.lane.b32.xlu0 %v1829, 20
        %v1909 = vpop.permute.xlu0 %1908
        %1910 = vrot.lane.b32.xlu0 %v1830, 20
        %v1911 = vpop.permute.xlu0 %1910
        %1912 = vrot.lane.b32.xlu0 %v1831, 20
        %v1913 = vpop.permute.xlu0 %1912
        %1914 = vrot.lane.b32.xlu0 %v1832, 20
        %v1915 = vpop.permute.xlu0 %1914
        %1916 = vrot.lane.b32.xlu0 %v1833, 20
        %v1917 = vpop.permute.xlu0 %1916
        %1918 = vrot.lane.b32.xlu0 %v1834, 20
        %v1919 = vpop.permute.xlu0 %1918
        %1920 = vrot.lane.b32.xlu0 %v1835, 20
        %v1921 = vpop.permute.xlu0 %1920
        %1922 = vrot.lane.b32.xlu0 %v1836, 20
        %v1923 = vpop.permute.xlu0 %1922
        %1924 = vrot.lane.b32.xlu0 %v1837, 20
        %v1925 = vpop.permute.xlu0 %1924
        %1926 = vrot.lane.b32.xlu0 %v1838, 20
        %v1927 = vpop.permute.xlu0 %1926
        %1928 = vrot.lane.b32.xlu0 %v1839, 20
        %v1929 = vpop.permute.xlu0 %1928
        %1930 = vrot.lane.b32.xlu0 %v1840, 20
        %v1931 = vpop.permute.xlu0 %1930
        %1932 = vrot.lane.b32.xlu0 %v1841, 20
        %v1933 = vpop.permute.xlu0 %1932
        %1934 = vrot.lane.b32.xlu0 %v1842, 20
        %v1935 = vpop.permute.xlu0 %1934
        %1936 = vrot.lane.b32.xlu0 %v1843, 20
        %v1937 = vpop.permute.xlu0 %1936
        %1938 = vrot.lane.b32.xlu0 %v1844, 20
        %v1939 = vpop.permute.xlu0 %1938
        %1940 = vrot.lane.b32.xlu0 %v1845, 20
        %v1941 = vpop.permute.xlu0 %1940
        %vm1974 = vcmask 195744
        %1975 = vst.msk [vmem:[#allocation3] sm:$0xff] %vm1974, %v1879
        %1976 = vst.msk [vmem:[#allocation3 + $0x8] sm:$0xff] %vm1974, %v1881
        %1977 = vst.msk [vmem:[#allocation3 + $0x10] sm:$0xff] %vm1974, %v1883
        %1978 = vst.msk [vmem:[#allocation3 + $0x18] sm:$0xff] %vm1974, %v1885
        %1979 = vst.msk [vmem:[#allocation3 + $0x20] sm:$0xff] %vm1974, %v1887
        %1980 = vst.msk [vmem:[#allocation3 + $0x28] sm:$0xff] %vm1974, %v1889
        %1981 = vst.msk [vmem:[#allocation3 + $0x30] sm:$0xff] %vm1974, %v1891
        %1982 = vst.msk [vmem:[#allocation3 + $0x38] sm:$0xff] %vm1974, %v1893
        %1983 = vst.msk [vmem:[#allocation3 + $0x40] sm:$0xff] %vm1974, %v1895
        %1984 = vst.msk [vmem:[#allocation3 + $0x48] sm:$0xff] %vm1974, %v1897
        %1985 = vst.msk [vmem:[#allocation3 + $0x50] sm:$0xff] %vm1974, %v1899
        %1986 = vst.msk [vmem:[#allocation3 + $0x58] sm:$0xff] %vm1974, %v1901
        %1987 = vst.msk [vmem:[#allocation3 + $0x60] sm:$0xff] %vm1974, %v1903
        %1988 = vst.msk [vmem:[#allocation3 + $0x68] sm:$0xff] %vm1974, %v1905
        %1989 = vst.msk [vmem:[#allocation3 + $0x70] sm:$0xff] %vm1974, %v1907
        %1990 = vst.msk [vmem:[#allocation3 + $0x78] sm:$0xff] %vm1974, %v1909
        %1991 = vst.msk [vmem:[#allocation3 + $0x80] sm:$0xff] %vm1974, %v1911
        %1992 = vst.msk [vmem:[#allocation3 + $0x88] sm:$0xff] %vm1974, %v1913
        %1993 = vst.msk [vmem:[#allocation3 + $0x90] sm:$0xff] %vm1974, %v1915
        %1994 = vst.msk [vmem:[#allocation3 + $0x98] sm:$0xff] %vm1974, %v1917
        %1995 = vst.msk [vmem:[#allocation3 + $0xa0] sm:$0xff] %vm1974, %v1919
        %1996 = vst.msk [vmem:[#allocation3 + $0xa8] sm:$0xff] %vm1974, %v1921
        %1997 = vst.msk [vmem:[#allocation3 + $0xb0] sm:$0xff] %vm1974, %v1923
        %1998 = vst.msk [vmem:[#allocation3 + $0xb8] sm:$0xff] %vm1974, %v1925
        %1999 = vst.msk [vmem:[#allocation3 + $0xc0] sm:$0xff] %vm1974, %v1927
        %2000 = vst.msk [vmem:[#allocation3 + $0xc8] sm:$0xff] %vm1974, %v1929
        %2001 = vst.msk [vmem:[#allocation3 + $0xd0] sm:$0xff] %vm1974, %v1931
        %2002 = vst.msk [vmem:[#allocation3 + $0xd8] sm:$0xff] %vm1974, %v1933
        %2003 = vst.msk [vmem:[#allocation3 + $0xe0] sm:$0xff] %vm1974, %v1935
        %2004 = vst.msk [vmem:[#allocation3 + $0xe8] sm:$0xff] %vm1974, %v1937
        %2005 = vst.msk [vmem:[#allocation3 + $0xf0] sm:$0xff] %vm1974, %v1939
        %2006 = vst.msk [vmem:[#allocation3 + $0xf8] sm:$0xff] %vm1974, %v1941
        %s2007 = scalar_lea.vmem [#allocation2], 48
        %v2008 = vld [vmem:[%s2007] sm:$0xff]
        %v2009 = vld [vmem:[%s2007 + $0x8] sm:$0xff]
        %v2010 = vld [vmem:[%s2007 + $0x18] sm:$0xff]
        %v2011 = vld [vmem:[%s2007 + $0x20] sm:$0xff]
        %v2012 = vld [vmem:[%s2007 + $0x30] sm:$0xff]
        %v2013 = vld [vmem:[%s2007 + $0x38] sm:$0xff]
        %v2014 = vld [vmem:[%s2007 + $0x48] sm:$0xff]
        %v2015 = vld [vmem:[%s2007 + $0x50] sm:$0xff]
        %v2016 = vld [vmem:[%s2007 + $0x60] sm:$0xff]
        %v2017 = vld [vmem:[%s2007 + $0x68] sm:$0xff]
        %v2018 = vld [vmem:[%s2007 + $0x78] sm:$0xff]
        %v2019 = vld [vmem:[%s2007 + $0x80] sm:$0xff]
        %v2020 = vld [vmem:[%s2007 + $0x90] sm:$0xff]
        %v2021 = vld [vmem:[%s2007 + $0x98] sm:$0xff]
        %v2022 = vld [vmem:[%s2007 + $0xa8] sm:$0xff]
        %v2023 = vld [vmem:[%s2007 + $0xb0] sm:$0xff]
        %v2024 = vld [vmem:[%s2007 + $0xc0] sm:$0xff]
        %v2025 = vld [vmem:[%s2007 + $0xc8] sm:$0xff]
        %v2026 = vld [vmem:[%s2007 + $0xd8] sm:$0xff]
        %v2027 = vld [vmem:[%s2007 + $0xe0] sm:$0xff]
        %v2028 = vld [vmem:[%s2007 + $0xf0] sm:$0xff]
        %v2029 = vld [vmem:[%s2007 + $0xf8] sm:$0xff]
        %v2030 = vld [vmem:[%s2007 + $0x108] sm:$0xff]
        %v2031 = vld [vmem:[%s2007 + $0x110] sm:$0xff]
        %v2032 = vld [vmem:[%s2007 + $0x120] sm:$0xff]
        %v2033 = vld [vmem:[%s2007 + $0x128] sm:$0xff]
        %v2034 = vld [vmem:[%s2007 + $0x138] sm:$0xff]
        %v2035 = vld [vmem:[%s2007 + $0x140] sm:$0xff]
        %v2036 = vld [vmem:[%s2007 + $0x150] sm:$0xff]
        %v2037 = vld [vmem:[%s2007 + $0x158] sm:$0xff]
        %v2038 = vld [vmem:[%s2007 + $0x168] sm:$0xff]
        %v2039 = vld [vmem:[%s2007 + $0x170] sm:$0xff]
        %2072 = vrot.lane.b32.xlu0 %v2008, 24
        %v2073 = vpop.permute.xlu0 %2072
        %2074 = vrot.lane.b32.xlu0 %v2009, 24
        %v2075 = vpop.permute.xlu0 %2074
        %2076 = vrot.lane.b32.xlu0 %v2010, 24
        %v2077 = vpop.permute.xlu0 %2076
        %2078 = vrot.lane.b32.xlu0 %v2011, 24
        %v2079 = vpop.permute.xlu0 %2078
        %2080 = vrot.lane.b32.xlu0 %v2012, 24
        %v2081 = vpop.permute.xlu0 %2080
        %2082 = vrot.lane.b32.xlu0 %v2013, 24
        %v2083 = vpop.permute.xlu0 %2082
        %2084 = vrot.lane.b32.xlu0 %v2014, 24
        %v2085 = vpop.permute.xlu0 %2084
        %2086 = vrot.lane.b32.xlu0 %v2015, 24
        %v2087 = vpop.permute.xlu0 %2086
        %2088 = vrot.lane.b32.xlu0 %v2016, 24
        %v2089 = vpop.permute.xlu0 %2088
        %2090 = vrot.lane.b32.xlu0 %v2017, 24
        %v2091 = vpop.permute.xlu0 %2090
        %2092 = vrot.lane.b32.xlu0 %v2018, 24
        %v2093 = vpop.permute.xlu0 %2092
        %2094 = vrot.lane.b32.xlu0 %v2019, 24
        %v2095 = vpop.permute.xlu0 %2094
        %2096 = vrot.lane.b32.xlu0 %v2020, 24
        %v2097 = vpop.permute.xlu0 %2096
        %2098 = vrot.lane.b32.xlu0 %v2021, 24
        %v2099 = vpop.permute.xlu0 %2098
        %2100 = vrot.lane.b32.xlu0 %v2022, 24
        %v2101 = vpop.permute.xlu0 %2100
        %2102 = vrot.lane.b32.xlu0 %v2023, 24
        %v2103 = vpop.permute.xlu0 %2102
        %2104 = vrot.lane.b32.xlu0 %v2024, 24
        %v2105 = vpop.permute.xlu0 %2104
        %2106 = vrot.lane.b32.xlu0 %v2025, 24
        %v2107 = vpop.permute.xlu0 %2106
        %2108 = vrot.lane.b32.xlu0 %v2026, 24
        %v2109 = vpop.permute.xlu0 %2108
        %2110 = vrot.lane.b32.xlu0 %v2027, 24
        %v2111 = vpop.permute.xlu0 %2110
        %2112 = vrot.lane.b32.xlu0 %v2028, 24
        %v2113 = vpop.permute.xlu0 %2112
        %2114 = vrot.lane.b32.xlu0 %v2029, 24
        %v2115 = vpop.permute.xlu0 %2114
        %2116 = vrot.lane.b32.xlu0 %v2030, 24
        %v2117 = vpop.permute.xlu0 %2116
        %2118 = vrot.lane.b32.xlu0 %v2031, 24
        %v2119 = vpop.permute.xlu0 %2118
        %2120 = vrot.lane.b32.xlu0 %v2032, 24
        %v2121 = vpop.permute.xlu0 %2120
        %2122 = vrot.lane.b32.xlu0 %v2033, 24
        %v2123 = vpop.permute.xlu0 %2122
        %2124 = vrot.lane.b32.xlu0 %v2034, 24
        %v2125 = vpop.permute.xlu0 %2124
        %2126 = vrot.lane.b32.xlu0 %v2035, 24
        %v2127 = vpop.permute.xlu0 %2126
        %2128 = vrot.lane.b32.xlu0 %v2036, 24
        %v2129 = vpop.permute.xlu0 %2128
        %2130 = vrot.lane.b32.xlu0 %v2037, 24
        %v2131 = vpop.permute.xlu0 %2130
        %2132 = vrot.lane.b32.xlu0 %v2038, 24
        %v2133 = vpop.permute.xlu0 %2132
        %2134 = vrot.lane.b32.xlu0 %v2039, 24
        %v2135 = vpop.permute.xlu0 %2134
        %vm2168 = vcmask 228544
        %2169 = vst.msk [vmem:[#allocation3] sm:$0xff] %vm2168, %v2073
        %2170 = vst.msk [vmem:[#allocation3 + $0x8] sm:$0xff] %vm2168, %v2075
        %2171 = vst.msk [vmem:[#allocation3 + $0x10] sm:$0xff] %vm2168, %v2077
        %2172 = vst.msk [vmem:[#allocation3 + $0x18] sm:$0xff] %vm2168, %v2079
        %2173 = vst.msk [vmem:[#allocation3 + $0x20] sm:$0xff] %vm2168, %v2081
        %2174 = vst.msk [vmem:[#allocation3 + $0x28] sm:$0xff] %vm2168, %v2083
        %2175 = vst.msk [vmem:[#allocation3 + $0x30] sm:$0xff] %vm2168, %v2085
        %2176 = vst.msk [vmem:[#allocation3 + $0x38] sm:$0xff] %vm2168, %v2087
        %2177 = vst.msk [vmem:[#allocation3 + $0x40] sm:$0xff] %vm2168, %v2089
        %2178 = vst.msk [vmem:[#allocation3 + $0x48] sm:$0xff] %vm2168, %v2091
        %2179 = vst.msk [vmem:[#allocation3 + $0x50] sm:$0xff] %vm2168, %v2093
        %2180 = vst.msk [vmem:[#allocation3 + $0x58] sm:$0xff] %vm2168, %v2095
        %2181 = vst.msk [vmem:[#allocation3 + $0x60] sm:$0xff] %vm2168, %v2097
        %2182 = vst.msk [vmem:[#allocation3 + $0x68] sm:$0xff] %vm2168, %v2099
        %2183 = vst.msk [vmem:[#allocation3 + $0x70] sm:$0xff] %vm2168, %v2101
        %2184 = vst.msk [vmem:[#allocation3 + $0x78] sm:$0xff] %vm2168, %v2103
        %2185 = vst.msk [vmem:[#allocation3 + $0x80] sm:$0xff] %vm2168, %v2105
        %2186 = vst.msk [vmem:[#allocation3 + $0x88] sm:$0xff] %vm2168, %v2107
        %2187 = vst.msk [vmem:[#allocation3 + $0x90] sm:$0xff] %vm2168, %v2109
        %2188 = vst.msk [vmem:[#allocation3 + $0x98] sm:$0xff] %vm2168, %v2111
        %2189 = vst.msk [vmem:[#allocation3 + $0xa0] sm:$0xff] %vm2168, %v2113
        %2190 = vst.msk [vmem:[#allocation3 + $0xa8] sm:$0xff] %vm2168, %v2115
        %2191 = vst.msk [vmem:[#allocation3 + $0xb0] sm:$0xff] %vm2168, %v2117
        %2192 = vst.msk [vmem:[#allocation3 + $0xb8] sm:$0xff] %vm2168, %v2119
        %2193 = vst.msk [vmem:[#allocation3 + $0xc0] sm:$0xff] %vm2168, %v2121
        %2194 = vst.msk [vmem:[#allocation3 + $0xc8] sm:$0xff] %vm2168, %v2123
        %2195 = vst.msk [vmem:[#allocation3 + $0xd0] sm:$0xff] %vm2168, %v2125
        %2196 = vst.msk [vmem:[#allocation3 + $0xd8] sm:$0xff] %vm2168, %v2127
        %2197 = vst.msk [vmem:[#allocation3 + $0xe0] sm:$0xff] %vm2168, %v2129
        %2198 = vst.msk [vmem:[#allocation3 + $0xe8] sm:$0xff] %vm2168, %v2131
        %2199 = vst.msk [vmem:[#allocation3 + $0xf0] sm:$0xff] %vm2168, %v2133
        %2200 = vst.msk [vmem:[#allocation3 + $0xf8] sm:$0xff] %vm2168, %v2135
        %v2201 = vld [vmem:[%s2007 + $0x1] sm:$0xff]
        %v2202 = vld [vmem:[%s2007 + $0x9] sm:$0xff]
        %v2203 = vld [vmem:[%s2007 + $0x19] sm:$0xff]
        %v2204 = vld [vmem:[%s2007 + $0x21] sm:$0xff]
        %v2205 = vld [vmem:[%s2007 + $0x31] sm:$0xff]
        %v2206 = vld [vmem:[%s2007 + $0x39] sm:$0xff]
        %v2207 = vld [vmem:[%s2007 + $0x49] sm:$0xff]
        %v2208 = vld [vmem:[%s2007 + $0x51] sm:$0xff]
        %v2209 = vld [vmem:[%s2007 + $0x61] sm:$0xff]
        %v2210 = vld [vmem:[%s2007 + $0x69] sm:$0xff]
        %v2211 = vld [vmem:[%s2007 + $0x79] sm:$0xff]
        %v2212 = vld [vmem:[%s2007 + $0x81] sm:$0xff]
        %v2213 = vld [vmem:[%s2007 + $0x91] sm:$0xff]
        %v2214 = vld [vmem:[%s2007 + $0x99] sm:$0xff]
        %v2215 = vld [vmem:[%s2007 + $0xa9] sm:$0xff]
        %v2216 = vld [vmem:[%s2007 + $0xb1] sm:$0xff]
        %v2217 = vld [vmem:[%s2007 + $0xc1] sm:$0xff]
        %v2218 = vld [vmem:[%s2007 + $0xc9] sm:$0xff]
        %v2219 = vld [vmem:[%s2007 + $0xd9] sm:$0xff]
        %v2220 = vld [vmem:[%s2007 + $0xe1] sm:$0xff]
        %v2221 = vld [vmem:[%s2007 + $0xf1] sm:$0xff]
        %v2222 = vld [vmem:[%s2007 + $0xf9] sm:$0xff]
        %v2223 = vld [vmem:[%s2007 + $0x109] sm:$0xff]
        %v2224 = vld [vmem:[%s2007 + $0x111] sm:$0xff]
        %v2225 = vld [vmem:[%s2007 + $0x121] sm:$0xff]
        %v2226 = vld [vmem:[%s2007 + $0x129] sm:$0xff]
        %v2227 = vld [vmem:[%s2007 + $0x139] sm:$0xff]
        %v2228 = vld [vmem:[%s2007 + $0x141] sm:$0xff]
        %v2229 = vld [vmem:[%s2007 + $0x151] sm:$0xff]
        %v2230 = vld [vmem:[%s2007 + $0x159] sm:$0xff]
        %v2231 = vld [vmem:[%s2007 + $0x169] sm:$0xff]
        %v2232 = vld [vmem:[%s2007 + $0x171] sm:$0xff]
        %2265 = vrot.lane.b32.xlu0 %v2201, 28
        %v2266 = vpop.permute.xlu0 %2265
        %2267 = vrot.lane.b32.xlu0 %v2202, 28
        %v2268 = vpop.permute.xlu0 %2267
        %2269 = vrot.lane.b32.xlu0 %v2203, 28
        %v2270 = vpop.permute.xlu0 %2269
        %2271 = vrot.lane.b32.xlu0 %v2204, 28
        %v2272 = vpop.permute.xlu0 %2271
        %2273 = vrot.lane.b32.xlu0 %v2205, 28
        %v2274 = vpop.permute.xlu0 %2273
        %2275 = vrot.lane.b32.xlu0 %v2206, 28
        %v2276 = vpop.permute.xlu0 %2275
        %2277 = vrot.lane.b32.xlu0 %v2207, 28
        %v2278 = vpop.permute.xlu0 %2277
        %2279 = vrot.lane.b32.xlu0 %v2208, 28
        %v2280 = vpop.permute.xlu0 %2279
        %2281 = vrot.lane.b32.xlu0 %v2209, 28
        %v2282 = vpop.permute.xlu0 %2281
        %2283 = vrot.lane.b32.xlu0 %v2210, 28
        %v2284 = vpop.permute.xlu0 %2283
        %2285 = vrot.lane.b32.xlu0 %v2211, 28
        %v2286 = vpop.permute.xlu0 %2285
        %2287 = vrot.lane.b32.xlu0 %v2212, 28
        %v2288 = vpop.permute.xlu0 %2287
        %2289 = vrot.lane.b32.xlu0 %v2213, 28
        %v2290 = vpop.permute.xlu0 %2289
        %2291 = vrot.lane.b32.xlu0 %v2214, 28
        %v2292 = vpop.permute.xlu0 %2291
        %2293 = vrot.lane.b32.xlu0 %v2215, 28
        %v2294 = vpop.permute.xlu0 %2293
        %2295 = vrot.lane.b32.xlu0 %v2216, 28
        %v2296 = vpop.permute.xlu0 %2295
        %2297 = vrot.lane.b32.xlu0 %v2217, 28
        %v2298 = vpop.permute.xlu0 %2297
        %2299 = vrot.lane.b32.xlu0 %v2218, 28
        %v2300 = vpop.permute.xlu0 %2299
        %2301 = vrot.lane.b32.xlu0 %v2219, 28
        %v2302 = vpop.permute.xlu0 %2301
        %2303 = vrot.lane.b32.xlu0 %v2220, 28
        %v2304 = vpop.permute.xlu0 %2303
        %2305 = vrot.lane.b32.xlu0 %v2221, 28
        %v2306 = vpop.permute.xlu0 %2305
        %2307 = vrot.lane.b32.xlu0 %v2222, 28
        %v2308 = vpop.permute.xlu0 %2307
        %2309 = vrot.lane.b32.xlu0 %v2223, 28
        %v2310 = vpop.permute.xlu0 %2309
        %2311 = vrot.lane.b32.xlu0 %v2224, 28
        %v2312 = vpop.permute.xlu0 %2311
        %2313 = vrot.lane.b32.xlu0 %v2225, 28
        %v2314 = vpop.permute.xlu0 %2313
        %2315 = vrot.lane.b32.xlu0 %v2226, 28
        %v2316 = vpop.permute.xlu0 %2315
        %2317 = vrot.lane.b32.xlu0 %v2227, 28
        %v2318 = vpop.permute.xlu0 %2317
        %2319 = vrot.lane.b32.xlu0 %v2228, 28
        %v2320 = vpop.permute.xlu0 %2319
        %2321 = vrot.lane.b32.xlu0 %v2229, 28
        %v2322 = vpop.permute.xlu0 %2321
        %2323 = vrot.lane.b32.xlu0 %v2230, 28
        %v2324 = vpop.permute.xlu0 %2323
        %2325 = vrot.lane.b32.xlu0 %v2231, 28
        %v2326 = vpop.permute.xlu0 %2325
        %2327 = vrot.lane.b32.xlu0 %v2232, 28
        %v2328 = vpop.permute.xlu0 %2327
        %vm2361 = vcmask 261344
        %2362 = vst.msk [vmem:[#allocation3] sm:$0xff] %vm2361, %v2266
        %2363 = vst.msk [vmem:[#allocation3 + $0x8] sm:$0xff] %vm2361, %v2268
        %2364 = vst.msk [vmem:[#allocation3 + $0x10] sm:$0xff] %vm2361, %v2270
        %2365 = vst.msk [vmem:[#allocation3 + $0x18] sm:$0xff] %vm2361, %v2272
        %2366 = vst.msk [vmem:[#allocation3 + $0x20] sm:$0xff] %vm2361, %v2274
        %2367 = vst.msk [vmem:[#allocation3 + $0x28] sm:$0xff] %vm2361, %v2276
        %2368 = vst.msk [vmem:[#allocation3 + $0x30] sm:$0xff] %vm2361, %v2278
        %2369 = vst.msk [vmem:[#allocation3 + $0x38] sm:$0xff] %vm2361, %v2280
        %2370 = vst.msk [vmem:[#allocation3 + $0x40] sm:$0xff] %vm2361, %v2282
        %2371 = vst.msk [vmem:[#allocation3 + $0x48] sm:$0xff] %vm2361, %v2284
        %2372 = vst.msk [vmem:[#allocation3 + $0x50] sm:$0xff] %vm2361, %v2286
        %2373 = vst.msk [vmem:[#allocation3 + $0x58] sm:$0xff] %vm2361, %v2288
        %2374 = vst.msk [vmem:[#allocation3 + $0x60] sm:$0xff] %vm2361, %v2290
        %2375 = vst.msk [vmem:[#allocation3 + $0x68] sm:$0xff] %vm2361, %v2292
        %2376 = vst.msk [vmem:[#allocation3 + $0x70] sm:$0xff] %vm2361, %v2294
        %2377 = vst.msk [vmem:[#allocation3 + $0x78] sm:$0xff] %vm2361, %v2296
        %2378 = vst.msk [vmem:[#allocation3 + $0x80] sm:$0xff] %vm2361, %v2298
        %2379 = vst.msk [vmem:[#allocation3 + $0x88] sm:$0xff] %vm2361, %v2300
        %2380 = vst.msk [vmem:[#allocation3 + $0x90] sm:$0xff] %vm2361, %v2302
        %2381 = vst.msk [vmem:[#allocation3 + $0x98] sm:$0xff] %vm2361, %v2304
        %2382 = vst.msk [vmem:[#allocation3 + $0xa0] sm:$0xff] %vm2361, %v2306
        %2383 = vst.msk [vmem:[#allocation3 + $0xa8] sm:$0xff] %vm2361, %v2308
        %2384 = vst.msk [vmem:[#allocation3 + $0xb0] sm:$0xff] %vm2361, %v2310
        %2385 = vst.msk [vmem:[#allocation3 + $0xb8] sm:$0xff] %vm2361, %v2312
        %2386 = vst.msk [vmem:[#allocation3 + $0xc0] sm:$0xff] %vm2361, %v2314
        %2387 = vst.msk [vmem:[#allocation3 + $0xc8] sm:$0xff] %vm2361, %v2316
        %2388 = vst.msk [vmem:[#allocation3 + $0xd0] sm:$0xff] %vm2361, %v2318
        %2389 = vst.msk [vmem:[#allocation3 + $0xd8] sm:$0xff] %vm2361, %v2320
        %2390 = vst.msk [vmem:[#allocation3 + $0xe0] sm:$0xff] %vm2361, %v2322
        %2391 = vst.msk [vmem:[#allocation3 + $0xe8] sm:$0xff] %vm2361, %v2324
        %2392 = vst.msk [vmem:[#allocation3 + $0xf0] sm:$0xff] %vm2361, %v2326
        %2393 = vst.msk [vmem:[#allocation3 + $0xf8] sm:$0xff] %vm2361, %v2328
        %v2394 = vld [vmem:[%s2007 + $0x2] sm:$0xff]
        %v2395 = vld [vmem:[%s2007 + $0xa] sm:$0xff]
        %v2396 = vld [vmem:[%s2007 + $0x1a] sm:$0xff]
        %v2397 = vld [vmem:[%s2007 + $0x22] sm:$0xff]
        %v2398 = vld [vmem:[%s2007 + $0x32] sm:$0xff]
        %v2399 = vld [vmem:[%s2007 + $0x3a] sm:$0xff]
        %v2400 = vld [vmem:[%s2007 + $0x4a] sm:$0xff]
        %v2401 = vld [vmem:[%s2007 + $0x52] sm:$0xff]
        %v2402 = vld [vmem:[%s2007 + $0x62] sm:$0xff]
        %v2403 = vld [vmem:[%s2007 + $0x6a] sm:$0xff]
        %v2404 = vld [vmem:[%s2007 + $0x7a] sm:$0xff]
        %v2405 = vld [vmem:[%s2007 + $0x82] sm:$0xff]
        %v2406 = vld [vmem:[%s2007 + $0x92] sm:$0xff]
        %v2407 = vld [vmem:[%s2007 + $0x9a] sm:$0xff]
        %v2408 = vld [vmem:[%s2007 + $0xaa] sm:$0xff]
        %v2409 = vld [vmem:[%s2007 + $0xb2] sm:$0xff]
        %v2410 = vld [vmem:[%s2007 + $0xc2] sm:$0xff]
        %v2411 = vld [vmem:[%s2007 + $0xca] sm:$0xff]
        %v2412 = vld [vmem:[%s2007 + $0xda] sm:$0xff]
        %v2413 = vld [vmem:[%s2007 + $0xe2] sm:$0xff]
        %v2414 = vld [vmem:[%s2007 + $0xf2] sm:$0xff]
        %v2415 = vld [vmem:[%s2007 + $0xfa] sm:$0xff]
        %v2416 = vld [vmem:[%s2007 + $0x10a] sm:$0xff]
        %v2417 = vld [vmem:[%s2007 + $0x112] sm:$0xff]
        %v2418 = vld [vmem:[%s2007 + $0x122] sm:$0xff]
        %v2419 = vld [vmem:[%s2007 + $0x12a] sm:$0xff]
        %v2420 = vld [vmem:[%s2007 + $0x13a] sm:$0xff]
        %v2421 = vld [vmem:[%s2007 + $0x142] sm:$0xff]
        %v2422 = vld [vmem:[%s2007 + $0x152] sm:$0xff]
        %v2423 = vld [vmem:[%s2007 + $0x15a] sm:$0xff]
        %v2424 = vld [vmem:[%s2007 + $0x16a] sm:$0xff]
        %v2425 = vld [vmem:[%s2007 + $0x172] sm:$0xff]
        %2458 = vrot.lane.b32.xlu0 %v2394, 32
        %v2459 = vpop.permute.xlu0 %2458
        %2460 = vrot.lane.b32.xlu0 %v2395, 32
        %v2461 = vpop.permute.xlu0 %2460
        %2462 = vrot.lane.b32.xlu0 %v2396, 32
        %v2463 = vpop.permute.xlu0 %2462
        %2464 = vrot.lane.b32.xlu0 %v2397, 32
        %v2465 = vpop.permute.xlu0 %2464
        %2466 = vrot.lane.b32.xlu0 %v2398, 32
        %v2467 = vpop.permute.xlu0 %2466
        %2468 = vrot.lane.b32.xlu0 %v2399, 32
        %v2469 = vpop.permute.xlu0 %2468
        %2470 = vrot.lane.b32.xlu0 %v2400, 32
        %v2471 = vpop.permute.xlu0 %2470
        %2472 = vrot.lane.b32.xlu0 %v2401, 32
        %v2473 = vpop.permute.xlu0 %2472
        %2474 = vrot.lane.b32.xlu0 %v2402, 32
        %v2475 = vpop.permute.xlu0 %2474
        %2476 = vrot.lane.b32.xlu0 %v2403, 32
        %v2477 = vpop.permute.xlu0 %2476
        %2478 = vrot.lane.b32.xlu0 %v2404, 32
        %v2479 = vpop.permute.xlu0 %2478
        %2480 = vrot.lane.b32.xlu0 %v2405, 32
        %v2481 = vpop.permute.xlu0 %2480
        %2482 = vrot.lane.b32.xlu0 %v2406, 32
        %v2483 = vpop.permute.xlu0 %2482
        %2484 = vrot.lane.b32.xlu0 %v2407, 32
        %v2485 = vpop.permute.xlu0 %2484
        %2486 = vrot.lane.b32.xlu0 %v2408, 32
        %v2487 = vpop.permute.xlu0 %2486
        %2488 = vrot.lane.b32.xlu0 %v2409, 32
        %v2489 = vpop.permute.xlu0 %2488
        %2490 = vrot.lane.b32.xlu0 %v2410, 32
        %v2491 = vpop.permute.xlu0 %2490
        %2492 = vrot.lane.b32.xlu0 %v2411, 32
        %v2493 = vpop.permute.xlu0 %2492
        %2494 = vrot.lane.b32.xlu0 %v2412, 32
        %v2495 = vpop.permute.xlu0 %2494
        %2496 = vrot.lane.b32.xlu0 %v2413, 32
        %v2497 = vpop.permute.xlu0 %2496
        %2498 = vrot.lane.b32.xlu0 %v2414, 32
        %v2499 = vpop.permute.xlu0 %2498
        %2500 = vrot.lane.b32.xlu0 %v2415, 32
        %v2501 = vpop.permute.xlu0 %2500
        %2502 = vrot.lane.b32.xlu0 %v2416, 32
        %v2503 = vpop.permute.xlu0 %2502
        %2504 = vrot.lane.b32.xlu0 %v2417, 32
        %v2505 = vpop.permute.xlu0 %2504
        %2506 = vrot.lane.b32.xlu0 %v2418, 32
        %v2507 = vpop.permute.xlu0 %2506
        %2508 = vrot.lane.b32.xlu0 %v2419, 32
        %v2509 = vpop.permute.xlu0 %2508
        %2510 = vrot.lane.b32.xlu0 %v2420, 32
        %v2511 = vpop.permute.xlu0 %2510
        %2512 = vrot.lane.b32.xlu0 %v2421, 32
        %v2513 = vpop.permute.xlu0 %2512
        %2514 = vrot.lane.b32.xlu0 %v2422, 32
        %v2515 = vpop.permute.xlu0 %2514
        %2516 = vrot.lane.b32.xlu0 %v2423, 32
        %v2517 = vpop.permute.xlu0 %2516
        %2518 = vrot.lane.b32.xlu0 %v2424, 32
        %v2519 = vpop.permute.xlu0 %2518
        %2520 = vrot.lane.b32.xlu0 %v2425, 32
        %v2521 = vpop.permute.xlu0 %2520
        %vm2554 = vcmask 294144
        %2555 = vst.msk [vmem:[#allocation3] sm:$0xff] %vm2554, %v2459
        %2556 = vst.msk [vmem:[#allocation3 + $0x8] sm:$0xff] %vm2554, %v2461
        %2557 = vst.msk [vmem:[#allocation3 + $0x10] sm:$0xff] %vm2554, %v2463
        %2558 = vst.msk [vmem:[#allocation3 + $0x18] sm:$0xff] %vm2554, %v2465
        %2559 = vst.msk [vmem:[#allocation3 + $0x20] sm:$0xff] %vm2554, %v2467
        %2560 = vst.msk [vmem:[#allocation3 + $0x28] sm:$0xff] %vm2554, %v2469
        %2561 = vst.msk [vmem:[#allocation3 + $0x30] sm:$0xff] %vm2554, %v2471
        %2562 = vst.msk [vmem:[#allocation3 + $0x38] sm:$0xff] %vm2554, %v2473
        %2563 = vst.msk [vmem:[#allocation3 + $0x40] sm:$0xff] %vm2554, %v2475
        %2564 = vst.msk [vmem:[#allocation3 + $0x48] sm:$0xff] %vm2554, %v2477
        %2565 = vst.msk [vmem:[#allocation3 + $0x50] sm:$0xff] %vm2554, %v2479
        %2566 = vst.msk [vmem:[#allocation3 + $0x58] sm:$0xff] %vm2554, %v2481
        %2567 = vst.msk [vmem:[#allocation3 + $0x60] sm:$0xff] %vm2554, %v2483
        %2568 = vst.msk [vmem:[#allocation3 + $0x68] sm:$0xff] %vm2554, %v2485
        %2569 = vst.msk [vmem:[#allocation3 + $0x70] sm:$0xff] %vm2554, %v2487
        %2570 = vst.msk [vmem:[#allocation3 + $0x78] sm:$0xff] %vm2554, %v2489
        %2571 = vst.msk [vmem:[#allocation3 + $0x80] sm:$0xff] %vm2554, %v2491
        %2572 = vst.msk [vmem:[#allocation3 + $0x88] sm:$0xff] %vm2554, %v2493
        %2573 = vst.msk [vmem:[#allocation3 + $0x90] sm:$0xff] %vm2554, %v2495
        %2574 = vst.msk [vmem:[#allocation3 + $0x98] sm:$0xff] %vm2554, %v2497
        %2575 = vst.msk [vmem:[#allocation3 + $0xa0] sm:$0xff] %vm2554, %v2499
        %2576 = vst.msk [vmem:[#allocation3 + $0xa8] sm:$0xff] %vm2554, %v2501
        %2577 = vst.msk [vmem:[#allocation3 + $0xb0] sm:$0xff] %vm2554, %v2503
        %2578 = vst.msk [vmem:[#allocation3 + $0xb8] sm:$0xff] %vm2554, %v2505
        %2579 = vst.msk [vmem:[#allocation3 + $0xc0] sm:$0xff] %vm2554, %v2507
        %2580 = vst.msk [vmem:[#allocation3 + $0xc8] sm:$0xff] %vm2554, %v2509
        %2581 = vst.msk [vmem:[#allocation3 + $0xd0] sm:$0xff] %vm2554, %v2511
        %2582 = vst.msk [vmem:[#allocation3 + $0xd8] sm:$0xff] %vm2554, %v2513
        %2583 = vst.msk [vmem:[#allocation3 + $0xe0] sm:$0xff] %vm2554, %v2515
        %2584 = vst.msk [vmem:[#allocation3 + $0xe8] sm:$0xff] %vm2554, %v2517
        %2585 = vst.msk [vmem:[#allocation3 + $0xf0] sm:$0xff] %vm2554, %v2519
        %2586 = vst.msk [vmem:[#allocation3 + $0xf8] sm:$0xff] %vm2554, %v2521
        %v2587 = vld [vmem:[#allocation3] sm:$0xff]
        %v2588 = vld [vmem:[#allocation3 + $0x8] sm:$0xff]
        %v2589 = vld [vmem:[#allocation3 + $0x10] sm:$0xff]
        %v2590 = vld [vmem:[#allocation3 + $0x18] sm:$0xff]
        %v2591 = vld [vmem:[#allocation3 + $0x20] sm:$0xff]
        %v2592 = vld [vmem:[#allocation3 + $0x28] sm:$0xff]
        %v2593 = vld [vmem:[#allocation3 + $0x30] sm:$0xff]
        %v2594 = vld [vmem:[#allocation3 + $0x38] sm:$0xff]
        %v2595 = vld [vmem:[#allocation3 + $0x40] sm:$0xff]
        %v2596 = vld [vmem:[#allocation3 + $0x48] sm:$0xff]
        %v2597 = vld [vmem:[#allocation3 + $0x50] sm:$0xff]
        %v2598 = vld [vmem:[#allocation3 + $0x58] sm:$0xff]
        %v2599 = vld [vmem:[#allocation3 + $0x60] sm:$0xff]
        %v2600 = vld [vmem:[#allocation3 + $0x68] sm:$0xff]
        %v2601 = vld [vmem:[#allocation3 + $0x70] sm:$0xff]
        %v2602 = vld [vmem:[#allocation3 + $0x78] sm:$0xff]
        %v2603 = vld [vmem:[#allocation3 + $0x80] sm:$0xff]
        %v2604 = vld [vmem:[#allocation3 + $0x88] sm:$0xff]
        %v2605 = vld [vmem:[#allocation3 + $0x90] sm:$0xff]
        %v2606 = vld [vmem:[#allocation3 + $0x98] sm:$0xff]
        %v2607 = vld [vmem:[#allocation3 + $0xa0] sm:$0xff]
        %v2608 = vld [vmem:[#allocation3 + $0xa8] sm:$0xff]
        %v2609 = vld [vmem:[#allocation3 + $0xb0] sm:$0xff]
        %v2610 = vld [vmem:[#allocation3 + $0xb8] sm:$0xff]
        %v2611 = vld [vmem:[#allocation3 + $0xc0] sm:$0xff]
        %v2612 = vld [vmem:[#allocation3 + $0xc8] sm:$0xff]
        %v2613 = vld [vmem:[#allocation3 + $0xd0] sm:$0xff]
        %v2614 = vld [vmem:[#allocation3 + $0xd8] sm:$0xff]
        %v2615 = vld [vmem:[#allocation3 + $0xe0] sm:$0xff]
        %v2616 = vld [vmem:[#allocation3 + $0xe8] sm:$0xff]
        %v2617 = vld [vmem:[#allocation3 + $0xf0] sm:$0xff]
        %v2618 = vld [vmem:[#allocation3 + $0xf8] sm:$0xff]
        %v2619 = vld [vmem:[%s3] sm:$0xff]
        %v2620 = vld [vmem:[%s3 + $0x8] sm:$0xff]
        %v2621 = vld [vmem:[%s3 + $0x10] sm:$0xff]
        %v2622 = vld [vmem:[%s3 + $0x18] sm:$0xff]
        %v2623 = vld [vmem:[%s3 + $0x20] sm:$0xf]
        %v2624 = vld [vmem:[%s4] sm:$0x1]
        %v2626 = vlaneseq
        %v2627 = vshrl.u32 %v2626, 7
        %v2628 = vsub.s32 0, %v2627
        %v2629 = vrot.slane %v2624, %v2628
        %vm2631 = vcmask 293888
        %v2633 = vsel %vm2631, %v2587, 0
        %v2636 = vsel %vm2631, %v2588, 0
        %v2639 = vsel %vm2631, %v2589, 0
        %v2642 = vsel %vm2631, %v2590, 0
        %v2645 = vsel %vm2631, %v2591, 0
        %v2648 = vsel %vm2631, %v2592, 0
        %v2651 = vsel %vm2631, %v2593, 0
        %v2654 = vsel %vm2631, %v2594, 0
        %v2657 = vsel %vm2631, %v2595, 0
        %v2660 = vsel %vm2631, %v2596, 0
        %v2663 = vsel %vm2631, %v2597, 0
        %v2666 = vsel %vm2631, %v2598, 0
        %v2669 = vsel %vm2631, %v2599, 0
        %v2672 = vsel %vm2631, %v2600, 0
        %v2675 = vsel %vm2631, %v2601, 0
        %v2678 = vsel %vm2631, %v2602, 0
        %v2681 = vsel %vm2631, %v2603, 0
        %v2684 = vsel %vm2631, %v2604, 0
        %v2687 = vsel %vm2631, %v2605, 0
        %v2690 = vsel %vm2631, %v2606, 0
        %v2693 = vsel %vm2631, %v2607, 0
        %v2696 = vsel %vm2631, %v2608, 0
        %v2699 = vsel %vm2631, %v2609, 0
        %v2702 = vsel %vm2631, %v2610, 0
        %v2705 = vsel %vm2631, %v2611, 0
        %v2708 = vsel %vm2631, %v2612, 0
        %v2711 = vsel %vm2631, %v2613, 0
        %v2714 = vsel %vm2631, %v2614, 0
        %v2717 = vsel %vm2631, %v2615, 0
        %v2720 = vsel %vm2631, %v2616, 0
        %v2723 = vsel %vm2631, %v2617, 0
        %v2726 = vsel %vm2631, %v2618, 0
        %v2729 = vsel %vm468, %v2623, 0
        %2731 = vmatprep.subr.mxu0 0.0
        %2732 = vmatpush1.msra.mxu0 %v2619
        %2733 = vmatprep.subr.mxu0 0.0
        %2734 = vmatpush1.msra.mxu0 %v2620
        %2735 = vmatprep.subr.mxu0 0.0
        %2736 = vmatpush1.msra.mxu0 %v2621
        %2737 = vmatprep.subr.mxu0 0.0
        %2738 = vmatpush1.msra.mxu0 %v2622
        %2739 = vmatprep.subr.mxu0 0.0
        %2740 = vmatpush1.msra.mxu0 %v2729
        %2741 = vmatprep.subr.mxu0 0.0
        %2742 = vmatpush1.msra.mxu0 0.0
        %2743 = vmatprep.subr.mxu0 0.0
        %2744 = vmatpush1.msra.mxu0 0.0
        %2745 = vmatprep.subr.mxu0 0.0
        %2746 = vmatpush1.msra.mxu0 0.0
        %2747 = vmatprep.subr.mxu0 0.0
        %2748 = vmatpush1.msra.mxu0 0.0
        %2749 = vmatprep.subr.mxu0 0.0
        %2750 = vmatpush1.msra.mxu0 0.0
        %2751 = vmatprep.subr.mxu0 0.0
        %2752 = vmatpush1.msra.mxu0 0.0
        %2753 = vmatprep.subr.mxu0 0.0
        %2754 = vmatpush1.msra.mxu0 0.0
        %2755 = vmatprep.subr.mxu0 0.0
        %2756 = vmatpush1.msra.mxu0 0.0
        %2757 = vmatprep.subr.mxu0 0.0
        %2758 = vmatpush1.msra.mxu0 0.0
        %2759 = vmatprep.subr.mxu0 0.0
        %2760 = vmatpush1.msra.mxu0 0.0
        %2761 = vmatprep.subr.mxu0 0.0
        %2762 = vmatpush1.msra.mxu0 0.0
        %2763 = vmatprep.subr.mxu0 0.0
        %2764 = vmatpush1.msra.mxu0 0.0
        %2765 = vmatprep.subr.mxu0 0.0
        %2766 = vmatpush1.msra.mxu0 0.0
        %2767 = vmatprep.subr.mxu0 0.0
        %2768 = vmatpush1.msra.mxu0 0.0
        %2769 = vmatprep.subr.mxu0 0.0
        %2770 = vmatpush1.msra.mxu0 0.0
        %2771 = vmatprep.subr.mxu0 0.0
        %2772 = vmatpush1.msra.mxu0 0.0
        %2773 = vmatprep.subr.mxu0 0.0
        %2774 = vmatpush1.msra.mxu0 0.0
        %2775 = vmatprep.subr.mxu0 0.0
        %2776 = vmatpush1.msra.mxu0 0.0
        %2777 = vmatprep.subr.mxu0 0.0
        %2778 = vmatpush1.msra.mxu0 0.0
        %2779 = vmatprep.subr.mxu0 0.0
        %2780 = vmatpush1.msra.mxu0 0.0
        %2781 = vmatprep.subr.mxu0 0.0
        %2782 = vmatpush1.msra.mxu0 0.0
        %2783 = vmatprep.subr.mxu0 0.0
        %2784 = vmatpush1.msra.mxu0 0.0
        %2785 = vmatprep.subr.mxu0 0.0
        %2786 = vmatpush1.msra.mxu0 0.0
        %2787 = vmatprep.subr.mxu0 0.0
        %2788 = vmatpush1.msra.mxu0 0.0
        %2789 = vmatprep.subr.mxu0 0.0
        %2790 = vmatpush1.msra.mxu0 0.0
        %2791 = vmatprep.subr.mxu0 0.0
        %2792 = vmatpush1.msra.mxu0 0.0
        %2793 = vmatprep.subr.mxu0 0.0
        %2794 = vmatpush1.msra.mxu0 0.0
        %2795 = vmatprep.mubr.f32.mxu0 0.0
        %2796 = vmatmul.mubr.f32.gmra.mrb[0].mxu0 %v2633
        %v2797 = vpop.f32.mrb[0].mxu0
        %v2798 = vadd.f32 %v2629, %v2797
        %v2799 = vpop.f32.mrb[0].mxu0
        %2800 = vmatprep.mubr.f32.mxu0 0.0
        %2801 = vmatmul.mubr.f32.gmra.mrb[0].mxu0 %v2636
        %v2802 = vpop.f32.mrb[0].mxu0
        %v2803 = vadd.f32 %v2629, %v2802
        %v2804 = vpop.f32.mrb[0].mxu0
        %2805 = vmatprep.mubr.f32.mxu0 0.0
        %2806 = vmatmul.mubr.f32.gmra.mrb[0].mxu0 %v2639
        %v2807 = vpop.f32.mrb[0].mxu0
        %v2808 = vadd.f32 %v2629, %v2807
        %v2809 = vpop.f32.mrb[0].mxu0
        %2810 = vmatprep.mubr.f32.mxu0 0.0
        %2811 = vmatmul.mubr.f32.gmra.mrb[0].mxu0 %v2642
        %v2812 = vpop.f32.mrb[0].mxu0
        %v2813 = vadd.f32 %v2629, %v2812
        %v2814 = vpop.f32.mrb[0].mxu0
        %2815 = vmatprep.mubr.f32.mxu0 0.0
        %2816 = vmatmul.mubr.f32.gmra.mrb[0].mxu0 %v2645
        %v2817 = vpop.f32.mrb[0].mxu0
        %v2818 = vadd.f32 %v2629, %v2817
        %v2819 = vpop.f32.mrb[0].mxu0
        %2820 = vmatprep.mubr.f32.mxu0 0.0
        %2821 = vmatmul.mubr.f32.gmra.mrb[0].mxu0 %v2648
        %v2822 = vpop.f32.mrb[0].mxu0
        %v2823 = vadd.f32 %v2629, %v2822
        %v2824 = vpop.f32.mrb[0].mxu0
        %2825 = vmatprep.mubr.f32.mxu0 0.0
        %2826 = vmatmul.mubr.f32.gmra.mrb[0].mxu0 %v2651
        %v2827 = vpop.f32.mrb[0].mxu0
        %v2828 = vadd.f32 %v2629, %v2827
        %v2829 = vpop.f32.mrb[0].mxu0
        %2830 = vmatprep.mubr.f32.mxu0 0.0
        %2831 = vmatmul.mubr.f32.gmra.mrb[0].mxu0 %v2654
        %v2832 = vpop.f32.mrb[0].mxu0
        %v2833 = vadd.f32 %v2629, %v2832
        %v2834 = vpop.f32.mrb[0].mxu0
        %2835 = vmatprep.mubr.f32.mxu0 0.0
        %2836 = vmatmul.mubr.f32.gmra.mrb[0].mxu0 %v2657
        %v2837 = vpop.f32.mrb[0].mxu0
        %v2838 = vadd.f32 %v2629, %v2837
        %v2839 = vpop.f32.mrb[0].mxu0
        %2840 = vmatprep.mubr.f32.mxu0 0.0
        %2841 = vmatmul.mubr.f32.gmra.mrb[0].mxu0 %v2660
        %v2842 = vpop.f32.mrb[0].mxu0
        %v2843 = vadd.f32 %v2629, %v2842
        %v2844 = vpop.f32.mrb[0].mxu0
        %2845 = vmatprep.mubr.f32.mxu0 0.0
        %2846 = vmatmul.mubr.f32.gmra.mrb[0].mxu0 %v2663
        %v2847 = vpop.f32.mrb[0].mxu0
        %v2848 = vadd.f32 %v2629, %v2847
        %v2849 = vpop.f32.mrb[0].mxu0
        %2850 = vmatprep.mubr.f32.mxu0 0.0
        %2851 = vmatmul.mubr.f32.gmra.mrb[0].mxu0 %v2666
        %v2852 = vpop.f32.mrb[0].mxu0
        %v2853 = vadd.f32 %v2629, %v2852
        %v2854 = vpop.f32.mrb[0].mxu0
        %2855 = vmatprep.mubr.f32.mxu0 0.0
        %2856 = vmatmul.mubr.f32.gmra.mrb[0].mxu0 %v2669
        %v2857 = vpop.f32.mrb[0].mxu0
        %v2858 = vadd.f32 %v2629, %v2857
        %v2859 = vpop.f32.mrb[0].mxu0
        %2860 = vmatprep.mubr.f32.mxu0 0.0
        %2861 = vmatmul.mubr.f32.gmra.mrb[0].mxu0 %v2672
        %v2862 = vpop.f32.mrb[0].mxu0
        %v2863 = vadd.f32 %v2629, %v2862
        %v2864 = vpop.f32.mrb[0].mxu0
        %2865 = vmatprep.mubr.f32.mxu0 0.0
        %2866 = vmatmul.mubr.f32.gmra.mrb[0].mxu0 %v2675
        %v2867 = vpop.f32.mrb[0].mxu0
        %v2868 = vadd.f32 %v2629, %v2867
        %v2869 = vpop.f32.mrb[0].mxu0
        %2870 = vmatprep.mubr.f32.mxu0 0.0
        %2871 = vmatmul.mubr.f32.gmra.mrb[0].mxu0 %v2678
        %v2872 = vpop.f32.mrb[0].mxu0
        %v2873 = vadd.f32 %v2629, %v2872
        %v2874 = vpop.f32.mrb[0].mxu0
        %2875 = vmatprep.mubr.f32.mxu0 0.0
        %2876 = vmatmul.mubr.f32.gmra.mrb[0].mxu0 %v2681
        %v2877 = vpop.f32.mrb[0].mxu0
        %v2878 = vadd.f32 %v2629, %v2877
        %v2879 = vpop.f32.mrb[0].mxu0
        %2880 = vmatprep.mubr.f32.mxu0 0.0
        %2881 = vmatmul.mubr.f32.gmra.mrb[0].mxu0 %v2684
        %v2882 = vpop.f32.mrb[0].mxu0
        %v2883 = vadd.f32 %v2629, %v2882
        %v2884 = vpop.f32.mrb[0].mxu0
        %2885 = vmatprep.mubr.f32.mxu0 0.0
        %2886 = vmatmul.mubr.f32.gmra.mrb[0].mxu0 %v2687
        %v2887 = vpop.f32.mrb[0].mxu0
        %v2888 = vadd.f32 %v2629, %v2887
        %v2889 = vpop.f32.mrb[0].mxu0
        %2890 = vmatprep.mubr.f32.mxu0 0.0
        %2891 = vmatmul.mubr.f32.gmra.mrb[0].mxu0 %v2690
        %v2892 = vpop.f32.mrb[0].mxu0
        %v2893 = vadd.f32 %v2629, %v2892
        %v2894 = vpop.f32.mrb[0].mxu0
        %2895 = vmatprep.mubr.f32.mxu0 0.0
        %2896 = vmatmul.mubr.f32.gmra.mrb[0].mxu0 %v2693
        %v2897 = vpop.f32.mrb[0].mxu0
        %v2898 = vadd.f32 %v2629, %v2897
        %v2899 = vpop.f32.mrb[0].mxu0
        %2900 = vmatprep.mubr.f32.mxu0 0.0
        %2901 = vmatmul.mubr.f32.gmra.mrb[0].mxu0 %v2696
        %v2902 = vpop.f32.mrb[0].mxu0
        %v2903 = vadd.f32 %v2629, %v2902
        %v2904 = vpop.f32.mrb[0].mxu0
        %2905 = vmatprep.mubr.f32.mxu0 0.0
        %2906 = vmatmul.mubr.f32.gmra.mrb[0].mxu0 %v2699
        %v2907 = vpop.f32.mrb[0].mxu0
        %v2908 = vadd.f32 %v2629, %v2907
        %v2909 = vpop.f32.mrb[0].mxu0
        %2910 = vmatprep.mubr.f32.mxu0 0.0
        %2911 = vmatmul.mubr.f32.gmra.mrb[0].mxu0 %v2702
        %v2912 = vpop.f32.mrb[0].mxu0
        %v2913 = vadd.f32 %v2629, %v2912
        %v2914 = vpop.f32.mrb[0].mxu0
        %2915 = vmatprep.mubr.f32.mxu0 0.0
        %2916 = vmatmul.mubr.f32.gmra.mrb[0].mxu0 %v2705
        %v2917 = vpop.f32.mrb[0].mxu0
        %v2918 = vadd.f32 %v2629, %v2917
        %v2919 = vpop.f32.mrb[0].mxu0
        %2920 = vmatprep.mubr.f32.mxu0 0.0
        %2921 = vmatmul.mubr.f32.gmra.mrb[0].mxu0 %v2708
        %v2922 = vpop.f32.mrb[0].mxu0
        %v2923 = vadd.f32 %v2629, %v2922
        %v2924 = vpop.f32.mrb[0].mxu0
        %2925 = vmatprep.mubr.f32.mxu0 0.0
        %2926 = vmatmul.mubr.f32.gmra.mrb[0].mxu0 %v2711
        %v2927 = vpop.f32.mrb[0].mxu0
        %v2928 = vadd.f32 %v2629, %v2927
        %v2929 = vpop.f32.mrb[0].mxu0
        %2930 = vmatprep.mubr.f32.mxu0 0.0
        %2931 = vmatmul.mubr.f32.gmra.mrb[0].mxu0 %v2714
        %v2932 = vpop.f32.mrb[0].mxu0
        %v2933 = vadd.f32 %v2629, %v2932
        %v2934 = vpop.f32.mrb[0].mxu0
        %2935 = vmatprep.mubr.f32.mxu0 0.0
        %2936 = vmatmul.mubr.f32.gmra.mrb[0].mxu0 %v2717
        %v2937 = vpop.f32.mrb[0].mxu0
        %v2938 = vadd.f32 %v2629, %v2937
        %v2939 = vpop.f32.mrb[0].mxu0
        %2940 = vmatprep.mubr.f32.mxu0 0.0
        %2941 = vmatmul.mubr.f32.gmra.mrb[0].mxu0 %v2720
        %v2942 = vpop.f32.mrb[0].mxu0
        %v2943 = vadd.f32 %v2629, %v2942
        %v2944 = vpop.f32.mrb[0].mxu0
        %2945 = vmatprep.mubr.f32.mxu0 0.0
        %2946 = vmatmul.mubr.f32.gmra.mrb[0].mxu0 %v2723
        %v2947 = vpop.f32.mrb[0].mxu0
        %v2948 = vadd.f32 %v2629, %v2947
        %v2949 = vpop.f32.mrb[0].mxu0
        %2950 = vmatprep.mubr.f32.mxu0 0.0
        %2951 = vmatmul.mubr.f32.gmra.mrb[0].mxu0 %v2726
        %v2952 = vpop.f32.mrb[0].mxu0
        %v2953 = vadd.f32 %v2629, %v2952
        %v2954 = vpop.f32.mrb[0].mxu0
        %2955 = vdwg.mxu0
        %v2956 = vmax.f32 %v2798, 0.0
        %v2957 = vmax.f32 %v2803, 0.0
        %v2958 = vmax.f32 %v2808, 0.0
        %v2959 = vmax.f32 %v2813, 0.0
        %v2960 = vmax.f32 %v2818, 0.0
        %v2961 = vmax.f32 %v2823, 0.0
        %v2962 = vmax.f32 %v2828, 0.0
        %v2963 = vmax.f32 %v2833, 0.0
        %v2964 = vmax.f32 %v2838, 0.0
        %v2965 = vmax.f32 %v2843, 0.0
        %v2966 = vmax.f32 %v2848, 0.0
        %v2967 = vmax.f32 %v2853, 0.0
        %v2968 = vmax.f32 %v2858, 0.0
        %v2969 = vmax.f32 %v2863, 0.0
        %v2970 = vmax.f32 %v2868, 0.0
        %v2971 = vmax.f32 %v2873, 0.0
        %v2972 = vmax.f32 %v2878, 0.0
        %v2973 = vmax.f32 %v2883, 0.0
        %v2974 = vmax.f32 %v2888, 0.0
        %v2975 = vmax.f32 %v2893, 0.0
        %v2976 = vmax.f32 %v2898, 0.0
        %v2977 = vmax.f32 %v2903, 0.0
        %v2978 = vmax.f32 %v2908, 0.0
        %v2979 = vmax.f32 %v2913, 0.0
        %v2980 = vmax.f32 %v2918, 0.0
        %v2981 = vmax.f32 %v2923, 0.0
        %v2982 = vmax.f32 %v2928, 0.0
        %v2983 = vmax.f32 %v2933, 0.0
        %v2984 = vmax.f32 %v2938, 0.0
        %v2985 = vmax.f32 %v2943, 0.0
        %v2986 = vmax.f32 %v2948, 0.0
        %v2987 = vmax.f32 %v2953, 0.0
        %3020 = vrot.lane.b32.xlu0 %v2956, 8
        %v3021 = vpop.permute.xlu0 %3020
        %3022 = vrot.lane.b32.xlu0 %v2957, 8
        %v3023 = vpop.permute.xlu0 %3022
        %3024 = vrot.lane.b32.xlu0 %v2958, 8
        %v3025 = vpop.permute.xlu0 %3024
        %3026 = vrot.lane.b32.xlu0 %v2959, 8
        %v3027 = vpop.permute.xlu0 %3026
        %3028 = vrot.lane.b32.xlu0 %v2960, 8
        %v3029 = vpop.permute.xlu0 %3028
        %3030 = vrot.lane.b32.xlu0 %v2961, 8
        %v3031 = vpop.permute.xlu0 %3030
        %3032 = vrot.lane.b32.xlu0 %v2962, 8
        %v3033 = vpop.permute.xlu0 %3032
        %3034 = vrot.lane.b32.xlu0 %v2963, 8
        %v3035 = vpop.permute.xlu0 %3034
        %3036 = vrot.lane.b32.xlu0 %v2964, 8
        %v3037 = vpop.permute.xlu0 %3036
        %3038 = vrot.lane.b32.xlu0 %v2965, 8
        %v3039 = vpop.permute.xlu0 %3038
        %3040 = vrot.lane.b32.xlu0 %v2966, 8
        %v3041 = vpop.permute.xlu0 %3040
        %3042 = vrot.lane.b32.xlu0 %v2967, 8
        %v3043 = vpop.permute.xlu0 %3042
        %3044 = vrot.lane.b32.xlu0 %v2968, 8
        %v3045 = vpop.permute.xlu0 %3044
        %3046 = vrot.lane.b32.xlu0 %v2969, 8
        %v3047 = vpop.permute.xlu0 %3046
        %3048 = vrot.lane.b32.xlu0 %v2970, 8
        %v3049 = vpop.permute.xlu0 %3048
        %3050 = vrot.lane.b32.xlu0 %v2971, 8
        %v3051 = vpop.permute.xlu0 %3050
        %3052 = vrot.lane.b32.xlu0 %v2972, 8
        %v3053 = vpop.permute.xlu0 %3052
        %3054 = vrot.lane.b32.xlu0 %v2973, 8
        %v3055 = vpop.permute.xlu0 %3054
        %3056 = vrot.lane.b32.xlu0 %v2974, 8
        %v3057 = vpop.permute.xlu0 %3056
        %3058 = vrot.lane.b32.xlu0 %v2975, 8
        %v3059 = vpop.permute.xlu0 %3058
        %3060 = vrot.lane.b32.xlu0 %v2976, 8
        %v3061 = vpop.permute.xlu0 %3060
        %3062 = vrot.lane.b32.xlu0 %v2977, 8
        %v3063 = vpop.permute.xlu0 %3062
        %3064 = vrot.lane.b32.xlu0 %v2978, 8
        %v3065 = vpop.permute.xlu0 %3064
        %3066 = vrot.lane.b32.xlu0 %v2979, 8
        %v3067 = vpop.permute.xlu0 %3066
        %3068 = vrot.lane.b32.xlu0 %v2980, 8
        %v3069 = vpop.permute.xlu0 %3068
        %3070 = vrot.lane.b32.xlu0 %v2981, 8
        %v3071 = vpop.permute.xlu0 %3070
        %3072 = vrot.lane.b32.xlu0 %v2982, 8
        %v3073 = vpop.permute.xlu0 %3072
        %3074 = vrot.lane.b32.xlu0 %v2983, 8
        %v3075 = vpop.permute.xlu0 %3074
        %3076 = vrot.lane.b32.xlu0 %v2984, 8
        %v3077 = vpop.permute.xlu0 %3076
        %3078 = vrot.lane.b32.xlu0 %v2985, 8
        %v3079 = vpop.permute.xlu0 %3078
        %3080 = vrot.lane.b32.xlu0 %v2986, 8
        %v3081 = vpop.permute.xlu0 %3080
        %3082 = vrot.lane.b32.xlu0 %v2987, 8
        %v3083 = vpop.permute.xlu0 %3082
        %vm3116 = vcmask 130112
        %3117 = vst.msk [vmem:[%s325] sm:$0xff] %vm3116, %v3021
        %3118 = vst.msk [vmem:[%s325 + $0x8] sm:$0xff] %vm3116, %v3023
        %3119 = vst.msk [vmem:[%s325 + $0x10] sm:$0xff] %vm3116, %v3025
        %3120 = vst.msk [vmem:[%s325 + $0x18] sm:$0xff] %vm3116, %v3027
        %3121 = vst.msk [vmem:[%s325 + $0x20] sm:$0xff] %vm3116, %v3029
        %3122 = vst.msk [vmem:[%s325 + $0x28] sm:$0xff] %vm3116, %v3031
        %3123 = vst.msk [vmem:[%s325 + $0x30] sm:$0xff] %vm3116, %v3033
        %3124 = vst.msk [vmem:[%s325 + $0x38] sm:$0xff] %vm3116, %v3035
        %3125 = vst.msk [vmem:[%s325 + $0x40] sm:$0xff] %vm3116, %v3037
        %3126 = vst.msk [vmem:[%s325 + $0x48] sm:$0xff] %vm3116, %v3039
        %3127 = vst.msk [vmem:[%s325 + $0x50] sm:$0xff] %vm3116, %v3041
        %3128 = vst.msk [vmem:[%s325 + $0x58] sm:$0xff] %vm3116, %v3043
        %3129 = vst.msk [vmem:[%s325 + $0x60] sm:$0xff] %vm3116, %v3045
        %3130 = vst.msk [vmem:[%s325 + $0x68] sm:$0xff] %vm3116, %v3047
        %3131 = vst.msk [vmem:[%s325 + $0x70] sm:$0xff] %vm3116, %v3049
        %3132 = vst.msk [vmem:[%s325 + $0x78] sm:$0xff] %vm3116, %v3051
        %3133 = vst.msk [vmem:[%s325 + $0x80] sm:$0xff] %vm3116, %v3053
        %3134 = vst.msk [vmem:[%s325 + $0x88] sm:$0xff] %vm3116, %v3055
        %3135 = vst.msk [vmem:[%s325 + $0x90] sm:$0xff] %vm3116, %v3057
        %3136 = vst.msk [vmem:[%s325 + $0x98] sm:$0xff] %vm3116, %v3059
        %3137 = vst.msk [vmem:[%s325 + $0xa0] sm:$0xff] %vm3116, %v3061
        %3138 = vst.msk [vmem:[%s325 + $0xa8] sm:$0xff] %vm3116, %v3063
        %3139 = vst.msk [vmem:[%s325 + $0xb0] sm:$0xff] %vm3116, %v3065
        %3140 = vst.msk [vmem:[%s325 + $0xb8] sm:$0xff] %vm3116, %v3067
        %3141 = vst.msk [vmem:[%s325 + $0xc0] sm:$0xff] %vm3116, %v3069
        %3142 = vst.msk [vmem:[%s325 + $0xc8] sm:$0xff] %vm3116, %v3071
        %3143 = vst.msk [vmem:[%s325 + $0xd0] sm:$0xff] %vm3116, %v3073
        %3144 = vst.msk [vmem:[%s325 + $0xd8] sm:$0xff] %vm3116, %v3075
        %3145 = vst.msk [vmem:[%s325 + $0xe0] sm:$0xff] %vm3116, %v3077
        %3146 = vst.msk [vmem:[%s325 + $0xe8] sm:$0xff] %vm3116, %v3079
        %3147 = vst.msk [vmem:[%s325 + $0xf0] sm:$0xff] %vm3116, %v3081
        %3148 = vst.msk [vmem:[%s325 + $0xf8] sm:$0xff] %vm3116, %v3083
        %3149 = vst.msk [vmem:[#allocation4] sm:$0xff] %vm371, 0.0
        %3150 = vst.msk [vmem:[#allocation4 + $0x8] sm:$0xff] %vm371, 0.0
        %vm3151 = vcmask 27648
        %3152 = vst.msk [vmem:[#allocation4 + $0x10] sm:$0xf] %vm3151, 0.0
        %3153 = vst.msk [vmem:[#allocation4 + $0x18] sm:$0xff] %vm371, 0.0
        %3154 = vst.msk [vmem:[#allocation4 + $0x20] sm:$0xff] %vm371, 0.0
        %3155 = vst.msk [vmem:[#allocation4 + $0x28] sm:$0xf] %vm3151, 0.0
        %3156 = vst.msk [vmem:[#allocation4 + $0x30] sm:$0xff] %vm371, 0.0
        %3157 = vst.msk [vmem:[#allocation4 + $0x38] sm:$0xff] %vm371, 0.0
        %3158 = vst.msk [vmem:[#allocation4 + $0x40] sm:$0xf] %vm3151, 0.0
        %3159 = vst.msk [vmem:[#allocation4 + $0x48] sm:$0xff] %vm371, 0.0
        %3160 = vst.msk [vmem:[#allocation4 + $0x50] sm:$0xff] %vm371, 0.0
        %3161 = vst.msk [vmem:[#allocation4 + $0x58] sm:$0xf] %vm3151, 0.0
        %3162 = vst.msk [vmem:[#allocation4 + $0x60] sm:$0xff] %vm371, 0.0
        %3163 = vst.msk [vmem:[#allocation4 + $0x68] sm:$0xff] %vm371, 0.0
        %3164 = vst.msk [vmem:[#allocation4 + $0x70] sm:$0xf] %vm3151, 0.0
        %3165 = vst.msk [vmem:[#allocation4 + $0x78] sm:$0xff] %vm371, 0.0
        %3166 = vst.msk [vmem:[#allocation4 + $0x80] sm:$0xff] %vm371, 0.0
        %3167 = vst.msk [vmem:[#allocation4 + $0x88] sm:$0xf] %vm3151, 0.0
        %3168 = vst.msk [vmem:[#allocation4 + $0x90] sm:$0xff] %vm371, 0.0
        %3169 = vst.msk [vmem:[#allocation4 + $0x98] sm:$0xff] %vm371, 0.0
        %3170 = vst.msk [vmem:[#allocation4 + $0xa0] sm:$0xf] %vm3151, 0.0
        %3171 = vst.msk [vmem:[#allocation4 + $0xa8] sm:$0xff] %vm371, 0.0
        %3172 = vst.msk [vmem:[#allocation4 + $0xb0] sm:$0xff] %vm371, 0.0
        %3173 = vst.msk [vmem:[#allocation4 + $0xb8] sm:$0xf] %vm3151, 0.0
        %3174 = vst.msk [vmem:[#allocation4 + $0xc0] sm:$0xff] %vm371, 0.0
        %3175 = vst.msk [vmem:[#allocation4 + $0xc8] sm:$0xff] %vm371, 0.0
        %3176 = vst.msk [vmem:[#allocation4 + $0xd0] sm:$0xf] %vm3151, 0.0
        %3177 = vst.msk [vmem:[#allocation4 + $0xd8] sm:$0xff] %vm371, 0.0
        %3178 = vst.msk [vmem:[#allocation4 + $0xe0] sm:$0xff] %vm371, 0.0
        %3179 = vst.msk [vmem:[#allocation4 + $0xe8] sm:$0xf] %vm3151, 0.0
        %3180 = vst.msk [vmem:[#allocation4 + $0xf0] sm:$0xff] %vm371, 0.0
        %3181 = vst.msk [vmem:[#allocation4 + $0xf8] sm:$0xff] %vm371, 0.0
        %3182 = vst.msk [vmem:[#allocation4 + $0x100] sm:$0xf] %vm3151, 0.0
        %3183 = vst.msk [vmem:[#allocation4 + $0x108] sm:$0xff] %vm371, 0.0
        %3184 = vst.msk [vmem:[#allocation4 + $0x110] sm:$0xff] %vm371, 0.0
        %3185 = vst.msk [vmem:[#allocation4 + $0x118] sm:$0xf] %vm3151, 0.0
        %3186 = vst.msk [vmem:[#allocation4 + $0x120] sm:$0xff] %vm371, 0.0
        %3187 = vst.msk [vmem:[#allocation4 + $0x128] sm:$0xff] %vm371, 0.0
        %3188 = vst.msk [vmem:[#allocation4 + $0x130] sm:$0xf] %vm3151, 0.0
        %3189 = vst.msk [vmem:[#allocation4 + $0x138] sm:$0xff] %vm371, 0.0
        %3190 = vst.msk [vmem:[#allocation4 + $0x140] sm:$0xff] %vm371, 0.0
        %3191 = vst.msk [vmem:[#allocation4 + $0x148] sm:$0xf] %vm3151, 0.0
        %3192 = vst.msk [vmem:[#allocation4 + $0x150] sm:$0xff] %vm371, 0.0
        %3193 = vst.msk [vmem:[#allocation4 + $0x158] sm:$0xff] %vm371, 0.0
        %3194 = vst.msk [vmem:[#allocation4 + $0x160] sm:$0xf] %vm3151, 0.0
        %3195 = vst.msk [vmem:[#allocation4 + $0x168] sm:$0xff] %vm371, 0.0
        %3196 = vst.msk [vmem:[#allocation4 + $0x170] sm:$0xff] %vm371, 0.0
        %3197 = vst.msk [vmem:[#allocation4 + $0x178] sm:$0xf] %vm3151, 0.0
        %3198 = vst.msk [vmem:[#allocation4 + $0x180] sm:$0xff] %vm371, 0.0
        %3199 = vst.msk [vmem:[#allocation4 + $0x188] sm:$0xff] %vm371, 0.0
        %3200 = vst.msk [vmem:[#allocation4 + $0x190] sm:$0xf] %vm3151, 0.0
        %3201 = vst.msk [vmem:[#allocation4 + $0x198] sm:$0xff] %vm371, 0.0
        %3202 = vst.msk [vmem:[#allocation4 + $0x1a0] sm:$0xff] %vm371, 0.0
        %3203 = vst.msk [vmem:[#allocation4 + $0x1a8] sm:$0xf] %vm3151, 0.0
        %3204 = vst.msk [vmem:[#allocation4 + $0x1b0] sm:$0xff] %vm371, 0.0
        %3205 = vst.msk [vmem:[#allocation4 + $0x1b8] sm:$0xff] %vm371, 0.0
        %3206 = vst.msk [vmem:[#allocation4 + $0x1c0] sm:$0xf] %vm3151, 0.0
        %3207 = vst.msk [vmem:[#allocation4 + $0x1c8] sm:$0xff] %vm371, 0.0
        %3208 = vst.msk [vmem:[#allocation4 + $0x1d0] sm:$0xff] %vm371, 0.0
        %3209 = vst.msk [vmem:[#allocation4 + $0x1d8] sm:$0xf] %vm3151, 0.0
        %3210 = vrot.lane.b32.xlu0 %v697, 116
        %v3211 = vpop.permute.xlu0 %3210
        %3212 = vrot.lane.b32.xlu0 %v698, 116
        %v3213 = vpop.permute.xlu0 %3212
        %3214 = vrot.lane.b32.xlu0 %v699, 116
        %v3215 = vpop.permute.xlu0 %3214
        %3216 = vrot.lane.b32.xlu0 %v700, 116
        %v3217 = vpop.permute.xlu0 %3216
        %3218 = vrot.lane.b32.xlu0 %v701, 116
        %v3219 = vpop.permute.xlu0 %3218
        %3220 = vrot.lane.b32.xlu0 %v702, 116
        %v3221 = vpop.permute.xlu0 %3220
        %3222 = vrot.lane.b32.xlu0 %v703, 116
        %v3223 = vpop.permute.xlu0 %3222
        %3224 = vrot.lane.b32.xlu0 %v704, 116
        %v3225 = vpop.permute.xlu0 %3224
        %3226 = vrot.lane.b32.xlu0 %v705, 116
        %v3227 = vpop.permute.xlu0 %3226
        %3228 = vrot.lane.b32.xlu0 %v706, 116
        %v3229 = vpop.permute.xlu0 %3228
        %3230 = vrot.lane.b32.xlu0 %v707, 116
        %v3231 = vpop.permute.xlu0 %3230
        %3232 = vrot.lane.b32.xlu0 %v708, 116
        %v3233 = vpop.permute.xlu0 %3232
        %3234 = vrot.lane.b32.xlu0 %v709, 116
        %v3235 = vpop.permute.xlu0 %3234
        %3236 = vrot.lane.b32.xlu0 %v710, 116
        %v3237 = vpop.permute.xlu0 %3236
        %3238 = vrot.lane.b32.xlu0 %v711, 116
        %v3239 = vpop.permute.xlu0 %3238
        %3240 = vrot.lane.b32.xlu0 %v712, 116
        %v3241 = vpop.permute.xlu0 %3240
        %3242 = vrot.lane.b32.xlu0 %v713, 116
        %v3243 = vpop.permute.xlu0 %3242
        %3244 = vrot.lane.b32.xlu0 %v714, 116
        %v3245 = vpop.permute.xlu0 %3244
        %3246 = vrot.lane.b32.xlu0 %v715, 116
        %v3247 = vpop.permute.xlu0 %3246
        %3248 = vrot.lane.b32.xlu0 %v716, 116
        %v3249 = vpop.permute.xlu0 %3248
        %3250 = vrot.lane.b32.xlu0 %v717, 116
        %v3251 = vpop.permute.xlu0 %3250
        %3252 = vrot.lane.b32.xlu0 %v718, 116
        %v3253 = vpop.permute.xlu0 %3252
        %3254 = vrot.lane.b32.xlu0 %v719, 116
        %v3255 = vpop.permute.xlu0 %3254
        %3256 = vrot.lane.b32.xlu0 %v720, 116
        %v3257 = vpop.permute.xlu0 %3256
        %3258 = vrot.lane.b32.xlu0 %v721, 116
        %v3259 = vpop.permute.xlu0 %3258
        %3260 = vrot.lane.b32.xlu0 %v722, 116
        %v3261 = vpop.permute.xlu0 %3260
        %3262 = vrot.lane.b32.xlu0 %v723, 116
        %v3263 = vpop.permute.xlu0 %3262
        %3264 = vrot.lane.b32.xlu0 %v724, 116
        %v3265 = vpop.permute.xlu0 %3264
        %3266 = vrot.lane.b32.xlu0 %v725, 116
        %v3267 = vpop.permute.xlu0 %3266
        %3268 = vrot.lane.b32.xlu0 %v726, 116
        %v3269 = vpop.permute.xlu0 %3268
        %3270 = vrot.lane.b32.xlu0 %v727, 116
        %v3271 = vpop.permute.xlu0 %3270
        %3272 = vrot.lane.b32.xlu0 %v728, 116
        %v3273 = vpop.permute.xlu0 %3272
        %s3306 = scalar_lea.vmem [#allocation4], 48
        %3307 = vst.msk [vmem:[%s3306 + $0x2] sm:$0xff] %vm371, %v3211
        %3308 = vst.msk [vmem:[%s3306 + $0xa] sm:$0xff] %vm371, %v3213
        %3309 = vst.msk [vmem:[%s3306 + $0x1a] sm:$0xff] %vm371, %v3215
        %3310 = vst.msk [vmem:[%s3306 + $0x22] sm:$0xff] %vm371, %v3217
        %3311 = vst.msk [vmem:[%s3306 + $0x32] sm:$0xff] %vm371, %v3219
        %3312 = vst.msk [vmem:[%s3306 + $0x3a] sm:$0xff] %vm371, %v3221
        %3313 = vst.msk [vmem:[%s3306 + $0x4a] sm:$0xff] %vm371, %v3223
        %3314 = vst.msk [vmem:[%s3306 + $0x52] sm:$0xff] %vm371, %v3225
        %3315 = vst.msk [vmem:[%s3306 + $0x62] sm:$0xff] %vm371, %v3227
        %3316 = vst.msk [vmem:[%s3306 + $0x6a] sm:$0xff] %vm371, %v3229
        %3317 = vst.msk [vmem:[%s3306 + $0x7a] sm:$0xff] %vm371, %v3231
        %3318 = vst.msk [vmem:[%s3306 + $0x82] sm:$0xff] %vm371, %v3233
        %3319 = vst.msk [vmem:[%s3306 + $0x92] sm:$0xff] %vm371, %v3235
        %3320 = vst.msk [vmem:[%s3306 + $0x9a] sm:$0xff] %vm371, %v3237
        %3321 = vst.msk [vmem:[%s3306 + $0xaa] sm:$0xff] %vm371, %v3239
        %3322 = vst.msk [vmem:[%s3306 + $0xb2] sm:$0xff] %vm371, %v3241
        %3323 = vst.msk [vmem:[%s3306 + $0xc2] sm:$0xff] %vm371, %v3243
        %3324 = vst.msk [vmem:[%s3306 + $0xca] sm:$0xff] %vm371, %v3245
        %3325 = vst.msk [vmem:[%s3306 + $0xda] sm:$0xff] %vm371, %v3247
        %3326 = vst.msk [vmem:[%s3306 + $0xe2] sm:$0xff] %vm371, %v3249
        %3327 = vst.msk [vmem:[%s3306 + $0xf2] sm:$0xff] %vm371, %v3251
        %3328 = vst.msk [vmem:[%s3306 + $0xfa] sm:$0xff] %vm371, %v3253
        %3329 = vst.msk [vmem:[%s3306 + $0x10a] sm:$0xff] %vm371, %v3255
        %3330 = vst.msk [vmem:[%s3306 + $0x112] sm:$0xff] %vm371, %v3257
        %3331 = vst.msk [vmem:[%s3306 + $0x122] sm:$0xff] %vm371, %v3259
        %3332 = vst.msk [vmem:[%s3306 + $0x12a] sm:$0xff] %vm371, %v3261
        %3333 = vst.msk [vmem:[%s3306 + $0x13a] sm:$0xff] %vm371, %v3263
        %3334 = vst.msk [vmem:[%s3306 + $0x142] sm:$0xff] %vm371, %v3265
        %3335 = vst.msk [vmem:[%s3306 + $0x152] sm:$0xff] %vm371, %v3267
        %3336 = vst.msk [vmem:[%s3306 + $0x15a] sm:$0xff] %vm371, %v3269
        %3337 = vst.msk [vmem:[%s3306 + $0x16a] sm:$0xff] %vm371, %v3271
        %3338 = vst.msk [vmem:[%s3306 + $0x172] sm:$0xff] %vm371, %v3273
        %v3339 = vld [vmem:[#allocation4] sm:$0xff]
        %v3340 = vld [vmem:[#allocation4 + $0x8] sm:$0xff]
        %v3341 = vld [vmem:[#allocation4 + $0x18] sm:$0xff]
        %v3342 = vld [vmem:[#allocation4 + $0x20] sm:$0xff]
        %v3343 = vld [vmem:[#allocation4 + $0x30] sm:$0xff]
        %v3344 = vld [vmem:[#allocation4 + $0x38] sm:$0xff]
        %v3345 = vld [vmem:[#allocation4 + $0x48] sm:$0xff]
        %v3346 = vld [vmem:[#allocation4 + $0x50] sm:$0xff]
        %v3347 = vld [vmem:[#allocation4 + $0x60] sm:$0xff]
        %v3348 = vld [vmem:[#allocation4 + $0x68] sm:$0xff]
        %v3349 = vld [vmem:[#allocation4 + $0x78] sm:$0xff]
        %v3350 = vld [vmem:[#allocation4 + $0x80] sm:$0xff]
        %v3351 = vld [vmem:[#allocation4 + $0x90] sm:$0xff]
        %v3352 = vld [vmem:[#allocation4 + $0x98] sm:$0xff]
        %v3353 = vld [vmem:[#allocation4 + $0xa8] sm:$0xff]
        %v3354 = vld [vmem:[#allocation4 + $0xb0] sm:$0xff]
        %v3355 = vld [vmem:[#allocation4 + $0xc0] sm:$0xff]
        %v3356 = vld [vmem:[#allocation4 + $0xc8] sm:$0xff]
        %v3357 = vld [vmem:[#allocation4 + $0xd8] sm:$0xff]
        %v3358 = vld [vmem:[#allocation4 + $0xe0] sm:$0xff]
        %v3359 = vld [vmem:[#allocation4 + $0xf0] sm:$0xff]
        %v3360 = vld [vmem:[#allocation4 + $0xf8] sm:$0xff]
        %v3361 = vld [vmem:[#allocation4 + $0x108] sm:$0xff]
        %v3362 = vld [vmem:[#allocation4 + $0x110] sm:$0xff]
        %v3363 = vld [vmem:[#allocation4 + $0x120] sm:$0xff]
        %v3364 = vld [vmem:[#allocation4 + $0x128] sm:$0xff]
        %v3365 = vld [vmem:[#allocation4 + $0x138] sm:$0xff]
        %v3366 = vld [vmem:[#allocation4 + $0x140] sm:$0xff]
        %v3367 = vld [vmem:[#allocation4 + $0x150] sm:$0xff]
        %v3368 = vld [vmem:[#allocation4 + $0x158] sm:$0xff]
        %v3369 = vld [vmem:[#allocation4 + $0x168] sm:$0xff]
        %v3370 = vld [vmem:[#allocation4 + $0x170] sm:$0xff]
        %3371 = vst.msk [vmem:[#allocation5] sm:$0xff] %vm371, %v3339
        %3372 = vst.msk [vmem:[#allocation5 + $0x8] sm:$0xff] %vm371, %v3340
        %3373 = vst.msk [vmem:[#allocation5 + $0x10] sm:$0xff] %vm371, %v3341
        %3374 = vst.msk [vmem:[#allocation5 + $0x18] sm:$0xff] %vm371, %v3342
        %3375 = vst.msk [vmem:[#allocation5 + $0x20] sm:$0xff] %vm371, %v3343
        %3376 = vst.msk [vmem:[#allocation5 + $0x28] sm:$0xff] %vm371, %v3344
        %3377 = vst.msk [vmem:[#allocation5 + $0x30] sm:$0xff] %vm371, %v3345
        %3378 = vst.msk [vmem:[#allocation5 + $0x38] sm:$0xff] %vm371, %v3346
        %3379 = vst.msk [vmem:[#allocation5 + $0x40] sm:$0xff] %vm371, %v3347
        %3380 = vst.msk [vmem:[#allocation5 + $0x48] sm:$0xff] %vm371, %v3348
        %3381 = vst.msk [vmem:[#allocation5 + $0x50] sm:$0xff] %vm371, %v3349
        %3382 = vst.msk [vmem:[#allocation5 + $0x58] sm:$0xff] %vm371, %v3350
        %3383 = vst.msk [vmem:[#allocation5 + $0x60] sm:$0xff] %vm371, %v3351
        %3384 = vst.msk [vmem:[#allocation5 + $0x68] sm:$0xff] %vm371, %v3352
        %3385 = vst.msk [vmem:[#allocation5 + $0x70] sm:$0xff] %vm371, %v3353
        %3386 = vst.msk [vmem:[#allocation5 + $0x78] sm:$0xff] %vm371, %v3354
        %3387 = vst.msk [vmem:[#allocation5 + $0x80] sm:$0xff] %vm371, %v3355
        %3388 = vst.msk [vmem:[#allocation5 + $0x88] sm:$0xff] %vm371, %v3356
        %3389 = vst.msk [vmem:[#allocation5 + $0x90] sm:$0xff] %vm371, %v3357
        %3390 = vst.msk [vmem:[#allocation5 + $0x98] sm:$0xff] %vm371, %v3358
        %3391 = vst.msk [vmem:[#allocation5 + $0xa0] sm:$0xff] %vm371, %v3359
        %3392 = vst.msk [vmem:[#allocation5 + $0xa8] sm:$0xff] %vm371, %v3360
        %3393 = vst.msk [vmem:[#allocation5 + $0xb0] sm:$0xff] %vm371, %v3361
        %3394 = vst.msk [vmem:[#allocation5 + $0xb8] sm:$0xff] %vm371, %v3362
        %3395 = vst.msk [vmem:[#allocation5 + $0xc0] sm:$0xff] %vm371, %v3363
        %3396 = vst.msk [vmem:[#allocation5 + $0xc8] sm:$0xff] %vm371, %v3364
        %3397 = vst.msk [vmem:[#allocation5 + $0xd0] sm:$0xff] %vm371, %v3365
        %3398 = vst.msk [vmem:[#allocation5 + $0xd8] sm:$0xff] %vm371, %v3366
        %3399 = vst.msk [vmem:[#allocation5 + $0xe0] sm:$0xff] %vm371, %v3367
        %3400 = vst.msk [vmem:[#allocation5 + $0xe8] sm:$0xff] %vm371, %v3368
        %3401 = vst.msk [vmem:[#allocation5 + $0xf0] sm:$0xff] %vm371, %v3369
        %3402 = vst.msk [vmem:[#allocation5 + $0xf8] sm:$0xff] %vm371, %v3370
        %v3403 = vld [vmem:[#allocation4 + $0x1] sm:$0xff]
        %v3404 = vld [vmem:[#allocation4 + $0x9] sm:$0xff]
        %v3405 = vld [vmem:[#allocation4 + $0x19] sm:$0xff]
        %v3406 = vld [vmem:[#allocation4 + $0x21] sm:$0xff]
        %v3407 = vld [vmem:[#allocation4 + $0x31] sm:$0xff]
        %v3408 = vld [vmem:[#allocation4 + $0x39] sm:$0xff]
        %v3409 = vld [vmem:[#allocation4 + $0x49] sm:$0xff]
        %v3410 = vld [vmem:[#allocation4 + $0x51] sm:$0xff]
        %v3411 = vld [vmem:[#allocation4 + $0x61] sm:$0xff]
        %v3412 = vld [vmem:[#allocation4 + $0x69] sm:$0xff]
        %v3413 = vld [vmem:[#allocation4 + $0x79] sm:$0xff]
        %v3414 = vld [vmem:[#allocation4 + $0x81] sm:$0xff]
        %v3415 = vld [vmem:[#allocation4 + $0x91] sm:$0xff]
        %v3416 = vld [vmem:[#allocation4 + $0x99] sm:$0xff]
        %v3417 = vld [vmem:[#allocation4 + $0xa9] sm:$0xff]
        %v3418 = vld [vmem:[#allocation4 + $0xb1] sm:$0xff]
        %v3419 = vld [vmem:[#allocation4 + $0xc1] sm:$0xff]
        %v3420 = vld [vmem:[#allocation4 + $0xc9] sm:$0xff]
        %v3421 = vld [vmem:[#allocation4 + $0xd9] sm:$0xff]
        %v3422 = vld [vmem:[#allocation4 + $0xe1] sm:$0xff]
        %v3423 = vld [vmem:[#allocation4 + $0xf1] sm:$0xff]
        %v3424 = vld [vmem:[#allocation4 + $0xf9] sm:$0xff]
        %v3425 = vld [vmem:[#allocation4 + $0x109] sm:$0xff]
        %v3426 = vld [vmem:[#allocation4 + $0x111] sm:$0xff]
        %v3427 = vld [vmem:[#allocation4 + $0x121] sm:$0xff]
        %v3428 = vld [vmem:[#allocation4 + $0x129] sm:$0xff]
        %v3429 = vld [vmem:[#allocation4 + $0x139] sm:$0xff]
        %v3430 = vld [vmem:[#allocation4 + $0x141] sm:$0xff]
        %v3431 = vld [vmem:[#allocation4 + $0x151] sm:$0xff]
        %v3432 = vld [vmem:[#allocation4 + $0x159] sm:$0xff]
        %v3433 = vld [vmem:[#allocation4 + $0x169] sm:$0xff]
        %v3434 = vld [vmem:[#allocation4 + $0x171] sm:$0xff]
        %3467 = vrot.lane.b32.xlu0 %v3403, 4
        %v3468 = vpop.permute.xlu0 %3467
        %3469 = vrot.lane.b32.xlu0 %v3404, 4
        %v3470 = vpop.permute.xlu0 %3469
        %3471 = vrot.lane.b32.xlu0 %v3405, 4
        %v3472 = vpop.permute.xlu0 %3471
        %3473 = vrot.lane.b32.xlu0 %v3406, 4
        %v3474 = vpop.permute.xlu0 %3473
        %3475 = vrot.lane.b32.xlu0 %v3407, 4
        %v3476 = vpop.permute.xlu0 %3475
        %3477 = vrot.lane.b32.xlu0 %v3408, 4
        %v3478 = vpop.permute.xlu0 %3477
        %3479 = vrot.lane.b32.xlu0 %v3409, 4
        %v3480 = vpop.permute.xlu0 %3479
        %3481 = vrot.lane.b32.xlu0 %v3410, 4
        %v3482 = vpop.permute.xlu0 %3481
        %3483 = vrot.lane.b32.xlu0 %v3411, 4
        %v3484 = vpop.permute.xlu0 %3483
        %3485 = vrot.lane.b32.xlu0 %v3412, 4
        %v3486 = vpop.permute.xlu0 %3485
        %3487 = vrot.lane.b32.xlu0 %v3413, 4
        %v3488 = vpop.permute.xlu0 %3487
        %3489 = vrot.lane.b32.xlu0 %v3414, 4
        %v3490 = vpop.permute.xlu0 %3489
        %3491 = vrot.lane.b32.xlu0 %v3415, 4
        %v3492 = vpop.permute.xlu0 %3491
        %3493 = vrot.lane.b32.xlu0 %v3416, 4
        %v3494 = vpop.permute.xlu0 %3493
        %3495 = vrot.lane.b32.xlu0 %v3417, 4
        %v3496 = vpop.permute.xlu0 %3495
        %3497 = vrot.lane.b32.xlu0 %v3418, 4
        %v3498 = vpop.permute.xlu0 %3497
        %3499 = vrot.lane.b32.xlu0 %v3419, 4
        %v3500 = vpop.permute.xlu0 %3499
        %3501 = vrot.lane.b32.xlu0 %v3420, 4
        %v3502 = vpop.permute.xlu0 %3501
        %3503 = vrot.lane.b32.xlu0 %v3421, 4
        %v3504 = vpop.permute.xlu0 %3503
        %3505 = vrot.lane.b32.xlu0 %v3422, 4
        %v3506 = vpop.permute.xlu0 %3505
        %3507 = vrot.lane.b32.xlu0 %v3423, 4
        %v3508 = vpop.permute.xlu0 %3507
        %3509 = vrot.lane.b32.xlu0 %v3424, 4
        %v3510 = vpop.permute.xlu0 %3509
        %3511 = vrot.lane.b32.xlu0 %v3425, 4
        %v3512 = vpop.permute.xlu0 %3511
        %3513 = vrot.lane.b32.xlu0 %v3426, 4
        %v3514 = vpop.permute.xlu0 %3513
        %3515 = vrot.lane.b32.xlu0 %v3427, 4
        %v3516 = vpop.permute.xlu0 %3515
        %3517 = vrot.lane.b32.xlu0 %v3428, 4
        %v3518 = vpop.permute.xlu0 %3517
        %3519 = vrot.lane.b32.xlu0 %v3429, 4
        %v3520 = vpop.permute.xlu0 %3519
        %3521 = vrot.lane.b32.xlu0 %v3430, 4
        %v3522 = vpop.permute.xlu0 %3521
        %3523 = vrot.lane.b32.xlu0 %v3431, 4
        %v3524 = vpop.permute.xlu0 %3523
        %3525 = vrot.lane.b32.xlu0 %v3432, 4
        %v3526 = vpop.permute.xlu0 %3525
        %3527 = vrot.lane.b32.xlu0 %v3433, 4
        %v3528 = vpop.permute.xlu0 %3527
        %3529 = vrot.lane.b32.xlu0 %v3434, 4
        %v3530 = vpop.permute.xlu0 %3529
        %3563 = vst.msk [vmem:[#allocation5] sm:$0xff] %vm1202, %v3468
        %3564 = vst.msk [vmem:[#allocation5 + $0x8] sm:$0xff] %vm1202, %v3470
        %3565 = vst.msk [vmem:[#allocation5 + $0x10] sm:$0xff] %vm1202, %v3472
        %3566 = vst.msk [vmem:[#allocation5 + $0x18] sm:$0xff] %vm1202, %v3474
        %3567 = vst.msk [vmem:[#allocation5 + $0x20] sm:$0xff] %vm1202, %v3476
        %3568 = vst.msk [vmem:[#allocation5 + $0x28] sm:$0xff] %vm1202, %v3478
        %3569 = vst.msk [vmem:[#allocation5 + $0x30] sm:$0xff] %vm1202, %v3480
        %3570 = vst.msk [vmem:[#allocation5 + $0x38] sm:$0xff] %vm1202, %v3482
        %3571 = vst.msk [vmem:[#allocation5 + $0x40] sm:$0xff] %vm1202, %v3484
        %3572 = vst.msk [vmem:[#allocation5 + $0x48] sm:$0xff] %vm1202, %v3486
        %3573 = vst.msk [vmem:[#allocation5 + $0x50] sm:$0xff] %vm1202, %v3488
        %3574 = vst.msk [vmem:[#allocation5 + $0x58] sm:$0xff] %vm1202, %v3490
        %3575 = vst.msk [vmem:[#allocation5 + $0x60] sm:$0xff] %vm1202, %v3492
        %3576 = vst.msk [vmem:[#allocation5 + $0x68] sm:$0xff] %vm1202, %v3494
        %3577 = vst.msk [vmem:[#allocation5 + $0x70] sm:$0xff] %vm1202, %v3496
        %3578 = vst.msk [vmem:[#allocation5 + $0x78] sm:$0xff] %vm1202, %v3498
        %3579 = vst.msk [vmem:[#allocation5 + $0x80] sm:$0xff] %vm1202, %v3500
        %3580 = vst.msk [vmem:[#allocation5 + $0x88] sm:$0xff] %vm1202, %v3502
        %3581 = vst.msk [vmem:[#allocation5 + $0x90] sm:$0xff] %vm1202, %v3504
        %3582 = vst.msk [vmem:[#allocation5 + $0x98] sm:$0xff] %vm1202, %v3506
        %3583 = vst.msk [vmem:[#allocation5 + $0xa0] sm:$0xff] %vm1202, %v3508
        %3584 = vst.msk [vmem:[#allocation5 + $0xa8] sm:$0xff] %vm1202, %v3510
        %3585 = vst.msk [vmem:[#allocation5 + $0xb0] sm:$0xff] %vm1202, %v3512
        %3586 = vst.msk [vmem:[#allocation5 + $0xb8] sm:$0xff] %vm1202, %v3514
        %3587 = vst.msk [vmem:[#allocation5 + $0xc0] sm:$0xff] %vm1202, %v3516
        %3588 = vst.msk [vmem:[#allocation5 + $0xc8] sm:$0xff] %vm1202, %v3518
        %3589 = vst.msk [vmem:[#allocation5 + $0xd0] sm:$0xff] %vm1202, %v3520
        %3590 = vst.msk [vmem:[#allocation5 + $0xd8] sm:$0xff] %vm1202, %v3522
        %3591 = vst.msk [vmem:[#allocation5 + $0xe0] sm:$0xff] %vm1202, %v3524
        %3592 = vst.msk [vmem:[#allocation5 + $0xe8] sm:$0xff] %vm1202, %v3526
        %3593 = vst.msk [vmem:[#allocation5 + $0xf0] sm:$0xff] %vm1202, %v3528
        %3594 = vst.msk [vmem:[#allocation5 + $0xf8] sm:$0xff] %vm1202, %v3530
        %v3595 = vld [vmem:[#allocation4 + $0x2] sm:$0xff]
        %v3596 = vld [vmem:[#allocation4 + $0xa] sm:$0xff]
        %v3597 = vld [vmem:[#allocation4 + $0x1a] sm:$0xff]
        %v3598 = vld [vmem:[#allocation4 + $0x22] sm:$0xff]
        %v3599 = vld [vmem:[#allocation4 + $0x32] sm:$0xff]
        %v3600 = vld [vmem:[#allocation4 + $0x3a] sm:$0xff]
        %v3601 = vld [vmem:[#allocation4 + $0x4a] sm:$0xff]
        %v3602 = vld [vmem:[#allocation4 + $0x52] sm:$0xff]
        %v3603 = vld [vmem:[#allocation4 + $0x62] sm:$0xff]
        %v3604 = vld [vmem:[#allocation4 + $0x6a] sm:$0xff]
        %v3605 = vld [vmem:[#allocation4 + $0x7a] sm:$0xff]
        %v3606 = vld [vmem:[#allocation4 + $0x82] sm:$0xff]
        %v3607 = vld [vmem:[#allocation4 + $0x92] sm:$0xff]
        %v3608 = vld [vmem:[#allocation4 + $0x9a] sm:$0xff]
        %v3609 = vld [vmem:[#allocation4 + $0xaa] sm:$0xff]
        %v3610 = vld [vmem:[#allocation4 + $0xb2] sm:$0xff]
        %v3611 = vld [vmem:[#allocation4 + $0xc2] sm:$0xff]
        %v3612 = vld [vmem:[#allocation4 + $0xca] sm:$0xff]
        %v3613 = vld [vmem:[#allocation4 + $0xda] sm:$0xff]
        %v3614 = vld [vmem:[#allocation4 + $0xe2] sm:$0xff]
        %v3615 = vld [vmem:[#allocation4 + $0xf2] sm:$0xff]
        %v3616 = vld [vmem:[#allocation4 + $0xfa] sm:$0xff]
        %v3617 = vld [vmem:[#allocation4 + $0x10a] sm:$0xff]
        %v3618 = vld [vmem:[#allocation4 + $0x112] sm:$0xff]
        %v3619 = vld [vmem:[#allocation4 + $0x122] sm:$0xff]
        %v3620 = vld [vmem:[#allocation4 + $0x12a] sm:$0xff]
        %v3621 = vld [vmem:[#allocation4 + $0x13a] sm:$0xff]
        %v3622 = vld [vmem:[#allocation4 + $0x142] sm:$0xff]
        %v3623 = vld [vmem:[#allocation4 + $0x152] sm:$0xff]
        %v3624 = vld [vmem:[#allocation4 + $0x15a] sm:$0xff]
        %v3625 = vld [vmem:[#allocation4 + $0x16a] sm:$0xff]
        %v3626 = vld [vmem:[#allocation4 + $0x172] sm:$0xff]
        %3659 = vrot.lane.b32.xlu0 %v3595, 8
        %v3660 = vpop.permute.xlu0 %3659
        %3661 = vrot.lane.b32.xlu0 %v3596, 8
        %v3662 = vpop.permute.xlu0 %3661
        %3663 = vrot.lane.b32.xlu0 %v3597, 8
        %v3664 = vpop.permute.xlu0 %3663
        %3665 = vrot.lane.b32.xlu0 %v3598, 8
        %v3666 = vpop.permute.xlu0 %3665
        %3667 = vrot.lane.b32.xlu0 %v3599, 8
        %v3668 = vpop.permute.xlu0 %3667
        %3669 = vrot.lane.b32.xlu0 %v3600, 8
        %v3670 = vpop.permute.xlu0 %3669
        %3671 = vrot.lane.b32.xlu0 %v3601, 8
        %v3672 = vpop.permute.xlu0 %3671
        %3673 = vrot.lane.b32.xlu0 %v3602, 8
        %v3674 = vpop.permute.xlu0 %3673
        %3675 = vrot.lane.b32.xlu0 %v3603, 8
        %v3676 = vpop.permute.xlu0 %3675
        %3677 = vrot.lane.b32.xlu0 %v3604, 8
        %v3678 = vpop.permute.xlu0 %3677
        %3679 = vrot.lane.b32.xlu0 %v3605, 8
        %v3680 = vpop.permute.xlu0 %3679
        %3681 = vrot.lane.b32.xlu0 %v3606, 8
        %v3682 = vpop.permute.xlu0 %3681
        %3683 = vrot.lane.b32.xlu0 %v3607, 8
        %v3684 = vpop.permute.xlu0 %3683
        %3685 = vrot.lane.b32.xlu0 %v3608, 8
        %v3686 = vpop.permute.xlu0 %3685
        %3687 = vrot.lane.b32.xlu0 %v3609, 8
        %v3688 = vpop.permute.xlu0 %3687
        %3689 = vrot.lane.b32.xlu0 %v3610, 8
        %v3690 = vpop.permute.xlu0 %3689
        %3691 = vrot.lane.b32.xlu0 %v3611, 8
        %v3692 = vpop.permute.xlu0 %3691
        %3693 = vrot.lane.b32.xlu0 %v3612, 8
        %v3694 = vpop.permute.xlu0 %3693
        %3695 = vrot.lane.b32.xlu0 %v3613, 8
        %v3696 = vpop.permute.xlu0 %3695
        %3697 = vrot.lane.b32.xlu0 %v3614, 8
        %v3698 = vpop.permute.xlu0 %3697
        %3699 = vrot.lane.b32.xlu0 %v3615, 8
        %v3700 = vpop.permute.xlu0 %3699
        %3701 = vrot.lane.b32.xlu0 %v3616, 8
        %v3702 = vpop.permute.xlu0 %3701
        %3703 = vrot.lane.b32.xlu0 %v3617, 8
        %v3704 = vpop.permute.xlu0 %3703
        %3705 = vrot.lane.b32.xlu0 %v3618, 8
        %v3706 = vpop.permute.xlu0 %3705
        %3707 = vrot.lane.b32.xlu0 %v3619, 8
        %v3708 = vpop.permute.xlu0 %3707
        %3709 = vrot.lane.b32.xlu0 %v3620, 8
        %v3710 = vpop.permute.xlu0 %3709
        %3711 = vrot.lane.b32.xlu0 %v3621, 8
        %v3712 = vpop.permute.xlu0 %3711
        %3713 = vrot.lane.b32.xlu0 %v3622, 8
        %v3714 = vpop.permute.xlu0 %3713
        %3715 = vrot.lane.b32.xlu0 %v3623, 8
        %v3716 = vpop.permute.xlu0 %3715
        %3717 = vrot.lane.b32.xlu0 %v3624, 8
        %v3718 = vpop.permute.xlu0 %3717
        %3719 = vrot.lane.b32.xlu0 %v3625, 8
        %v3720 = vpop.permute.xlu0 %3719
        %3721 = vrot.lane.b32.xlu0 %v3626, 8
        %v3722 = vpop.permute.xlu0 %3721
        %3755 = vst.msk [vmem:[#allocation5] sm:$0xff] %vm1395, %v3660
        %3756 = vst.msk [vmem:[#allocation5 + $0x8] sm:$0xff] %vm1395, %v3662
        %3757 = vst.msk [vmem:[#allocation5 + $0x10] sm:$0xff] %vm1395, %v3664
        %3758 = vst.msk [vmem:[#allocation5 + $0x18] sm:$0xff] %vm1395, %v3666
        %3759 = vst.msk [vmem:[#allocation5 + $0x20] sm:$0xff] %vm1395, %v3668
        %3760 = vst.msk [vmem:[#allocation5 + $0x28] sm:$0xff] %vm1395, %v3670
        %3761 = vst.msk [vmem:[#allocation5 + $0x30] sm:$0xff] %vm1395, %v3672
        %3762 = vst.msk [vmem:[#allocation5 + $0x38] sm:$0xff] %vm1395, %v3674
        %3763 = vst.msk [vmem:[#allocation5 + $0x40] sm:$0xff] %vm1395, %v3676
        %3764 = vst.msk [vmem:[#allocation5 + $0x48] sm:$0xff] %vm1395, %v3678
        %3765 = vst.msk [vmem:[#allocation5 + $0x50] sm:$0xff] %vm1395, %v3680
        %3766 = vst.msk [vmem:[#allocation5 + $0x58] sm:$0xff] %vm1395, %v3682
        %3767 = vst.msk [vmem:[#allocation5 + $0x60] sm:$0xff] %vm1395, %v3684
        %3768 = vst.msk [vmem:[#allocation5 + $0x68] sm:$0xff] %vm1395, %v3686
        %3769 = vst.msk [vmem:[#allocation5 + $0x70] sm:$0xff] %vm1395, %v3688
        %3770 = vst.msk [vmem:[#allocation5 + $0x78] sm:$0xff] %vm1395, %v3690
        %3771 = vst.msk [vmem:[#allocation5 + $0x80] sm:$0xff] %vm1395, %v3692
        %3772 = vst.msk [vmem:[#allocation5 + $0x88] sm:$0xff] %vm1395, %v3694
        %3773 = vst.msk [vmem:[#allocation5 + $0x90] sm:$0xff] %vm1395, %v3696
        %3774 = vst.msk [vmem:[#allocation5 + $0x98] sm:$0xff] %vm1395, %v3698
        %3775 = vst.msk [vmem:[#allocation5 + $0xa0] sm:$0xff] %vm1395, %v3700
        %3776 = vst.msk [vmem:[#allocation5 + $0xa8] sm:$0xff] %vm1395, %v3702
        %3777 = vst.msk [vmem:[#allocation5 + $0xb0] sm:$0xff] %vm1395, %v3704
        %3778 = vst.msk [vmem:[#allocation5 + $0xb8] sm:$0xff] %vm1395, %v3706
        %3779 = vst.msk [vmem:[#allocation5 + $0xc0] sm:$0xff] %vm1395, %v3708
        %3780 = vst.msk [vmem:[#allocation5 + $0xc8] sm:$0xff] %vm1395, %v3710
        %3781 = vst.msk [vmem:[#allocation5 + $0xd0] sm:$0xff] %vm1395, %v3712
        %3782 = vst.msk [vmem:[#allocation5 + $0xd8] sm:$0xff] %vm1395, %v3714
        %3783 = vst.msk [vmem:[#allocation5 + $0xe0] sm:$0xff] %vm1395, %v3716
        %3784 = vst.msk [vmem:[#allocation5 + $0xe8] sm:$0xff] %vm1395, %v3718
        %3785 = vst.msk [vmem:[#allocation5 + $0xf0] sm:$0xff] %vm1395, %v3720
        %3786 = vst.msk [vmem:[#allocation5 + $0xf8] sm:$0xff] %vm1395, %v3722
        %v3787 = vld [vmem:[#allocation4 + $0x3] sm:$0xff]
        %v3788 = vld [vmem:[#allocation4 + $0xb] sm:$0xff]
        %v3789 = vld [vmem:[#allocation4 + $0x1b] sm:$0xff]
        %v3790 = vld [vmem:[#allocation4 + $0x23] sm:$0xff]
        %v3791 = vld [vmem:[#allocation4 + $0x33] sm:$0xff]
        %v3792 = vld [vmem:[#allocation4 + $0x3b] sm:$0xff]
        %v3793 = vld [vmem:[#allocation4 + $0x4b] sm:$0xff]
        %v3794 = vld [vmem:[#allocation4 + $0x53] sm:$0xff]
        %v3795 = vld [vmem:[#allocation4 + $0x63] sm:$0xff]
        %v3796 = vld [vmem:[#allocation4 + $0x6b] sm:$0xff]
        %v3797 = vld [vmem:[#allocation4 + $0x7b] sm:$0xff]
        %v3798 = vld [vmem:[#allocation4 + $0x83] sm:$0xff]
        %v3799 = vld [vmem:[#allocation4 + $0x93] sm:$0xff]
        %v3800 = vld [vmem:[#allocation4 + $0x9b] sm:$0xff]
        %v3801 = vld [vmem:[#allocation4 + $0xab] sm:$0xff]
        %v3802 = vld [vmem:[#allocation4 + $0xb3] sm:$0xff]
        %v3803 = vld [vmem:[#allocation4 + $0xc3] sm:$0xff]
        %v3804 = vld [vmem:[#allocation4 + $0xcb] sm:$0xff]
        %v3805 = vld [vmem:[#allocation4 + $0xdb] sm:$0xff]
        %v3806 = vld [vmem:[#allocation4 + $0xe3] sm:$0xff]
        %v3807 = vld [vmem:[#allocation4 + $0xf3] sm:$0xff]
        %v3808 = vld [vmem:[#allocation4 + $0xfb] sm:$0xff]
        %v3809 = vld [vmem:[#allocation4 + $0x10b] sm:$0xff]
        %v3810 = vld [vmem:[#allocation4 + $0x113] sm:$0xff]
        %v3811 = vld [vmem:[#allocation4 + $0x123] sm:$0xff]
        %v3812 = vld [vmem:[#allocation4 + $0x12b] sm:$0xff]
        %v3813 = vld [vmem:[#allocation4 + $0x13b] sm:$0xff]
        %v3814 = vld [vmem:[#allocation4 + $0x143] sm:$0xff]
        %v3815 = vld [vmem:[#allocation4 + $0x153] sm:$0xff]
        %v3816 = vld [vmem:[#allocation4 + $0x15b] sm:$0xff]
        %v3817 = vld [vmem:[#allocation4 + $0x16b] sm:$0xff]
        %v3818 = vld [vmem:[#allocation4 + $0x173] sm:$0xff]
        %3851 = vrot.lane.b32.xlu0 %v3787, 12
        %v3852 = vpop.permute.xlu0 %3851
        %3853 = vrot.lane.b32.xlu0 %v3788, 12
        %v3854 = vpop.permute.xlu0 %3853
        %3855 = vrot.lane.b32.xlu0 %v3789, 12
        %v3856 = vpop.permute.xlu0 %3855
        %3857 = vrot.lane.b32.xlu0 %v3790, 12
        %v3858 = vpop.permute.xlu0 %3857
        %3859 = vrot.lane.b32.xlu0 %v3791, 12
        %v3860 = vpop.permute.xlu0 %3859
        %3861 = vrot.lane.b32.xlu0 %v3792, 12
        %v3862 = vpop.permute.xlu0 %3861
        %3863 = vrot.lane.b32.xlu0 %v3793, 12
        %v3864 = vpop.permute.xlu0 %3863
        %3865 = vrot.lane.b32.xlu0 %v3794, 12
        %v3866 = vpop.permute.xlu0 %3865
        %3867 = vrot.lane.b32.xlu0 %v3795, 12
        %v3868 = vpop.permute.xlu0 %3867
        %3869 = vrot.lane.b32.xlu0 %v3796, 12
        %v3870 = vpop.permute.xlu0 %3869
        %3871 = vrot.lane.b32.xlu0 %v3797, 12
        %v3872 = vpop.permute.xlu0 %3871
        %3873 = vrot.lane.b32.xlu0 %v3798, 12
        %v3874 = vpop.permute.xlu0 %3873
        %3875 = vrot.lane.b32.xlu0 %v3799, 12
        %v3876 = vpop.permute.xlu0 %3875
        %3877 = vrot.lane.b32.xlu0 %v3800, 12
        %v3878 = vpop.permute.xlu0 %3877
        %3879 = vrot.lane.b32.xlu0 %v3801, 12
        %v3880 = vpop.permute.xlu0 %3879
        %3881 = vrot.lane.b32.xlu0 %v3802, 12
        %v3882 = vpop.permute.xlu0 %3881
        %3883 = vrot.lane.b32.xlu0 %v3803, 12
        %v3884 = vpop.permute.xlu0 %3883
        %3885 = vrot.lane.b32.xlu0 %v3804, 12
        %v3886 = vpop.permute.xlu0 %3885
        %3887 = vrot.lane.b32.xlu0 %v3805, 12
        %v3888 = vpop.permute.xlu0 %3887
        %3889 = vrot.lane.b32.xlu0 %v3806, 12
        %v3890 = vpop.permute.xlu0 %3889
        %3891 = vrot.lane.b32.xlu0 %v3807, 12
        %v3892 = vpop.permute.xlu0 %3891
        %3893 = vrot.lane.b32.xlu0 %v3808, 12
        %v3894 = vpop.permute.xlu0 %3893
        %3895 = vrot.lane.b32.xlu0 %v3809, 12
        %v3896 = vpop.permute.xlu0 %3895
        %3897 = vrot.lane.b32.xlu0 %v3810, 12
        %v3898 = vpop.permute.xlu0 %3897
        %3899 = vrot.lane.b32.xlu0 %v3811, 12
        %v3900 = vpop.permute.xlu0 %3899
        %3901 = vrot.lane.b32.xlu0 %v3812, 12
        %v3902 = vpop.permute.xlu0 %3901
        %3903 = vrot.lane.b32.xlu0 %v3813, 12
        %v3904 = vpop.permute.xlu0 %3903
        %3905 = vrot.lane.b32.xlu0 %v3814, 12
        %v3906 = vpop.permute.xlu0 %3905
        %3907 = vrot.lane.b32.xlu0 %v3815, 12
        %v3908 = vpop.permute.xlu0 %3907
        %3909 = vrot.lane.b32.xlu0 %v3816, 12
        %v3910 = vpop.permute.xlu0 %3909
        %3911 = vrot.lane.b32.xlu0 %v3817, 12
        %v3912 = vpop.permute.xlu0 %3911
        %3913 = vrot.lane.b32.xlu0 %v3818, 12
        %v3914 = vpop.permute.xlu0 %3913
        %3947 = vst.msk [vmem:[#allocation5] sm:$0xff] %vm1588, %v3852
        %3948 = vst.msk [vmem:[#allocation5 + $0x8] sm:$0xff] %vm1588, %v3854
        %3949 = vst.msk [vmem:[#allocation5 + $0x10] sm:$0xff] %vm1588, %v3856
        %3950 = vst.msk [vmem:[#allocation5 + $0x18] sm:$0xff] %vm1588, %v3858
        %3951 = vst.msk [vmem:[#allocation5 + $0x20] sm:$0xff] %vm1588, %v3860
        %3952 = vst.msk [vmem:[#allocation5 + $0x28] sm:$0xff] %vm1588, %v3862
        %3953 = vst.msk [vmem:[#allocation5 + $0x30] sm:$0xff] %vm1588, %v3864
        %3954 = vst.msk [vmem:[#allocation5 + $0x38] sm:$0xff] %vm1588, %v3866
        %3955 = vst.msk [vmem:[#allocation5 + $0x40] sm:$0xff] %vm1588, %v3868
        %3956 = vst.msk [vmem:[#allocation5 + $0x48] sm:$0xff] %vm1588, %v3870
        %3957 = vst.msk [vmem:[#allocation5 + $0x50] sm:$0xff] %vm1588, %v3872
        %3958 = vst.msk [vmem:[#allocation5 + $0x58] sm:$0xff] %vm1588, %v3874
        %3959 = vst.msk [vmem:[#allocation5 + $0x60] sm:$0xff] %vm1588, %v3876
        %3960 = vst.msk [vmem:[#allocation5 + $0x68] sm:$0xff] %vm1588, %v3878
        %3961 = vst.msk [vmem:[#allocation5 + $0x70] sm:$0xff] %vm1588, %v3880
        %3962 = vst.msk [vmem:[#allocation5 + $0x78] sm:$0xff] %vm1588, %v3882
        %3963 = vst.msk [vmem:[#allocation5 + $0x80] sm:$0xff] %vm1588, %v3884
        %3964 = vst.msk [vmem:[#allocation5 + $0x88] sm:$0xff] %vm1588, %v3886
        %3965 = vst.msk [vmem:[#allocation5 + $0x90] sm:$0xff] %vm1588, %v3888
        %3966 = vst.msk [vmem:[#allocation5 + $0x98] sm:$0xff] %vm1588, %v3890
        %3967 = vst.msk [vmem:[#allocation5 + $0xa0] sm:$0xff] %vm1588, %v3892
        %3968 = vst.msk [vmem:[#allocation5 + $0xa8] sm:$0xff] %vm1588, %v3894
        %3969 = vst.msk [vmem:[#allocation5 + $0xb0] sm:$0xff] %vm1588, %v3896
        %3970 = vst.msk [vmem:[#allocation5 + $0xb8] sm:$0xff] %vm1588, %v3898
        %3971 = vst.msk [vmem:[#allocation5 + $0xc0] sm:$0xff] %vm1588, %v3900
        %3972 = vst.msk [vmem:[#allocation5 + $0xc8] sm:$0xff] %vm1588, %v3902
        %3973 = vst.msk [vmem:[#allocation5 + $0xd0] sm:$0xff] %vm1588, %v3904
        %3974 = vst.msk [vmem:[#allocation5 + $0xd8] sm:$0xff] %vm1588, %v3906
        %3975 = vst.msk [vmem:[#allocation5 + $0xe0] sm:$0xff] %vm1588, %v3908
        %3976 = vst.msk [vmem:[#allocation5 + $0xe8] sm:$0xff] %vm1588, %v3910
        %3977 = vst.msk [vmem:[#allocation5 + $0xf0] sm:$0xff] %vm1588, %v3912
        %3978 = vst.msk [vmem:[#allocation5 + $0xf8] sm:$0xff] %vm1588, %v3914
        %v3979 = vld [vmem:[#allocation4 + $0x4] sm:$0xff]
        %v3980 = vld [vmem:[#allocation4 + $0xc] sm:$0xff]
        %v3981 = vld [vmem:[#allocation4 + $0x1c] sm:$0xff]
        %v3982 = vld [vmem:[#allocation4 + $0x24] sm:$0xff]
        %v3983 = vld [vmem:[#allocation4 + $0x34] sm:$0xff]
        %v3984 = vld [vmem:[#allocation4 + $0x3c] sm:$0xff]
        %v3985 = vld [vmem:[#allocation4 + $0x4c] sm:$0xff]
        %v3986 = vld [vmem:[#allocation4 + $0x54] sm:$0xff]
        %v3987 = vld [vmem:[#allocation4 + $0x64] sm:$0xff]
        %v3988 = vld [vmem:[#allocation4 + $0x6c] sm:$0xff]
        %v3989 = vld [vmem:[#allocation4 + $0x7c] sm:$0xff]
        %v3990 = vld [vmem:[#allocation4 + $0x84] sm:$0xff]
        %v3991 = vld [vmem:[#allocation4 + $0x94] sm:$0xff]
        %v3992 = vld [vmem:[#allocation4 + $0x9c] sm:$0xff]
        %v3993 = vld [vmem:[#allocation4 + $0xac] sm:$0xff]
        %v3994 = vld [vmem:[#allocation4 + $0xb4] sm:$0xff]
        %v3995 = vld [vmem:[#allocation4 + $0xc4] sm:$0xff]
        %v3996 = vld [vmem:[#allocation4 + $0xcc] sm:$0xff]
        %v3997 = vld [vmem:[#allocation4 + $0xdc] sm:$0xff]
        %v3998 = vld [vmem:[#allocation4 + $0xe4] sm:$0xff]
        %v3999 = vld [vmem:[#allocation4 + $0xf4] sm:$0xff]
        %v4000 = vld [vmem:[#allocation4 + $0xfc] sm:$0xff]
        %v4001 = vld [vmem:[#allocation4 + $0x10c] sm:$0xff]
        %v4002 = vld [vmem:[#allocation4 + $0x114] sm:$0xff]
        %v4003 = vld [vmem:[#allocation4 + $0x124] sm:$0xff]
        %v4004 = vld [vmem:[#allocation4 + $0x12c] sm:$0xff]
        %v4005 = vld [vmem:[#allocation4 + $0x13c] sm:$0xff]
        %v4006 = vld [vmem:[#allocation4 + $0x144] sm:$0xff]
        %v4007 = vld [vmem:[#allocation4 + $0x154] sm:$0xff]
        %v4008 = vld [vmem:[#allocation4 + $0x15c] sm:$0xff]
        %v4009 = vld [vmem:[#allocation4 + $0x16c] sm:$0xff]
        %v4010 = vld [vmem:[#allocation4 + $0x174] sm:$0xff]
        %4043 = vrot.lane.b32.xlu0 %v3979, 16
        %v4044 = vpop.permute.xlu0 %4043
        %4045 = vrot.lane.b32.xlu0 %v3980, 16
        %v4046 = vpop.permute.xlu0 %4045
        %4047 = vrot.lane.b32.xlu0 %v3981, 16
        %v4048 = vpop.permute.xlu0 %4047
        %4049 = vrot.lane.b32.xlu0 %v3982, 16
        %v4050 = vpop.permute.xlu0 %4049
        %4051 = vrot.lane.b32.xlu0 %v3983, 16
        %v4052 = vpop.permute.xlu0 %4051
        %4053 = vrot.lane.b32.xlu0 %v3984, 16
        %v4054 = vpop.permute.xlu0 %4053
        %4055 = vrot.lane.b32.xlu0 %v3985, 16
        %v4056 = vpop.permute.xlu0 %4055
        %4057 = vrot.lane.b32.xlu0 %v3986, 16
        %v4058 = vpop.permute.xlu0 %4057
        %4059 = vrot.lane.b32.xlu0 %v3987, 16
        %v4060 = vpop.permute.xlu0 %4059
        %4061 = vrot.lane.b32.xlu0 %v3988, 16
        %v4062 = vpop.permute.xlu0 %4061
        %4063 = vrot.lane.b32.xlu0 %v3989, 16
        %v4064 = vpop.permute.xlu0 %4063
        %4065 = vrot.lane.b32.xlu0 %v3990, 16
        %v4066 = vpop.permute.xlu0 %4065
        %4067 = vrot.lane.b32.xlu0 %v3991, 16
        %v4068 = vpop.permute.xlu0 %4067
        %4069 = vrot.lane.b32.xlu0 %v3992, 16
        %v4070 = vpop.permute.xlu0 %4069
        %4071 = vrot.lane.b32.xlu0 %v3993, 16
        %v4072 = vpop.permute.xlu0 %4071
        %4073 = vrot.lane.b32.xlu0 %v3994, 16
        %v4074 = vpop.permute.xlu0 %4073
        %4075 = vrot.lane.b32.xlu0 %v3995, 16
        %v4076 = vpop.permute.xlu0 %4075
        %4077 = vrot.lane.b32.xlu0 %v3996, 16
        %v4078 = vpop.permute.xlu0 %4077
        %4079 = vrot.lane.b32.xlu0 %v3997, 16
        %v4080 = vpop.permute.xlu0 %4079
        %4081 = vrot.lane.b32.xlu0 %v3998, 16
        %v4082 = vpop.permute.xlu0 %4081
        %4083 = vrot.lane.b32.xlu0 %v3999, 16
        %v4084 = vpop.permute.xlu0 %4083
        %4085 = vrot.lane.b32.xlu0 %v4000, 16
        %v4086 = vpop.permute.xlu0 %4085
        %4087 = vrot.lane.b32.xlu0 %v4001, 16
        %v4088 = vpop.permute.xlu0 %4087
        %4089 = vrot.lane.b32.xlu0 %v4002, 16
        %v4090 = vpop.permute.xlu0 %4089
        %4091 = vrot.lane.b32.xlu0 %v4003, 16
        %v4092 = vpop.permute.xlu0 %4091
        %4093 = vrot.lane.b32.xlu0 %v4004, 16
        %v4094 = vpop.permute.xlu0 %4093
        %4095 = vrot.lane.b32.xlu0 %v4005, 16
        %v4096 = vpop.permute.xlu0 %4095
        %4097 = vrot.lane.b32.xlu0 %v4006, 16
        %v4098 = vpop.permute.xlu0 %4097
        %4099 = vrot.lane.b32.xlu0 %v4007, 16
        %v4100 = vpop.permute.xlu0 %4099
        %4101 = vrot.lane.b32.xlu0 %v4008, 16
        %v4102 = vpop.permute.xlu0 %4101
        %4103 = vrot.lane.b32.xlu0 %v4009, 16
        %v4104 = vpop.permute.xlu0 %4103
        %4105 = vrot.lane.b32.xlu0 %v4010, 16
        %v4106 = vpop.permute.xlu0 %4105
        %4139 = vst.msk [vmem:[#allocation5] sm:$0xff] %vm1781, %v4044
        %4140 = vst.msk [vmem:[#allocation5 + $0x8] sm:$0xff] %vm1781, %v4046
        %4141 = vst.msk [vmem:[#allocation5 + $0x10] sm:$0xff] %vm1781, %v4048
        %4142 = vst.msk [vmem:[#allocation5 + $0x18] sm:$0xff] %vm1781, %v4050
        %4143 = vst.msk [vmem:[#allocation5 + $0x20] sm:$0xff] %vm1781, %v4052
        %4144 = vst.msk [vmem:[#allocation5 + $0x28] sm:$0xff] %vm1781, %v4054
        %4145 = vst.msk [vmem:[#allocation5 + $0x30] sm:$0xff] %vm1781, %v4056
        %4146 = vst.msk [vmem:[#allocation5 + $0x38] sm:$0xff] %vm1781, %v4058
        %4147 = vst.msk [vmem:[#allocation5 + $0x40] sm:$0xff] %vm1781, %v4060
        %4148 = vst.msk [vmem:[#allocation5 + $0x48] sm:$0xff] %vm1781, %v4062
        %4149 = vst.msk [vmem:[#allocation5 + $0x50] sm:$0xff] %vm1781, %v4064
        %4150 = vst.msk [vmem:[#allocation5 + $0x58] sm:$0xff] %vm1781, %v4066
        %4151 = vst.msk [vmem:[#allocation5 + $0x60] sm:$0xff] %vm1781, %v4068
        %4152 = vst.msk [vmem:[#allocation5 + $0x68] sm:$0xff] %vm1781, %v4070
        %4153 = vst.msk [vmem:[#allocation5 + $0x70] sm:$0xff] %vm1781, %v4072
        %4154 = vst.msk [vmem:[#allocation5 + $0x78] sm:$0xff] %vm1781, %v4074
        %4155 = vst.msk [vmem:[#allocation5 + $0x80] sm:$0xff] %vm1781, %v4076
        %4156 = vst.msk [vmem:[#allocation5 + $0x88] sm:$0xff] %vm1781, %v4078
        %4157 = vst.msk [vmem:[#allocation5 + $0x90] sm:$0xff] %vm1781, %v4080
        %4158 = vst.msk [vmem:[#allocation5 + $0x98] sm:$0xff] %vm1781, %v4082
        %4159 = vst.msk [vmem:[#allocation5 + $0xa0] sm:$0xff] %vm1781, %v4084
        %4160 = vst.msk [vmem:[#allocation5 + $0xa8] sm:$0xff] %vm1781, %v4086
        %4161 = vst.msk [vmem:[#allocation5 + $0xb0] sm:$0xff] %vm1781, %v4088
        %4162 = vst.msk [vmem:[#allocation5 + $0xb8] sm:$0xff] %vm1781, %v4090
        %4163 = vst.msk [vmem:[#allocation5 + $0xc0] sm:$0xff] %vm1781, %v4092
        %4164 = vst.msk [vmem:[#allocation5 + $0xc8] sm:$0xff] %vm1781, %v4094
        %4165 = vst.msk [vmem:[#allocation5 + $0xd0] sm:$0xff] %vm1781, %v4096
        %4166 = vst.msk [vmem:[#allocation5 + $0xd8] sm:$0xff] %vm1781, %v4098
        %4167 = vst.msk [vmem:[#allocation5 + $0xe0] sm:$0xff] %vm1781, %v4100
        %4168 = vst.msk [vmem:[#allocation5 + $0xe8] sm:$0xff] %vm1781, %v4102
        %4169 = vst.msk [vmem:[#allocation5 + $0xf0] sm:$0xff] %vm1781, %v4104
        %4170 = vst.msk [vmem:[#allocation5 + $0xf8] sm:$0xff] %vm1781, %v4106
        %s4171 = scalar_lea.vmem [#allocation4], 24
        %v4172 = vld [vmem:[%s4171] sm:$0xff]
        %v4173 = vld [vmem:[%s4171 + $0x8] sm:$0xff]
        %v4174 = vld [vmem:[%s4171 + $0x18] sm:$0xff]
        %v4175 = vld [vmem:[%s4171 + $0x20] sm:$0xff]
        %v4176 = vld [vmem:[%s4171 + $0x30] sm:$0xff]
        %v4177 = vld [vmem:[%s4171 + $0x38] sm:$0xff]
        %v4178 = vld [vmem:[%s4171 + $0x48] sm:$0xff]
        %v4179 = vld [vmem:[%s4171 + $0x50] sm:$0xff]
        %v4180 = vld [vmem:[%s4171 + $0x60] sm:$0xff]
        %v4181 = vld [vmem:[%s4171 + $0x68] sm:$0xff]
        %v4182 = vld [vmem:[%s4171 + $0x78] sm:$0xff]
        %v4183 = vld [vmem:[%s4171 + $0x80] sm:$0xff]
        %v4184 = vld [vmem:[%s4171 + $0x90] sm:$0xff]
        %v4185 = vld [vmem:[%s4171 + $0x98] sm:$0xff]
        %v4186 = vld [vmem:[%s4171 + $0xa8] sm:$0xff]
        %v4187 = vld [vmem:[%s4171 + $0xb0] sm:$0xff]
        %v4188 = vld [vmem:[%s4171 + $0xc0] sm:$0xff]
        %v4189 = vld [vmem:[%s4171 + $0xc8] sm:$0xff]
        %v4190 = vld [vmem:[%s4171 + $0xd8] sm:$0xff]
        %v4191 = vld [vmem:[%s4171 + $0xe0] sm:$0xff]
        %v4192 = vld [vmem:[%s4171 + $0xf0] sm:$0xff]
        %v4193 = vld [vmem:[%s4171 + $0xf8] sm:$0xff]
        %v4194 = vld [vmem:[%s4171 + $0x108] sm:$0xff]
        %v4195 = vld [vmem:[%s4171 + $0x110] sm:$0xff]
        %v4196 = vld [vmem:[%s4171 + $0x120] sm:$0xff]
        %v4197 = vld [vmem:[%s4171 + $0x128] sm:$0xff]
        %v4198 = vld [vmem:[%s4171 + $0x138] sm:$0xff]
        %v4199 = vld [vmem:[%s4171 + $0x140] sm:$0xff]
        %v4200 = vld [vmem:[%s4171 + $0x150] sm:$0xff]
        %v4201 = vld [vmem:[%s4171 + $0x158] sm:$0xff]
        %v4202 = vld [vmem:[%s4171 + $0x168] sm:$0xff]
        %v4203 = vld [vmem:[%s4171 + $0x170] sm:$0xff]
        %4236 = vrot.lane.b32.xlu0 %v4172, 20
        %v4237 = vpop.permute.xlu0 %4236
        %4238 = vrot.lane.b32.xlu0 %v4173, 20
        %v4239 = vpop.permute.xlu0 %4238
        %4240 = vrot.lane.b32.xlu0 %v4174, 20
        %v4241 = vpop.permute.xlu0 %4240
        %4242 = vrot.lane.b32.xlu0 %v4175, 20
        %v4243 = vpop.permute.xlu0 %4242
        %4244 = vrot.lane.b32.xlu0 %v4176, 20
        %v4245 = vpop.permute.xlu0 %4244
        %4246 = vrot.lane.b32.xlu0 %v4177, 20
        %v4247 = vpop.permute.xlu0 %4246
        %4248 = vrot.lane.b32.xlu0 %v4178, 20
        %v4249 = vpop.permute.xlu0 %4248
        %4250 = vrot.lane.b32.xlu0 %v4179, 20
        %v4251 = vpop.permute.xlu0 %4250
        %4252 = vrot.lane.b32.xlu0 %v4180, 20
        %v4253 = vpop.permute.xlu0 %4252
        %4254 = vrot.lane.b32.xlu0 %v4181, 20
        %v4255 = vpop.permute.xlu0 %4254
        %4256 = vrot.lane.b32.xlu0 %v4182, 20
        %v4257 = vpop.permute.xlu0 %4256
        %4258 = vrot.lane.b32.xlu0 %v4183, 20
        %v4259 = vpop.permute.xlu0 %4258
        %4260 = vrot.lane.b32.xlu0 %v4184, 20
        %v4261 = vpop.permute.xlu0 %4260
        %4262 = vrot.lane.b32.xlu0 %v4185, 20
        %v4263 = vpop.permute.xlu0 %4262
        %4264 = vrot.lane.b32.xlu0 %v4186, 20
        %v4265 = vpop.permute.xlu0 %4264
        %4266 = vrot.lane.b32.xlu0 %v4187, 20
        %v4267 = vpop.permute.xlu0 %4266
        %4268 = vrot.lane.b32.xlu0 %v4188, 20
        %v4269 = vpop.permute.xlu0 %4268
        %4270 = vrot.lane.b32.xlu0 %v4189, 20
        %v4271 = vpop.permute.xlu0 %4270
        %4272 = vrot.lane.b32.xlu0 %v4190, 20
        %v4273 = vpop.permute.xlu0 %4272
        %4274 = vrot.lane.b32.xlu0 %v4191, 20
        %v4275 = vpop.permute.xlu0 %4274
        %4276 = vrot.lane.b32.xlu0 %v4192, 20
        %v4277 = vpop.permute.xlu0 %4276
        %4278 = vrot.lane.b32.xlu0 %v4193, 20
        %v4279 = vpop.permute.xlu0 %4278
        %4280 = vrot.lane.b32.xlu0 %v4194, 20
        %v4281 = vpop.permute.xlu0 %4280
        %4282 = vrot.lane.b32.xlu0 %v4195, 20
        %v4283 = vpop.permute.xlu0 %4282
        %4284 = vrot.lane.b32.xlu0 %v4196, 20
        %v4285 = vpop.permute.xlu0 %4284
        %4286 = vrot.lane.b32.xlu0 %v4197, 20
        %v4287 = vpop.permute.xlu0 %4286
        %4288 = vrot.lane.b32.xlu0 %v4198, 20
        %v4289 = vpop.permute.xlu0 %4288
        %4290 = vrot.lane.b32.xlu0 %v4199, 20
        %v4291 = vpop.permute.xlu0 %4290
        %4292 = vrot.lane.b32.xlu0 %v4200, 20
        %v4293 = vpop.permute.xlu0 %4292
        %4294 = vrot.lane.b32.xlu0 %v4201, 20
        %v4295 = vpop.permute.xlu0 %4294
        %4296 = vrot.lane.b32.xlu0 %v4202, 20
        %v4297 = vpop.permute.xlu0 %4296
        %4298 = vrot.lane.b32.xlu0 %v4203, 20
        %v4299 = vpop.permute.xlu0 %4298
        %4332 = vst.msk [vmem:[#allocation5] sm:$0xff] %vm1974, %v4237
        %4333 = vst.msk [vmem:[#allocation5 + $0x8] sm:$0xff] %vm1974, %v4239
        %4334 = vst.msk [vmem:[#allocation5 + $0x10] sm:$0xff] %vm1974, %v4241
        %4335 = vst.msk [vmem:[#allocation5 + $0x18] sm:$0xff] %vm1974, %v4243
        %4336 = vst.msk [vmem:[#allocation5 + $0x20] sm:$0xff] %vm1974, %v4245
        %4337 = vst.msk [vmem:[#allocation5 + $0x28] sm:$0xff] %vm1974, %v4247
        %4338 = vst.msk [vmem:[#allocation5 + $0x30] sm:$0xff] %vm1974, %v4249
        %4339 = vst.msk [vmem:[#allocation5 + $0x38] sm:$0xff] %vm1974, %v4251
        %4340 = vst.msk [vmem:[#allocation5 + $0x40] sm:$0xff] %vm1974, %v4253
        %4341 = vst.msk [vmem:[#allocation5 + $0x48] sm:$0xff] %vm1974, %v4255
        %4342 = vst.msk [vmem:[#allocation5 + $0x50] sm:$0xff] %vm1974, %v4257
        %4343 = vst.msk [vmem:[#allocation5 + $0x58] sm:$0xff] %vm1974, %v4259
        %4344 = vst.msk [vmem:[#allocation5 + $0x60] sm:$0xff] %vm1974, %v4261
        %4345 = vst.msk [vmem:[#allocation5 + $0x68] sm:$0xff] %vm1974, %v4263
        %4346 = vst.msk [vmem:[#allocation5 + $0x70] sm:$0xff] %vm1974, %v4265
        %4347 = vst.msk [vmem:[#allocation5 + $0x78] sm:$0xff] %vm1974, %v4267
        %4348 = vst.msk [vmem:[#allocation5 + $0x80] sm:$0xff] %vm1974, %v4269
        %4349 = vst.msk [vmem:[#allocation5 + $0x88] sm:$0xff] %vm1974, %v4271
        %4350 = vst.msk [vmem:[#allocation5 + $0x90] sm:$0xff] %vm1974, %v4273
        %4351 = vst.msk [vmem:[#allocation5 + $0x98] sm:$0xff] %vm1974, %v4275
        %4352 = vst.msk [vmem:[#allocation5 + $0xa0] sm:$0xff] %vm1974, %v4277
        %4353 = vst.msk [vmem:[#allocation5 + $0xa8] sm:$0xff] %vm1974, %v4279
        %4354 = vst.msk [vmem:[#allocation5 + $0xb0] sm:$0xff] %vm1974, %v4281
        %4355 = vst.msk [vmem:[#allocation5 + $0xb8] sm:$0xff] %vm1974, %v4283
        %4356 = vst.msk [vmem:[#allocation5 + $0xc0] sm:$0xff] %vm1974, %v4285
        %4357 = vst.msk [vmem:[#allocation5 + $0xc8] sm:$0xff] %vm1974, %v4287
        %4358 = vst.msk [vmem:[#allocation5 + $0xd0] sm:$0xff] %vm1974, %v4289
        %4359 = vst.msk [vmem:[#allocation5 + $0xd8] sm:$0xff] %vm1974, %v4291
        %4360 = vst.msk [vmem:[#allocation5 + $0xe0] sm:$0xff] %vm1974, %v4293
        %4361 = vst.msk [vmem:[#allocation5 + $0xe8] sm:$0xff] %vm1974, %v4295
        %4362 = vst.msk [vmem:[#allocation5 + $0xf0] sm:$0xff] %vm1974, %v4297
        %4363 = vst.msk [vmem:[#allocation5 + $0xf8] sm:$0xff] %vm1974, %v4299
        %v4364 = vld [vmem:[%s4171 + $0x1] sm:$0xff]
        %v4365 = vld [vmem:[%s4171 + $0x9] sm:$0xff]
        %v4366 = vld [vmem:[%s4171 + $0x19] sm:$0xff]
        %v4367 = vld [vmem:[%s4171 + $0x21] sm:$0xff]
        %v4368 = vld [vmem:[%s4171 + $0x31] sm:$0xff]
        %v4369 = vld [vmem:[%s4171 + $0x39] sm:$0xff]
        %v4370 = vld [vmem:[%s4171 + $0x49] sm:$0xff]
        %v4371 = vld [vmem:[%s4171 + $0x51] sm:$0xff]
        %v4372 = vld [vmem:[%s4171 + $0x61] sm:$0xff]
        %v4373 = vld [vmem:[%s4171 + $0x69] sm:$0xff]
        %v4374 = vld [vmem:[%s4171 + $0x79] sm:$0xff]
        %v4375 = vld [vmem:[%s4171 + $0x81] sm:$0xff]
        %v4376 = vld [vmem:[%s4171 + $0x91] sm:$0xff]
        %v4377 = vld [vmem:[%s4171 + $0x99] sm:$0xff]
        %v4378 = vld [vmem:[%s4171 + $0xa9] sm:$0xff]
        %v4379 = vld [vmem:[%s4171 + $0xb1] sm:$0xff]
        %v4380 = vld [vmem:[%s4171 + $0xc1] sm:$0xff]
        %v4381 = vld [vmem:[%s4171 + $0xc9] sm:$0xff]
        %v4382 = vld [vmem:[%s4171 + $0xd9] sm:$0xff]
        %v4383 = vld [vmem:[%s4171 + $0xe1] sm:$0xff]
        %v4384 = vld [vmem:[%s4171 + $0xf1] sm:$0xff]
        %v4385 = vld [vmem:[%s4171 + $0xf9] sm:$0xff]
        %v4386 = vld [vmem:[%s4171 + $0x109] sm:$0xff]
        %v4387 = vld [vmem:[%s4171 + $0x111] sm:$0xff]
        %v4388 = vld [vmem:[%s4171 + $0x121] sm:$0xff]
        %v4389 = vld [vmem:[%s4171 + $0x129] sm:$0xff]
        %v4390 = vld [vmem:[%s4171 + $0x139] sm:$0xff]
        %v4391 = vld [vmem:[%s4171 + $0x141] sm:$0xff]
        %v4392 = vld [vmem:[%s4171 + $0x151] sm:$0xff]
        %v4393 = vld [vmem:[%s4171 + $0x159] sm:$0xff]
        %v4394 = vld [vmem:[%s4171 + $0x169] sm:$0xff]
        %v4395 = vld [vmem:[%s4171 + $0x171] sm:$0xff]
        %4428 = vrot.lane.b32.xlu0 %v4364, 24
        %v4429 = vpop.permute.xlu0 %4428
        %4430 = vrot.lane.b32.xlu0 %v4365, 24
        %v4431 = vpop.permute.xlu0 %4430
        %4432 = vrot.lane.b32.xlu0 %v4366, 24
        %v4433 = vpop.permute.xlu0 %4432
        %4434 = vrot.lane.b32.xlu0 %v4367, 24
        %v4435 = vpop.permute.xlu0 %4434
        %4436 = vrot.lane.b32.xlu0 %v4368, 24
        %v4437 = vpop.permute.xlu0 %4436
        %4438 = vrot.lane.b32.xlu0 %v4369, 24
        %v4439 = vpop.permute.xlu0 %4438
        %4440 = vrot.lane.b32.xlu0 %v4370, 24
        %v4441 = vpop.permute.xlu0 %4440
        %4442 = vrot.lane.b32.xlu0 %v4371, 24
        %v4443 = vpop.permute.xlu0 %4442
        %4444 = vrot.lane.b32.xlu0 %v4372, 24
        %v4445 = vpop.permute.xlu0 %4444
        %4446 = vrot.lane.b32.xlu0 %v4373, 24
        %v4447 = vpop.permute.xlu0 %4446
        %4448 = vrot.lane.b32.xlu0 %v4374, 24
        %v4449 = vpop.permute.xlu0 %4448
        %4450 = vrot.lane.b32.xlu0 %v4375, 24
        %v4451 = vpop.permute.xlu0 %4450
        %4452 = vrot.lane.b32.xlu0 %v4376, 24
        %v4453 = vpop.permute.xlu0 %4452
        %4454 = vrot.lane.b32.xlu0 %v4377, 24
        %v4455 = vpop.permute.xlu0 %4454
        %4456 = vrot.lane.b32.xlu0 %v4378, 24
        %v4457 = vpop.permute.xlu0 %4456
        %4458 = vrot.lane.b32.xlu0 %v4379, 24
        %v4459 = vpop.permute.xlu0 %4458
        %4460 = vrot.lane.b32.xlu0 %v4380, 24
        %v4461 = vpop.permute.xlu0 %4460
        %4462 = vrot.lane.b32.xlu0 %v4381, 24
        %v4463 = vpop.permute.xlu0 %4462
        %4464 = vrot.lane.b32.xlu0 %v4382, 24
        %v4465 = vpop.permute.xlu0 %4464
        %4466 = vrot.lane.b32.xlu0 %v4383, 24
        %v4467 = vpop.permute.xlu0 %4466
        %4468 = vrot.lane.b32.xlu0 %v4384, 24
        %v4469 = vpop.permute.xlu0 %4468
        %4470 = vrot.lane.b32.xlu0 %v4385, 24
        %v4471 = vpop.permute.xlu0 %4470
        %4472 = vrot.lane.b32.xlu0 %v4386, 24
        %v4473 = vpop.permute.xlu0 %4472
        %4474 = vrot.lane.b32.xlu0 %v4387, 24
        %v4475 = vpop.permute.xlu0 %4474
        %4476 = vrot.lane.b32.xlu0 %v4388, 24
        %v4477 = vpop.permute.xlu0 %4476
        %4478 = vrot.lane.b32.xlu0 %v4389, 24
        %v4479 = vpop.permute.xlu0 %4478
        %4480 = vrot.lane.b32.xlu0 %v4390, 24
        %v4481 = vpop.permute.xlu0 %4480
        %4482 = vrot.lane.b32.xlu0 %v4391, 24
        %v4483 = vpop.permute.xlu0 %4482
        %4484 = vrot.lane.b32.xlu0 %v4392, 24
        %v4485 = vpop.permute.xlu0 %4484
        %4486 = vrot.lane.b32.xlu0 %v4393, 24
        %v4487 = vpop.permute.xlu0 %4486
        %4488 = vrot.lane.b32.xlu0 %v4394, 24
        %v4489 = vpop.permute.xlu0 %4488
        %4490 = vrot.lane.b32.xlu0 %v4395, 24
        %v4491 = vpop.permute.xlu0 %4490
        %4524 = vst.msk [vmem:[#allocation5] sm:$0xff] %vm2168, %v4429
        %4525 = vst.msk [vmem:[#allocation5 + $0x8] sm:$0xff] %vm2168, %v4431
        %4526 = vst.msk [vmem:[#allocation5 + $0x10] sm:$0xff] %vm2168, %v4433
        %4527 = vst.msk [vmem:[#allocation5 + $0x18] sm:$0xff] %vm2168, %v4435
        %4528 = vst.msk [vmem:[#allocation5 + $0x20] sm:$0xff] %vm2168, %v4437
        %4529 = vst.msk [vmem:[#allocation5 + $0x28] sm:$0xff] %vm2168, %v4439
        %4530 = vst.msk [vmem:[#allocation5 + $0x30] sm:$0xff] %vm2168, %v4441
        %4531 = vst.msk [vmem:[#allocation5 + $0x38] sm:$0xff] %vm2168, %v4443
        %4532 = vst.msk [vmem:[#allocation5 + $0x40] sm:$0xff] %vm2168, %v4445
        %4533 = vst.msk [vmem:[#allocation5 + $0x48] sm:$0xff] %vm2168, %v4447
        %4534 = vst.msk [vmem:[#allocation5 + $0x50] sm:$0xff] %vm2168, %v4449
        %4535 = vst.msk [vmem:[#allocation5 + $0x58] sm:$0xff] %vm2168, %v4451
        %4536 = vst.msk [vmem:[#allocation5 + $0x60] sm:$0xff] %vm2168, %v4453
        %4537 = vst.msk [vmem:[#allocation5 + $0x68] sm:$0xff] %vm2168, %v4455
        %4538 = vst.msk [vmem:[#allocation5 + $0x70] sm:$0xff] %vm2168, %v4457
        %4539 = vst.msk [vmem:[#allocation5 + $0x78] sm:$0xff] %vm2168, %v4459
        %4540 = vst.msk [vmem:[#allocation5 + $0x80] sm:$0xff] %vm2168, %v4461
        %4541 = vst.msk [vmem:[#allocation5 + $0x88] sm:$0xff] %vm2168, %v4463
        %4542 = vst.msk [vmem:[#allocation5 + $0x90] sm:$0xff] %vm2168, %v4465
        %4543 = vst.msk [vmem:[#allocation5 + $0x98] sm:$0xff] %vm2168, %v4467
        %4544 = vst.msk [vmem:[#allocation5 + $0xa0] sm:$0xff] %vm2168, %v4469
        %4545 = vst.msk [vmem:[#allocation5 + $0xa8] sm:$0xff] %vm2168, %v4471
        %4546 = vst.msk [vmem:[#allocation5 + $0xb0] sm:$0xff] %vm2168, %v4473
        %4547 = vst.msk [vmem:[#allocation5 + $0xb8] sm:$0xff] %vm2168, %v4475
        %4548 = vst.msk [vmem:[#allocation5 + $0xc0] sm:$0xff] %vm2168, %v4477
        %4549 = vst.msk [vmem:[#allocation5 + $0xc8] sm:$0xff] %vm2168, %v4479
        %4550 = vst.msk [vmem:[#allocation5 + $0xd0] sm:$0xff] %vm2168, %v4481
        %4551 = vst.msk [vmem:[#allocation5 + $0xd8] sm:$0xff] %vm2168, %v4483
        %4552 = vst.msk [vmem:[#allocation5 + $0xe0] sm:$0xff] %vm2168, %v4485
        %4553 = vst.msk [vmem:[#allocation5 + $0xe8] sm:$0xff] %vm2168, %v4487
        %4554 = vst.msk [vmem:[#allocation5 + $0xf0] sm:$0xff] %vm2168, %v4489
        %4555 = vst.msk [vmem:[#allocation5 + $0xf8] sm:$0xff] %vm2168, %v4491
        %v4556 = vld [vmem:[%s4171 + $0x2] sm:$0xff]
        %v4557 = vld [vmem:[%s4171 + $0xa] sm:$0xff]
        %v4558 = vld [vmem:[%s4171 + $0x1a] sm:$0xff]
        %v4559 = vld [vmem:[%s4171 + $0x22] sm:$0xff]
        %v4560 = vld [vmem:[%s4171 + $0x32] sm:$0xff]
        %v4561 = vld [vmem:[%s4171 + $0x3a] sm:$0xff]
        %v4562 = vld [vmem:[%s4171 + $0x4a] sm:$0xff]
        %v4563 = vld [vmem:[%s4171 + $0x52] sm:$0xff]
        %v4564 = vld [vmem:[%s4171 + $0x62] sm:$0xff]
        %v4565 = vld [vmem:[%s4171 + $0x6a] sm:$0xff]
        %v4566 = vld [vmem:[%s4171 + $0x7a] sm:$0xff]
        %v4567 = vld [vmem:[%s4171 + $0x82] sm:$0xff]
        %v4568 = vld [vmem:[%s4171 + $0x92] sm:$0xff]
        %v4569 = vld [vmem:[%s4171 + $0x9a] sm:$0xff]
        %v4570 = vld [vmem:[%s4171 + $0xaa] sm:$0xff]
        %v4571 = vld [vmem:[%s4171 + $0xb2] sm:$0xff]
        %v4572 = vld [vmem:[%s4171 + $0xc2] sm:$0xff]
        %v4573 = vld [vmem:[%s4171 + $0xca] sm:$0xff]
        %v4574 = vld [vmem:[%s4171 + $0xda] sm:$0xff]
        %v4575 = vld [vmem:[%s4171 + $0xe2] sm:$0xff]
        %v4576 = vld [vmem:[%s4171 + $0xf2] sm:$0xff]
        %v4577 = vld [vmem:[%s4171 + $0xfa] sm:$0xff]
        %v4578 = vld [vmem:[%s4171 + $0x10a] sm:$0xff]
        %v4579 = vld [vmem:[%s4171 + $0x112] sm:$0xff]
        %v4580 = vld [vmem:[%s4171 + $0x122] sm:$0xff]
        %v4581 = vld [vmem:[%s4171 + $0x12a] sm:$0xff]
        %v4582 = vld [vmem:[%s4171 + $0x13a] sm:$0xff]
        %v4583 = vld [vmem:[%s4171 + $0x142] sm:$0xff]
        %v4584 = vld [vmem:[%s4171 + $0x152] sm:$0xff]
        %v4585 = vld [vmem:[%s4171 + $0x15a] sm:$0xff]
        %v4586 = vld [vmem:[%s4171 + $0x16a] sm:$0xff]
        %v4587 = vld [vmem:[%s4171 + $0x172] sm:$0xff]
        %4620 = vrot.lane.b32.xlu0 %v4556, 28
        %v4621 = vpop.permute.xlu0 %4620
        %4622 = vrot.lane.b32.xlu0 %v4557, 28
        %v4623 = vpop.permute.xlu0 %4622
        %4624 = vrot.lane.b32.xlu0 %v4558, 28
        %v4625 = vpop.permute.xlu0 %4624
        %4626 = vrot.lane.b32.xlu0 %v4559, 28
        %v4627 = vpop.permute.xlu0 %4626
        %4628 = vrot.lane.b32.xlu0 %v4560, 28
        %v4629 = vpop.permute.xlu0 %4628
        %4630 = vrot.lane.b32.xlu0 %v4561, 28
        %v4631 = vpop.permute.xlu0 %4630
        %4632 = vrot.lane.b32.xlu0 %v4562, 28
        %v4633 = vpop.permute.xlu0 %4632
        %4634 = vrot.lane.b32.xlu0 %v4563, 28
        %v4635 = vpop.permute.xlu0 %4634
        %4636 = vrot.lane.b32.xlu0 %v4564, 28
        %v4637 = vpop.permute.xlu0 %4636
        %4638 = vrot.lane.b32.xlu0 %v4565, 28
        %v4639 = vpop.permute.xlu0 %4638
        %4640 = vrot.lane.b32.xlu0 %v4566, 28
        %v4641 = vpop.permute.xlu0 %4640
        %4642 = vrot.lane.b32.xlu0 %v4567, 28
        %v4643 = vpop.permute.xlu0 %4642
        %4644 = vrot.lane.b32.xlu0 %v4568, 28
        %v4645 = vpop.permute.xlu0 %4644
        %4646 = vrot.lane.b32.xlu0 %v4569, 28
        %v4647 = vpop.permute.xlu0 %4646
        %4648 = vrot.lane.b32.xlu0 %v4570, 28
        %v4649 = vpop.permute.xlu0 %4648
        %4650 = vrot.lane.b32.xlu0 %v4571, 28
        %v4651 = vpop.permute.xlu0 %4650
        %4652 = vrot.lane.b32.xlu0 %v4572, 28
        %v4653 = vpop.permute.xlu0 %4652
        %4654 = vrot.lane.b32.xlu0 %v4573, 28
        %v4655 = vpop.permute.xlu0 %4654
        %4656 = vrot.lane.b32.xlu0 %v4574, 28
        %v4657 = vpop.permute.xlu0 %4656
        %4658 = vrot.lane.b32.xlu0 %v4575, 28
        %v4659 = vpop.permute.xlu0 %4658
        %4660 = vrot.lane.b32.xlu0 %v4576, 28
        %v4661 = vpop.permute.xlu0 %4660
        %4662 = vrot.lane.b32.xlu0 %v4577, 28
        %v4663 = vpop.permute.xlu0 %4662
        %4664 = vrot.lane.b32.xlu0 %v4578, 28
        %v4665 = vpop.permute.xlu0 %4664
        %4666 = vrot.lane.b32.xlu0 %v4579, 28
        %v4667 = vpop.permute.xlu0 %4666
        %4668 = vrot.lane.b32.xlu0 %v4580, 28
        %v4669 = vpop.permute.xlu0 %4668
        %4670 = vrot.lane.b32.xlu0 %v4581, 28
        %v4671 = vpop.permute.xlu0 %4670
        %4672 = vrot.lane.b32.xlu0 %v4582, 28
        %v4673 = vpop.permute.xlu0 %4672
        %4674 = vrot.lane.b32.xlu0 %v4583, 28
        %v4675 = vpop.permute.xlu0 %4674
        %4676 = vrot.lane.b32.xlu0 %v4584, 28
        %v4677 = vpop.permute.xlu0 %4676
        %4678 = vrot.lane.b32.xlu0 %v4585, 28
        %v4679 = vpop.permute.xlu0 %4678
        %4680 = vrot.lane.b32.xlu0 %v4586, 28
        %v4681 = vpop.permute.xlu0 %4680
        %4682 = vrot.lane.b32.xlu0 %v4587, 28
        %v4683 = vpop.permute.xlu0 %4682
        %4716 = vst.msk [vmem:[#allocation5] sm:$0xff] %vm2361, %v4621
        %4717 = vst.msk [vmem:[#allocation5 + $0x8] sm:$0xff] %vm2361, %v4623
        %4718 = vst.msk [vmem:[#allocation5 + $0x10] sm:$0xff] %vm2361, %v4625
        %4719 = vst.msk [vmem:[#allocation5 + $0x18] sm:$0xff] %vm2361, %v4627
        %4720 = vst.msk [vmem:[#allocation5 + $0x20] sm:$0xff] %vm2361, %v4629
        %4721 = vst.msk [vmem:[#allocation5 + $0x28] sm:$0xff] %vm2361, %v4631
        %4722 = vst.msk [vmem:[#allocation5 + $0x30] sm:$0xff] %vm2361, %v4633
        %4723 = vst.msk [vmem:[#allocation5 + $0x38] sm:$0xff] %vm2361, %v4635
        %4724 = vst.msk [vmem:[#allocation5 + $0x40] sm:$0xff] %vm2361, %v4637
        %4725 = vst.msk [vmem:[#allocation5 + $0x48] sm:$0xff] %vm2361, %v4639
        %4726 = vst.msk [vmem:[#allocation5 + $0x50] sm:$0xff] %vm2361, %v4641
        %4727 = vst.msk [vmem:[#allocation5 + $0x58] sm:$0xff] %vm2361, %v4643
        %4728 = vst.msk [vmem:[#allocation5 + $0x60] sm:$0xff] %vm2361, %v4645
        %4729 = vst.msk [vmem:[#allocation5 + $0x68] sm:$0xff] %vm2361, %v4647
        %4730 = vst.msk [vmem:[#allocation5 + $0x70] sm:$0xff] %vm2361, %v4649
        %4731 = vst.msk [vmem:[#allocation5 + $0x78] sm:$0xff] %vm2361, %v4651
        %4732 = vst.msk [vmem:[#allocation5 + $0x80] sm:$0xff] %vm2361, %v4653
        %4733 = vst.msk [vmem:[#allocation5 + $0x88] sm:$0xff] %vm2361, %v4655
        %4734 = vst.msk [vmem:[#allocation5 + $0x90] sm:$0xff] %vm2361, %v4657
        %4735 = vst.msk [vmem:[#allocation5 + $0x98] sm:$0xff] %vm2361, %v4659
        %4736 = vst.msk [vmem:[#allocation5 + $0xa0] sm:$0xff] %vm2361, %v4661
        %4737 = vst.msk [vmem:[#allocation5 + $0xa8] sm:$0xff] %vm2361, %v4663
        %4738 = vst.msk [vmem:[#allocation5 + $0xb0] sm:$0xff] %vm2361, %v4665
        %4739 = vst.msk [vmem:[#allocation5 + $0xb8] sm:$0xff] %vm2361, %v4667
        %4740 = vst.msk [vmem:[#allocation5 + $0xc0] sm:$0xff] %vm2361, %v4669
        %4741 = vst.msk [vmem:[#allocation5 + $0xc8] sm:$0xff] %vm2361, %v4671
        %4742 = vst.msk [vmem:[#allocation5 + $0xd0] sm:$0xff] %vm2361, %v4673
        %4743 = vst.msk [vmem:[#allocation5 + $0xd8] sm:$0xff] %vm2361, %v4675
        %4744 = vst.msk [vmem:[#allocation5 + $0xe0] sm:$0xff] %vm2361, %v4677
        %4745 = vst.msk [vmem:[#allocation5 + $0xe8] sm:$0xff] %vm2361, %v4679
        %4746 = vst.msk [vmem:[#allocation5 + $0xf0] sm:$0xff] %vm2361, %v4681
        %4747 = vst.msk [vmem:[#allocation5 + $0xf8] sm:$0xff] %vm2361, %v4683
        %v4748 = vld [vmem:[%s4171 + $0x3] sm:$0xff]
        %v4749 = vld [vmem:[%s4171 + $0xb] sm:$0xff]
        %v4750 = vld [vmem:[%s4171 + $0x1b] sm:$0xff]
        %v4751 = vld [vmem:[%s4171 + $0x23] sm:$0xff]
        %v4752 = vld [vmem:[%s4171 + $0x33] sm:$0xff]
        %v4753 = vld [vmem:[%s4171 + $0x3b] sm:$0xff]
        %v4754 = vld [vmem:[%s4171 + $0x4b] sm:$0xff]
        %v4755 = vld [vmem:[%s4171 + $0x53] sm:$0xff]
        %v4756 = vld [vmem:[%s4171 + $0x63] sm:$0xff]
        %v4757 = vld [vmem:[%s4171 + $0x6b] sm:$0xff]
        %v4758 = vld [vmem:[%s4171 + $0x7b] sm:$0xff]
        %v4759 = vld [vmem:[%s4171 + $0x83] sm:$0xff]
        %v4760 = vld [vmem:[%s4171 + $0x93] sm:$0xff]
        %v4761 = vld [vmem:[%s4171 + $0x9b] sm:$0xff]
        %v4762 = vld [vmem:[%s4171 + $0xab] sm:$0xff]
        %v4763 = vld [vmem:[%s4171 + $0xb3] sm:$0xff]
        %v4764 = vld [vmem:[%s4171 + $0xc3] sm:$0xff]
        %v4765 = vld [vmem:[%s4171 + $0xcb] sm:$0xff]
        %v4766 = vld [vmem:[%s4171 + $0xdb] sm:$0xff]
        %v4767 = vld [vmem:[%s4171 + $0xe3] sm:$0xff]
        %v4768 = vld [vmem:[%s4171 + $0xf3] sm:$0xff]
        %v4769 = vld [vmem:[%s4171 + $0xfb] sm:$0xff]
        %v4770 = vld [vmem:[%s4171 + $0x10b] sm:$0xff]
        %v4771 = vld [vmem:[%s4171 + $0x113] sm:$0xff]
        %v4772 = vld [vmem:[%s4171 + $0x123] sm:$0xff]
        %v4773 = vld [vmem:[%s4171 + $0x12b] sm:$0xff]
        %v4774 = vld [vmem:[%s4171 + $0x13b] sm:$0xff]
        %v4775 = vld [vmem:[%s4171 + $0x143] sm:$0xff]
        %v4776 = vld [vmem:[%s4171 + $0x153] sm:$0xff]
        %v4777 = vld [vmem:[%s4171 + $0x15b] sm:$0xff]
        %v4778 = vld [vmem:[%s4171 + $0x16b] sm:$0xff]
        %v4779 = vld [vmem:[%s4171 + $0x173] sm:$0xff]
        %4812 = vrot.lane.b32.xlu0 %v4748, 32
        %v4813 = vpop.permute.xlu0 %4812
        %4814 = vrot.lane.b32.xlu0 %v4749, 32
        %v4815 = vpop.permute.xlu0 %4814
        %4816 = vrot.lane.b32.xlu0 %v4750, 32
        %v4817 = vpop.permute.xlu0 %4816
        %4818 = vrot.lane.b32.xlu0 %v4751, 32
        %v4819 = vpop.permute.xlu0 %4818
        %4820 = vrot.lane.b32.xlu0 %v4752, 32
        %v4821 = vpop.permute.xlu0 %4820
        %4822 = vrot.lane.b32.xlu0 %v4753, 32
        %v4823 = vpop.permute.xlu0 %4822
        %4824 = vrot.lane.b32.xlu0 %v4754, 32
        %v4825 = vpop.permute.xlu0 %4824
        %4826 = vrot.lane.b32.xlu0 %v4755, 32
        %v4827 = vpop.permute.xlu0 %4826
        %4828 = vrot.lane.b32.xlu0 %v4756, 32
        %v4829 = vpop.permute.xlu0 %4828
        %4830 = vrot.lane.b32.xlu0 %v4757, 32
        %v4831 = vpop.permute.xlu0 %4830
        %4832 = vrot.lane.b32.xlu0 %v4758, 32
        %v4833 = vpop.permute.xlu0 %4832
        %4834 = vrot.lane.b32.xlu0 %v4759, 32
        %v4835 = vpop.permute.xlu0 %4834
        %4836 = vrot.lane.b32.xlu0 %v4760, 32
        %v4837 = vpop.permute.xlu0 %4836
        %4838 = vrot.lane.b32.xlu0 %v4761, 32
        %v4839 = vpop.permute.xlu0 %4838
        %4840 = vrot.lane.b32.xlu0 %v4762, 32
        %v4841 = vpop.permute.xlu0 %4840
        %4842 = vrot.lane.b32.xlu0 %v4763, 32
        %v4843 = vpop.permute.xlu0 %4842
        %4844 = vrot.lane.b32.xlu0 %v4764, 32
        %v4845 = vpop.permute.xlu0 %4844
        %4846 = vrot.lane.b32.xlu0 %v4765, 32
        %v4847 = vpop.permute.xlu0 %4846
        %4848 = vrot.lane.b32.xlu0 %v4766, 32
        %v4849 = vpop.permute.xlu0 %4848
        %4850 = vrot.lane.b32.xlu0 %v4767, 32
        %v4851 = vpop.permute.xlu0 %4850
        %4852 = vrot.lane.b32.xlu0 %v4768, 32
        %v4853 = vpop.permute.xlu0 %4852
        %4854 = vrot.lane.b32.xlu0 %v4769, 32
        %v4855 = vpop.permute.xlu0 %4854
        %4856 = vrot.lane.b32.xlu0 %v4770, 32
        %v4857 = vpop.permute.xlu0 %4856
        %4858 = vrot.lane.b32.xlu0 %v4771, 32
        %v4859 = vpop.permute.xlu0 %4858
        %4860 = vrot.lane.b32.xlu0 %v4772, 32
        %v4861 = vpop.permute.xlu0 %4860
        %4862 = vrot.lane.b32.xlu0 %v4773, 32
        %v4863 = vpop.permute.xlu0 %4862
        %4864 = vrot.lane.b32.xlu0 %v4774, 32
        %v4865 = vpop.permute.xlu0 %4864
        %4866 = vrot.lane.b32.xlu0 %v4775, 32
        %v4867 = vpop.permute.xlu0 %4866
        %4868 = vrot.lane.b32.xlu0 %v4776, 32
        %v4869 = vpop.permute.xlu0 %4868
        %4870 = vrot.lane.b32.xlu0 %v4777, 32
        %v4871 = vpop.permute.xlu0 %4870
        %4872 = vrot.lane.b32.xlu0 %v4778, 32
        %v4873 = vpop.permute.xlu0 %4872
        %4874 = vrot.lane.b32.xlu0 %v4779, 32
        %v4875 = vpop.permute.xlu0 %4874
        %4908 = vst.msk [vmem:[#allocation5] sm:$0xff] %vm2554, %v4813
        %4909 = vst.msk [vmem:[#allocation5 + $0x8] sm:$0xff] %vm2554, %v4815
        %4910 = vst.msk [vmem:[#allocation5 + $0x10] sm:$0xff] %vm2554, %v4817
        %4911 = vst.msk [vmem:[#allocation5 + $0x18] sm:$0xff] %vm2554, %v4819
        %4912 = vst.msk [vmem:[#allocation5 + $0x20] sm:$0xff] %vm2554, %v4821
        %4913 = vst.msk [vmem:[#allocation5 + $0x28] sm:$0xff] %vm2554, %v4823
        %4914 = vst.msk [vmem:[#allocation5 + $0x30] sm:$0xff] %vm2554, %v4825
        %4915 = vst.msk [vmem:[#allocation5 + $0x38] sm:$0xff] %vm2554, %v4827
        %4916 = vst.msk [vmem:[#allocation5 + $0x40] sm:$0xff] %vm2554, %v4829
        %4917 = vst.msk [vmem:[#allocation5 + $0x48] sm:$0xff] %vm2554, %v4831
        %4918 = vst.msk [vmem:[#allocation5 + $0x50] sm:$0xff] %vm2554, %v4833
        %4919 = vst.msk [vmem:[#allocation5 + $0x58] sm:$0xff] %vm2554, %v4835
        %4920 = vst.msk [vmem:[#allocation5 + $0x60] sm:$0xff] %vm2554, %v4837
        %4921 = vst.msk [vmem:[#allocation5 + $0x68] sm:$0xff] %vm2554, %v4839
        %4922 = vst.msk [vmem:[#allocation5 + $0x70] sm:$0xff] %vm2554, %v4841
        %4923 = vst.msk [vmem:[#allocation5 + $0x78] sm:$0xff] %vm2554, %v4843
        %4924 = vst.msk [vmem:[#allocation5 + $0x80] sm:$0xff] %vm2554, %v4845
        %4925 = vst.msk [vmem:[#allocation5 + $0x88] sm:$0xff] %vm2554, %v4847
        %4926 = vst.msk [vmem:[#allocation5 + $0x90] sm:$0xff] %vm2554, %v4849
        %4927 = vst.msk [vmem:[#allocation5 + $0x98] sm:$0xff] %vm2554, %v4851
        %4928 = vst.msk [vmem:[#allocation5 + $0xa0] sm:$0xff] %vm2554, %v4853
        %4929 = vst.msk [vmem:[#allocation5 + $0xa8] sm:$0xff] %vm2554, %v4855
        %4930 = vst.msk [vmem:[#allocation5 + $0xb0] sm:$0xff] %vm2554, %v4857
        %4931 = vst.msk [vmem:[#allocation5 + $0xb8] sm:$0xff] %vm2554, %v4859
        %4932 = vst.msk [vmem:[#allocation5 + $0xc0] sm:$0xff] %vm2554, %v4861
        %4933 = vst.msk [vmem:[#allocation5 + $0xc8] sm:$0xff] %vm2554, %v4863
        %4934 = vst.msk [vmem:[#allocation5 + $0xd0] sm:$0xff] %vm2554, %v4865
        %4935 = vst.msk [vmem:[#allocation5 + $0xd8] sm:$0xff] %vm2554, %v4867
        %4936 = vst.msk [vmem:[#allocation5 + $0xe0] sm:$0xff] %vm2554, %v4869
        %4937 = vst.msk [vmem:[#allocation5 + $0xe8] sm:$0xff] %vm2554, %v4871
        %4938 = vst.msk [vmem:[#allocation5 + $0xf0] sm:$0xff] %vm2554, %v4873
        %4939 = vst.msk [vmem:[#allocation5 + $0xf8] sm:$0xff] %vm2554, %v4875
        %v4940 = vld [vmem:[%s4171 + $0x4] sm:$0xff]
        %v4941 = vld [vmem:[%s4171 + $0xc] sm:$0xff]
        %v4942 = vld [vmem:[%s4171 + $0x1c] sm:$0xff]
        %v4943 = vld [vmem:[%s4171 + $0x24] sm:$0xff]
        %v4944 = vld [vmem:[%s4171 + $0x34] sm:$0xff]
        %v4945 = vld [vmem:[%s4171 + $0x3c] sm:$0xff]
        %v4946 = vld [vmem:[%s4171 + $0x4c] sm:$0xff]
        %v4947 = vld [vmem:[%s4171 + $0x54] sm:$0xff]
        %v4948 = vld [vmem:[%s4171 + $0x64] sm:$0xff]
        %v4949 = vld [vmem:[%s4171 + $0x6c] sm:$0xff]
        %v4950 = vld [vmem:[%s4171 + $0x7c] sm:$0xff]
        %v4951 = vld [vmem:[%s4171 + $0x84] sm:$0xff]
        %v4952 = vld [vmem:[%s4171 + $0x94] sm:$0xff]
        %v4953 = vld [vmem:[%s4171 + $0x9c] sm:$0xff]
        %v4954 = vld [vmem:[%s4171 + $0xac] sm:$0xff]
        %v4955 = vld [vmem:[%s4171 + $0xb4] sm:$0xff]
        %v4956 = vld [vmem:[%s4171 + $0xc4] sm:$0xff]
        %v4957 = vld [vmem:[%s4171 + $0xcc] sm:$0xff]
        %v4958 = vld [vmem:[%s4171 + $0xdc] sm:$0xff]
        %v4959 = vld [vmem:[%s4171 + $0xe4] sm:$0xff]
        %v4960 = vld [vmem:[%s4171 + $0xf4] sm:$0xff]
        %v4961 = vld [vmem:[%s4171 + $0xfc] sm:$0xff]
        %v4962 = vld [vmem:[%s4171 + $0x10c] sm:$0xff]
        %v4963 = vld [vmem:[%s4171 + $0x114] sm:$0xff]
        %v4964 = vld [vmem:[%s4171 + $0x124] sm:$0xff]
        %v4965 = vld [vmem:[%s4171 + $0x12c] sm:$0xff]
        %v4966 = vld [vmem:[%s4171 + $0x13c] sm:$0xff]
        %v4967 = vld [vmem:[%s4171 + $0x144] sm:$0xff]
        %v4968 = vld [vmem:[%s4171 + $0x154] sm:$0xff]
        %v4969 = vld [vmem:[%s4171 + $0x15c] sm:$0xff]
        %v4970 = vld [vmem:[%s4171 + $0x16c] sm:$0xff]
        %v4971 = vld [vmem:[%s4171 + $0x174] sm:$0xff]
        %5004 = vrot.lane.b32.xlu0 %v4940, 36
        %v5005 = vpop.permute.xlu0 %5004
        %5006 = vrot.lane.b32.xlu0 %v4941, 36
        %v5007 = vpop.permute.xlu0 %5006
        %5008 = vrot.lane.b32.xlu0 %v4942, 36
        %v5009 = vpop.permute.xlu0 %5008
        %5010 = vrot.lane.b32.xlu0 %v4943, 36
        %v5011 = vpop.permute.xlu0 %5010
        %5012 = vrot.lane.b32.xlu0 %v4944, 36
        %v5013 = vpop.permute.xlu0 %5012
        %5014 = vrot.lane.b32.xlu0 %v4945, 36
        %v5015 = vpop.permute.xlu0 %5014
        %5016 = vrot.lane.b32.xlu0 %v4946, 36
        %v5017 = vpop.permute.xlu0 %5016
        %5018 = vrot.lane.b32.xlu0 %v4947, 36
        %v5019 = vpop.permute.xlu0 %5018
        %5020 = vrot.lane.b32.xlu0 %v4948, 36
        %v5021 = vpop.permute.xlu0 %5020
        %5022 = vrot.lane.b32.xlu0 %v4949, 36
        %v5023 = vpop.permute.xlu0 %5022
        %5024 = vrot.lane.b32.xlu0 %v4950, 36
        %v5025 = vpop.permute.xlu0 %5024
        %5026 = vrot.lane.b32.xlu0 %v4951, 36
        %v5027 = vpop.permute.xlu0 %5026
        %5028 = vrot.lane.b32.xlu0 %v4952, 36
        %v5029 = vpop.permute.xlu0 %5028
        %5030 = vrot.lane.b32.xlu0 %v4953, 36
        %v5031 = vpop.permute.xlu0 %5030
        %5032 = vrot.lane.b32.xlu0 %v4954, 36
        %v5033 = vpop.permute.xlu0 %5032
        %5034 = vrot.lane.b32.xlu0 %v4955, 36
        %v5035 = vpop.permute.xlu0 %5034
        %5036 = vrot.lane.b32.xlu0 %v4956, 36
        %v5037 = vpop.permute.xlu0 %5036
        %5038 = vrot.lane.b32.xlu0 %v4957, 36
        %v5039 = vpop.permute.xlu0 %5038
        %5040 = vrot.lane.b32.xlu0 %v4958, 36
        %v5041 = vpop.permute.xlu0 %5040
        %5042 = vrot.lane.b32.xlu0 %v4959, 36
        %v5043 = vpop.permute.xlu0 %5042
        %5044 = vrot.lane.b32.xlu0 %v4960, 36
        %v5045 = vpop.permute.xlu0 %5044
        %5046 = vrot.lane.b32.xlu0 %v4961, 36
        %v5047 = vpop.permute.xlu0 %5046
        %5048 = vrot.lane.b32.xlu0 %v4962, 36
        %v5049 = vpop.permute.xlu0 %5048
        %5050 = vrot.lane.b32.xlu0 %v4963, 36
        %v5051 = vpop.permute.xlu0 %5050
        %5052 = vrot.lane.b32.xlu0 %v4964, 36
        %v5053 = vpop.permute.xlu0 %5052
        %5054 = vrot.lane.b32.xlu0 %v4965, 36
        %v5055 = vpop.permute.xlu0 %5054
        %5056 = vrot.lane.b32.xlu0 %v4966, 36
        %v5057 = vpop.permute.xlu0 %5056
        %5058 = vrot.lane.b32.xlu0 %v4967, 36
        %v5059 = vpop.permute.xlu0 %5058
        %5060 = vrot.lane.b32.xlu0 %v4968, 36
        %v5061 = vpop.permute.xlu0 %5060
        %5062 = vrot.lane.b32.xlu0 %v4969, 36
        %v5063 = vpop.permute.xlu0 %5062
        %5064 = vrot.lane.b32.xlu0 %v4970, 36
        %v5065 = vpop.permute.xlu0 %5064
        %5066 = vrot.lane.b32.xlu0 %v4971, 36
        %v5067 = vpop.permute.xlu0 %5066
        %vm5100 = vcmask 326944
        %5101 = vst.msk [vmem:[#allocation5] sm:$0xff] %vm5100, %v5005
        %5102 = vst.msk [vmem:[#allocation5 + $0x8] sm:$0xff] %vm5100, %v5007
        %5103 = vst.msk [vmem:[#allocation5 + $0x10] sm:$0xff] %vm5100, %v5009
        %5104 = vst.msk [vmem:[#allocation5 + $0x18] sm:$0xff] %vm5100, %v5011
        %5105 = vst.msk [vmem:[#allocation5 + $0x20] sm:$0xff] %vm5100, %v5013
        %5106 = vst.msk [vmem:[#allocation5 + $0x28] sm:$0xff] %vm5100, %v5015
        %5107 = vst.msk [vmem:[#allocation5 + $0x30] sm:$0xff] %vm5100, %v5017
        %5108 = vst.msk [vmem:[#allocation5 + $0x38] sm:$0xff] %vm5100, %v5019
        %5109 = vst.msk [vmem:[#allocation5 + $0x40] sm:$0xff] %vm5100, %v5021
        %5110 = vst.msk [vmem:[#allocation5 + $0x48] sm:$0xff] %vm5100, %v5023
        %5111 = vst.msk [vmem:[#allocation5 + $0x50] sm:$0xff] %vm5100, %v5025
        %5112 = vst.msk [vmem:[#allocation5 + $0x58] sm:$0xff] %vm5100, %v5027
        %5113 = vst.msk [vmem:[#allocation5 + $0x60] sm:$0xff] %vm5100, %v5029
        %5114 = vst.msk [vmem:[#allocation5 + $0x68] sm:$0xff] %vm5100, %v5031
        %5115 = vst.msk [vmem:[#allocation5 + $0x70] sm:$0xff] %vm5100, %v5033
        %5116 = vst.msk [vmem:[#allocation5 + $0x78] sm:$0xff] %vm5100, %v5035
        %5117 = vst.msk [vmem:[#allocation5 + $0x80] sm:$0xff] %vm5100, %v5037
        %5118 = vst.msk [vmem:[#allocation5 + $0x88] sm:$0xff] %vm5100, %v5039
        %5119 = vst.msk [vmem:[#allocation5 + $0x90] sm:$0xff] %vm5100, %v5041
        %5120 = vst.msk [vmem:[#allocation5 + $0x98] sm:$0xff] %vm5100, %v5043
        %5121 = vst.msk [vmem:[#allocation5 + $0xa0] sm:$0xff] %vm5100, %v5045
        %5122 = vst.msk [vmem:[#allocation5 + $0xa8] sm:$0xff] %vm5100, %v5047
        %5123 = vst.msk [vmem:[#allocation5 + $0xb0] sm:$0xff] %vm5100, %v5049
        %5124 = vst.msk [vmem:[#allocation5 + $0xb8] sm:$0xff] %vm5100, %v5051
        %5125 = vst.msk [vmem:[#allocation5 + $0xc0] sm:$0xff] %vm5100, %v5053
        %5126 = vst.msk [vmem:[#allocation5 + $0xc8] sm:$0xff] %vm5100, %v5055
        %5127 = vst.msk [vmem:[#allocation5 + $0xd0] sm:$0xff] %vm5100, %v5057
        %5128 = vst.msk [vmem:[#allocation5 + $0xd8] sm:$0xff] %vm5100, %v5059
        %5129 = vst.msk [vmem:[#allocation5 + $0xe0] sm:$0xff] %vm5100, %v5061
        %5130 = vst.msk [vmem:[#allocation5 + $0xe8] sm:$0xff] %vm5100, %v5063
        %5131 = vst.msk [vmem:[#allocation5 + $0xf0] sm:$0xff] %vm5100, %v5065
        %5132 = vst.msk [vmem:[#allocation5 + $0xf8] sm:$0xff] %vm5100, %v5067
        %v5133 = vld [vmem:[%s3306] sm:$0xff]
        %v5134 = vld [vmem:[%s3306 + $0x8] sm:$0xff]
        %v5135 = vld [vmem:[%s3306 + $0x18] sm:$0xff]
        %v5136 = vld [vmem:[%s3306 + $0x20] sm:$0xff]
        %v5137 = vld [vmem:[%s3306 + $0x30] sm:$0xff]
        %v5138 = vld [vmem:[%s3306 + $0x38] sm:$0xff]
        %v5139 = vld [vmem:[%s3306 + $0x48] sm:$0xff]
        %v5140 = vld [vmem:[%s3306 + $0x50] sm:$0xff]
        %v5141 = vld [vmem:[%s3306 + $0x60] sm:$0xff]
        %v5142 = vld [vmem:[%s3306 + $0x68] sm:$0xff]
        %v5143 = vld [vmem:[%s3306 + $0x78] sm:$0xff]
        %v5144 = vld [vmem:[%s3306 + $0x80] sm:$0xff]
        %v5145 = vld [vmem:[%s3306 + $0x90] sm:$0xff]
        %v5146 = vld [vmem:[%s3306 + $0x98] sm:$0xff]
        %v5147 = vld [vmem:[%s3306 + $0xa8] sm:$0xff]
        %v5148 = vld [vmem:[%s3306 + $0xb0] sm:$0xff]
        %v5149 = vld [vmem:[%s3306 + $0xc0] sm:$0xff]
        %v5150 = vld [vmem:[%s3306 + $0xc8] sm:$0xff]
        %v5151 = vld [vmem:[%s3306 + $0xd8] sm:$0xff]
        %v5152 = vld [vmem:[%s3306 + $0xe0] sm:$0xff]
        %v5153 = vld [vmem:[%s3306 + $0xf0] sm:$0xff]
        %v5154 = vld [vmem:[%s3306 + $0xf8] sm:$0xff]
        %v5155 = vld [vmem:[%s3306 + $0x108] sm:$0xff]
        %v5156 = vld [vmem:[%s3306 + $0x110] sm:$0xff]
        %v5157 = vld [vmem:[%s3306 + $0x120] sm:$0xff]
        %v5158 = vld [vmem:[%s3306 + $0x128] sm:$0xff]
        %v5159 = vld [vmem:[%s3306 + $0x138] sm:$0xff]
        %v5160 = vld [vmem:[%s3306 + $0x140] sm:$0xff]
        %v5161 = vld [vmem:[%s3306 + $0x150] sm:$0xff]
        %v5162 = vld [vmem:[%s3306 + $0x158] sm:$0xff]
        %v5163 = vld [vmem:[%s3306 + $0x168] sm:$0xff]
        %v5164 = vld [vmem:[%s3306 + $0x170] sm:$0xff]
        %5197 = vrot.lane.b32.xlu0 %v5133, 40
        %v5198 = vpop.permute.xlu0 %5197
        %5199 = vrot.lane.b32.xlu0 %v5134, 40
        %v5200 = vpop.permute.xlu0 %5199
        %5201 = vrot.lane.b32.xlu0 %v5135, 40
        %v5202 = vpop.permute.xlu0 %5201
        %5203 = vrot.lane.b32.xlu0 %v5136, 40
        %v5204 = vpop.permute.xlu0 %5203
        %5205 = vrot.lane.b32.xlu0 %v5137, 40
        %v5206 = vpop.permute.xlu0 %5205
        %5207 = vrot.lane.b32.xlu0 %v5138, 40
        %v5208 = vpop.permute.xlu0 %5207
        %5209 = vrot.lane.b32.xlu0 %v5139, 40
        %v5210 = vpop.permute.xlu0 %5209
        %5211 = vrot.lane.b32.xlu0 %v5140, 40
        %v5212 = vpop.permute.xlu0 %5211
        %5213 = vrot.lane.b32.xlu0 %v5141, 40
        %v5214 = vpop.permute.xlu0 %5213
        %5215 = vrot.lane.b32.xlu0 %v5142, 40
        %v5216 = vpop.permute.xlu0 %5215
        %5217 = vrot.lane.b32.xlu0 %v5143, 40
        %v5218 = vpop.permute.xlu0 %5217
        %5219 = vrot.lane.b32.xlu0 %v5144, 40
        %v5220 = vpop.permute.xlu0 %5219
        %5221 = vrot.lane.b32.xlu0 %v5145, 40
        %v5222 = vpop.permute.xlu0 %5221
        %5223 = vrot.lane.b32.xlu0 %v5146, 40
        %v5224 = vpop.permute.xlu0 %5223
        %5225 = vrot.lane.b32.xlu0 %v5147, 40
        %v5226 = vpop.permute.xlu0 %5225
        %5227 = vrot.lane.b32.xlu0 %v5148, 40
        %v5228 = vpop.permute.xlu0 %5227
        %5229 = vrot.lane.b32.xlu0 %v5149, 40
        %v5230 = vpop.permute.xlu0 %5229
        %5231 = vrot.lane.b32.xlu0 %v5150, 40
        %v5232 = vpop.permute.xlu0 %5231
        %5233 = vrot.lane.b32.xlu0 %v5151, 40
        %v5234 = vpop.permute.xlu0 %5233
        %5235 = vrot.lane.b32.xlu0 %v5152, 40
        %v5236 = vpop.permute.xlu0 %5235
        %5237 = vrot.lane.b32.xlu0 %v5153, 40
        %v5238 = vpop.permute.xlu0 %5237
        %5239 = vrot.lane.b32.xlu0 %v5154, 40
        %v5240 = vpop.permute.xlu0 %5239
        %5241 = vrot.lane.b32.xlu0 %v5155, 40
        %v5242 = vpop.permute.xlu0 %5241
        %5243 = vrot.lane.b32.xlu0 %v5156, 40
        %v5244 = vpop.permute.xlu0 %5243
        %5245 = vrot.lane.b32.xlu0 %v5157, 40
        %v5246 = vpop.permute.xlu0 %5245
        %5247 = vrot.lane.b32.xlu0 %v5158, 40
        %v5248 = vpop.permute.xlu0 %5247
        %5249 = vrot.lane.b32.xlu0 %v5159, 40
        %v5250 = vpop.permute.xlu0 %5249
        %5251 = vrot.lane.b32.xlu0 %v5160, 40
        %v5252 = vpop.permute.xlu0 %5251
        %5253 = vrot.lane.b32.xlu0 %v5161, 40
        %v5254 = vpop.permute.xlu0 %5253
        %5255 = vrot.lane.b32.xlu0 %v5162, 40
        %v5256 = vpop.permute.xlu0 %5255
        %5257 = vrot.lane.b32.xlu0 %v5163, 40
        %v5258 = vpop.permute.xlu0 %5257
        %5259 = vrot.lane.b32.xlu0 %v5164, 40
        %v5260 = vpop.permute.xlu0 %5259
        %vm5293 = vcmask 359744
        %5294 = vst.msk [vmem:[#allocation5] sm:$0xff] %vm5293, %v5198
        %5295 = vst.msk [vmem:[#allocation5 + $0x8] sm:$0xff] %vm5293, %v5200
        %5296 = vst.msk [vmem:[#allocation5 + $0x10] sm:$0xff] %vm5293, %v5202
        %5297 = vst.msk [vmem:[#allocation5 + $0x18] sm:$0xff] %vm5293, %v5204
        %5298 = vst.msk [vmem:[#allocation5 + $0x20] sm:$0xff] %vm5293, %v5206
        %5299 = vst.msk [vmem:[#allocation5 + $0x28] sm:$0xff] %vm5293, %v5208
        %5300 = vst.msk [vmem:[#allocation5 + $0x30] sm:$0xff] %vm5293, %v5210
        %5301 = vst.msk [vmem:[#allocation5 + $0x38] sm:$0xff] %vm5293, %v5212
        %5302 = vst.msk [vmem:[#allocation5 + $0x40] sm:$0xff] %vm5293, %v5214
        %5303 = vst.msk [vmem:[#allocation5 + $0x48] sm:$0xff] %vm5293, %v5216
        %5304 = vst.msk [vmem:[#allocation5 + $0x50] sm:$0xff] %vm5293, %v5218
        %5305 = vst.msk [vmem:[#allocation5 + $0x58] sm:$0xff] %vm5293, %v5220
        %5306 = vst.msk [vmem:[#allocation5 + $0x60] sm:$0xff] %vm5293, %v5222
        %5307 = vst.msk [vmem:[#allocation5 + $0x68] sm:$0xff] %vm5293, %v5224
        %5308 = vst.msk [vmem:[#allocation5 + $0x70] sm:$0xff] %vm5293, %v5226
        %5309 = vst.msk [vmem:[#allocation5 + $0x78] sm:$0xff] %vm5293, %v5228
        %5310 = vst.msk [vmem:[#allocation5 + $0x80] sm:$0xff] %vm5293, %v5230
        %5311 = vst.msk [vmem:[#allocation5 + $0x88] sm:$0xff] %vm5293, %v5232
        %5312 = vst.msk [vmem:[#allocation5 + $0x90] sm:$0xff] %vm5293, %v5234
        %5313 = vst.msk [vmem:[#allocation5 + $0x98] sm:$0xff] %vm5293, %v5236
        %5314 = vst.msk [vmem:[#allocation5 + $0xa0] sm:$0xff] %vm5293, %v5238
        %5315 = vst.msk [vmem:[#allocation5 + $0xa8] sm:$0xff] %vm5293, %v5240
        %5316 = vst.msk [vmem:[#allocation5 + $0xb0] sm:$0xff] %vm5293, %v5242
        %5317 = vst.msk [vmem:[#allocation5 + $0xb8] sm:$0xff] %vm5293, %v5244
        %5318 = vst.msk [vmem:[#allocation5 + $0xc0] sm:$0xff] %vm5293, %v5246
        %5319 = vst.msk [vmem:[#allocation5 + $0xc8] sm:$0xff] %vm5293, %v5248
        %5320 = vst.msk [vmem:[#allocation5 + $0xd0] sm:$0xff] %vm5293, %v5250
        %5321 = vst.msk [vmem:[#allocation5 + $0xd8] sm:$0xff] %vm5293, %v5252
        %5322 = vst.msk [vmem:[#allocation5 + $0xe0] sm:$0xff] %vm5293, %v5254
        %5323 = vst.msk [vmem:[#allocation5 + $0xe8] sm:$0xff] %vm5293, %v5256
        %5324 = vst.msk [vmem:[#allocation5 + $0xf0] sm:$0xff] %vm5293, %v5258
        %5325 = vst.msk [vmem:[#allocation5 + $0xf8] sm:$0xff] %vm5293, %v5260
        %v5326 = vld [vmem:[%s3306 + $0x1] sm:$0xff]
        %v5327 = vld [vmem:[%s3306 + $0x9] sm:$0xff]
        %v5328 = vld [vmem:[%s3306 + $0x19] sm:$0xff]
        %v5329 = vld [vmem:[%s3306 + $0x21] sm:$0xff]
        %v5330 = vld [vmem:[%s3306 + $0x31] sm:$0xff]
        %v5331 = vld [vmem:[%s3306 + $0x39] sm:$0xff]
        %v5332 = vld [vmem:[%s3306 + $0x49] sm:$0xff]
        %v5333 = vld [vmem:[%s3306 + $0x51] sm:$0xff]
        %v5334 = vld [vmem:[%s3306 + $0x61] sm:$0xff]
        %v5335 = vld [vmem:[%s3306 + $0x69] sm:$0xff]
        %v5336 = vld [vmem:[%s3306 + $0x79] sm:$0xff]
        %v5337 = vld [vmem:[%s3306 + $0x81] sm:$0xff]
        %v5338 = vld [vmem:[%s3306 + $0x91] sm:$0xff]
        %v5339 = vld [vmem:[%s3306 + $0x99] sm:$0xff]
        %v5340 = vld [vmem:[%s3306 + $0xa9] sm:$0xff]
        %v5341 = vld [vmem:[%s3306 + $0xb1] sm:$0xff]
        %v5342 = vld [vmem:[%s3306 + $0xc1] sm:$0xff]
        %v5343 = vld [vmem:[%s3306 + $0xc9] sm:$0xff]
        %v5344 = vld [vmem:[%s3306 + $0xd9] sm:$0xff]
        %v5345 = vld [vmem:[%s3306 + $0xe1] sm:$0xff]
        %v5346 = vld [vmem:[%s3306 + $0xf1] sm:$0xff]
        %v5347 = vld [vmem:[%s3306 + $0xf9] sm:$0xff]
        %v5348 = vld [vmem:[%s3306 + $0x109] sm:$0xff]
        %v5349 = vld [vmem:[%s3306 + $0x111] sm:$0xff]
        %v5350 = vld [vmem:[%s3306 + $0x121] sm:$0xff]
        %v5351 = vld [vmem:[%s3306 + $0x129] sm:$0xff]
        %v5352 = vld [vmem:[%s3306 + $0x139] sm:$0xff]
        %v5353 = vld [vmem:[%s3306 + $0x141] sm:$0xff]
        %v5354 = vld [vmem:[%s3306 + $0x151] sm:$0xff]
        %v5355 = vld [vmem:[%s3306 + $0x159] sm:$0xff]
        %v5356 = vld [vmem:[%s3306 + $0x169] sm:$0xff]
        %v5357 = vld [vmem:[%s3306 + $0x171] sm:$0xff]
        %5390 = vrot.lane.b32.xlu0 %v5326, 44
        %v5391 = vpop.permute.xlu0 %5390
        %5392 = vrot.lane.b32.xlu0 %v5327, 44
        %v5393 = vpop.permute.xlu0 %5392
        %5394 = vrot.lane.b32.xlu0 %v5328, 44
        %v5395 = vpop.permute.xlu0 %5394
        %5396 = vrot.lane.b32.xlu0 %v5329, 44
        %v5397 = vpop.permute.xlu0 %5396
        %5398 = vrot.lane.b32.xlu0 %v5330, 44
        %v5399 = vpop.permute.xlu0 %5398
        %5400 = vrot.lane.b32.xlu0 %v5331, 44
        %v5401 = vpop.permute.xlu0 %5400
        %5402 = vrot.lane.b32.xlu0 %v5332, 44
        %v5403 = vpop.permute.xlu0 %5402
        %5404 = vrot.lane.b32.xlu0 %v5333, 44
        %v5405 = vpop.permute.xlu0 %5404
        %5406 = vrot.lane.b32.xlu0 %v5334, 44
        %v5407 = vpop.permute.xlu0 %5406
        %5408 = vrot.lane.b32.xlu0 %v5335, 44
        %v5409 = vpop.permute.xlu0 %5408
        %5410 = vrot.lane.b32.xlu0 %v5336, 44
        %v5411 = vpop.permute.xlu0 %5410
        %5412 = vrot.lane.b32.xlu0 %v5337, 44
        %v5413 = vpop.permute.xlu0 %5412
        %5414 = vrot.lane.b32.xlu0 %v5338, 44
        %v5415 = vpop.permute.xlu0 %5414
        %5416 = vrot.lane.b32.xlu0 %v5339, 44
        %v5417 = vpop.permute.xlu0 %5416
        %5418 = vrot.lane.b32.xlu0 %v5340, 44
        %v5419 = vpop.permute.xlu0 %5418
        %5420 = vrot.lane.b32.xlu0 %v5341, 44
        %v5421 = vpop.permute.xlu0 %5420
        %5422 = vrot.lane.b32.xlu0 %v5342, 44
        %v5423 = vpop.permute.xlu0 %5422
        %5424 = vrot.lane.b32.xlu0 %v5343, 44
        %v5425 = vpop.permute.xlu0 %5424
        %5426 = vrot.lane.b32.xlu0 %v5344, 44
        %v5427 = vpop.permute.xlu0 %5426
        %5428 = vrot.lane.b32.xlu0 %v5345, 44
        %v5429 = vpop.permute.xlu0 %5428
        %5430 = vrot.lane.b32.xlu0 %v5346, 44
        %v5431 = vpop.permute.xlu0 %5430
        %5432 = vrot.lane.b32.xlu0 %v5347, 44
        %v5433 = vpop.permute.xlu0 %5432
        %5434 = vrot.lane.b32.xlu0 %v5348, 44
        %v5435 = vpop.permute.xlu0 %5434
        %5436 = vrot.lane.b32.xlu0 %v5349, 44
        %v5437 = vpop.permute.xlu0 %5436
        %5438 = vrot.lane.b32.xlu0 %v5350, 44
        %v5439 = vpop.permute.xlu0 %5438
        %5440 = vrot.lane.b32.xlu0 %v5351, 44
        %v5441 = vpop.permute.xlu0 %5440
        %5442 = vrot.lane.b32.xlu0 %v5352, 44
        %v5443 = vpop.permute.xlu0 %5442
        %5444 = vrot.lane.b32.xlu0 %v5353, 44
        %v5445 = vpop.permute.xlu0 %5444
        %5446 = vrot.lane.b32.xlu0 %v5354, 44
        %v5447 = vpop.permute.xlu0 %5446
        %5448 = vrot.lane.b32.xlu0 %v5355, 44
        %v5449 = vpop.permute.xlu0 %5448
        %5450 = vrot.lane.b32.xlu0 %v5356, 44
        %v5451 = vpop.permute.xlu0 %5450
        %5452 = vrot.lane.b32.xlu0 %v5357, 44
        %v5453 = vpop.permute.xlu0 %5452
        %vm5486 = vcmask 392544
        %5487 = vst.msk [vmem:[#allocation5] sm:$0xff] %vm5486, %v5391
        %5488 = vst.msk [vmem:[#allocation5 + $0x8] sm:$0xff] %vm5486, %v5393
        %5489 = vst.msk [vmem:[#allocation5 + $0x10] sm:$0xff] %vm5486, %v5395
        %5490 = vst.msk [vmem:[#allocation5 + $0x18] sm:$0xff] %vm5486, %v5397
        %5491 = vst.msk [vmem:[#allocation5 + $0x20] sm:$0xff] %vm5486, %v5399
        %5492 = vst.msk [vmem:[#allocation5 + $0x28] sm:$0xff] %vm5486, %v5401
        %5493 = vst.msk [vmem:[#allocation5 + $0x30] sm:$0xff] %vm5486, %v5403
        %5494 = vst.msk [vmem:[#allocation5 + $0x38] sm:$0xff] %vm5486, %v5405
        %5495 = vst.msk [vmem:[#allocation5 + $0x40] sm:$0xff] %vm5486, %v5407
        %5496 = vst.msk [vmem:[#allocation5 + $0x48] sm:$0xff] %vm5486, %v5409
        %5497 = vst.msk [vmem:[#allocation5 + $0x50] sm:$0xff] %vm5486, %v5411
        %5498 = vst.msk [vmem:[#allocation5 + $0x58] sm:$0xff] %vm5486, %v5413
        %5499 = vst.msk [vmem:[#allocation5 + $0x60] sm:$0xff] %vm5486, %v5415
        %5500 = vst.msk [vmem:[#allocation5 + $0x68] sm:$0xff] %vm5486, %v5417
        %5501 = vst.msk [vmem:[#allocation5 + $0x70] sm:$0xff] %vm5486, %v5419
        %5502 = vst.msk [vmem:[#allocation5 + $0x78] sm:$0xff] %vm5486, %v5421
        %5503 = vst.msk [vmem:[#allocation5 + $0x80] sm:$0xff] %vm5486, %v5423
        %5504 = vst.msk [vmem:[#allocation5 + $0x88] sm:$0xff] %vm5486, %v5425
        %5505 = vst.msk [vmem:[#allocation5 + $0x90] sm:$0xff] %vm5486, %v5427
        %5506 = vst.msk [vmem:[#allocation5 + $0x98] sm:$0xff] %vm5486, %v5429
        %5507 = vst.msk [vmem:[#allocation5 + $0xa0] sm:$0xff] %vm5486, %v5431
        %5508 = vst.msk [vmem:[#allocation5 + $0xa8] sm:$0xff] %vm5486, %v5433
        %5509 = vst.msk [vmem:[#allocation5 + $0xb0] sm:$0xff] %vm5486, %v5435
        %5510 = vst.msk [vmem:[#allocation5 + $0xb8] sm:$0xff] %vm5486, %v5437
        %5511 = vst.msk [vmem:[#allocation5 + $0xc0] sm:$0xff] %vm5486, %v5439
        %5512 = vst.msk [vmem:[#allocation5 + $0xc8] sm:$0xff] %vm5486, %v5441
        %5513 = vst.msk [vmem:[#allocation5 + $0xd0] sm:$0xff] %vm5486, %v5443
        %5514 = vst.msk [vmem:[#allocation5 + $0xd8] sm:$0xff] %vm5486, %v5445
        %5515 = vst.msk [vmem:[#allocation5 + $0xe0] sm:$0xff] %vm5486, %v5447
        %5516 = vst.msk [vmem:[#allocation5 + $0xe8] sm:$0xff] %vm5486, %v5449
        %5517 = vst.msk [vmem:[#allocation5 + $0xf0] sm:$0xff] %vm5486, %v5451
        %5518 = vst.msk [vmem:[#allocation5 + $0xf8] sm:$0xff] %vm5486, %v5453
        %v5519 = vld [vmem:[%s3306 + $0x2] sm:$0xff]
        %v5520 = vld [vmem:[%s3306 + $0xa] sm:$0xff]
        %v5521 = vld [vmem:[%s3306 + $0x1a] sm:$0xff]
        %v5522 = vld [vmem:[%s3306 + $0x22] sm:$0xff]
        %v5523 = vld [vmem:[%s3306 + $0x32] sm:$0xff]
        %v5524 = vld [vmem:[%s3306 + $0x3a] sm:$0xff]
        %v5525 = vld [vmem:[%s3306 + $0x4a] sm:$0xff]
        %v5526 = vld [vmem:[%s3306 + $0x52] sm:$0xff]
        %v5527 = vld [vmem:[%s3306 + $0x62] sm:$0xff]
        %v5528 = vld [vmem:[%s3306 + $0x6a] sm:$0xff]
        %v5529 = vld [vmem:[%s3306 + $0x7a] sm:$0xff]
        %v5530 = vld [vmem:[%s3306 + $0x82] sm:$0xff]
        %v5531 = vld [vmem:[%s3306 + $0x92] sm:$0xff]
        %v5532 = vld [vmem:[%s3306 + $0x9a] sm:$0xff]
        %v5533 = vld [vmem:[%s3306 + $0xaa] sm:$0xff]
        %v5534 = vld [vmem:[%s3306 + $0xb2] sm:$0xff]
        %v5535 = vld [vmem:[%s3306 + $0xc2] sm:$0xff]
        %v5536 = vld [vmem:[%s3306 + $0xca] sm:$0xff]
        %v5537 = vld [vmem:[%s3306 + $0xda] sm:$0xff]
        %v5538 = vld [vmem:[%s3306 + $0xe2] sm:$0xff]
        %v5539 = vld [vmem:[%s3306 + $0xf2] sm:$0xff]
        %v5540 = vld [vmem:[%s3306 + $0xfa] sm:$0xff]
        %v5541 = vld [vmem:[%s3306 + $0x10a] sm:$0xff]
        %v5542 = vld [vmem:[%s3306 + $0x112] sm:$0xff]
        %v5543 = vld [vmem:[%s3306 + $0x122] sm:$0xff]
        %v5544 = vld [vmem:[%s3306 + $0x12a] sm:$0xff]
        %v5545 = vld [vmem:[%s3306 + $0x13a] sm:$0xff]
        %v5546 = vld [vmem:[%s3306 + $0x142] sm:$0xff]
        %v5547 = vld [vmem:[%s3306 + $0x152] sm:$0xff]
        %v5548 = vld [vmem:[%s3306 + $0x15a] sm:$0xff]
        %v5549 = vld [vmem:[%s3306 + $0x16a] sm:$0xff]
        %v5550 = vld [vmem:[%s3306 + $0x172] sm:$0xff]
        %5583 = vrot.lane.b32.xlu0 %v5519, 48
        %v5584 = vpop.permute.xlu0 %5583
        %5585 = vrot.lane.b32.xlu0 %v5520, 48
        %v5586 = vpop.permute.xlu0 %5585
        %5587 = vrot.lane.b32.xlu0 %v5521, 48
        %v5588 = vpop.permute.xlu0 %5587
        %5589 = vrot.lane.b32.xlu0 %v5522, 48
        %v5590 = vpop.permute.xlu0 %5589
        %5591 = vrot.lane.b32.xlu0 %v5523, 48
        %v5592 = vpop.permute.xlu0 %5591
        %5593 = vrot.lane.b32.xlu0 %v5524, 48
        %v5594 = vpop.permute.xlu0 %5593
        %5595 = vrot.lane.b32.xlu0 %v5525, 48
        %v5596 = vpop.permute.xlu0 %5595
        %5597 = vrot.lane.b32.xlu0 %v5526, 48
        %v5598 = vpop.permute.xlu0 %5597
        %5599 = vrot.lane.b32.xlu0 %v5527, 48
        %v5600 = vpop.permute.xlu0 %5599
        %5601 = vrot.lane.b32.xlu0 %v5528, 48
        %v5602 = vpop.permute.xlu0 %5601
        %5603 = vrot.lane.b32.xlu0 %v5529, 48
        %v5604 = vpop.permute.xlu0 %5603
        %5605 = vrot.lane.b32.xlu0 %v5530, 48
        %v5606 = vpop.permute.xlu0 %5605
        %5607 = vrot.lane.b32.xlu0 %v5531, 48
        %v5608 = vpop.permute.xlu0 %5607
        %5609 = vrot.lane.b32.xlu0 %v5532, 48
        %v5610 = vpop.permute.xlu0 %5609
        %5611 = vrot.lane.b32.xlu0 %v5533, 48
        %v5612 = vpop.permute.xlu0 %5611
        %5613 = vrot.lane.b32.xlu0 %v5534, 48
        %v5614 = vpop.permute.xlu0 %5613
        %5615 = vrot.lane.b32.xlu0 %v5535, 48
        %v5616 = vpop.permute.xlu0 %5615
        %5617 = vrot.lane.b32.xlu0 %v5536, 48
        %v5618 = vpop.permute.xlu0 %5617
        %5619 = vrot.lane.b32.xlu0 %v5537, 48
        %v5620 = vpop.permute.xlu0 %5619
        %5621 = vrot.lane.b32.xlu0 %v5538, 48
        %v5622 = vpop.permute.xlu0 %5621
        %5623 = vrot.lane.b32.xlu0 %v5539, 48
        %v5624 = vpop.permute.xlu0 %5623
        %5625 = vrot.lane.b32.xlu0 %v5540, 48
        %v5626 = vpop.permute.xlu0 %5625
        %5627 = vrot.lane.b32.xlu0 %v5541, 48
        %v5628 = vpop.permute.xlu0 %5627
        %5629 = vrot.lane.b32.xlu0 %v5542, 48
        %v5630 = vpop.permute.xlu0 %5629
        %5631 = vrot.lane.b32.xlu0 %v5543, 48
        %v5632 = vpop.permute.xlu0 %5631
        %5633 = vrot.lane.b32.xlu0 %v5544, 48
        %v5634 = vpop.permute.xlu0 %5633
        %5635 = vrot.lane.b32.xlu0 %v5545, 48
        %v5636 = vpop.permute.xlu0 %5635
        %5637 = vrot.lane.b32.xlu0 %v5546, 48
        %v5638 = vpop.permute.xlu0 %5637
        %5639 = vrot.lane.b32.xlu0 %v5547, 48
        %v5640 = vpop.permute.xlu0 %5639
        %5641 = vrot.lane.b32.xlu0 %v5548, 48
        %v5642 = vpop.permute.xlu0 %5641
        %5643 = vrot.lane.b32.xlu0 %v5549, 48
        %v5644 = vpop.permute.xlu0 %5643
        %5645 = vrot.lane.b32.xlu0 %v5550, 48
        %v5646 = vpop.permute.xlu0 %5645
        %vm5679 = vcmask 425344
        %5680 = vst.msk [vmem:[#allocation5] sm:$0xff] %vm5679, %v5584
        %5681 = vst.msk [vmem:[#allocation5 + $0x8] sm:$0xff] %vm5679, %v5586
        %5682 = vst.msk [vmem:[#allocation5 + $0x10] sm:$0xff] %vm5679, %v5588
        %5683 = vst.msk [vmem:[#allocation5 + $0x18] sm:$0xff] %vm5679, %v5590
        %5684 = vst.msk [vmem:[#allocation5 + $0x20] sm:$0xff] %vm5679, %v5592
        %5685 = vst.msk [vmem:[#allocation5 + $0x28] sm:$0xff] %vm5679, %v5594
        %5686 = vst.msk [vmem:[#allocation5 + $0x30] sm:$0xff] %vm5679, %v5596
        %5687 = vst.msk [vmem:[#allocation5 + $0x38] sm:$0xff] %vm5679, %v5598
        %5688 = vst.msk [vmem:[#allocation5 + $0x40] sm:$0xff] %vm5679, %v5600
        %5689 = vst.msk [vmem:[#allocation5 + $0x48] sm:$0xff] %vm5679, %v5602
        %5690 = vst.msk [vmem:[#allocation5 + $0x50] sm:$0xff] %vm5679, %v5604
        %5691 = vst.msk [vmem:[#allocation5 + $0x58] sm:$0xff] %vm5679, %v5606
        %5692 = vst.msk [vmem:[#allocation5 + $0x60] sm:$0xff] %vm5679, %v5608
        %5693 = vst.msk [vmem:[#allocation5 + $0x68] sm:$0xff] %vm5679, %v5610
        %5694 = vst.msk [vmem:[#allocation5 + $0x70] sm:$0xff] %vm5679, %v5612
        %5695 = vst.msk [vmem:[#allocation5 + $0x78] sm:$0xff] %vm5679, %v5614
        %5696 = vst.msk [vmem:[#allocation5 + $0x80] sm:$0xff] %vm5679, %v5616
        %5697 = vst.msk [vmem:[#allocation5 + $0x88] sm:$0xff] %vm5679, %v5618
        %5698 = vst.msk [vmem:[#allocation5 + $0x90] sm:$0xff] %vm5679, %v5620
        %5699 = vst.msk [vmem:[#allocation5 + $0x98] sm:$0xff] %vm5679, %v5622
        %5700 = vst.msk [vmem:[#allocation5 + $0xa0] sm:$0xff] %vm5679, %v5624
        %5701 = vst.msk [vmem:[#allocation5 + $0xa8] sm:$0xff] %vm5679, %v5626
        %5702 = vst.msk [vmem:[#allocation5 + $0xb0] sm:$0xff] %vm5679, %v5628
        %5703 = vst.msk [vmem:[#allocation5 + $0xb8] sm:$0xff] %vm5679, %v5630
        %5704 = vst.msk [vmem:[#allocation5 + $0xc0] sm:$0xff] %vm5679, %v5632
        %5705 = vst.msk [vmem:[#allocation5 + $0xc8] sm:$0xff] %vm5679, %v5634
        %5706 = vst.msk [vmem:[#allocation5 + $0xd0] sm:$0xff] %vm5679, %v5636
        %5707 = vst.msk [vmem:[#allocation5 + $0xd8] sm:$0xff] %vm5679, %v5638
        %5708 = vst.msk [vmem:[#allocation5 + $0xe0] sm:$0xff] %vm5679, %v5640
        %5709 = vst.msk [vmem:[#allocation5 + $0xe8] sm:$0xff] %vm5679, %v5642
        %5710 = vst.msk [vmem:[#allocation5 + $0xf0] sm:$0xff] %vm5679, %v5644
        %5711 = vst.msk [vmem:[#allocation5 + $0xf8] sm:$0xff] %vm5679, %v5646
        %v5712 = vld [vmem:[%s3306 + $0x3] sm:$0xff]
        %v5713 = vld [vmem:[%s3306 + $0xb] sm:$0xff]
        %v5714 = vld [vmem:[%s3306 + $0x1b] sm:$0xff]
        %v5715 = vld [vmem:[%s3306 + $0x23] sm:$0xff]
        %v5716 = vld [vmem:[%s3306 + $0x33] sm:$0xff]
        %v5717 = vld [vmem:[%s3306 + $0x3b] sm:$0xff]
        %v5718 = vld [vmem:[%s3306 + $0x4b] sm:$0xff]
        %v5719 = vld [vmem:[%s3306 + $0x53] sm:$0xff]
        %v5720 = vld [vmem:[%s3306 + $0x63] sm:$0xff]
        %v5721 = vld [vmem:[%s3306 + $0x6b] sm:$0xff]
        %v5722 = vld [vmem:[%s3306 + $0x7b] sm:$0xff]
        %v5723 = vld [vmem:[%s3306 + $0x83] sm:$0xff]
        %v5724 = vld [vmem:[%s3306 + $0x93] sm:$0xff]
        %v5725 = vld [vmem:[%s3306 + $0x9b] sm:$0xff]
        %v5726 = vld [vmem:[%s3306 + $0xab] sm:$0xff]
        %v5727 = vld [vmem:[%s3306 + $0xb3] sm:$0xff]
        %v5728 = vld [vmem:[%s3306 + $0xc3] sm:$0xff]
        %v5729 = vld [vmem:[%s3306 + $0xcb] sm:$0xff]
        %v5730 = vld [vmem:[%s3306 + $0xdb] sm:$0xff]
        %v5731 = vld [vmem:[%s3306 + $0xe3] sm:$0xff]
        %v5732 = vld [vmem:[%s3306 + $0xf3] sm:$0xff]
        %v5733 = vld [vmem:[%s3306 + $0xfb] sm:$0xff]
        %v5734 = vld [vmem:[%s3306 + $0x10b] sm:$0xff]
        %v5735 = vld [vmem:[%s3306 + $0x113] sm:$0xff]
        %v5736 = vld [vmem:[%s3306 + $0x123] sm:$0xff]
        %v5737 = vld [vmem:[%s3306 + $0x12b] sm:$0xff]
        %v5738 = vld [vmem:[%s3306 + $0x13b] sm:$0xff]
        %v5739 = vld [vmem:[%s3306 + $0x143] sm:$0xff]
        %v5740 = vld [vmem:[%s3306 + $0x153] sm:$0xff]
        %v5741 = vld [vmem:[%s3306 + $0x15b] sm:$0xff]
        %v5742 = vld [vmem:[%s3306 + $0x16b] sm:$0xff]
        %v5743 = vld [vmem:[%s3306 + $0x173] sm:$0xff]
        %5776 = vrot.lane.b32.xlu0 %v5712, 52
        %v5777 = vpop.permute.xlu0 %5776
        %5778 = vrot.lane.b32.xlu0 %v5713, 52
        %v5779 = vpop.permute.xlu0 %5778
        %5780 = vrot.lane.b32.xlu0 %v5714, 52
        %v5781 = vpop.permute.xlu0 %5780
        %5782 = vrot.lane.b32.xlu0 %v5715, 52
        %v5783 = vpop.permute.xlu0 %5782
        %5784 = vrot.lane.b32.xlu0 %v5716, 52
        %v5785 = vpop.permute.xlu0 %5784
        %5786 = vrot.lane.b32.xlu0 %v5717, 52
        %v5787 = vpop.permute.xlu0 %5786
        %5788 = vrot.lane.b32.xlu0 %v5718, 52
        %v5789 = vpop.permute.xlu0 %5788
        %5790 = vrot.lane.b32.xlu0 %v5719, 52
        %v5791 = vpop.permute.xlu0 %5790
        %5792 = vrot.lane.b32.xlu0 %v5720, 52
        %v5793 = vpop.permute.xlu0 %5792
        %5794 = vrot.lane.b32.xlu0 %v5721, 52
        %v5795 = vpop.permute.xlu0 %5794
        %5796 = vrot.lane.b32.xlu0 %v5722, 52
        %v5797 = vpop.permute.xlu0 %5796
        %5798 = vrot.lane.b32.xlu0 %v5723, 52
        %v5799 = vpop.permute.xlu0 %5798
        %5800 = vrot.lane.b32.xlu0 %v5724, 52
        %v5801 = vpop.permute.xlu0 %5800
        %5802 = vrot.lane.b32.xlu0 %v5725, 52
        %v5803 = vpop.permute.xlu0 %5802
        %5804 = vrot.lane.b32.xlu0 %v5726, 52
        %v5805 = vpop.permute.xlu0 %5804
        %5806 = vrot.lane.b32.xlu0 %v5727, 52
        %v5807 = vpop.permute.xlu0 %5806
        %5808 = vrot.lane.b32.xlu0 %v5728, 52
        %v5809 = vpop.permute.xlu0 %5808
        %5810 = vrot.lane.b32.xlu0 %v5729, 52
        %v5811 = vpop.permute.xlu0 %5810
        %5812 = vrot.lane.b32.xlu0 %v5730, 52
        %v5813 = vpop.permute.xlu0 %5812
        %5814 = vrot.lane.b32.xlu0 %v5731, 52
        %v5815 = vpop.permute.xlu0 %5814
        %5816 = vrot.lane.b32.xlu0 %v5732, 52
        %v5817 = vpop.permute.xlu0 %5816
        %5818 = vrot.lane.b32.xlu0 %v5733, 52
        %v5819 = vpop.permute.xlu0 %5818
        %5820 = vrot.lane.b32.xlu0 %v5734, 52
        %v5821 = vpop.permute.xlu0 %5820
        %5822 = vrot.lane.b32.xlu0 %v5735, 52
        %v5823 = vpop.permute.xlu0 %5822
        %5824 = vrot.lane.b32.xlu0 %v5736, 52
        %v5825 = vpop.permute.xlu0 %5824
        %5826 = vrot.lane.b32.xlu0 %v5737, 52
        %v5827 = vpop.permute.xlu0 %5826
        %5828 = vrot.lane.b32.xlu0 %v5738, 52
        %v5829 = vpop.permute.xlu0 %5828
        %5830 = vrot.lane.b32.xlu0 %v5739, 52
        %v5831 = vpop.permute.xlu0 %5830
        %5832 = vrot.lane.b32.xlu0 %v5740, 52
        %v5833 = vpop.permute.xlu0 %5832
        %5834 = vrot.lane.b32.xlu0 %v5741, 52
        %v5835 = vpop.permute.xlu0 %5834
        %5836 = vrot.lane.b32.xlu0 %v5742, 52
        %v5837 = vpop.permute.xlu0 %5836
        %5838 = vrot.lane.b32.xlu0 %v5743, 52
        %v5839 = vpop.permute.xlu0 %5838
        %vm5872 = vcmask 458144
        %5873 = vst.msk [vmem:[#allocation5] sm:$0xff] %vm5872, %v5777
        %5874 = vst.msk [vmem:[#allocation5 + $0x8] sm:$0xff] %vm5872, %v5779
        %5875 = vst.msk [vmem:[#allocation5 + $0x10] sm:$0xff] %vm5872, %v5781
        %5876 = vst.msk [vmem:[#allocation5 + $0x18] sm:$0xff] %vm5872, %v5783
        %5877 = vst.msk [vmem:[#allocation5 + $0x20] sm:$0xff] %vm5872, %v5785
        %5878 = vst.msk [vmem:[#allocation5 + $0x28] sm:$0xff] %vm5872, %v5787
        %5879 = vst.msk [vmem:[#allocation5 + $0x30] sm:$0xff] %vm5872, %v5789
        %5880 = vst.msk [vmem:[#allocation5 + $0x38] sm:$0xff] %vm5872, %v5791
        %5881 = vst.msk [vmem:[#allocation5 + $0x40] sm:$0xff] %vm5872, %v5793
        %5882 = vst.msk [vmem:[#allocation5 + $0x48] sm:$0xff] %vm5872, %v5795
        %5883 = vst.msk [vmem:[#allocation5 + $0x50] sm:$0xff] %vm5872, %v5797
        %5884 = vst.msk [vmem:[#allocation5 + $0x58] sm:$0xff] %vm5872, %v5799
        %5885 = vst.msk [vmem:[#allocation5 + $0x60] sm:$0xff] %vm5872, %v5801
        %5886 = vst.msk [vmem:[#allocation5 + $0x68] sm:$0xff] %vm5872, %v5803
        %5887 = vst.msk [vmem:[#allocation5 + $0x70] sm:$0xff] %vm5872, %v5805
        %5888 = vst.msk [vmem:[#allocation5 + $0x78] sm:$0xff] %vm5872, %v5807
        %5889 = vst.msk [vmem:[#allocation5 + $0x80] sm:$0xff] %vm5872, %v5809
        %5890 = vst.msk [vmem:[#allocation5 + $0x88] sm:$0xff] %vm5872, %v5811
        %5891 = vst.msk [vmem:[#allocation5 + $0x90] sm:$0xff] %vm5872, %v5813
        %5892 = vst.msk [vmem:[#allocation5 + $0x98] sm:$0xff] %vm5872, %v5815
        %5893 = vst.msk [vmem:[#allocation5 + $0xa0] sm:$0xff] %vm5872, %v5817
        %5894 = vst.msk [vmem:[#allocation5 + $0xa8] sm:$0xff] %vm5872, %v5819
        %5895 = vst.msk [vmem:[#allocation5 + $0xb0] sm:$0xff] %vm5872, %v5821
        %5896 = vst.msk [vmem:[#allocation5 + $0xb8] sm:$0xff] %vm5872, %v5823
        %5897 = vst.msk [vmem:[#allocation5 + $0xc0] sm:$0xff] %vm5872, %v5825
        %5898 = vst.msk [vmem:[#allocation5 + $0xc8] sm:$0xff] %vm5872, %v5827
        %5899 = vst.msk [vmem:[#allocation5 + $0xd0] sm:$0xff] %vm5872, %v5829
        %5900 = vst.msk [vmem:[#allocation5 + $0xd8] sm:$0xff] %vm5872, %v5831
        %5901 = vst.msk [vmem:[#allocation5 + $0xe0] sm:$0xff] %vm5872, %v5833
        %5902 = vst.msk [vmem:[#allocation5 + $0xe8] sm:$0xff] %vm5872, %v5835
        %5903 = vst.msk [vmem:[#allocation5 + $0xf0] sm:$0xff] %vm5872, %v5837
        %5904 = vst.msk [vmem:[#allocation5 + $0xf8] sm:$0xff] %vm5872, %v5839
        %v5905 = vld [vmem:[%s3306 + $0x4] sm:$0xff]
        %v5906 = vld [vmem:[%s3306 + $0xc] sm:$0xff]
        %v5907 = vld [vmem:[%s3306 + $0x1c] sm:$0xff]
        %v5908 = vld [vmem:[%s3306 + $0x24] sm:$0xff]
        %v5909 = vld [vmem:[%s3306 + $0x34] sm:$0xff]
        %v5910 = vld [vmem:[%s3306 + $0x3c] sm:$0xff]
        %v5911 = vld [vmem:[%s3306 + $0x4c] sm:$0xff]
        %v5912 = vld [vmem:[%s3306 + $0x54] sm:$0xff]
        %v5913 = vld [vmem:[%s3306 + $0x64] sm:$0xff]
        %v5914 = vld [vmem:[%s3306 + $0x6c] sm:$0xff]
        %v5915 = vld [vmem:[%s3306 + $0x7c] sm:$0xff]
        %v5916 = vld [vmem:[%s3306 + $0x84] sm:$0xff]
        %v5917 = vld [vmem:[%s3306 + $0x94] sm:$0xff]
        %v5918 = vld [vmem:[%s3306 + $0x9c] sm:$0xff]
        %v5919 = vld [vmem:[%s3306 + $0xac] sm:$0xff]
        %v5920 = vld [vmem:[%s3306 + $0xb4] sm:$0xff]
        %v5921 = vld [vmem:[%s3306 + $0xc4] sm:$0xff]
        %v5922 = vld [vmem:[%s3306 + $0xcc] sm:$0xff]
        %v5923 = vld [vmem:[%s3306 + $0xdc] sm:$0xff]
        %v5924 = vld [vmem:[%s3306 + $0xe4] sm:$0xff]
        %v5925 = vld [vmem:[%s3306 + $0xf4] sm:$0xff]
        %v5926 = vld [vmem:[%s3306 + $0xfc] sm:$0xff]
        %v5927 = vld [vmem:[%s3306 + $0x10c] sm:$0xff]
        %v5928 = vld [vmem:[%s3306 + $0x114] sm:$0xff]
        %v5929 = vld [vmem:[%s3306 + $0x124] sm:$0xff]
        %v5930 = vld [vmem:[%s3306 + $0x12c] sm:$0xff]
        %v5931 = vld [vmem:[%s3306 + $0x13c] sm:$0xff]
        %v5932 = vld [vmem:[%s3306 + $0x144] sm:$0xff]
        %v5933 = vld [vmem:[%s3306 + $0x154] sm:$0xff]
        %v5934 = vld [vmem:[%s3306 + $0x15c] sm:$0xff]
        %v5935 = vld [vmem:[%s3306 + $0x16c] sm:$0xff]
        %v5936 = vld [vmem:[%s3306 + $0x174] sm:$0xff]
        %5969 = vrot.lane.b32.xlu0 %v5905, 56
        %v5970 = vpop.permute.xlu0 %5969
        %5971 = vrot.lane.b32.xlu0 %v5906, 56
        %v5972 = vpop.permute.xlu0 %5971
        %5973 = vrot.lane.b32.xlu0 %v5907, 56
        %v5974 = vpop.permute.xlu0 %5973
        %5975 = vrot.lane.b32.xlu0 %v5908, 56
        %v5976 = vpop.permute.xlu0 %5975
        %5977 = vrot.lane.b32.xlu0 %v5909, 56
        %v5978 = vpop.permute.xlu0 %5977
        %5979 = vrot.lane.b32.xlu0 %v5910, 56
        %v5980 = vpop.permute.xlu0 %5979
        %5981 = vrot.lane.b32.xlu0 %v5911, 56
        %v5982 = vpop.permute.xlu0 %5981
        %5983 = vrot.lane.b32.xlu0 %v5912, 56
        %v5984 = vpop.permute.xlu0 %5983
        %5985 = vrot.lane.b32.xlu0 %v5913, 56
        %v5986 = vpop.permute.xlu0 %5985
        %5987 = vrot.lane.b32.xlu0 %v5914, 56
        %v5988 = vpop.permute.xlu0 %5987
        %5989 = vrot.lane.b32.xlu0 %v5915, 56
        %v5990 = vpop.permute.xlu0 %5989
        %5991 = vrot.lane.b32.xlu0 %v5916, 56
        %v5992 = vpop.permute.xlu0 %5991
        %5993 = vrot.lane.b32.xlu0 %v5917, 56
        %v5994 = vpop.permute.xlu0 %5993
        %5995 = vrot.lane.b32.xlu0 %v5918, 56
        %v5996 = vpop.permute.xlu0 %5995
        %5997 = vrot.lane.b32.xlu0 %v5919, 56
        %v5998 = vpop.permute.xlu0 %5997
        %5999 = vrot.lane.b32.xlu0 %v5920, 56
        %v6000 = vpop.permute.xlu0 %5999
        %6001 = vrot.lane.b32.xlu0 %v5921, 56
        %v6002 = vpop.permute.xlu0 %6001
        %6003 = vrot.lane.b32.xlu0 %v5922, 56
        %v6004 = vpop.permute.xlu0 %6003
        %6005 = vrot.lane.b32.xlu0 %v5923, 56
        %v6006 = vpop.permute.xlu0 %6005
        %6007 = vrot.lane.b32.xlu0 %v5924, 56
        %v6008 = vpop.permute.xlu0 %6007
        %6009 = vrot.lane.b32.xlu0 %v5925, 56
        %v6010 = vpop.permute.xlu0 %6009
        %6011 = vrot.lane.b32.xlu0 %v5926, 56
        %v6012 = vpop.permute.xlu0 %6011
        %6013 = vrot.lane.b32.xlu0 %v5927, 56
        %v6014 = vpop.permute.xlu0 %6013
        %6015 = vrot.lane.b32.xlu0 %v5928, 56
        %v6016 = vpop.permute.xlu0 %6015
        %6017 = vrot.lane.b32.xlu0 %v5929, 56
        %v6018 = vpop.permute.xlu0 %6017
        %6019 = vrot.lane.b32.xlu0 %v5930, 56
        %v6020 = vpop.permute.xlu0 %6019
        %6021 = vrot.lane.b32.xlu0 %v5931, 56
        %v6022 = vpop.permute.xlu0 %6021
        %6023 = vrot.lane.b32.xlu0 %v5932, 56
        %v6024 = vpop.permute.xlu0 %6023
        %6025 = vrot.lane.b32.xlu0 %v5933, 56
        %v6026 = vpop.permute.xlu0 %6025
        %6027 = vrot.lane.b32.xlu0 %v5934, 56
        %v6028 = vpop.permute.xlu0 %6027
        %6029 = vrot.lane.b32.xlu0 %v5935, 56
        %v6030 = vpop.permute.xlu0 %6029
        %6031 = vrot.lane.b32.xlu0 %v5936, 56
        %v6032 = vpop.permute.xlu0 %6031
        %vm6065 = vcmask 490944
        %6066 = vst.msk [vmem:[#allocation5] sm:$0xff] %vm6065, %v5970
        %6067 = vst.msk [vmem:[#allocation5 + $0x8] sm:$0xff] %vm6065, %v5972
        %6068 = vst.msk [vmem:[#allocation5 + $0x10] sm:$0xff] %vm6065, %v5974
        %6069 = vst.msk [vmem:[#allocation5 + $0x18] sm:$0xff] %vm6065, %v5976
        %6070 = vst.msk [vmem:[#allocation5 + $0x20] sm:$0xff] %vm6065, %v5978
        %6071 = vst.msk [vmem:[#allocation5 + $0x28] sm:$0xff] %vm6065, %v5980
        %6072 = vst.msk [vmem:[#allocation5 + $0x30] sm:$0xff] %vm6065, %v5982
        %6073 = vst.msk [vmem:[#allocation5 + $0x38] sm:$0xff] %vm6065, %v5984
        %6074 = vst.msk [vmem:[#allocation5 + $0x40] sm:$0xff] %vm6065, %v5986
        %6075 = vst.msk [vmem:[#allocation5 + $0x48] sm:$0xff] %vm6065, %v5988
        %6076 = vst.msk [vmem:[#allocation5 + $0x50] sm:$0xff] %vm6065, %v5990
        %6077 = vst.msk [vmem:[#allocation5 + $0x58] sm:$0xff] %vm6065, %v5992
        %6078 = vst.msk [vmem:[#allocation5 + $0x60] sm:$0xff] %vm6065, %v5994
        %6079 = vst.msk [vmem:[#allocation5 + $0x68] sm:$0xff] %vm6065, %v5996
        %6080 = vst.msk [vmem:[#allocation5 + $0x70] sm:$0xff] %vm6065, %v5998
        %6081 = vst.msk [vmem:[#allocation5 + $0x78] sm:$0xff] %vm6065, %v6000
        %6082 = vst.msk [vmem:[#allocation5 + $0x80] sm:$0xff] %vm6065, %v6002
        %6083 = vst.msk [vmem:[#allocation5 + $0x88] sm:$0xff] %vm6065, %v6004
        %6084 = vst.msk [vmem:[#allocation5 + $0x90] sm:$0xff] %vm6065, %v6006
        %6085 = vst.msk [vmem:[#allocation5 + $0x98] sm:$0xff] %vm6065, %v6008
        %6086 = vst.msk [vmem:[#allocation5 + $0xa0] sm:$0xff] %vm6065, %v6010
        %6087 = vst.msk [vmem:[#allocation5 + $0xa8] sm:$0xff] %vm6065, %v6012
        %6088 = vst.msk [vmem:[#allocation5 + $0xb0] sm:$0xff] %vm6065, %v6014
        %6089 = vst.msk [vmem:[#allocation5 + $0xb8] sm:$0xff] %vm6065, %v6016
        %6090 = vst.msk [vmem:[#allocation5 + $0xc0] sm:$0xff] %vm6065, %v6018
        %6091 = vst.msk [vmem:[#allocation5 + $0xc8] sm:$0xff] %vm6065, %v6020
        %6092 = vst.msk [vmem:[#allocation5 + $0xd0] sm:$0xff] %vm6065, %v6022
        %6093 = vst.msk [vmem:[#allocation5 + $0xd8] sm:$0xff] %vm6065, %v6024
        %6094 = vst.msk [vmem:[#allocation5 + $0xe0] sm:$0xff] %vm6065, %v6026
        %6095 = vst.msk [vmem:[#allocation5 + $0xe8] sm:$0xff] %vm6065, %v6028
        %6096 = vst.msk [vmem:[#allocation5 + $0xf0] sm:$0xff] %vm6065, %v6030
        %6097 = vst.msk [vmem:[#allocation5 + $0xf8] sm:$0xff] %vm6065, %v6032
        %s6098 = scalar_lea.vmem [#allocation4], 72
        %v6099 = vld [vmem:[%s6098] sm:$0xff]
        %v6100 = vld [vmem:[%s6098 + $0x8] sm:$0xff]
        %v6101 = vld [vmem:[%s6098 + $0x18] sm:$0xff]
        %v6102 = vld [vmem:[%s6098 + $0x20] sm:$0xff]
        %v6103 = vld [vmem:[%s6098 + $0x30] sm:$0xff]
        %v6104 = vld [vmem:[%s6098 + $0x38] sm:$0xff]
        %v6105 = vld [vmem:[%s6098 + $0x48] sm:$0xff]
        %v6106 = vld [vmem:[%s6098 + $0x50] sm:$0xff]
        %v6107 = vld [vmem:[%s6098 + $0x60] sm:$0xff]
        %v6108 = vld [vmem:[%s6098 + $0x68] sm:$0xff]
        %v6109 = vld [vmem:[%s6098 + $0x78] sm:$0xff]
        %v6110 = vld [vmem:[%s6098 + $0x80] sm:$0xff]
        %v6111 = vld [vmem:[%s6098 + $0x90] sm:$0xff]
        %v6112 = vld [vmem:[%s6098 + $0x98] sm:$0xff]
        %v6113 = vld [vmem:[%s6098 + $0xa8] sm:$0xff]
        %v6114 = vld [vmem:[%s6098 + $0xb0] sm:$0xff]
        %v6115 = vld [vmem:[%s6098 + $0xc0] sm:$0xff]
        %v6116 = vld [vmem:[%s6098 + $0xc8] sm:$0xff]
        %v6117 = vld [vmem:[%s6098 + $0xd8] sm:$0xff]
        %v6118 = vld [vmem:[%s6098 + $0xe0] sm:$0xff]
        %v6119 = vld [vmem:[%s6098 + $0xf0] sm:$0xff]
        %v6120 = vld [vmem:[%s6098 + $0xf8] sm:$0xff]
        %v6121 = vld [vmem:[%s6098 + $0x108] sm:$0xff]
        %v6122 = vld [vmem:[%s6098 + $0x110] sm:$0xff]
        %v6123 = vld [vmem:[%s6098 + $0x120] sm:$0xff]
        %v6124 = vld [vmem:[%s6098 + $0x128] sm:$0xff]
        %v6125 = vld [vmem:[%s6098 + $0x138] sm:$0xff]
        %v6126 = vld [vmem:[%s6098 + $0x140] sm:$0xff]
        %v6127 = vld [vmem:[%s6098 + $0x150] sm:$0xff]
        %v6128 = vld [vmem:[%s6098 + $0x158] sm:$0xff]
        %v6129 = vld [vmem:[%s6098 + $0x168] sm:$0xff]
        %v6130 = vld [vmem:[%s6098 + $0x170] sm:$0xff]
        %6163 = vrot.lane.b32.xlu0 %v6099, 60
        %v6164 = vpop.permute.xlu0 %6163
        %6165 = vrot.lane.b32.xlu0 %v6100, 60
        %v6166 = vpop.permute.xlu0 %6165
        %6167 = vrot.lane.b32.xlu0 %v6101, 60
        %v6168 = vpop.permute.xlu0 %6167
        %6169 = vrot.lane.b32.xlu0 %v6102, 60
        %v6170 = vpop.permute.xlu0 %6169
        %6171 = vrot.lane.b32.xlu0 %v6103, 60
        %v6172 = vpop.permute.xlu0 %6171
        %6173 = vrot.lane.b32.xlu0 %v6104, 60
        %v6174 = vpop.permute.xlu0 %6173
        %6175 = vrot.lane.b32.xlu0 %v6105, 60
        %v6176 = vpop.permute.xlu0 %6175
        %6177 = vrot.lane.b32.xlu0 %v6106, 60
        %v6178 = vpop.permute.xlu0 %6177
        %6179 = vrot.lane.b32.xlu0 %v6107, 60
        %v6180 = vpop.permute.xlu0 %6179
        %6181 = vrot.lane.b32.xlu0 %v6108, 60
        %v6182 = vpop.permute.xlu0 %6181
        %6183 = vrot.lane.b32.xlu0 %v6109, 60
        %v6184 = vpop.permute.xlu0 %6183
        %6185 = vrot.lane.b32.xlu0 %v6110, 60
        %v6186 = vpop.permute.xlu0 %6185
        %6187 = vrot.lane.b32.xlu0 %v6111, 60
        %v6188 = vpop.permute.xlu0 %6187
        %6189 = vrot.lane.b32.xlu0 %v6112, 60
        %v6190 = vpop.permute.xlu0 %6189
        %6191 = vrot.lane.b32.xlu0 %v6113, 60
        %v6192 = vpop.permute.xlu0 %6191
        %6193 = vrot.lane.b32.xlu0 %v6114, 60
        %v6194 = vpop.permute.xlu0 %6193
        %6195 = vrot.lane.b32.xlu0 %v6115, 60
        %v6196 = vpop.permute.xlu0 %6195
        %6197 = vrot.lane.b32.xlu0 %v6116, 60
        %v6198 = vpop.permute.xlu0 %6197
        %6199 = vrot.lane.b32.xlu0 %v6117, 60
        %v6200 = vpop.permute.xlu0 %6199
        %6201 = vrot.lane.b32.xlu0 %v6118, 60
        %v6202 = vpop.permute.xlu0 %6201
        %6203 = vrot.lane.b32.xlu0 %v6119, 60
        %v6204 = vpop.permute.xlu0 %6203
        %6205 = vrot.lane.b32.xlu0 %v6120, 60
        %v6206 = vpop.permute.xlu0 %6205
        %6207 = vrot.lane.b32.xlu0 %v6121, 60
        %v6208 = vpop.permute.xlu0 %6207
        %6209 = vrot.lane.b32.xlu0 %v6122, 60
        %v6210 = vpop.permute.xlu0 %6209
        %6211 = vrot.lane.b32.xlu0 %v6123, 60
        %v6212 = vpop.permute.xlu0 %6211
        %6213 = vrot.lane.b32.xlu0 %v6124, 60
        %v6214 = vpop.permute.xlu0 %6213
        %6215 = vrot.lane.b32.xlu0 %v6125, 60
        %v6216 = vpop.permute.xlu0 %6215
        %6217 = vrot.lane.b32.xlu0 %v6126, 60
        %v6218 = vpop.permute.xlu0 %6217
        %6219 = vrot.lane.b32.xlu0 %v6127, 60
        %v6220 = vpop.permute.xlu0 %6219
        %6221 = vrot.lane.b32.xlu0 %v6128, 60
        %v6222 = vpop.permute.xlu0 %6221
        %6223 = vrot.lane.b32.xlu0 %v6129, 60
        %v6224 = vpop.permute.xlu0 %6223
        %6225 = vrot.lane.b32.xlu0 %v6130, 60
        %v6226 = vpop.permute.xlu0 %6225
        %vm6259 = vcmask 523744
        %6260 = vst.msk [vmem:[#allocation5] sm:$0xff] %vm6259, %v6164
        %6261 = vst.msk [vmem:[#allocation5 + $0x8] sm:$0xff] %vm6259, %v6166
        %6262 = vst.msk [vmem:[#allocation5 + $0x10] sm:$0xff] %vm6259, %v6168
        %6263 = vst.msk [vmem:[#allocation5 + $0x18] sm:$0xff] %vm6259, %v6170
        %6264 = vst.msk [vmem:[#allocation5 + $0x20] sm:$0xff] %vm6259, %v6172
        %6265 = vst.msk [vmem:[#allocation5 + $0x28] sm:$0xff] %vm6259, %v6174
        %6266 = vst.msk [vmem:[#allocation5 + $0x30] sm:$0xff] %vm6259, %v6176
        %6267 = vst.msk [vmem:[#allocation5 + $0x38] sm:$0xff] %vm6259, %v6178
        %6268 = vst.msk [vmem:[#allocation5 + $0x40] sm:$0xff] %vm6259, %v6180
        %6269 = vst.msk [vmem:[#allocation5 + $0x48] sm:$0xff] %vm6259, %v6182
        %6270 = vst.msk [vmem:[#allocation5 + $0x50] sm:$0xff] %vm6259, %v6184
        %6271 = vst.msk [vmem:[#allocation5 + $0x58] sm:$0xff] %vm6259, %v6186
        %6272 = vst.msk [vmem:[#allocation5 + $0x60] sm:$0xff] %vm6259, %v6188
        %6273 = vst.msk [vmem:[#allocation5 + $0x68] sm:$0xff] %vm6259, %v6190
        %6274 = vst.msk [vmem:[#allocation5 + $0x70] sm:$0xff] %vm6259, %v6192
        %6275 = vst.msk [vmem:[#allocation5 + $0x78] sm:$0xff] %vm6259, %v6194
        %6276 = vst.msk [vmem:[#allocation5 + $0x80] sm:$0xff] %vm6259, %v6196
        %6277 = vst.msk [vmem:[#allocation5 + $0x88] sm:$0xff] %vm6259, %v6198
        %6278 = vst.msk [vmem:[#allocation5 + $0x90] sm:$0xff] %vm6259, %v6200
        %6279 = vst.msk [vmem:[#allocation5 + $0x98] sm:$0xff] %vm6259, %v6202
        %6280 = vst.msk [vmem:[#allocation5 + $0xa0] sm:$0xff] %vm6259, %v6204
        %6281 = vst.msk [vmem:[#allocation5 + $0xa8] sm:$0xff] %vm6259, %v6206
        %6282 = vst.msk [vmem:[#allocation5 + $0xb0] sm:$0xff] %vm6259, %v6208
        %6283 = vst.msk [vmem:[#allocation5 + $0xb8] sm:$0xff] %vm6259, %v6210
        %6284 = vst.msk [vmem:[#allocation5 + $0xc0] sm:$0xff] %vm6259, %v6212
        %6285 = vst.msk [vmem:[#allocation5 + $0xc8] sm:$0xff] %vm6259, %v6214
        %6286 = vst.msk [vmem:[#allocation5 + $0xd0] sm:$0xff] %vm6259, %v6216
        %6287 = vst.msk [vmem:[#allocation5 + $0xd8] sm:$0xff] %vm6259, %v6218
        %6288 = vst.msk [vmem:[#allocation5 + $0xe0] sm:$0xff] %vm6259, %v6220
        %6289 = vst.msk [vmem:[#allocation5 + $0xe8] sm:$0xff] %vm6259, %v6222
        %6290 = vst.msk [vmem:[#allocation5 + $0xf0] sm:$0xff] %vm6259, %v6224
        %6291 = vst.msk [vmem:[#allocation5 + $0xf8] sm:$0xff] %vm6259, %v6226
        %v6292 = vld [vmem:[%s6098 + $0x1] sm:$0xff]
        %v6293 = vld [vmem:[%s6098 + $0x9] sm:$0xff]
        %v6294 = vld [vmem:[%s6098 + $0x19] sm:$0xff]
        %v6295 = vld [vmem:[%s6098 + $0x21] sm:$0xff]
        %v6296 = vld [vmem:[%s6098 + $0x31] sm:$0xff]
        %v6297 = vld [vmem:[%s6098 + $0x39] sm:$0xff]
        %v6298 = vld [vmem:[%s6098 + $0x49] sm:$0xff]
        %v6299 = vld [vmem:[%s6098 + $0x51] sm:$0xff]
        %v6300 = vld [vmem:[%s6098 + $0x61] sm:$0xff]
        %v6301 = vld [vmem:[%s6098 + $0x69] sm:$0xff]
        %v6302 = vld [vmem:[%s6098 + $0x79] sm:$0xff]
        %v6303 = vld [vmem:[%s6098 + $0x81] sm:$0xff]
        %v6304 = vld [vmem:[%s6098 + $0x91] sm:$0xff]
        %v6305 = vld [vmem:[%s6098 + $0x99] sm:$0xff]
        %v6306 = vld [vmem:[%s6098 + $0xa9] sm:$0xff]
        %v6307 = vld [vmem:[%s6098 + $0xb1] sm:$0xff]
        %v6308 = vld [vmem:[%s6098 + $0xc1] sm:$0xff]
        %v6309 = vld [vmem:[%s6098 + $0xc9] sm:$0xff]
        %v6310 = vld [vmem:[%s6098 + $0xd9] sm:$0xff]
        %v6311 = vld [vmem:[%s6098 + $0xe1] sm:$0xff]
        %v6312 = vld [vmem:[%s6098 + $0xf1] sm:$0xff]
        %v6313 = vld [vmem:[%s6098 + $0xf9] sm:$0xff]
        %v6314 = vld [vmem:[%s6098 + $0x109] sm:$0xff]
        %v6315 = vld [vmem:[%s6098 + $0x111] sm:$0xff]
        %v6316 = vld [vmem:[%s6098 + $0x121] sm:$0xff]
        %v6317 = vld [vmem:[%s6098 + $0x129] sm:$0xff]
        %v6318 = vld [vmem:[%s6098 + $0x139] sm:$0xff]
        %v6319 = vld [vmem:[%s6098 + $0x141] sm:$0xff]
        %v6320 = vld [vmem:[%s6098 + $0x151] sm:$0xff]
        %v6321 = vld [vmem:[%s6098 + $0x159] sm:$0xff]
        %v6322 = vld [vmem:[%s6098 + $0x169] sm:$0xff]
        %v6323 = vld [vmem:[%s6098 + $0x171] sm:$0xff]
        %6356 = vrot.lane.b32.xlu0 %v6292, 64
        %v6357 = vpop.permute.xlu0 %6356
        %6358 = vrot.lane.b32.xlu0 %v6293, 64
        %v6359 = vpop.permute.xlu0 %6358
        %6360 = vrot.lane.b32.xlu0 %v6294, 64
        %v6361 = vpop.permute.xlu0 %6360
        %6362 = vrot.lane.b32.xlu0 %v6295, 64
        %v6363 = vpop.permute.xlu0 %6362
        %6364 = vrot.lane.b32.xlu0 %v6296, 64
        %v6365 = vpop.permute.xlu0 %6364
        %6366 = vrot.lane.b32.xlu0 %v6297, 64
        %v6367 = vpop.permute.xlu0 %6366
        %6368 = vrot.lane.b32.xlu0 %v6298, 64
        %v6369 = vpop.permute.xlu0 %6368
        %6370 = vrot.lane.b32.xlu0 %v6299, 64
        %v6371 = vpop.permute.xlu0 %6370
        %6372 = vrot.lane.b32.xlu0 %v6300, 64
        %v6373 = vpop.permute.xlu0 %6372
        %6374 = vrot.lane.b32.xlu0 %v6301, 64
        %v6375 = vpop.permute.xlu0 %6374
        %6376 = vrot.lane.b32.xlu0 %v6302, 64
        %v6377 = vpop.permute.xlu0 %6376
        %6378 = vrot.lane.b32.xlu0 %v6303, 64
        %v6379 = vpop.permute.xlu0 %6378
        %6380 = vrot.lane.b32.xlu0 %v6304, 64
        %v6381 = vpop.permute.xlu0 %6380
        %6382 = vrot.lane.b32.xlu0 %v6305, 64
        %v6383 = vpop.permute.xlu0 %6382
        %6384 = vrot.lane.b32.xlu0 %v6306, 64
        %v6385 = vpop.permute.xlu0 %6384
        %6386 = vrot.lane.b32.xlu0 %v6307, 64
        %v6387 = vpop.permute.xlu0 %6386
        %6388 = vrot.lane.b32.xlu0 %v6308, 64
        %v6389 = vpop.permute.xlu0 %6388
        %6390 = vrot.lane.b32.xlu0 %v6309, 64
        %v6391 = vpop.permute.xlu0 %6390
        %6392 = vrot.lane.b32.xlu0 %v6310, 64
        %v6393 = vpop.permute.xlu0 %6392
        %6394 = vrot.lane.b32.xlu0 %v6311, 64
        %v6395 = vpop.permute.xlu0 %6394
        %6396 = vrot.lane.b32.xlu0 %v6312, 64
        %v6397 = vpop.permute.xlu0 %6396
        %6398 = vrot.lane.b32.xlu0 %v6313, 64
        %v6399 = vpop.permute.xlu0 %6398
        %6400 = vrot.lane.b32.xlu0 %v6314, 64
        %v6401 = vpop.permute.xlu0 %6400
        %6402 = vrot.lane.b32.xlu0 %v6315, 64
        %v6403 = vpop.permute.xlu0 %6402
        %6404 = vrot.lane.b32.xlu0 %v6316, 64
        %v6405 = vpop.permute.xlu0 %6404
        %6406 = vrot.lane.b32.xlu0 %v6317, 64
        %v6407 = vpop.permute.xlu0 %6406
        %6408 = vrot.lane.b32.xlu0 %v6318, 64
        %v6409 = vpop.permute.xlu0 %6408
        %6410 = vrot.lane.b32.xlu0 %v6319, 64
        %v6411 = vpop.permute.xlu0 %6410
        %6412 = vrot.lane.b32.xlu0 %v6320, 64
        %v6413 = vpop.permute.xlu0 %6412
        %6414 = vrot.lane.b32.xlu0 %v6321, 64
        %v6415 = vpop.permute.xlu0 %6414
        %6416 = vrot.lane.b32.xlu0 %v6322, 64
        %v6417 = vpop.permute.xlu0 %6416
        %6418 = vrot.lane.b32.xlu0 %v6323, 64
        %v6419 = vpop.permute.xlu0 %6418
        %vm6452 = vcmask 556544
        %6453 = vst.msk [vmem:[#allocation5] sm:$0xff] %vm6452, %v6357
        %6454 = vst.msk [vmem:[#allocation5 + $0x8] sm:$0xff] %vm6452, %v6359
        %6455 = vst.msk [vmem:[#allocation5 + $0x10] sm:$0xff] %vm6452, %v6361
        %6456 = vst.msk [vmem:[#allocation5 + $0x18] sm:$0xff] %vm6452, %v6363
        %6457 = vst.msk [vmem:[#allocation5 + $0x20] sm:$0xff] %vm6452, %v6365
        %6458 = vst.msk [vmem:[#allocation5 + $0x28] sm:$0xff] %vm6452, %v6367
        %6459 = vst.msk [vmem:[#allocation5 + $0x30] sm:$0xff] %vm6452, %v6369
        %6460 = vst.msk [vmem:[#allocation5 + $0x38] sm:$0xff] %vm6452, %v6371
        %6461 = vst.msk [vmem:[#allocation5 + $0x40] sm:$0xff] %vm6452, %v6373
        %6462 = vst.msk [vmem:[#allocation5 + $0x48] sm:$0xff] %vm6452, %v6375
        %6463 = vst.msk [vmem:[#allocation5 + $0x50] sm:$0xff] %vm6452, %v6377
        %6464 = vst.msk [vmem:[#allocation5 + $0x58] sm:$0xff] %vm6452, %v6379
        %6465 = vst.msk [vmem:[#allocation5 + $0x60] sm:$0xff] %vm6452, %v6381
        %6466 = vst.msk [vmem:[#allocation5 + $0x68] sm:$0xff] %vm6452, %v6383
        %6467 = vst.msk [vmem:[#allocation5 + $0x70] sm:$0xff] %vm6452, %v6385
        %6468 = vst.msk [vmem:[#allocation5 + $0x78] sm:$0xff] %vm6452, %v6387
        %6469 = vst.msk [vmem:[#allocation5 + $0x80] sm:$0xff] %vm6452, %v6389
        %6470 = vst.msk [vmem:[#allocation5 + $0x88] sm:$0xff] %vm6452, %v6391
        %6471 = vst.msk [vmem:[#allocation5 + $0x90] sm:$0xff] %vm6452, %v6393
        %6472 = vst.msk [vmem:[#allocation5 + $0x98] sm:$0xff] %vm6452, %v6395
        %6473 = vst.msk [vmem:[#allocation5 + $0xa0] sm:$0xff] %vm6452, %v6397
        %6474 = vst.msk [vmem:[#allocation5 + $0xa8] sm:$0xff] %vm6452, %v6399
        %6475 = vst.msk [vmem:[#allocation5 + $0xb0] sm:$0xff] %vm6452, %v6401
        %6476 = vst.msk [vmem:[#allocation5 + $0xb8] sm:$0xff] %vm6452, %v6403
        %6477 = vst.msk [vmem:[#allocation5 + $0xc0] sm:$0xff] %vm6452, %v6405
        %6478 = vst.msk [vmem:[#allocation5 + $0xc8] sm:$0xff] %vm6452, %v6407
        %6479 = vst.msk [vmem:[#allocation5 + $0xd0] sm:$0xff] %vm6452, %v6409
        %6480 = vst.msk [vmem:[#allocation5 + $0xd8] sm:$0xff] %vm6452, %v6411
        %6481 = vst.msk [vmem:[#allocation5 + $0xe0] sm:$0xff] %vm6452, %v6413
        %6482 = vst.msk [vmem:[#allocation5 + $0xe8] sm:$0xff] %vm6452, %v6415
        %6483 = vst.msk [vmem:[#allocation5 + $0xf0] sm:$0xff] %vm6452, %v6417
        %6484 = vst.msk [vmem:[#allocation5 + $0xf8] sm:$0xff] %vm6452, %v6419
        %v6485 = vld [vmem:[%s6098 + $0x2] sm:$0xff]
        %v6486 = vld [vmem:[%s6098 + $0xa] sm:$0xff]
        %v6487 = vld [vmem:[%s6098 + $0x1a] sm:$0xff]
        %v6488 = vld [vmem:[%s6098 + $0x22] sm:$0xff]
        %v6489 = vld [vmem:[%s6098 + $0x32] sm:$0xff]
        %v6490 = vld [vmem:[%s6098 + $0x3a] sm:$0xff]
        %v6491 = vld [vmem:[%s6098 + $0x4a] sm:$0xff]
        %v6492 = vld [vmem:[%s6098 + $0x52] sm:$0xff]
        %v6493 = vld [vmem:[%s6098 + $0x62] sm:$0xff]
        %v6494 = vld [vmem:[%s6098 + $0x6a] sm:$0xff]
        %v6495 = vld [vmem:[%s6098 + $0x7a] sm:$0xff]
        %v6496 = vld [vmem:[%s6098 + $0x82] sm:$0xff]
        %v6497 = vld [vmem:[%s6098 + $0x92] sm:$0xff]
        %v6498 = vld [vmem:[%s6098 + $0x9a] sm:$0xff]
        %v6499 = vld [vmem:[%s6098 + $0xaa] sm:$0xff]
        %v6500 = vld [vmem:[%s6098 + $0xb2] sm:$0xff]
        %v6501 = vld [vmem:[%s6098 + $0xc2] sm:$0xff]
        %v6502 = vld [vmem:[%s6098 + $0xca] sm:$0xff]
        %v6503 = vld [vmem:[%s6098 + $0xda] sm:$0xff]
        %v6504 = vld [vmem:[%s6098 + $0xe2] sm:$0xff]
        %v6505 = vld [vmem:[%s6098 + $0xf2] sm:$0xff]
        %v6506 = vld [vmem:[%s6098 + $0xfa] sm:$0xff]
        %v6507 = vld [vmem:[%s6098 + $0x10a] sm:$0xff]
        %v6508 = vld [vmem:[%s6098 + $0x112] sm:$0xff]
        %v6509 = vld [vmem:[%s6098 + $0x122] sm:$0xff]
        %v6510 = vld [vmem:[%s6098 + $0x12a] sm:$0xff]
        %v6511 = vld [vmem:[%s6098 + $0x13a] sm:$0xff]
        %v6512 = vld [vmem:[%s6098 + $0x142] sm:$0xff]
        %v6513 = vld [vmem:[%s6098 + $0x152] sm:$0xff]
        %v6514 = vld [vmem:[%s6098 + $0x15a] sm:$0xff]
        %v6515 = vld [vmem:[%s6098 + $0x16a] sm:$0xff]
        %v6516 = vld [vmem:[%s6098 + $0x172] sm:$0xff]
        %6549 = vrot.lane.b32.xlu0 %v6485, 68
        %v6550 = vpop.permute.xlu0 %6549
        %6551 = vrot.lane.b32.xlu0 %v6486, 68
        %v6552 = vpop.permute.xlu0 %6551
        %6553 = vrot.lane.b32.xlu0 %v6487, 68
        %v6554 = vpop.permute.xlu0 %6553
        %6555 = vrot.lane.b32.xlu0 %v6488, 68
        %v6556 = vpop.permute.xlu0 %6555
        %6557 = vrot.lane.b32.xlu0 %v6489, 68
        %v6558 = vpop.permute.xlu0 %6557
        %6559 = vrot.lane.b32.xlu0 %v6490, 68
        %v6560 = vpop.permute.xlu0 %6559
        %6561 = vrot.lane.b32.xlu0 %v6491, 68
        %v6562 = vpop.permute.xlu0 %6561
        %6563 = vrot.lane.b32.xlu0 %v6492, 68
        %v6564 = vpop.permute.xlu0 %6563
        %6565 = vrot.lane.b32.xlu0 %v6493, 68
        %v6566 = vpop.permute.xlu0 %6565
        %6567 = vrot.lane.b32.xlu0 %v6494, 68
        %v6568 = vpop.permute.xlu0 %6567
        %6569 = vrot.lane.b32.xlu0 %v6495, 68
        %v6570 = vpop.permute.xlu0 %6569
        %6571 = vrot.lane.b32.xlu0 %v6496, 68
        %v6572 = vpop.permute.xlu0 %6571
        %6573 = vrot.lane.b32.xlu0 %v6497, 68
        %v6574 = vpop.permute.xlu0 %6573
        %6575 = vrot.lane.b32.xlu0 %v6498, 68
        %v6576 = vpop.permute.xlu0 %6575
        %6577 = vrot.lane.b32.xlu0 %v6499, 68
        %v6578 = vpop.permute.xlu0 %6577
        %6579 = vrot.lane.b32.xlu0 %v6500, 68
        %v6580 = vpop.permute.xlu0 %6579
        %6581 = vrot.lane.b32.xlu0 %v6501, 68
        %v6582 = vpop.permute.xlu0 %6581
        %6583 = vrot.lane.b32.xlu0 %v6502, 68
        %v6584 = vpop.permute.xlu0 %6583
        %6585 = vrot.lane.b32.xlu0 %v6503, 68
        %v6586 = vpop.permute.xlu0 %6585
        %6587 = vrot.lane.b32.xlu0 %v6504, 68
        %v6588 = vpop.permute.xlu0 %6587
        %6589 = vrot.lane.b32.xlu0 %v6505, 68
        %v6590 = vpop.permute.xlu0 %6589
        %6591 = vrot.lane.b32.xlu0 %v6506, 68
        %v6592 = vpop.permute.xlu0 %6591
        %6593 = vrot.lane.b32.xlu0 %v6507, 68
        %v6594 = vpop.permute.xlu0 %6593
        %6595 = vrot.lane.b32.xlu0 %v6508, 68
        %v6596 = vpop.permute.xlu0 %6595
        %6597 = vrot.lane.b32.xlu0 %v6509, 68
        %v6598 = vpop.permute.xlu0 %6597
        %6599 = vrot.lane.b32.xlu0 %v6510, 68
        %v6600 = vpop.permute.xlu0 %6599
        %6601 = vrot.lane.b32.xlu0 %v6511, 68
        %v6602 = vpop.permute.xlu0 %6601
        %6603 = vrot.lane.b32.xlu0 %v6512, 68
        %v6604 = vpop.permute.xlu0 %6603
        %6605 = vrot.lane.b32.xlu0 %v6513, 68
        %v6606 = vpop.permute.xlu0 %6605
        %6607 = vrot.lane.b32.xlu0 %v6514, 68
        %v6608 = vpop.permute.xlu0 %6607
        %6609 = vrot.lane.b32.xlu0 %v6515, 68
        %v6610 = vpop.permute.xlu0 %6609
        %6611 = vrot.lane.b32.xlu0 %v6516, 68
        %v6612 = vpop.permute.xlu0 %6611
        %vm6645 = vcmask 589344
        %6646 = vst.msk [vmem:[#allocation5] sm:$0xff] %vm6645, %v6550
        %6647 = vst.msk [vmem:[#allocation5 + $0x8] sm:$0xff] %vm6645, %v6552
        %6648 = vst.msk [vmem:[#allocation5 + $0x10] sm:$0xff] %vm6645, %v6554
        %6649 = vst.msk [vmem:[#allocation5 + $0x18] sm:$0xff] %vm6645, %v6556
        %6650 = vst.msk [vmem:[#allocation5 + $0x20] sm:$0xff] %vm6645, %v6558
        %6651 = vst.msk [vmem:[#allocation5 + $0x28] sm:$0xff] %vm6645, %v6560
        %6652 = vst.msk [vmem:[#allocation5 + $0x30] sm:$0xff] %vm6645, %v6562
        %6653 = vst.msk [vmem:[#allocation5 + $0x38] sm:$0xff] %vm6645, %v6564
        %6654 = vst.msk [vmem:[#allocation5 + $0x40] sm:$0xff] %vm6645, %v6566
        %6655 = vst.msk [vmem:[#allocation5 + $0x48] sm:$0xff] %vm6645, %v6568
        %6656 = vst.msk [vmem:[#allocation5 + $0x50] sm:$0xff] %vm6645, %v6570
        %6657 = vst.msk [vmem:[#allocation5 + $0x58] sm:$0xff] %vm6645, %v6572
        %6658 = vst.msk [vmem:[#allocation5 + $0x60] sm:$0xff] %vm6645, %v6574
        %6659 = vst.msk [vmem:[#allocation5 + $0x68] sm:$0xff] %vm6645, %v6576
        %6660 = vst.msk [vmem:[#allocation5 + $0x70] sm:$0xff] %vm6645, %v6578
        %6661 = vst.msk [vmem:[#allocation5 + $0x78] sm:$0xff] %vm6645, %v6580
        %6662 = vst.msk [vmem:[#allocation5 + $0x80] sm:$0xff] %vm6645, %v6582
        %6663 = vst.msk [vmem:[#allocation5 + $0x88] sm:$0xff] %vm6645, %v6584
        %6664 = vst.msk [vmem:[#allocation5 + $0x90] sm:$0xff] %vm6645, %v6586
        %6665 = vst.msk [vmem:[#allocation5 + $0x98] sm:$0xff] %vm6645, %v6588
        %6666 = vst.msk [vmem:[#allocation5 + $0xa0] sm:$0xff] %vm6645, %v6590
        %6667 = vst.msk [vmem:[#allocation5 + $0xa8] sm:$0xff] %vm6645, %v6592
        %6668 = vst.msk [vmem:[#allocation5 + $0xb0] sm:$0xff] %vm6645, %v6594
        %6669 = vst.msk [vmem:[#allocation5 + $0xb8] sm:$0xff] %vm6645, %v6596
        %6670 = vst.msk [vmem:[#allocation5 + $0xc0] sm:$0xff] %vm6645, %v6598
        %6671 = vst.msk [vmem:[#allocation5 + $0xc8] sm:$0xff] %vm6645, %v6600
        %6672 = vst.msk [vmem:[#allocation5 + $0xd0] sm:$0xff] %vm6645, %v6602
        %6673 = vst.msk [vmem:[#allocation5 + $0xd8] sm:$0xff] %vm6645, %v6604
        %6674 = vst.msk [vmem:[#allocation5 + $0xe0] sm:$0xff] %vm6645, %v6606
        %6675 = vst.msk [vmem:[#allocation5 + $0xe8] sm:$0xff] %vm6645, %v6608
        %6676 = vst.msk [vmem:[#allocation5 + $0xf0] sm:$0xff] %vm6645, %v6610
        %6677 = vst.msk [vmem:[#allocation5 + $0xf8] sm:$0xff] %vm6645, %v6612
        %v6678 = vld [vmem:[%s6098 + $0x3] sm:$0xff]
        %v6679 = vld [vmem:[%s6098 + $0xb] sm:$0xff]
        %v6680 = vld [vmem:[%s6098 + $0x1b] sm:$0xff]
        %v6681 = vld [vmem:[%s6098 + $0x23] sm:$0xff]
        %v6682 = vld [vmem:[%s6098 + $0x33] sm:$0xff]
        %v6683 = vld [vmem:[%s6098 + $0x3b] sm:$0xff]
        %v6684 = vld [vmem:[%s6098 + $0x4b] sm:$0xff]
        %v6685 = vld [vmem:[%s6098 + $0x53] sm:$0xff]
        %v6686 = vld [vmem:[%s6098 + $0x63] sm:$0xff]
        %v6687 = vld [vmem:[%s6098 + $0x6b] sm:$0xff]
        %v6688 = vld [vmem:[%s6098 + $0x7b] sm:$0xff]
        %v6689 = vld [vmem:[%s6098 + $0x83] sm:$0xff]
        %v6690 = vld [vmem:[%s6098 + $0x93] sm:$0xff]
        %v6691 = vld [vmem:[%s6098 + $0x9b] sm:$0xff]
        %v6692 = vld [vmem:[%s6098 + $0xab] sm:$0xff]
        %v6693 = vld [vmem:[%s6098 + $0xb3] sm:$0xff]
        %v6694 = vld [vmem:[%s6098 + $0xc3] sm:$0xff]
        %v6695 = vld [vmem:[%s6098 + $0xcb] sm:$0xff]
        %v6696 = vld [vmem:[%s6098 + $0xdb] sm:$0xff]
        %v6697 = vld [vmem:[%s6098 + $0xe3] sm:$0xff]
        %v6698 = vld [vmem:[%s6098 + $0xf3] sm:$0xff]
        %v6699 = vld [vmem:[%s6098 + $0xfb] sm:$0xff]
        %v6700 = vld [vmem:[%s6098 + $0x10b] sm:$0xff]
        %v6701 = vld [vmem:[%s6098 + $0x113] sm:$0xff]
        %v6702 = vld [vmem:[%s6098 + $0x123] sm:$0xff]
        %v6703 = vld [vmem:[%s6098 + $0x12b] sm:$0xff]
        %v6704 = vld [vmem:[%s6098 + $0x13b] sm:$0xff]
        %v6705 = vld [vmem:[%s6098 + $0x143] sm:$0xff]
        %v6706 = vld [vmem:[%s6098 + $0x153] sm:$0xff]
        %v6707 = vld [vmem:[%s6098 + $0x15b] sm:$0xff]
        %v6708 = vld [vmem:[%s6098 + $0x16b] sm:$0xff]
        %v6709 = vld [vmem:[%s6098 + $0x173] sm:$0xff]
        %6742 = vrot.lane.b32.xlu0 %v6678, 72
        %v6743 = vpop.permute.xlu0 %6742
        %6744 = vrot.lane.b32.xlu0 %v6679, 72
        %v6745 = vpop.permute.xlu0 %6744
        %6746 = vrot.lane.b32.xlu0 %v6680, 72
        %v6747 = vpop.permute.xlu0 %6746
        %6748 = vrot.lane.b32.xlu0 %v6681, 72
        %v6749 = vpop.permute.xlu0 %6748
        %6750 = vrot.lane.b32.xlu0 %v6682, 72
        %v6751 = vpop.permute.xlu0 %6750
        %6752 = vrot.lane.b32.xlu0 %v6683, 72
        %v6753 = vpop.permute.xlu0 %6752
        %6754 = vrot.lane.b32.xlu0 %v6684, 72
        %v6755 = vpop.permute.xlu0 %6754
        %6756 = vrot.lane.b32.xlu0 %v6685, 72
        %v6757 = vpop.permute.xlu0 %6756
        %6758 = vrot.lane.b32.xlu0 %v6686, 72
        %v6759 = vpop.permute.xlu0 %6758
        %6760 = vrot.lane.b32.xlu0 %v6687, 72
        %v6761 = vpop.permute.xlu0 %6760
        %6762 = vrot.lane.b32.xlu0 %v6688, 72
        %v6763 = vpop.permute.xlu0 %6762
        %6764 = vrot.lane.b32.xlu0 %v6689, 72
        %v6765 = vpop.permute.xlu0 %6764
        %6766 = vrot.lane.b32.xlu0 %v6690, 72
        %v6767 = vpop.permute.xlu0 %6766
        %6768 = vrot.lane.b32.xlu0 %v6691, 72
        %v6769 = vpop.permute.xlu0 %6768
        %6770 = vrot.lane.b32.xlu0 %v6692, 72
        %v6771 = vpop.permute.xlu0 %6770
        %6772 = vrot.lane.b32.xlu0 %v6693, 72
        %v6773 = vpop.permute.xlu0 %6772
        %6774 = vrot.lane.b32.xlu0 %v6694, 72
        %v6775 = vpop.permute.xlu0 %6774
        %6776 = vrot.lane.b32.xlu0 %v6695, 72
        %v6777 = vpop.permute.xlu0 %6776
        %6778 = vrot.lane.b32.xlu0 %v6696, 72
        %v6779 = vpop.permute.xlu0 %6778
        %6780 = vrot.lane.b32.xlu0 %v6697, 72
        %v6781 = vpop.permute.xlu0 %6780
        %6782 = vrot.lane.b32.xlu0 %v6698, 72
        %v6783 = vpop.permute.xlu0 %6782
        %6784 = vrot.lane.b32.xlu0 %v6699, 72
        %v6785 = vpop.permute.xlu0 %6784
        %6786 = vrot.lane.b32.xlu0 %v6700, 72
        %v6787 = vpop.permute.xlu0 %6786
        %6788 = vrot.lane.b32.xlu0 %v6701, 72
        %v6789 = vpop.permute.xlu0 %6788
        %6790 = vrot.lane.b32.xlu0 %v6702, 72
        %v6791 = vpop.permute.xlu0 %6790
        %6792 = vrot.lane.b32.xlu0 %v6703, 72
        %v6793 = vpop.permute.xlu0 %6792
        %6794 = vrot.lane.b32.xlu0 %v6704, 72
        %v6795 = vpop.permute.xlu0 %6794
        %6796 = vrot.lane.b32.xlu0 %v6705, 72
        %v6797 = vpop.permute.xlu0 %6796
        %6798 = vrot.lane.b32.xlu0 %v6706, 72
        %v6799 = vpop.permute.xlu0 %6798
        %6800 = vrot.lane.b32.xlu0 %v6707, 72
        %v6801 = vpop.permute.xlu0 %6800
        %6802 = vrot.lane.b32.xlu0 %v6708, 72
        %v6803 = vpop.permute.xlu0 %6802
        %6804 = vrot.lane.b32.xlu0 %v6709, 72
        %v6805 = vpop.permute.xlu0 %6804
        %vm6838 = vcmask 622144
        %6839 = vst.msk [vmem:[#allocation5] sm:$0xff] %vm6838, %v6743
        %6840 = vst.msk [vmem:[#allocation5 + $0x8] sm:$0xff] %vm6838, %v6745
        %6841 = vst.msk [vmem:[#allocation5 + $0x10] sm:$0xff] %vm6838, %v6747
        %6842 = vst.msk [vmem:[#allocation5 + $0x18] sm:$0xff] %vm6838, %v6749
        %6843 = vst.msk [vmem:[#allocation5 + $0x20] sm:$0xff] %vm6838, %v6751
        %6844 = vst.msk [vmem:[#allocation5 + $0x28] sm:$0xff] %vm6838, %v6753
        %6845 = vst.msk [vmem:[#allocation5 + $0x30] sm:$0xff] %vm6838, %v6755
        %6846 = vst.msk [vmem:[#allocation5 + $0x38] sm:$0xff] %vm6838, %v6757
        %6847 = vst.msk [vmem:[#allocation5 + $0x40] sm:$0xff] %vm6838, %v6759
        %6848 = vst.msk [vmem:[#allocation5 + $0x48] sm:$0xff] %vm6838, %v6761
        %6849 = vst.msk [vmem:[#allocation5 + $0x50] sm:$0xff] %vm6838, %v6763
        %6850 = vst.msk [vmem:[#allocation5 + $0x58] sm:$0xff] %vm6838, %v6765
        %6851 = vst.msk [vmem:[#allocation5 + $0x60] sm:$0xff] %vm6838, %v6767
        %6852 = vst.msk [vmem:[#allocation5 + $0x68] sm:$0xff] %vm6838, %v6769
        %6853 = vst.msk [vmem:[#allocation5 + $0x70] sm:$0xff] %vm6838, %v6771
        %6854 = vst.msk [vmem:[#allocation5 + $0x78] sm:$0xff] %vm6838, %v6773
        %6855 = vst.msk [vmem:[#allocation5 + $0x80] sm:$0xff] %vm6838, %v6775
        %6856 = vst.msk [vmem:[#allocation5 + $0x88] sm:$0xff] %vm6838, %v6777
        %6857 = vst.msk [vmem:[#allocation5 + $0x90] sm:$0xff] %vm6838, %v6779
        %6858 = vst.msk [vmem:[#allocation5 + $0x98] sm:$0xff] %vm6838, %v6781
        %6859 = vst.msk [vmem:[#allocation5 + $0xa0] sm:$0xff] %vm6838, %v6783
        %6860 = vst.msk [vmem:[#allocation5 + $0xa8] sm:$0xff] %vm6838, %v6785
        %6861 = vst.msk [vmem:[#allocation5 + $0xb0] sm:$0xff] %vm6838, %v6787
        %6862 = vst.msk [vmem:[#allocation5 + $0xb8] sm:$0xff] %vm6838, %v6789
        %6863 = vst.msk [vmem:[#allocation5 + $0xc0] sm:$0xff] %vm6838, %v6791
        %6864 = vst.msk [vmem:[#allocation5 + $0xc8] sm:$0xff] %vm6838, %v6793
        %6865 = vst.msk [vmem:[#allocation5 + $0xd0] sm:$0xff] %vm6838, %v6795
        %6866 = vst.msk [vmem:[#allocation5 + $0xd8] sm:$0xff] %vm6838, %v6797
        %6867 = vst.msk [vmem:[#allocation5 + $0xe0] sm:$0xff] %vm6838, %v6799
        %6868 = vst.msk [vmem:[#allocation5 + $0xe8] sm:$0xff] %vm6838, %v6801
        %6869 = vst.msk [vmem:[#allocation5 + $0xf0] sm:$0xff] %vm6838, %v6803
        %6870 = vst.msk [vmem:[#allocation5 + $0xf8] sm:$0xff] %vm6838, %v6805
        %v6871 = vld [vmem:[%s6098 + $0x4] sm:$0xff]
        %v6872 = vld [vmem:[%s6098 + $0xc] sm:$0xff]
        %v6873 = vld [vmem:[%s6098 + $0x1c] sm:$0xff]
        %v6874 = vld [vmem:[%s6098 + $0x24] sm:$0xff]
        %v6875 = vld [vmem:[%s6098 + $0x34] sm:$0xff]
        %v6876 = vld [vmem:[%s6098 + $0x3c] sm:$0xff]
        %v6877 = vld [vmem:[%s6098 + $0x4c] sm:$0xff]
        %v6878 = vld [vmem:[%s6098 + $0x54] sm:$0xff]
        %v6879 = vld [vmem:[%s6098 + $0x64] sm:$0xff]
        %v6880 = vld [vmem:[%s6098 + $0x6c] sm:$0xff]
        %v6881 = vld [vmem:[%s6098 + $0x7c] sm:$0xff]
        %v6882 = vld [vmem:[%s6098 + $0x84] sm:$0xff]
        %v6883 = vld [vmem:[%s6098 + $0x94] sm:$0xff]
        %v6884 = vld [vmem:[%s6098 + $0x9c] sm:$0xff]
        %v6885 = vld [vmem:[%s6098 + $0xac] sm:$0xff]
        %v6886 = vld [vmem:[%s6098 + $0xb4] sm:$0xff]
        %v6887 = vld [vmem:[%s6098 + $0xc4] sm:$0xff]
        %v6888 = vld [vmem:[%s6098 + $0xcc] sm:$0xff]
        %v6889 = vld [vmem:[%s6098 + $0xdc] sm:$0xff]
        %v6890 = vld [vmem:[%s6098 + $0xe4] sm:$0xff]
        %v6891 = vld [vmem:[%s6098 + $0xf4] sm:$0xff]
        %v6892 = vld [vmem:[%s6098 + $0xfc] sm:$0xff]
        %v6893 = vld [vmem:[%s6098 + $0x10c] sm:$0xff]
        %v6894 = vld [vmem:[%s6098 + $0x114] sm:$0xff]
        %v6895 = vld [vmem:[%s6098 + $0x124] sm:$0xff]
        %v6896 = vld [vmem:[%s6098 + $0x12c] sm:$0xff]
        %v6897 = vld [vmem:[%s6098 + $0x13c] sm:$0xff]
        %v6898 = vld [vmem:[%s6098 + $0x144] sm:$0xff]
        %v6899 = vld [vmem:[%s6098 + $0x154] sm:$0xff]
        %v6900 = vld [vmem:[%s6098 + $0x15c] sm:$0xff]
        %v6901 = vld [vmem:[%s6098 + $0x16c] sm:$0xff]
        %v6902 = vld [vmem:[%s6098 + $0x174] sm:$0xff]
        %6935 = vrot.lane.b32.xlu0 %v6871, 76
        %v6936 = vpop.permute.xlu0 %6935
        %6937 = vrot.lane.b32.xlu0 %v6872, 76
        %v6938 = vpop.permute.xlu0 %6937
        %6939 = vrot.lane.b32.xlu0 %v6873, 76
        %v6940 = vpop.permute.xlu0 %6939
        %6941 = vrot.lane.b32.xlu0 %v6874, 76
        %v6942 = vpop.permute.xlu0 %6941
        %6943 = vrot.lane.b32.xlu0 %v6875, 76
        %v6944 = vpop.permute.xlu0 %6943
        %6945 = vrot.lane.b32.xlu0 %v6876, 76
        %v6946 = vpop.permute.xlu0 %6945
        %6947 = vrot.lane.b32.xlu0 %v6877, 76
        %v6948 = vpop.permute.xlu0 %6947
        %6949 = vrot.lane.b32.xlu0 %v6878, 76
        %v6950 = vpop.permute.xlu0 %6949
        %6951 = vrot.lane.b32.xlu0 %v6879, 76
        %v6952 = vpop.permute.xlu0 %6951
        %6953 = vrot.lane.b32.xlu0 %v6880, 76
        %v6954 = vpop.permute.xlu0 %6953
        %6955 = vrot.lane.b32.xlu0 %v6881, 76
        %v6956 = vpop.permute.xlu0 %6955
        %6957 = vrot.lane.b32.xlu0 %v6882, 76
        %v6958 = vpop.permute.xlu0 %6957
        %6959 = vrot.lane.b32.xlu0 %v6883, 76
        %v6960 = vpop.permute.xlu0 %6959
        %6961 = vrot.lane.b32.xlu0 %v6884, 76
        %v6962 = vpop.permute.xlu0 %6961
        %6963 = vrot.lane.b32.xlu0 %v6885, 76
        %v6964 = vpop.permute.xlu0 %6963
        %6965 = vrot.lane.b32.xlu0 %v6886, 76
        %v6966 = vpop.permute.xlu0 %6965
        %6967 = vrot.lane.b32.xlu0 %v6887, 76
        %v6968 = vpop.permute.xlu0 %6967
        %6969 = vrot.lane.b32.xlu0 %v6888, 76
        %v6970 = vpop.permute.xlu0 %6969
        %6971 = vrot.lane.b32.xlu0 %v6889, 76
        %v6972 = vpop.permute.xlu0 %6971
        %6973 = vrot.lane.b32.xlu0 %v6890, 76
        %v6974 = vpop.permute.xlu0 %6973
        %6975 = vrot.lane.b32.xlu0 %v6891, 76
        %v6976 = vpop.permute.xlu0 %6975
        %6977 = vrot.lane.b32.xlu0 %v6892, 76
        %v6978 = vpop.permute.xlu0 %6977
        %6979 = vrot.lane.b32.xlu0 %v6893, 76
        %v6980 = vpop.permute.xlu0 %6979
        %6981 = vrot.lane.b32.xlu0 %v6894, 76
        %v6982 = vpop.permute.xlu0 %6981
        %6983 = vrot.lane.b32.xlu0 %v6895, 76
        %v6984 = vpop.permute.xlu0 %6983
        %6985 = vrot.lane.b32.xlu0 %v6896, 76
        %v6986 = vpop.permute.xlu0 %6985
        %6987 = vrot.lane.b32.xlu0 %v6897, 76
        %v6988 = vpop.permute.xlu0 %6987
        %6989 = vrot.lane.b32.xlu0 %v6898, 76
        %v6990 = vpop.permute.xlu0 %6989
        %6991 = vrot.lane.b32.xlu0 %v6899, 76
        %v6992 = vpop.permute.xlu0 %6991
        %6993 = vrot.lane.b32.xlu0 %v6900, 76
        %v6994 = vpop.permute.xlu0 %6993
        %6995 = vrot.lane.b32.xlu0 %v6901, 76
        %v6996 = vpop.permute.xlu0 %6995
        %6997 = vrot.lane.b32.xlu0 %v6902, 76
        %v6998 = vpop.permute.xlu0 %6997
        %vm7031 = vcmask 654944
        %7032 = vst.msk [vmem:[#allocation5] sm:$0xff] %vm7031, %v6936
        %7033 = vst.msk [vmem:[#allocation5 + $0x8] sm:$0xff] %vm7031, %v6938
        %7034 = vst.msk [vmem:[#allocation5 + $0x10] sm:$0xff] %vm7031, %v6940
        %7035 = vst.msk [vmem:[#allocation5 + $0x18] sm:$0xff] %vm7031, %v6942
        %7036 = vst.msk [vmem:[#allocation5 + $0x20] sm:$0xff] %vm7031, %v6944
        %7037 = vst.msk [vmem:[#allocation5 + $0x28] sm:$0xff] %vm7031, %v6946
        %7038 = vst.msk [vmem:[#allocation5 + $0x30] sm:$0xff] %vm7031, %v6948
        %7039 = vst.msk [vmem:[#allocation5 + $0x38] sm:$0xff] %vm7031, %v6950
        %7040 = vst.msk [vmem:[#allocation5 + $0x40] sm:$0xff] %vm7031, %v6952
        %7041 = vst.msk [vmem:[#allocation5 + $0x48] sm:$0xff] %vm7031, %v6954
        %7042 = vst.msk [vmem:[#allocation5 + $0x50] sm:$0xff] %vm7031, %v6956
        %7043 = vst.msk [vmem:[#allocation5 + $0x58] sm:$0xff] %vm7031, %v6958
        %7044 = vst.msk [vmem:[#allocation5 + $0x60] sm:$0xff] %vm7031, %v6960
        %7045 = vst.msk [vmem:[#allocation5 + $0x68] sm:$0xff] %vm7031, %v6962
        %7046 = vst.msk [vmem:[#allocation5 + $0x70] sm:$0xff] %vm7031, %v6964
        %7047 = vst.msk [vmem:[#allocation5 + $0x78] sm:$0xff] %vm7031, %v6966
        %7048 = vst.msk [vmem:[#allocation5 + $0x80] sm:$0xff] %vm7031, %v6968
        %7049 = vst.msk [vmem:[#allocation5 + $0x88] sm:$0xff] %vm7031, %v6970
        %7050 = vst.msk [vmem:[#allocation5 + $0x90] sm:$0xff] %vm7031, %v6972
        %7051 = vst.msk [vmem:[#allocation5 + $0x98] sm:$0xff] %vm7031, %v6974
        %7052 = vst.msk [vmem:[#allocation5 + $0xa0] sm:$0xff] %vm7031, %v6976
        %7053 = vst.msk [vmem:[#allocation5 + $0xa8] sm:$0xff] %vm7031, %v6978
        %7054 = vst.msk [vmem:[#allocation5 + $0xb0] sm:$0xff] %vm7031, %v6980
        %7055 = vst.msk [vmem:[#allocation5 + $0xb8] sm:$0xff] %vm7031, %v6982
        %7056 = vst.msk [vmem:[#allocation5 + $0xc0] sm:$0xff] %vm7031, %v6984
        %7057 = vst.msk [vmem:[#allocation5 + $0xc8] sm:$0xff] %vm7031, %v6986
        %7058 = vst.msk [vmem:[#allocation5 + $0xd0] sm:$0xff] %vm7031, %v6988
        %7059 = vst.msk [vmem:[#allocation5 + $0xd8] sm:$0xff] %vm7031, %v6990
        %7060 = vst.msk [vmem:[#allocation5 + $0xe0] sm:$0xff] %vm7031, %v6992
        %7061 = vst.msk [vmem:[#allocation5 + $0xe8] sm:$0xff] %vm7031, %v6994
        %7062 = vst.msk [vmem:[#allocation5 + $0xf0] sm:$0xff] %vm7031, %v6996
        %7063 = vst.msk [vmem:[#allocation5 + $0xf8] sm:$0xff] %vm7031, %v6998
        %s7064 = scalar_lea.vmem [#allocation4], 96
        %v7065 = vld [vmem:[%s7064] sm:$0xff]
        %v7066 = vld [vmem:[%s7064 + $0x8] sm:$0xff]
        %v7067 = vld [vmem:[%s7064 + $0x18] sm:$0xff]
        %v7068 = vld [vmem:[%s7064 + $0x20] sm:$0xff]
        %v7069 = vld [vmem:[%s7064 + $0x30] sm:$0xff]
        %v7070 = vld [vmem:[%s7064 + $0x38] sm:$0xff]
        %v7071 = vld [vmem:[%s7064 + $0x48] sm:$0xff]
        %v7072 = vld [vmem:[%s7064 + $0x50] sm:$0xff]
        %v7073 = vld [vmem:[%s7064 + $0x60] sm:$0xff]
        %v7074 = vld [vmem:[%s7064 + $0x68] sm:$0xff]
        %v7075 = vld [vmem:[%s7064 + $0x78] sm:$0xff]
        %v7076 = vld [vmem:[%s7064 + $0x80] sm:$0xff]
        %v7077 = vld [vmem:[%s7064 + $0x90] sm:$0xff]
        %v7078 = vld [vmem:[%s7064 + $0x98] sm:$0xff]
        %v7079 = vld [vmem:[%s7064 + $0xa8] sm:$0xff]
        %v7080 = vld [vmem:[%s7064 + $0xb0] sm:$0xff]
        %v7081 = vld [vmem:[%s7064 + $0xc0] sm:$0xff]
        %v7082 = vld [vmem:[%s7064 + $0xc8] sm:$0xff]
        %v7083 = vld [vmem:[%s7064 + $0xd8] sm:$0xff]
        %v7084 = vld [vmem:[%s7064 + $0xe0] sm:$0xff]
        %v7085 = vld [vmem:[%s7064 + $0xf0] sm:$0xff]
        %v7086 = vld [vmem:[%s7064 + $0xf8] sm:$0xff]
        %v7087 = vld [vmem:[%s7064 + $0x108] sm:$0xff]
        %v7088 = vld [vmem:[%s7064 + $0x110] sm:$0xff]
        %v7089 = vld [vmem:[%s7064 + $0x120] sm:$0xff]
        %v7090 = vld [vmem:[%s7064 + $0x128] sm:$0xff]
        %v7091 = vld [vmem:[%s7064 + $0x138] sm:$0xff]
        %v7092 = vld [vmem:[%s7064 + $0x140] sm:$0xff]
        %v7093 = vld [vmem:[%s7064 + $0x150] sm:$0xff]
        %v7094 = vld [vmem:[%s7064 + $0x158] sm:$0xff]
        %v7095 = vld [vmem:[%s7064 + $0x168] sm:$0xff]
        %v7096 = vld [vmem:[%s7064 + $0x170] sm:$0xff]
        %7129 = vrot.lane.b32.xlu0 %v7065, 80
        %v7130 = vpop.permute.xlu0 %7129
        %7131 = vrot.lane.b32.xlu0 %v7066, 80
        %v7132 = vpop.permute.xlu0 %7131
        %7133 = vrot.lane.b32.xlu0 %v7067, 80
        %v7134 = vpop.permute.xlu0 %7133
        %7135 = vrot.lane.b32.xlu0 %v7068, 80
        %v7136 = vpop.permute.xlu0 %7135
        %7137 = vrot.lane.b32.xlu0 %v7069, 80
        %v7138 = vpop.permute.xlu0 %7137
        %7139 = vrot.lane.b32.xlu0 %v7070, 80
        %v7140 = vpop.permute.xlu0 %7139
        %7141 = vrot.lane.b32.xlu0 %v7071, 80
        %v7142 = vpop.permute.xlu0 %7141
        %7143 = vrot.lane.b32.xlu0 %v7072, 80
        %v7144 = vpop.permute.xlu0 %7143
        %7145 = vrot.lane.b32.xlu0 %v7073, 80
        %v7146 = vpop.permute.xlu0 %7145
        %7147 = vrot.lane.b32.xlu0 %v7074, 80
        %v7148 = vpop.permute.xlu0 %7147
        %7149 = vrot.lane.b32.xlu0 %v7075, 80
        %v7150 = vpop.permute.xlu0 %7149
        %7151 = vrot.lane.b32.xlu0 %v7076, 80
        %v7152 = vpop.permute.xlu0 %7151
        %7153 = vrot.lane.b32.xlu0 %v7077, 80
        %v7154 = vpop.permute.xlu0 %7153
        %7155 = vrot.lane.b32.xlu0 %v7078, 80
        %v7156 = vpop.permute.xlu0 %7155
        %7157 = vrot.lane.b32.xlu0 %v7079, 80
        %v7158 = vpop.permute.xlu0 %7157
        %7159 = vrot.lane.b32.xlu0 %v7080, 80
        %v7160 = vpop.permute.xlu0 %7159
        %7161 = vrot.lane.b32.xlu0 %v7081, 80
        %v7162 = vpop.permute.xlu0 %7161
        %7163 = vrot.lane.b32.xlu0 %v7082, 80
        %v7164 = vpop.permute.xlu0 %7163
        %7165 = vrot.lane.b32.xlu0 %v7083, 80
        %v7166 = vpop.permute.xlu0 %7165
        %7167 = vrot.lane.b32.xlu0 %v7084, 80
        %v7168 = vpop.permute.xlu0 %7167
        %7169 = vrot.lane.b32.xlu0 %v7085, 80
        %v7170 = vpop.permute.xlu0 %7169
        %7171 = vrot.lane.b32.xlu0 %v7086, 80
        %v7172 = vpop.permute.xlu0 %7171
        %7173 = vrot.lane.b32.xlu0 %v7087, 80
        %v7174 = vpop.permute.xlu0 %7173
        %7175 = vrot.lane.b32.xlu0 %v7088, 80
        %v7176 = vpop.permute.xlu0 %7175
        %7177 = vrot.lane.b32.xlu0 %v7089, 80
        %v7178 = vpop.permute.xlu0 %7177
        %7179 = vrot.lane.b32.xlu0 %v7090, 80
        %v7180 = vpop.permute.xlu0 %7179
        %7181 = vrot.lane.b32.xlu0 %v7091, 80
        %v7182 = vpop.permute.xlu0 %7181
        %7183 = vrot.lane.b32.xlu0 %v7092, 80
        %v7184 = vpop.permute.xlu0 %7183
        %7185 = vrot.lane.b32.xlu0 %v7093, 80
        %v7186 = vpop.permute.xlu0 %7185
        %7187 = vrot.lane.b32.xlu0 %v7094, 80
        %v7188 = vpop.permute.xlu0 %7187
        %7189 = vrot.lane.b32.xlu0 %v7095, 80
        %v7190 = vpop.permute.xlu0 %7189
        %7191 = vrot.lane.b32.xlu0 %v7096, 80
        %v7192 = vpop.permute.xlu0 %7191
        %vm7225 = vcmask 687744
        %7226 = vst.msk [vmem:[#allocation5] sm:$0xff] %vm7225, %v7130
        %7227 = vst.msk [vmem:[#allocation5 + $0x8] sm:$0xff] %vm7225, %v7132
        %7228 = vst.msk [vmem:[#allocation5 + $0x10] sm:$0xff] %vm7225, %v7134
        %7229 = vst.msk [vmem:[#allocation5 + $0x18] sm:$0xff] %vm7225, %v7136
        %7230 = vst.msk [vmem:[#allocation5 + $0x20] sm:$0xff] %vm7225, %v7138
        %7231 = vst.msk [vmem:[#allocation5 + $0x28] sm:$0xff] %vm7225, %v7140
        %7232 = vst.msk [vmem:[#allocation5 + $0x30] sm:$0xff] %vm7225, %v7142
        %7233 = vst.msk [vmem:[#allocation5 + $0x38] sm:$0xff] %vm7225, %v7144
        %7234 = vst.msk [vmem:[#allocation5 + $0x40] sm:$0xff] %vm7225, %v7146
        %7235 = vst.msk [vmem:[#allocation5 + $0x48] sm:$0xff] %vm7225, %v7148
        %7236 = vst.msk [vmem:[#allocation5 + $0x50] sm:$0xff] %vm7225, %v7150
        %7237 = vst.msk [vmem:[#allocation5 + $0x58] sm:$0xff] %vm7225, %v7152
        %7238 = vst.msk [vmem:[#allocation5 + $0x60] sm:$0xff] %vm7225, %v7154
        %7239 = vst.msk [vmem:[#allocation5 + $0x68] sm:$0xff] %vm7225, %v7156
        %7240 = vst.msk [vmem:[#allocation5 + $0x70] sm:$0xff] %vm7225, %v7158
        %7241 = vst.msk [vmem:[#allocation5 + $0x78] sm:$0xff] %vm7225, %v7160
        %7242 = vst.msk [vmem:[#allocation5 + $0x80] sm:$0xff] %vm7225, %v7162
        %7243 = vst.msk [vmem:[#allocation5 + $0x88] sm:$0xff] %vm7225, %v7164
        %7244 = vst.msk [vmem:[#allocation5 + $0x90] sm:$0xff] %vm7225, %v7166
        %7245 = vst.msk [vmem:[#allocation5 + $0x98] sm:$0xff] %vm7225, %v7168
        %7246 = vst.msk [vmem:[#allocation5 + $0xa0] sm:$0xff] %vm7225, %v7170
        %7247 = vst.msk [vmem:[#allocation5 + $0xa8] sm:$0xff] %vm7225, %v7172
        %7248 = vst.msk [vmem:[#allocation5 + $0xb0] sm:$0xff] %vm7225, %v7174
        %7249 = vst.msk [vmem:[#allocation5 + $0xb8] sm:$0xff] %vm7225, %v7176
        %7250 = vst.msk [vmem:[#allocation5 + $0xc0] sm:$0xff] %vm7225, %v7178
        %7251 = vst.msk [vmem:[#allocation5 + $0xc8] sm:$0xff] %vm7225, %v7180
        %7252 = vst.msk [vmem:[#allocation5 + $0xd0] sm:$0xff] %vm7225, %v7182
        %7253 = vst.msk [vmem:[#allocation5 + $0xd8] sm:$0xff] %vm7225, %v7184
        %7254 = vst.msk [vmem:[#allocation5 + $0xe0] sm:$0xff] %vm7225, %v7186
        %7255 = vst.msk [vmem:[#allocation5 + $0xe8] sm:$0xff] %vm7225, %v7188
        %7256 = vst.msk [vmem:[#allocation5 + $0xf0] sm:$0xff] %vm7225, %v7190
        %7257 = vst.msk [vmem:[#allocation5 + $0xf8] sm:$0xff] %vm7225, %v7192
        %v7258 = vld [vmem:[%s7064 + $0x1] sm:$0xff]
        %v7259 = vld [vmem:[%s7064 + $0x9] sm:$0xff]
        %v7260 = vld [vmem:[%s7064 + $0x19] sm:$0xff]
        %v7261 = vld [vmem:[%s7064 + $0x21] sm:$0xff]
        %v7262 = vld [vmem:[%s7064 + $0x31] sm:$0xff]
        %v7263 = vld [vmem:[%s7064 + $0x39] sm:$0xff]
        %v7264 = vld [vmem:[%s7064 + $0x49] sm:$0xff]
        %v7265 = vld [vmem:[%s7064 + $0x51] sm:$0xff]
        %v7266 = vld [vmem:[%s7064 + $0x61] sm:$0xff]
        %v7267 = vld [vmem:[%s7064 + $0x69] sm:$0xff]
        %v7268 = vld [vmem:[%s7064 + $0x79] sm:$0xff]
        %v7269 = vld [vmem:[%s7064 + $0x81] sm:$0xff]
        %v7270 = vld [vmem:[%s7064 + $0x91] sm:$0xff]
        %v7271 = vld [vmem:[%s7064 + $0x99] sm:$0xff]
        %v7272 = vld [vmem:[%s7064 + $0xa9] sm:$0xff]
        %v7273 = vld [vmem:[%s7064 + $0xb1] sm:$0xff]
        %v7274 = vld [vmem:[%s7064 + $0xc1] sm:$0xff]
        %v7275 = vld [vmem:[%s7064 + $0xc9] sm:$0xff]
        %v7276 = vld [vmem:[%s7064 + $0xd9] sm:$0xff]
        %v7277 = vld [vmem:[%s7064 + $0xe1] sm:$0xff]
        %v7278 = vld [vmem:[%s7064 + $0xf1] sm:$0xff]
        %v7279 = vld [vmem:[%s7064 + $0xf9] sm:$0xff]
        %v7280 = vld [vmem:[%s7064 + $0x109] sm:$0xff]
        %v7281 = vld [vmem:[%s7064 + $0x111] sm:$0xff]
        %v7282 = vld [vmem:[%s7064 + $0x121] sm:$0xff]
        %v7283 = vld [vmem:[%s7064 + $0x129] sm:$0xff]
        %v7284 = vld [vmem:[%s7064 + $0x139] sm:$0xff]
        %v7285 = vld [vmem:[%s7064 + $0x141] sm:$0xff]
        %v7286 = vld [vmem:[%s7064 + $0x151] sm:$0xff]
        %v7287 = vld [vmem:[%s7064 + $0x159] sm:$0xff]
        %v7288 = vld [vmem:[%s7064 + $0x169] sm:$0xff]
        %v7289 = vld [vmem:[%s7064 + $0x171] sm:$0xff]
        %7322 = vrot.lane.b32.xlu0 %v7258, 84
        %v7323 = vpop.permute.xlu0 %7322
        %7324 = vrot.lane.b32.xlu0 %v7259, 84
        %v7325 = vpop.permute.xlu0 %7324
        %7326 = vrot.lane.b32.xlu0 %v7260, 84
        %v7327 = vpop.permute.xlu0 %7326
        %7328 = vrot.lane.b32.xlu0 %v7261, 84
        %v7329 = vpop.permute.xlu0 %7328
        %7330 = vrot.lane.b32.xlu0 %v7262, 84
        %v7331 = vpop.permute.xlu0 %7330
        %7332 = vrot.lane.b32.xlu0 %v7263, 84
        %v7333 = vpop.permute.xlu0 %7332
        %7334 = vrot.lane.b32.xlu0 %v7264, 84
        %v7335 = vpop.permute.xlu0 %7334
        %7336 = vrot.lane.b32.xlu0 %v7265, 84
        %v7337 = vpop.permute.xlu0 %7336
        %7338 = vrot.lane.b32.xlu0 %v7266, 84
        %v7339 = vpop.permute.xlu0 %7338
        %7340 = vrot.lane.b32.xlu0 %v7267, 84
        %v7341 = vpop.permute.xlu0 %7340
        %7342 = vrot.lane.b32.xlu0 %v7268, 84
        %v7343 = vpop.permute.xlu0 %7342
        %7344 = vrot.lane.b32.xlu0 %v7269, 84
        %v7345 = vpop.permute.xlu0 %7344
        %7346 = vrot.lane.b32.xlu0 %v7270, 84
        %v7347 = vpop.permute.xlu0 %7346
        %7348 = vrot.lane.b32.xlu0 %v7271, 84
        %v7349 = vpop.permute.xlu0 %7348
        %7350 = vrot.lane.b32.xlu0 %v7272, 84
        %v7351 = vpop.permute.xlu0 %7350
        %7352 = vrot.lane.b32.xlu0 %v7273, 84
        %v7353 = vpop.permute.xlu0 %7352
        %7354 = vrot.lane.b32.xlu0 %v7274, 84
        %v7355 = vpop.permute.xlu0 %7354
        %7356 = vrot.lane.b32.xlu0 %v7275, 84
        %v7357 = vpop.permute.xlu0 %7356
        %7358 = vrot.lane.b32.xlu0 %v7276, 84
        %v7359 = vpop.permute.xlu0 %7358
        %7360 = vrot.lane.b32.xlu0 %v7277, 84
        %v7361 = vpop.permute.xlu0 %7360
        %7362 = vrot.lane.b32.xlu0 %v7278, 84
        %v7363 = vpop.permute.xlu0 %7362
        %7364 = vrot.lane.b32.xlu0 %v7279, 84
        %v7365 = vpop.permute.xlu0 %7364
        %7366 = vrot.lane.b32.xlu0 %v7280, 84
        %v7367 = vpop.permute.xlu0 %7366
        %7368 = vrot.lane.b32.xlu0 %v7281, 84
        %v7369 = vpop.permute.xlu0 %7368
        %7370 = vrot.lane.b32.xlu0 %v7282, 84
        %v7371 = vpop.permute.xlu0 %7370
        %7372 = vrot.lane.b32.xlu0 %v7283, 84
        %v7373 = vpop.permute.xlu0 %7372
        %7374 = vrot.lane.b32.xlu0 %v7284, 84
        %v7375 = vpop.permute.xlu0 %7374
        %7376 = vrot.lane.b32.xlu0 %v7285, 84
        %v7377 = vpop.permute.xlu0 %7376
        %7378 = vrot.lane.b32.xlu0 %v7286, 84
        %v7379 = vpop.permute.xlu0 %7378
        %7380 = vrot.lane.b32.xlu0 %v7287, 84
        %v7381 = vpop.permute.xlu0 %7380
        %7382 = vrot.lane.b32.xlu0 %v7288, 84
        %v7383 = vpop.permute.xlu0 %7382
        %7384 = vrot.lane.b32.xlu0 %v7289, 84
        %v7385 = vpop.permute.xlu0 %7384
        %vm7418 = vcmask 720544
        %7419 = vst.msk [vmem:[#allocation5] sm:$0xff] %vm7418, %v7323
        %7420 = vst.msk [vmem:[#allocation5 + $0x8] sm:$0xff] %vm7418, %v7325
        %7421 = vst.msk [vmem:[#allocation5 + $0x10] sm:$0xff] %vm7418, %v7327
        %7422 = vst.msk [vmem:[#allocation5 + $0x18] sm:$0xff] %vm7418, %v7329
        %7423 = vst.msk [vmem:[#allocation5 + $0x20] sm:$0xff] %vm7418, %v7331
        %7424 = vst.msk [vmem:[#allocation5 + $0x28] sm:$0xff] %vm7418, %v7333
        %7425 = vst.msk [vmem:[#allocation5 + $0x30] sm:$0xff] %vm7418, %v7335
        %7426 = vst.msk [vmem:[#allocation5 + $0x38] sm:$0xff] %vm7418, %v7337
        %7427 = vst.msk [vmem:[#allocation5 + $0x40] sm:$0xff] %vm7418, %v7339
        %7428 = vst.msk [vmem:[#allocation5 + $0x48] sm:$0xff] %vm7418, %v7341
        %7429 = vst.msk [vmem:[#allocation5 + $0x50] sm:$0xff] %vm7418, %v7343
        %7430 = vst.msk [vmem:[#allocation5 + $0x58] sm:$0xff] %vm7418, %v7345
        %7431 = vst.msk [vmem:[#allocation5 + $0x60] sm:$0xff] %vm7418, %v7347
        %7432 = vst.msk [vmem:[#allocation5 + $0x68] sm:$0xff] %vm7418, %v7349
        %7433 = vst.msk [vmem:[#allocation5 + $0x70] sm:$0xff] %vm7418, %v7351
        %7434 = vst.msk [vmem:[#allocation5 + $0x78] sm:$0xff] %vm7418, %v7353
        %7435 = vst.msk [vmem:[#allocation5 + $0x80] sm:$0xff] %vm7418, %v7355
        %7436 = vst.msk [vmem:[#allocation5 + $0x88] sm:$0xff] %vm7418, %v7357
        %7437 = vst.msk [vmem:[#allocation5 + $0x90] sm:$0xff] %vm7418, %v7359
        %7438 = vst.msk [vmem:[#allocation5 + $0x98] sm:$0xff] %vm7418, %v7361
        %7439 = vst.msk [vmem:[#allocation5 + $0xa0] sm:$0xff] %vm7418, %v7363
        %7440 = vst.msk [vmem:[#allocation5 + $0xa8] sm:$0xff] %vm7418, %v7365
        %7441 = vst.msk [vmem:[#allocation5 + $0xb0] sm:$0xff] %vm7418, %v7367
        %7442 = vst.msk [vmem:[#allocation5 + $0xb8] sm:$0xff] %vm7418, %v7369
        %7443 = vst.msk [vmem:[#allocation5 + $0xc0] sm:$0xff] %vm7418, %v7371
        %7444 = vst.msk [vmem:[#allocation5 + $0xc8] sm:$0xff] %vm7418, %v7373
        %7445 = vst.msk [vmem:[#allocation5 + $0xd0] sm:$0xff] %vm7418, %v7375
        %7446 = vst.msk [vmem:[#allocation5 + $0xd8] sm:$0xff] %vm7418, %v7377
        %7447 = vst.msk [vmem:[#allocation5 + $0xe0] sm:$0xff] %vm7418, %v7379
        %7448 = vst.msk [vmem:[#allocation5 + $0xe8] sm:$0xff] %vm7418, %v7381
        %7449 = vst.msk [vmem:[#allocation5 + $0xf0] sm:$0xff] %vm7418, %v7383
        %7450 = vst.msk [vmem:[#allocation5 + $0xf8] sm:$0xff] %vm7418, %v7385
        %v7451 = vld [vmem:[%s7064 + $0x2] sm:$0xff]
        %v7452 = vld [vmem:[%s7064 + $0xa] sm:$0xff]
        %v7453 = vld [vmem:[%s7064 + $0x1a] sm:$0xff]
        %v7454 = vld [vmem:[%s7064 + $0x22] sm:$0xff]
        %v7455 = vld [vmem:[%s7064 + $0x32] sm:$0xff]
        %v7456 = vld [vmem:[%s7064 + $0x3a] sm:$0xff]
        %v7457 = vld [vmem:[%s7064 + $0x4a] sm:$0xff]
        %v7458 = vld [vmem:[%s7064 + $0x52] sm:$0xff]
        %v7459 = vld [vmem:[%s7064 + $0x62] sm:$0xff]
        %v7460 = vld [vmem:[%s7064 + $0x6a] sm:$0xff]
        %v7461 = vld [vmem:[%s7064 + $0x7a] sm:$0xff]
        %v7462 = vld [vmem:[%s7064 + $0x82] sm:$0xff]
        %v7463 = vld [vmem:[%s7064 + $0x92] sm:$0xff]
        %v7464 = vld [vmem:[%s7064 + $0x9a] sm:$0xff]
        %v7465 = vld [vmem:[%s7064 + $0xaa] sm:$0xff]
        %v7466 = vld [vmem:[%s7064 + $0xb2] sm:$0xff]
        %v7467 = vld [vmem:[%s7064 + $0xc2] sm:$0xff]
        %v7468 = vld [vmem:[%s7064 + $0xca] sm:$0xff]
        %v7469 = vld [vmem:[%s7064 + $0xda] sm:$0xff]
        %v7470 = vld [vmem:[%s7064 + $0xe2] sm:$0xff]
        %v7471 = vld [vmem:[%s7064 + $0xf2] sm:$0xff]
        %v7472 = vld [vmem:[%s7064 + $0xfa] sm:$0xff]
        %v7473 = vld [vmem:[%s7064 + $0x10a] sm:$0xff]
        %v7474 = vld [vmem:[%s7064 + $0x112] sm:$0xff]
        %v7475 = vld [vmem:[%s7064 + $0x122] sm:$0xff]
        %v7476 = vld [vmem:[%s7064 + $0x12a] sm:$0xff]
        %v7477 = vld [vmem:[%s7064 + $0x13a] sm:$0xff]
        %v7478 = vld [vmem:[%s7064 + $0x142] sm:$0xff]
        %v7479 = vld [vmem:[%s7064 + $0x152] sm:$0xff]
        %v7480 = vld [vmem:[%s7064 + $0x15a] sm:$0xff]
        %v7481 = vld [vmem:[%s7064 + $0x16a] sm:$0xff]
        %v7482 = vld [vmem:[%s7064 + $0x172] sm:$0xff]
        %7515 = vrot.lane.b32.xlu0 %v7451, 88
        %v7516 = vpop.permute.xlu0 %7515
        %7517 = vrot.lane.b32.xlu0 %v7452, 88
        %v7518 = vpop.permute.xlu0 %7517
        %7519 = vrot.lane.b32.xlu0 %v7453, 88
        %v7520 = vpop.permute.xlu0 %7519
        %7521 = vrot.lane.b32.xlu0 %v7454, 88
        %v7522 = vpop.permute.xlu0 %7521
        %7523 = vrot.lane.b32.xlu0 %v7455, 88
        %v7524 = vpop.permute.xlu0 %7523
        %7525 = vrot.lane.b32.xlu0 %v7456, 88
        %v7526 = vpop.permute.xlu0 %7525
        %7527 = vrot.lane.b32.xlu0 %v7457, 88
        %v7528 = vpop.permute.xlu0 %7527
        %7529 = vrot.lane.b32.xlu0 %v7458, 88
        %v7530 = vpop.permute.xlu0 %7529
        %7531 = vrot.lane.b32.xlu0 %v7459, 88
        %v7532 = vpop.permute.xlu0 %7531
        %7533 = vrot.lane.b32.xlu0 %v7460, 88
        %v7534 = vpop.permute.xlu0 %7533
        %7535 = vrot.lane.b32.xlu0 %v7461, 88
        %v7536 = vpop.permute.xlu0 %7535
        %7537 = vrot.lane.b32.xlu0 %v7462, 88
        %v7538 = vpop.permute.xlu0 %7537
        %7539 = vrot.lane.b32.xlu0 %v7463, 88
        %v7540 = vpop.permute.xlu0 %7539
        %7541 = vrot.lane.b32.xlu0 %v7464, 88
        %v7542 = vpop.permute.xlu0 %7541
        %7543 = vrot.lane.b32.xlu0 %v7465, 88
        %v7544 = vpop.permute.xlu0 %7543
        %7545 = vrot.lane.b32.xlu0 %v7466, 88
        %v7546 = vpop.permute.xlu0 %7545
        %7547 = vrot.lane.b32.xlu0 %v7467, 88
        %v7548 = vpop.permute.xlu0 %7547
        %7549 = vrot.lane.b32.xlu0 %v7468, 88
        %v7550 = vpop.permute.xlu0 %7549
        %7551 = vrot.lane.b32.xlu0 %v7469, 88
        %v7552 = vpop.permute.xlu0 %7551
        %7553 = vrot.lane.b32.xlu0 %v7470, 88
        %v7554 = vpop.permute.xlu0 %7553
        %7555 = vrot.lane.b32.xlu0 %v7471, 88
        %v7556 = vpop.permute.xlu0 %7555
        %7557 = vrot.lane.b32.xlu0 %v7472, 88
        %v7558 = vpop.permute.xlu0 %7557
        %7559 = vrot.lane.b32.xlu0 %v7473, 88
        %v7560 = vpop.permute.xlu0 %7559
        %7561 = vrot.lane.b32.xlu0 %v7474, 88
        %v7562 = vpop.permute.xlu0 %7561
        %7563 = vrot.lane.b32.xlu0 %v7475, 88
        %v7564 = vpop.permute.xlu0 %7563
        %7565 = vrot.lane.b32.xlu0 %v7476, 88
        %v7566 = vpop.permute.xlu0 %7565
        %7567 = vrot.lane.b32.xlu0 %v7477, 88
        %v7568 = vpop.permute.xlu0 %7567
        %7569 = vrot.lane.b32.xlu0 %v7478, 88
        %v7570 = vpop.permute.xlu0 %7569
        %7571 = vrot.lane.b32.xlu0 %v7479, 88
        %v7572 = vpop.permute.xlu0 %7571
        %7573 = vrot.lane.b32.xlu0 %v7480, 88
        %v7574 = vpop.permute.xlu0 %7573
        %7575 = vrot.lane.b32.xlu0 %v7481, 88
        %v7576 = vpop.permute.xlu0 %7575
        %7577 = vrot.lane.b32.xlu0 %v7482, 88
        %v7578 = vpop.permute.xlu0 %7577
        %vm7611 = vcmask 753344
        %7612 = vst.msk [vmem:[#allocation5] sm:$0xff] %vm7611, %v7516
        %7613 = vst.msk [vmem:[#allocation5 + $0x8] sm:$0xff] %vm7611, %v7518
        %7614 = vst.msk [vmem:[#allocation5 + $0x10] sm:$0xff] %vm7611, %v7520
        %7615 = vst.msk [vmem:[#allocation5 + $0x18] sm:$0xff] %vm7611, %v7522
        %7616 = vst.msk [vmem:[#allocation5 + $0x20] sm:$0xff] %vm7611, %v7524
        %7617 = vst.msk [vmem:[#allocation5 + $0x28] sm:$0xff] %vm7611, %v7526
        %7618 = vst.msk [vmem:[#allocation5 + $0x30] sm:$0xff] %vm7611, %v7528
        %7619 = vst.msk [vmem:[#allocation5 + $0x38] sm:$0xff] %vm7611, %v7530
        %7620 = vst.msk [vmem:[#allocation5 + $0x40] sm:$0xff] %vm7611, %v7532
        %7621 = vst.msk [vmem:[#allocation5 + $0x48] sm:$0xff] %vm7611, %v7534
        %7622 = vst.msk [vmem:[#allocation5 + $0x50] sm:$0xff] %vm7611, %v7536
        %7623 = vst.msk [vmem:[#allocation5 + $0x58] sm:$0xff] %vm7611, %v7538
        %7624 = vst.msk [vmem:[#allocation5 + $0x60] sm:$0xff] %vm7611, %v7540
        %7625 = vst.msk [vmem:[#allocation5 + $0x68] sm:$0xff] %vm7611, %v7542
        %7626 = vst.msk [vmem:[#allocation5 + $0x70] sm:$0xff] %vm7611, %v7544
        %7627 = vst.msk [vmem:[#allocation5 + $0x78] sm:$0xff] %vm7611, %v7546
        %7628 = vst.msk [vmem:[#allocation5 + $0x80] sm:$0xff] %vm7611, %v7548
        %7629 = vst.msk [vmem:[#allocation5 + $0x88] sm:$0xff] %vm7611, %v7550
        %7630 = vst.msk [vmem:[#allocation5 + $0x90] sm:$0xff] %vm7611, %v7552
        %7631 = vst.msk [vmem:[#allocation5 + $0x98] sm:$0xff] %vm7611, %v7554
        %7632 = vst.msk [vmem:[#allocation5 + $0xa0] sm:$0xff] %vm7611, %v7556
        %7633 = vst.msk [vmem:[#allocation5 + $0xa8] sm:$0xff] %vm7611, %v7558
        %7634 = vst.msk [vmem:[#allocation5 + $0xb0] sm:$0xff] %vm7611, %v7560
        %7635 = vst.msk [vmem:[#allocation5 + $0xb8] sm:$0xff] %vm7611, %v7562
        %7636 = vst.msk [vmem:[#allocation5 + $0xc0] sm:$0xff] %vm7611, %v7564
        %7637 = vst.msk [vmem:[#allocation5 + $0xc8] sm:$0xff] %vm7611, %v7566
        %7638 = vst.msk [vmem:[#allocation5 + $0xd0] sm:$0xff] %vm7611, %v7568
        %7639 = vst.msk [vmem:[#allocation5 + $0xd8] sm:$0xff] %vm7611, %v7570
        %7640 = vst.msk [vmem:[#allocation5 + $0xe0] sm:$0xff] %vm7611, %v7572
        %7641 = vst.msk [vmem:[#allocation5 + $0xe8] sm:$0xff] %vm7611, %v7574
        %7642 = vst.msk [vmem:[#allocation5 + $0xf0] sm:$0xff] %vm7611, %v7576
        %7643 = vst.msk [vmem:[#allocation5 + $0xf8] sm:$0xff] %vm7611, %v7578
        %v7644 = vld [vmem:[%s7064 + $0x3] sm:$0xff]
        %v7645 = vld [vmem:[%s7064 + $0xb] sm:$0xff]
        %v7646 = vld [vmem:[%s7064 + $0x1b] sm:$0xff]
        %v7647 = vld [vmem:[%s7064 + $0x23] sm:$0xff]
        %v7648 = vld [vmem:[%s7064 + $0x33] sm:$0xff]
        %v7649 = vld [vmem:[%s7064 + $0x3b] sm:$0xff]
        %v7650 = vld [vmem:[%s7064 + $0x4b] sm:$0xff]
        %v7651 = vld [vmem:[%s7064 + $0x53] sm:$0xff]
        %v7652 = vld [vmem:[%s7064 + $0x63] sm:$0xff]
        %v7653 = vld [vmem:[%s7064 + $0x6b] sm:$0xff]
        %v7654 = vld [vmem:[%s7064 + $0x7b] sm:$0xff]
        %v7655 = vld [vmem:[%s7064 + $0x83] sm:$0xff]
        %v7656 = vld [vmem:[%s7064 + $0x93] sm:$0xff]
        %v7657 = vld [vmem:[%s7064 + $0x9b] sm:$0xff]
        %v7658 = vld [vmem:[%s7064 + $0xab] sm:$0xff]
        %v7659 = vld [vmem:[%s7064 + $0xb3] sm:$0xff]
        %v7660 = vld [vmem:[%s7064 + $0xc3] sm:$0xff]
        %v7661 = vld [vmem:[%s7064 + $0xcb] sm:$0xff]
        %v7662 = vld [vmem:[%s7064 + $0xdb] sm:$0xff]
        %v7663 = vld [vmem:[%s7064 + $0xe3] sm:$0xff]
        %v7664 = vld [vmem:[%s7064 + $0xf3] sm:$0xff]
        %v7665 = vld [vmem:[%s7064 + $0xfb] sm:$0xff]
        %v7666 = vld [vmem:[%s7064 + $0x10b] sm:$0xff]
        %v7667 = vld [vmem:[%s7064 + $0x113] sm:$0xff]
        %v7668 = vld [vmem:[%s7064 + $0x123] sm:$0xff]
        %v7669 = vld [vmem:[%s7064 + $0x12b] sm:$0xff]
        %v7670 = vld [vmem:[%s7064 + $0x13b] sm:$0xff]
        %v7671 = vld [vmem:[%s7064 + $0x143] sm:$0xff]
        %v7672 = vld [vmem:[%s7064 + $0x153] sm:$0xff]
        %v7673 = vld [vmem:[%s7064 + $0x15b] sm:$0xff]
        %v7674 = vld [vmem:[%s7064 + $0x16b] sm:$0xff]
        %v7675 = vld [vmem:[%s7064 + $0x173] sm:$0xff]
        %7708 = vrot.lane.b32.xlu0 %v7644, 92
        %v7709 = vpop.permute.xlu0 %7708
        %7710 = vrot.lane.b32.xlu0 %v7645, 92
        %v7711 = vpop.permute.xlu0 %7710
        %7712 = vrot.lane.b32.xlu0 %v7646, 92
        %v7713 = vpop.permute.xlu0 %7712
        %7714 = vrot.lane.b32.xlu0 %v7647, 92
        %v7715 = vpop.permute.xlu0 %7714
        %7716 = vrot.lane.b32.xlu0 %v7648, 92
        %v7717 = vpop.permute.xlu0 %7716
        %7718 = vrot.lane.b32.xlu0 %v7649, 92
        %v7719 = vpop.permute.xlu0 %7718
        %7720 = vrot.lane.b32.xlu0 %v7650, 92
        %v7721 = vpop.permute.xlu0 %7720
        %7722 = vrot.lane.b32.xlu0 %v7651, 92
        %v7723 = vpop.permute.xlu0 %7722
        %7724 = vrot.lane.b32.xlu0 %v7652, 92
        %v7725 = vpop.permute.xlu0 %7724
        %7726 = vrot.lane.b32.xlu0 %v7653, 92
        %v7727 = vpop.permute.xlu0 %7726
        %7728 = vrot.lane.b32.xlu0 %v7654, 92
        %v7729 = vpop.permute.xlu0 %7728
        %7730 = vrot.lane.b32.xlu0 %v7655, 92
        %v7731 = vpop.permute.xlu0 %7730
        %7732 = vrot.lane.b32.xlu0 %v7656, 92
        %v7733 = vpop.permute.xlu0 %7732
        %7734 = vrot.lane.b32.xlu0 %v7657, 92
        %v7735 = vpop.permute.xlu0 %7734
        %7736 = vrot.lane.b32.xlu0 %v7658, 92
        %v7737 = vpop.permute.xlu0 %7736
        %7738 = vrot.lane.b32.xlu0 %v7659, 92
        %v7739 = vpop.permute.xlu0 %7738
        %7740 = vrot.lane.b32.xlu0 %v7660, 92
        %v7741 = vpop.permute.xlu0 %7740
        %7742 = vrot.lane.b32.xlu0 %v7661, 92
        %v7743 = vpop.permute.xlu0 %7742
        %7744 = vrot.lane.b32.xlu0 %v7662, 92
        %v7745 = vpop.permute.xlu0 %7744
        %7746 = vrot.lane.b32.xlu0 %v7663, 92
        %v7747 = vpop.permute.xlu0 %7746
        %7748 = vrot.lane.b32.xlu0 %v7664, 92
        %v7749 = vpop.permute.xlu0 %7748
        %7750 = vrot.lane.b32.xlu0 %v7665, 92
        %v7751 = vpop.permute.xlu0 %7750
        %7752 = vrot.lane.b32.xlu0 %v7666, 92
        %v7753 = vpop.permute.xlu0 %7752
        %7754 = vrot.lane.b32.xlu0 %v7667, 92
        %v7755 = vpop.permute.xlu0 %7754
        %7756 = vrot.lane.b32.xlu0 %v7668, 92
        %v7757 = vpop.permute.xlu0 %7756
        %7758 = vrot.lane.b32.xlu0 %v7669, 92
        %v7759 = vpop.permute.xlu0 %7758
        %7760 = vrot.lane.b32.xlu0 %v7670, 92
        %v7761 = vpop.permute.xlu0 %7760
        %7762 = vrot.lane.b32.xlu0 %v7671, 92
        %v7763 = vpop.permute.xlu0 %7762
        %7764 = vrot.lane.b32.xlu0 %v7672, 92
        %v7765 = vpop.permute.xlu0 %7764
        %7766 = vrot.lane.b32.xlu0 %v7673, 92
        %v7767 = vpop.permute.xlu0 %7766
        %7768 = vrot.lane.b32.xlu0 %v7674, 92
        %v7769 = vpop.permute.xlu0 %7768
        %7770 = vrot.lane.b32.xlu0 %v7675, 92
        %v7771 = vpop.permute.xlu0 %7770
        %vm7804 = vcmask 786144
        %7805 = vst.msk [vmem:[#allocation5] sm:$0xff] %vm7804, %v7709
        %7806 = vst.msk [vmem:[#allocation5 + $0x8] sm:$0xff] %vm7804, %v7711
        %7807 = vst.msk [vmem:[#allocation5 + $0x10] sm:$0xff] %vm7804, %v7713
        %7808 = vst.msk [vmem:[#allocation5 + $0x18] sm:$0xff] %vm7804, %v7715
        %7809 = vst.msk [vmem:[#allocation5 + $0x20] sm:$0xff] %vm7804, %v7717
        %7810 = vst.msk [vmem:[#allocation5 + $0x28] sm:$0xff] %vm7804, %v7719
        %7811 = vst.msk [vmem:[#allocation5 + $0x30] sm:$0xff] %vm7804, %v7721
        %7812 = vst.msk [vmem:[#allocation5 + $0x38] sm:$0xff] %vm7804, %v7723
        %7813 = vst.msk [vmem:[#allocation5 + $0x40] sm:$0xff] %vm7804, %v7725
        %7814 = vst.msk [vmem:[#allocation5 + $0x48] sm:$0xff] %vm7804, %v7727
        %7815 = vst.msk [vmem:[#allocation5 + $0x50] sm:$0xff] %vm7804, %v7729
        %7816 = vst.msk [vmem:[#allocation5 + $0x58] sm:$0xff] %vm7804, %v7731
        %7817 = vst.msk [vmem:[#allocation5 + $0x60] sm:$0xff] %vm7804, %v7733
        %7818 = vst.msk [vmem:[#allocation5 + $0x68] sm:$0xff] %vm7804, %v7735
        %7819 = vst.msk [vmem:[#allocation5 + $0x70] sm:$0xff] %vm7804, %v7737
        %7820 = vst.msk [vmem:[#allocation5 + $0x78] sm:$0xff] %vm7804, %v7739
        %7821 = vst.msk [vmem:[#allocation5 + $0x80] sm:$0xff] %vm7804, %v7741
        %7822 = vst.msk [vmem:[#allocation5 + $0x88] sm:$0xff] %vm7804, %v7743
        %7823 = vst.msk [vmem:[#allocation5 + $0x90] sm:$0xff] %vm7804, %v7745
        %7824 = vst.msk [vmem:[#allocation5 + $0x98] sm:$0xff] %vm7804, %v7747
        %7825 = vst.msk [vmem:[#allocation5 + $0xa0] sm:$0xff] %vm7804, %v7749
        %7826 = vst.msk [vmem:[#allocation5 + $0xa8] sm:$0xff] %vm7804, %v7751
        %7827 = vst.msk [vmem:[#allocation5 + $0xb0] sm:$0xff] %vm7804, %v7753
        %7828 = vst.msk [vmem:[#allocation5 + $0xb8] sm:$0xff] %vm7804, %v7755
        %7829 = vst.msk [vmem:[#allocation5 + $0xc0] sm:$0xff] %vm7804, %v7757
        %7830 = vst.msk [vmem:[#allocation5 + $0xc8] sm:$0xff] %vm7804, %v7759
        %7831 = vst.msk [vmem:[#allocation5 + $0xd0] sm:$0xff] %vm7804, %v7761
        %7832 = vst.msk [vmem:[#allocation5 + $0xd8] sm:$0xff] %vm7804, %v7763
        %7833 = vst.msk [vmem:[#allocation5 + $0xe0] sm:$0xff] %vm7804, %v7765
        %7834 = vst.msk [vmem:[#allocation5 + $0xe8] sm:$0xff] %vm7804, %v7767
        %7835 = vst.msk [vmem:[#allocation5 + $0xf0] sm:$0xff] %vm7804, %v7769
        %7836 = vst.msk [vmem:[#allocation5 + $0xf8] sm:$0xff] %vm7804, %v7771
        %v7837 = vld [vmem:[%s7064 + $0x4] sm:$0xff]
        %v7838 = vld [vmem:[%s7064 + $0xc] sm:$0xff]
        %v7839 = vld [vmem:[%s7064 + $0x1c] sm:$0xff]
        %v7840 = vld [vmem:[%s7064 + $0x24] sm:$0xff]
        %v7841 = vld [vmem:[%s7064 + $0x34] sm:$0xff]
        %v7842 = vld [vmem:[%s7064 + $0x3c] sm:$0xff]
        %v7843 = vld [vmem:[%s7064 + $0x4c] sm:$0xff]
        %v7844 = vld [vmem:[%s7064 + $0x54] sm:$0xff]
        %v7845 = vld [vmem:[%s7064 + $0x64] sm:$0xff]
        %v7846 = vld [vmem:[%s7064 + $0x6c] sm:$0xff]
        %v7847 = vld [vmem:[%s7064 + $0x7c] sm:$0xff]
        %v7848 = vld [vmem:[%s7064 + $0x84] sm:$0xff]
        %v7849 = vld [vmem:[%s7064 + $0x94] sm:$0xff]
        %v7850 = vld [vmem:[%s7064 + $0x9c] sm:$0xff]
        %v7851 = vld [vmem:[%s7064 + $0xac] sm:$0xff]
        %v7852 = vld [vmem:[%s7064 + $0xb4] sm:$0xff]
        %v7853 = vld [vmem:[%s7064 + $0xc4] sm:$0xff]
        %v7854 = vld [vmem:[%s7064 + $0xcc] sm:$0xff]
        %v7855 = vld [vmem:[%s7064 + $0xdc] sm:$0xff]
        %v7856 = vld [vmem:[%s7064 + $0xe4] sm:$0xff]
        %v7857 = vld [vmem:[%s7064 + $0xf4] sm:$0xff]
        %v7858 = vld [vmem:[%s7064 + $0xfc] sm:$0xff]
        %v7859 = vld [vmem:[%s7064 + $0x10c] sm:$0xff]
        %v7860 = vld [vmem:[%s7064 + $0x114] sm:$0xff]
        %v7861 = vld [vmem:[%s7064 + $0x124] sm:$0xff]
        %v7862 = vld [vmem:[%s7064 + $0x12c] sm:$0xff]
        %v7863 = vld [vmem:[%s7064 + $0x13c] sm:$0xff]
        %v7864 = vld [vmem:[%s7064 + $0x144] sm:$0xff]
        %v7865 = vld [vmem:[%s7064 + $0x154] sm:$0xff]
        %v7866 = vld [vmem:[%s7064 + $0x15c] sm:$0xff]
        %v7867 = vld [vmem:[%s7064 + $0x16c] sm:$0xff]
        %v7868 = vld [vmem:[%s7064 + $0x174] sm:$0xff]
        %7901 = vrot.lane.b32.xlu0 %v7837, 96
        %v7902 = vpop.permute.xlu0 %7901
        %7903 = vrot.lane.b32.xlu0 %v7838, 96
        %v7904 = vpop.permute.xlu0 %7903
        %7905 = vrot.lane.b32.xlu0 %v7839, 96
        %v7906 = vpop.permute.xlu0 %7905
        %7907 = vrot.lane.b32.xlu0 %v7840, 96
        %v7908 = vpop.permute.xlu0 %7907
        %7909 = vrot.lane.b32.xlu0 %v7841, 96
        %v7910 = vpop.permute.xlu0 %7909
        %7911 = vrot.lane.b32.xlu0 %v7842, 96
        %v7912 = vpop.permute.xlu0 %7911
        %7913 = vrot.lane.b32.xlu0 %v7843, 96
        %v7914 = vpop.permute.xlu0 %7913
        %7915 = vrot.lane.b32.xlu0 %v7844, 96
        %v7916 = vpop.permute.xlu0 %7915
        %7917 = vrot.lane.b32.xlu0 %v7845, 96
        %v7918 = vpop.permute.xlu0 %7917
        %7919 = vrot.lane.b32.xlu0 %v7846, 96
        %v7920 = vpop.permute.xlu0 %7919
        %7921 = vrot.lane.b32.xlu0 %v7847, 96
        %v7922 = vpop.permute.xlu0 %7921
        %7923 = vrot.lane.b32.xlu0 %v7848, 96
        %v7924 = vpop.permute.xlu0 %7923
        %7925 = vrot.lane.b32.xlu0 %v7849, 96
        %v7926 = vpop.permute.xlu0 %7925
        %7927 = vrot.lane.b32.xlu0 %v7850, 96
        %v7928 = vpop.permute.xlu0 %7927
        %7929 = vrot.lane.b32.xlu0 %v7851, 96
        %v7930 = vpop.permute.xlu0 %7929
        %7931 = vrot.lane.b32.xlu0 %v7852, 96
        %v7932 = vpop.permute.xlu0 %7931
        %7933 = vrot.lane.b32.xlu0 %v7853, 96
        %v7934 = vpop.permute.xlu0 %7933
        %7935 = vrot.lane.b32.xlu0 %v7854, 96
        %v7936 = vpop.permute.xlu0 %7935
        %7937 = vrot.lane.b32.xlu0 %v7855, 96
        %v7938 = vpop.permute.xlu0 %7937
        %7939 = vrot.lane.b32.xlu0 %v7856, 96
        %v7940 = vpop.permute.xlu0 %7939
        %7941 = vrot.lane.b32.xlu0 %v7857, 96
        %v7942 = vpop.permute.xlu0 %7941
        %7943 = vrot.lane.b32.xlu0 %v7858, 96
        %v7944 = vpop.permute.xlu0 %7943
        %7945 = vrot.lane.b32.xlu0 %v7859, 96
        %v7946 = vpop.permute.xlu0 %7945
        %7947 = vrot.lane.b32.xlu0 %v7860, 96
        %v7948 = vpop.permute.xlu0 %7947
        %7949 = vrot.lane.b32.xlu0 %v7861, 96
        %v7950 = vpop.permute.xlu0 %7949
        %7951 = vrot.lane.b32.xlu0 %v7862, 96
        %v7952 = vpop.permute.xlu0 %7951
        %7953 = vrot.lane.b32.xlu0 %v7863, 96
        %v7954 = vpop.permute.xlu0 %7953
        %7955 = vrot.lane.b32.xlu0 %v7864, 96
        %v7956 = vpop.permute.xlu0 %7955
        %7957 = vrot.lane.b32.xlu0 %v7865, 96
        %v7958 = vpop.permute.xlu0 %7957
        %7959 = vrot.lane.b32.xlu0 %v7866, 96
        %v7960 = vpop.permute.xlu0 %7959
        %7961 = vrot.lane.b32.xlu0 %v7867, 96
        %v7962 = vpop.permute.xlu0 %7961
        %7963 = vrot.lane.b32.xlu0 %v7868, 96
        %v7964 = vpop.permute.xlu0 %7963
        %vm7997 = vcmask 818944
        %7998 = vst.msk [vmem:[#allocation5] sm:$0xff] %vm7997, %v7902
        %7999 = vst.msk [vmem:[#allocation5 + $0x8] sm:$0xff] %vm7997, %v7904
        %8000 = vst.msk [vmem:[#allocation5 + $0x10] sm:$0xff] %vm7997, %v7906
        %8001 = vst.msk [vmem:[#allocation5 + $0x18] sm:$0xff] %vm7997, %v7908
        %8002 = vst.msk [vmem:[#allocation5 + $0x20] sm:$0xff] %vm7997, %v7910
        %8003 = vst.msk [vmem:[#allocation5 + $0x28] sm:$0xff] %vm7997, %v7912
        %8004 = vst.msk [vmem:[#allocation5 + $0x30] sm:$0xff] %vm7997, %v7914
        %8005 = vst.msk [vmem:[#allocation5 + $0x38] sm:$0xff] %vm7997, %v7916
        %8006 = vst.msk [vmem:[#allocation5 + $0x40] sm:$0xff] %vm7997, %v7918
        %8007 = vst.msk [vmem:[#allocation5 + $0x48] sm:$0xff] %vm7997, %v7920
        %8008 = vst.msk [vmem:[#allocation5 + $0x50] sm:$0xff] %vm7997, %v7922
        %8009 = vst.msk [vmem:[#allocation5 + $0x58] sm:$0xff] %vm7997, %v7924
        %8010 = vst.msk [vmem:[#allocation5 + $0x60] sm:$0xff] %vm7997, %v7926
        %8011 = vst.msk [vmem:[#allocation5 + $0x68] sm:$0xff] %vm7997, %v7928
        %8012 = vst.msk [vmem:[#allocation5 + $0x70] sm:$0xff] %vm7997, %v7930
        %8013 = vst.msk [vmem:[#allocation5 + $0x78] sm:$0xff] %vm7997, %v7932
        %8014 = vst.msk [vmem:[#allocation5 + $0x80] sm:$0xff] %vm7997, %v7934
        %8015 = vst.msk [vmem:[#allocation5 + $0x88] sm:$0xff] %vm7997, %v7936
        %8016 = vst.msk [vmem:[#allocation5 + $0x90] sm:$0xff] %vm7997, %v7938
        %8017 = vst.msk [vmem:[#allocation5 + $0x98] sm:$0xff] %vm7997, %v7940
        %8018 = vst.msk [vmem:[#allocation5 + $0xa0] sm:$0xff] %vm7997, %v7942
        %8019 = vst.msk [vmem:[#allocation5 + $0xa8] sm:$0xff] %vm7997, %v7944
        %8020 = vst.msk [vmem:[#allocation5 + $0xb0] sm:$0xff] %vm7997, %v7946
        %8021 = vst.msk [vmem:[#allocation5 + $0xb8] sm:$0xff] %vm7997, %v7948
        %8022 = vst.msk [vmem:[#allocation5 + $0xc0] sm:$0xff] %vm7997, %v7950
        %8023 = vst.msk [vmem:[#allocation5 + $0xc8] sm:$0xff] %vm7997, %v7952
        %8024 = vst.msk [vmem:[#allocation5 + $0xd0] sm:$0xff] %vm7997, %v7954
        %8025 = vst.msk [vmem:[#allocation5 + $0xd8] sm:$0xff] %vm7997, %v7956
        %8026 = vst.msk [vmem:[#allocation5 + $0xe0] sm:$0xff] %vm7997, %v7958
        %8027 = vst.msk [vmem:[#allocation5 + $0xe8] sm:$0xff] %vm7997, %v7960
        %8028 = vst.msk [vmem:[#allocation5 + $0xf0] sm:$0xff] %vm7997, %v7962
        %8029 = vst.msk [vmem:[#allocation5 + $0xf8] sm:$0xff] %vm7997, %v7964
        %v8030 = vld [vmem:[#allocation5] sm:$0xff]
        %v8031 = vld [vmem:[#allocation5 + $0x8] sm:$0xff]
        %v8032 = vld [vmem:[#allocation5 + $0x10] sm:$0xff]
        %v8033 = vld [vmem:[#allocation5 + $0x18] sm:$0xff]
        %v8034 = vld [vmem:[#allocation5 + $0x20] sm:$0xff]
        %v8035 = vld [vmem:[#allocation5 + $0x28] sm:$0xff]
        %v8036 = vld [vmem:[#allocation5 + $0x30] sm:$0xff]
        %v8037 = vld [vmem:[#allocation5 + $0x38] sm:$0xff]
        %v8038 = vld [vmem:[#allocation5 + $0x40] sm:$0xff]
        %v8039 = vld [vmem:[#allocation5 + $0x48] sm:$0xff]
        %v8040 = vld [vmem:[#allocation5 + $0x50] sm:$0xff]
        %v8041 = vld [vmem:[#allocation5 + $0x58] sm:$0xff]
        %v8042 = vld [vmem:[#allocation5 + $0x60] sm:$0xff]
        %v8043 = vld [vmem:[#allocation5 + $0x68] sm:$0xff]
        %v8044 = vld [vmem:[#allocation5 + $0x70] sm:$0xff]
        %v8045 = vld [vmem:[#allocation5 + $0x78] sm:$0xff]
        %v8046 = vld [vmem:[#allocation5 + $0x80] sm:$0xff]
        %v8047 = vld [vmem:[#allocation5 + $0x88] sm:$0xff]
        %v8048 = vld [vmem:[#allocation5 + $0x90] sm:$0xff]
        %v8049 = vld [vmem:[#allocation5 + $0x98] sm:$0xff]
        %v8050 = vld [vmem:[#allocation5 + $0xa0] sm:$0xff]
        %v8051 = vld [vmem:[#allocation5 + $0xa8] sm:$0xff]
        %v8052 = vld [vmem:[#allocation5 + $0xb0] sm:$0xff]
        %v8053 = vld [vmem:[#allocation5 + $0xb8] sm:$0xff]
        %v8054 = vld [vmem:[#allocation5 + $0xc0] sm:$0xff]
        %v8055 = vld [vmem:[#allocation5 + $0xc8] sm:$0xff]
        %v8056 = vld [vmem:[#allocation5 + $0xd0] sm:$0xff]
        %v8057 = vld [vmem:[#allocation5 + $0xd8] sm:$0xff]
        %v8058 = vld [vmem:[#allocation5 + $0xe0] sm:$0xff]
        %v8059 = vld [vmem:[#allocation5 + $0xe8] sm:$0xff]
        %v8060 = vld [vmem:[#allocation5 + $0xf0] sm:$0xff]
        %v8061 = vld [vmem:[#allocation5 + $0xf8] sm:$0xff]
        %v8062 = vld [vmem:[%s5] sm:$0xff]
        %v8063 = vld [vmem:[%s5 + $0x8] sm:$0xff]
        %v8064 = vld [vmem:[%s5 + $0x10] sm:$0xff]
        %v8065 = vld [vmem:[%s5 + $0x18] sm:$0xff]
        %v8066 = vld [vmem:[%s5 + $0x20] sm:$0xff]
        %v8067 = vld [vmem:[%s5 + $0x28] sm:$0xff]
        %v8068 = vld [vmem:[%s5 + $0x30] sm:$0xff]
        %v8069 = vld [vmem:[%s5 + $0x38] sm:$0xff]
        %v8070 = vld [vmem:[%s5 + $0x40] sm:$0xff]
        %v8071 = vld [vmem:[%s5 + $0x48] sm:$0xff]
        %v8072 = vld [vmem:[%s5 + $0x50] sm:$0xff]
        %v8073 = vld [vmem:[%s5 + $0x58] sm:$0xff]
        %v8074 = vld [vmem:[%s5 + $0x60] sm:$0xf]
        %v8075 = vld [vmem:[%s6] sm:$0x1]
        %v8077 = vlaneseq
        %v8078 = vshrl.u32 %v8077, 7
        %v8079 = vsub.s32 0, %v8078
        %v8080 = vrot.slane %v8075, %v8079
        %vm8082 = vcmask 818176
        %v8084 = vsel %vm8082, %v8030, 0
        %v8087 = vsel %vm8082, %v8031, 0
        %v8090 = vsel %vm8082, %v8032, 0
        %v8093 = vsel %vm8082, %v8033, 0
        %v8096 = vsel %vm8082, %v8034, 0
        %v8099 = vsel %vm8082, %v8035, 0
        %v8102 = vsel %vm8082, %v8036, 0
        %v8105 = vsel %vm8082, %v8037, 0
        %v8108 = vsel %vm8082, %v8038, 0
        %v8111 = vsel %vm8082, %v8039, 0
        %v8114 = vsel %vm8082, %v8040, 0
        %v8117 = vsel %vm8082, %v8041, 0
        %v8120 = vsel %vm8082, %v8042, 0
        %v8123 = vsel %vm8082, %v8043, 0
        %v8126 = vsel %vm8082, %v8044, 0
        %v8129 = vsel %vm8082, %v8045, 0
        %v8132 = vsel %vm8082, %v8046, 0
        %v8135 = vsel %vm8082, %v8047, 0
        %v8138 = vsel %vm8082, %v8048, 0
        %v8141 = vsel %vm8082, %v8049, 0
        %v8144 = vsel %vm8082, %v8050, 0
        %v8147 = vsel %vm8082, %v8051, 0
        %v8150 = vsel %vm8082, %v8052, 0
        %v8153 = vsel %vm8082, %v8053, 0
        %v8156 = vsel %vm8082, %v8054, 0
        %v8159 = vsel %vm8082, %v8055, 0
        %v8162 = vsel %vm8082, %v8056, 0
        %v8165 = vsel %vm8082, %v8057, 0
        %v8168 = vsel %vm8082, %v8058, 0
        %v8171 = vsel %vm8082, %v8059, 0
        %v8174 = vsel %vm8082, %v8060, 0
        %v8177 = vsel %vm8082, %v8061, 0
        %v8180 = vsel %vm468, %v8074, 0
        %8182 = vmatprep.subr.mxu0 0.0
        %8183 = vmatpush1.msra.mxu0 %v8062
        %8184 = vmatprep.subr.mxu0 0.0
        %8185 = vmatpush1.msra.mxu0 %v8063
        %8186 = vmatprep.subr.mxu0 0.0
        %8187 = vmatpush1.msra.mxu0 %v8064
        %8188 = vmatprep.subr.mxu0 0.0
        %8189 = vmatpush1.msra.mxu0 %v8065
        %8190 = vmatprep.subr.mxu0 0.0
        %8191 = vmatpush1.msra.mxu0 %v8066
        %8192 = vmatprep.subr.mxu0 0.0
        %8193 = vmatpush1.msra.mxu0 %v8067
        %8194 = vmatprep.subr.mxu0 0.0
        %8195 = vmatpush1.msra.mxu0 %v8068
        %8196 = vmatprep.subr.mxu0 0.0
        %8197 = vmatpush1.msra.mxu0 %v8069
        %8198 = vmatprep.subr.mxu0 0.0
        %8199 = vmatpush1.msra.mxu0 %v8070
        %8200 = vmatprep.subr.mxu0 0.0
        %8201 = vmatpush1.msra.mxu0 %v8071
        %8202 = vmatprep.subr.mxu0 0.0
        %8203 = vmatpush1.msra.mxu0 %v8072
        %8204 = vmatprep.subr.mxu0 0.0
        %8205 = vmatpush1.msra.mxu0 %v8073
        %8206 = vmatprep.subr.mxu0 0.0
        %8207 = vmatpush1.msra.mxu0 %v8180
        %8208 = vmatprep.subr.mxu0 0.0
        %8209 = vmatpush1.msra.mxu0 0.0
        %8210 = vmatprep.subr.mxu0 0.0
        %8211 = vmatpush1.msra.mxu0 0.0
        %8212 = vmatprep.subr.mxu0 0.0
        %8213 = vmatpush1.msra.mxu0 0.0
        %8214 = vmatprep.subr.mxu0 0.0
        %8215 = vmatpush1.msra.mxu0 0.0
        %8216 = vmatprep.subr.mxu0 0.0
        %8217 = vmatpush1.msra.mxu0 0.0
        %8218 = vmatprep.subr.mxu0 0.0
        %8219 = vmatpush1.msra.mxu0 0.0
        %8220 = vmatprep.subr.mxu0 0.0
        %8221 = vmatpush1.msra.mxu0 0.0
        %8222 = vmatprep.subr.mxu0 0.0
        %8223 = vmatpush1.msra.mxu0 0.0
        %8224 = vmatprep.subr.mxu0 0.0
        %8225 = vmatpush1.msra.mxu0 0.0
        %8226 = vmatprep.subr.mxu0 0.0
        %8227 = vmatpush1.msra.mxu0 0.0
        %8228 = vmatprep.subr.mxu0 0.0
        %8229 = vmatpush1.msra.mxu0 0.0
        %8230 = vmatprep.subr.mxu0 0.0
        %8231 = vmatpush1.msra.mxu0 0.0
        %8232 = vmatprep.subr.mxu0 0.0
        %8233 = vmatpush1.msra.mxu0 0.0
        %8234 = vmatprep.subr.mxu0 0.0
        %8235 = vmatpush1.msra.mxu0 0.0
        %8236 = vmatprep.subr.mxu0 0.0
        %8237 = vmatpush1.msra.mxu0 0.0
        %8238 = vmatprep.subr.mxu0 0.0
        %8239 = vmatpush1.msra.mxu0 0.0
        %8240 = vmatprep.subr.mxu0 0.0
        %8241 = vmatpush1.msra.mxu0 0.0
        %8242 = vmatprep.subr.mxu0 0.0
        %8243 = vmatpush1.msra.mxu0 0.0
        %8244 = vmatprep.subr.mxu0 0.0
        %8245 = vmatpush1.msra.mxu0 0.0
        %8246 = vmatprep.mubr.f32.mxu0 0.0
        %8247 = vmatmul.mubr.f32.gmra.mrb[0].mxu0 %v8084
        %v8248 = vpop.f32.mrb[0].mxu0
        %v8249 = vadd.f32 %v8080, %v8248
        %v8250 = vpop.f32.mrb[0].mxu0
        %8251 = vmatprep.mubr.f32.mxu0 0.0
        %8252 = vmatmul.mubr.f32.gmra.mrb[0].mxu0 %v8087
        %v8253 = vpop.f32.mrb[0].mxu0
        %v8254 = vadd.f32 %v8080, %v8253
        %v8255 = vpop.f32.mrb[0].mxu0
        %8256 = vmatprep.mubr.f32.mxu0 0.0
        %8257 = vmatmul.mubr.f32.gmra.mrb[0].mxu0 %v8090
        %v8258 = vpop.f32.mrb[0].mxu0
        %v8259 = vadd.f32 %v8080, %v8258
        %v8260 = vpop.f32.mrb[0].mxu0
        %8261 = vmatprep.mubr.f32.mxu0 0.0
        %8262 = vmatmul.mubr.f32.gmra.mrb[0].mxu0 %v8093
        %v8263 = vpop.f32.mrb[0].mxu0
        %v8264 = vadd.f32 %v8080, %v8263
        %v8265 = vpop.f32.mrb[0].mxu0
        %8266 = vmatprep.mubr.f32.mxu0 0.0
        %8267 = vmatmul.mubr.f32.gmra.mrb[0].mxu0 %v8096
        %v8268 = vpop.f32.mrb[0].mxu0
        %v8269 = vadd.f32 %v8080, %v8268
        %v8270 = vpop.f32.mrb[0].mxu0
        %8271 = vmatprep.mubr.f32.mxu0 0.0
        %8272 = vmatmul.mubr.f32.gmra.mrb[0].mxu0 %v8099
        %v8273 = vpop.f32.mrb[0].mxu0
        %v8274 = vadd.f32 %v8080, %v8273
        %v8275 = vpop.f32.mrb[0].mxu0
        %8276 = vmatprep.mubr.f32.mxu0 0.0
        %8277 = vmatmul.mubr.f32.gmra.mrb[0].mxu0 %v8102
        %v8278 = vpop.f32.mrb[0].mxu0
        %v8279 = vadd.f32 %v8080, %v8278
        %v8280 = vpop.f32.mrb[0].mxu0
        %8281 = vmatprep.mubr.f32.mxu0 0.0
        %8282 = vmatmul.mubr.f32.gmra.mrb[0].mxu0 %v8105
        %v8283 = vpop.f32.mrb[0].mxu0
        %v8284 = vadd.f32 %v8080, %v8283
        %v8285 = vpop.f32.mrb[0].mxu0
        %8286 = vmatprep.mubr.f32.mxu0 0.0
        %8287 = vmatmul.mubr.f32.gmra.mrb[0].mxu0 %v8108
        %v8288 = vpop.f32.mrb[0].mxu0
        %v8289 = vadd.f32 %v8080, %v8288
        %v8290 = vpop.f32.mrb[0].mxu0
        %8291 = vmatprep.mubr.f32.mxu0 0.0
        %8292 = vmatmul.mubr.f32.gmra.mrb[0].mxu0 %v8111
        %v8293 = vpop.f32.mrb[0].mxu0
        %v8294 = vadd.f32 %v8080, %v8293
        %v8295 = vpop.f32.mrb[0].mxu0
        %8296 = vmatprep.mubr.f32.mxu0 0.0
        %8297 = vmatmul.mubr.f32.gmra.mrb[0].mxu0 %v8114
        %v8298 = vpop.f32.mrb[0].mxu0
        %v8299 = vadd.f32 %v8080, %v8298
        %v8300 = vpop.f32.mrb[0].mxu0
        %8301 = vmatprep.mubr.f32.mxu0 0.0
        %8302 = vmatmul.mubr.f32.gmra.mrb[0].mxu0 %v8117
        %v8303 = vpop.f32.mrb[0].mxu0
        %v8304 = vadd.f32 %v8080, %v8303
        %v8305 = vpop.f32.mrb[0].mxu0
        %8306 = vmatprep.mubr.f32.mxu0 0.0
        %8307 = vmatmul.mubr.f32.gmra.mrb[0].mxu0 %v8120
        %v8308 = vpop.f32.mrb[0].mxu0
        %v8309 = vadd.f32 %v8080, %v8308
        %v8310 = vpop.f32.mrb[0].mxu0
        %8311 = vmatprep.mubr.f32.mxu0 0.0
        %8312 = vmatmul.mubr.f32.gmra.mrb[0].mxu0 %v8123
        %v8313 = vpop.f32.mrb[0].mxu0
        %v8314 = vadd.f32 %v8080, %v8313
        %v8315 = vpop.f32.mrb[0].mxu0
        %8316 = vmatprep.mubr.f32.mxu0 0.0
        %8317 = vmatmul.mubr.f32.gmra.mrb[0].mxu0 %v8126
        %v8318 = vpop.f32.mrb[0].mxu0
        %v8319 = vadd.f32 %v8080, %v8318
        %v8320 = vpop.f32.mrb[0].mxu0
        %8321 = vmatprep.mubr.f32.mxu0 0.0
        %8322 = vmatmul.mubr.f32.gmra.mrb[0].mxu0 %v8129
        %v8323 = vpop.f32.mrb[0].mxu0
        %v8324 = vadd.f32 %v8080, %v8323
        %v8325 = vpop.f32.mrb[0].mxu0
        %8326 = vmatprep.mubr.f32.mxu0 0.0
        %8327 = vmatmul.mubr.f32.gmra.mrb[0].mxu0 %v8132
        %v8328 = vpop.f32.mrb[0].mxu0
        %v8329 = vadd.f32 %v8080, %v8328
        %v8330 = vpop.f32.mrb[0].mxu0
        %8331 = vmatprep.mubr.f32.mxu0 0.0
        %8332 = vmatmul.mubr.f32.gmra.mrb[0].mxu0 %v8135
        %v8333 = vpop.f32.mrb[0].mxu0
        %v8334 = vadd.f32 %v8080, %v8333
        %v8335 = vpop.f32.mrb[0].mxu0
        %8336 = vmatprep.mubr.f32.mxu0 0.0
        %8337 = vmatmul.mubr.f32.gmra.mrb[0].mxu0 %v8138
        %v8338 = vpop.f32.mrb[0].mxu0
        %v8339 = vadd.f32 %v8080, %v8338
        %v8340 = vpop.f32.mrb[0].mxu0
        %8341 = vmatprep.mubr.f32.mxu0 0.0
        %8342 = vmatmul.mubr.f32.gmra.mrb[0].mxu0 %v8141
        %v8343 = vpop.f32.mrb[0].mxu0
        %v8344 = vadd.f32 %v8080, %v8343
        %v8345 = vpop.f32.mrb[0].mxu0
        %8346 = vmatprep.mubr.f32.mxu0 0.0
        %8347 = vmatmul.mubr.f32.gmra.mrb[0].mxu0 %v8144
        %v8348 = vpop.f32.mrb[0].mxu0
        %v8349 = vadd.f32 %v8080, %v8348
        %v8350 = vpop.f32.mrb[0].mxu0
        %8351 = vmatprep.mubr.f32.mxu0 0.0
        %8352 = vmatmul.mubr.f32.gmra.mrb[0].mxu0 %v8147
        %v8353 = vpop.f32.mrb[0].mxu0
        %v8354 = vadd.f32 %v8080, %v8353
        %v8355 = vpop.f32.mrb[0].mxu0
        %8356 = vmatprep.mubr.f32.mxu0 0.0
        %8357 = vmatmul.mubr.f32.gmra.mrb[0].mxu0 %v8150
        %v8358 = vpop.f32.mrb[0].mxu0
        %v8359 = vadd.f32 %v8080, %v8358
        %v8360 = vpop.f32.mrb[0].mxu0
        %8361 = vmatprep.mubr.f32.mxu0 0.0
        %8362 = vmatmul.mubr.f32.gmra.mrb[0].mxu0 %v8153
        %v8363 = vpop.f32.mrb[0].mxu0
        %v8364 = vadd.f32 %v8080, %v8363
        %v8365 = vpop.f32.mrb[0].mxu0
        %8366 = vmatprep.mubr.f32.mxu0 0.0
        %8367 = vmatmul.mubr.f32.gmra.mrb[0].mxu0 %v8156
        %v8368 = vpop.f32.mrb[0].mxu0
        %v8369 = vadd.f32 %v8080, %v8368
        %v8370 = vpop.f32.mrb[0].mxu0
        %8371 = vmatprep.mubr.f32.mxu0 0.0
        %8372 = vmatmul.mubr.f32.gmra.mrb[0].mxu0 %v8159
        %v8373 = vpop.f32.mrb[0].mxu0
        %v8374 = vadd.f32 %v8080, %v8373
        %v8375 = vpop.f32.mrb[0].mxu0
        %8376 = vmatprep.mubr.f32.mxu0 0.0
        %8377 = vmatmul.mubr.f32.gmra.mrb[0].mxu0 %v8162
        %v8378 = vpop.f32.mrb[0].mxu0
        %v8379 = vadd.f32 %v8080, %v8378
        %v8380 = vpop.f32.mrb[0].mxu0
        %8381 = vmatprep.mubr.f32.mxu0 0.0
        %8382 = vmatmul.mubr.f32.gmra.mrb[0].mxu0 %v8165
        %v8383 = vpop.f32.mrb[0].mxu0
        %v8384 = vadd.f32 %v8080, %v8383
        %v8385 = vpop.f32.mrb[0].mxu0
        %8386 = vmatprep.mubr.f32.mxu0 0.0
        %8387 = vmatmul.mubr.f32.gmra.mrb[0].mxu0 %v8168
        %v8388 = vpop.f32.mrb[0].mxu0
        %v8389 = vadd.f32 %v8080, %v8388
        %v8390 = vpop.f32.mrb[0].mxu0
        %8391 = vmatprep.mubr.f32.mxu0 0.0
        %8392 = vmatmul.mubr.f32.gmra.mrb[0].mxu0 %v8171
        %v8393 = vpop.f32.mrb[0].mxu0
        %v8394 = vadd.f32 %v8080, %v8393
        %v8395 = vpop.f32.mrb[0].mxu0
        %8396 = vmatprep.mubr.f32.mxu0 0.0
        %8397 = vmatmul.mubr.f32.gmra.mrb[0].mxu0 %v8174
        %v8398 = vpop.f32.mrb[0].mxu0
        %v8399 = vadd.f32 %v8080, %v8398
        %v8400 = vpop.f32.mrb[0].mxu0
        %8401 = vmatprep.mubr.f32.mxu0 0.0
        %8402 = vmatmul.mubr.f32.gmra.mrb[0].mxu0 %v8177
        %v8403 = vpop.f32.mrb[0].mxu0
        %v8404 = vadd.f32 %v8080, %v8403
        %v8405 = vpop.f32.mrb[0].mxu0
        %8406 = vdwg.mxu0
        %v8407 = vmax.f32 %v8249, 0.0
        %v8408 = vmax.f32 %v8254, 0.0
        %v8409 = vmax.f32 %v8259, 0.0
        %v8410 = vmax.f32 %v8264, 0.0
        %v8411 = vmax.f32 %v8269, 0.0
        %v8412 = vmax.f32 %v8274, 0.0
        %v8413 = vmax.f32 %v8279, 0.0
        %v8414 = vmax.f32 %v8284, 0.0
        %v8415 = vmax.f32 %v8289, 0.0
        %v8416 = vmax.f32 %v8294, 0.0
        %v8417 = vmax.f32 %v8299, 0.0
        %v8418 = vmax.f32 %v8304, 0.0
        %v8419 = vmax.f32 %v8309, 0.0
        %v8420 = vmax.f32 %v8314, 0.0
        %v8421 = vmax.f32 %v8319, 0.0
        %v8422 = vmax.f32 %v8324, 0.0
        %v8423 = vmax.f32 %v8329, 0.0
        %v8424 = vmax.f32 %v8334, 0.0
        %v8425 = vmax.f32 %v8339, 0.0
        %v8426 = vmax.f32 %v8344, 0.0
        %v8427 = vmax.f32 %v8349, 0.0
        %v8428 = vmax.f32 %v8354, 0.0
        %v8429 = vmax.f32 %v8359, 0.0
        %v8430 = vmax.f32 %v8364, 0.0
        %v8431 = vmax.f32 %v8369, 0.0
        %v8432 = vmax.f32 %v8374, 0.0
        %v8433 = vmax.f32 %v8379, 0.0
        %v8434 = vmax.f32 %v8384, 0.0
        %v8435 = vmax.f32 %v8389, 0.0
        %v8436 = vmax.f32 %v8394, 0.0
        %v8437 = vmax.f32 %v8399, 0.0
        %v8438 = vmax.f32 %v8404, 0.0
        %8471 = vrot.lane.b32.xlu0 %v8407, 16
        %v8472 = vpop.permute.xlu0 %8471
        %8473 = vrot.lane.b32.xlu0 %v8408, 16
        %v8474 = vpop.permute.xlu0 %8473
        %8475 = vrot.lane.b32.xlu0 %v8409, 16
        %v8476 = vpop.permute.xlu0 %8475
        %8477 = vrot.lane.b32.xlu0 %v8410, 16
        %v8478 = vpop.permute.xlu0 %8477
        %8479 = vrot.lane.b32.xlu0 %v8411, 16
        %v8480 = vpop.permute.xlu0 %8479
        %8481 = vrot.lane.b32.xlu0 %v8412, 16
        %v8482 = vpop.permute.xlu0 %8481
        %8483 = vrot.lane.b32.xlu0 %v8413, 16
        %v8484 = vpop.permute.xlu0 %8483
        %8485 = vrot.lane.b32.xlu0 %v8414, 16
        %v8486 = vpop.permute.xlu0 %8485
        %8487 = vrot.lane.b32.xlu0 %v8415, 16
        %v8488 = vpop.permute.xlu0 %8487
        %8489 = vrot.lane.b32.xlu0 %v8416, 16
        %v8490 = vpop.permute.xlu0 %8489
        %8491 = vrot.lane.b32.xlu0 %v8417, 16
        %v8492 = vpop.permute.xlu0 %8491
        %8493 = vrot.lane.b32.xlu0 %v8418, 16
        %v8494 = vpop.permute.xlu0 %8493
        %8495 = vrot.lane.b32.xlu0 %v8419, 16
        %v8496 = vpop.permute.xlu0 %8495
        %8497 = vrot.lane.b32.xlu0 %v8420, 16
        %v8498 = vpop.permute.xlu0 %8497
        %8499 = vrot.lane.b32.xlu0 %v8421, 16
        %v8500 = vpop.permute.xlu0 %8499
        %8501 = vrot.lane.b32.xlu0 %v8422, 16
        %v8502 = vpop.permute.xlu0 %8501
        %8503 = vrot.lane.b32.xlu0 %v8423, 16
        %v8504 = vpop.permute.xlu0 %8503
        %8505 = vrot.lane.b32.xlu0 %v8424, 16
        %v8506 = vpop.permute.xlu0 %8505
        %8507 = vrot.lane.b32.xlu0 %v8425, 16
        %v8508 = vpop.permute.xlu0 %8507
        %8509 = vrot.lane.b32.xlu0 %v8426, 16
        %v8510 = vpop.permute.xlu0 %8509
        %8511 = vrot.lane.b32.xlu0 %v8427, 16
        %v8512 = vpop.permute.xlu0 %8511
        %8513 = vrot.lane.b32.xlu0 %v8428, 16
        %v8514 = vpop.permute.xlu0 %8513
        %8515 = vrot.lane.b32.xlu0 %v8429, 16
        %v8516 = vpop.permute.xlu0 %8515
        %8517 = vrot.lane.b32.xlu0 %v8430, 16
        %v8518 = vpop.permute.xlu0 %8517
        %8519 = vrot.lane.b32.xlu0 %v8431, 16
        %v8520 = vpop.permute.xlu0 %8519
        %8521 = vrot.lane.b32.xlu0 %v8432, 16
        %v8522 = vpop.permute.xlu0 %8521
        %8523 = vrot.lane.b32.xlu0 %v8433, 16
        %v8524 = vpop.permute.xlu0 %8523
        %8525 = vrot.lane.b32.xlu0 %v8434, 16
        %v8526 = vpop.permute.xlu0 %8525
        %8527 = vrot.lane.b32.xlu0 %v8435, 16
        %v8528 = vpop.permute.xlu0 %8527
        %8529 = vrot.lane.b32.xlu0 %v8436, 16
        %v8530 = vpop.permute.xlu0 %8529
        %8531 = vrot.lane.b32.xlu0 %v8437, 16
        %v8532 = vpop.permute.xlu0 %8531
        %8533 = vrot.lane.b32.xlu0 %v8438, 16
        %v8534 = vpop.permute.xlu0 %8533
        %vm8567 = vcmask 195712
        %8568 = vst.msk [vmem:[%s325] sm:$0xff] %vm8567, %v8472
        %8569 = vst.msk [vmem:[%s325 + $0x8] sm:$0xff] %vm8567, %v8474
        %8570 = vst.msk [vmem:[%s325 + $0x10] sm:$0xff] %vm8567, %v8476
        %8571 = vst.msk [vmem:[%s325 + $0x18] sm:$0xff] %vm8567, %v8478
        %8572 = vst.msk [vmem:[%s325 + $0x20] sm:$0xff] %vm8567, %v8480
        %8573 = vst.msk [vmem:[%s325 + $0x28] sm:$0xff] %vm8567, %v8482
        %8574 = vst.msk [vmem:[%s325 + $0x30] sm:$0xff] %vm8567, %v8484
        %8575 = vst.msk [vmem:[%s325 + $0x38] sm:$0xff] %vm8567, %v8486
        %8576 = vst.msk [vmem:[%s325 + $0x40] sm:$0xff] %vm8567, %v8488
        %8577 = vst.msk [vmem:[%s325 + $0x48] sm:$0xff] %vm8567, %v8490
        %8578 = vst.msk [vmem:[%s325 + $0x50] sm:$0xff] %vm8567, %v8492
        %8579 = vst.msk [vmem:[%s325 + $0x58] sm:$0xff] %vm8567, %v8494
        %8580 = vst.msk [vmem:[%s325 + $0x60] sm:$0xff] %vm8567, %v8496
        %8581 = vst.msk [vmem:[%s325 + $0x68] sm:$0xff] %vm8567, %v8498
        %8582 = vst.msk [vmem:[%s325 + $0x70] sm:$0xff] %vm8567, %v8500
        %8583 = vst.msk [vmem:[%s325 + $0x78] sm:$0xff] %vm8567, %v8502
        %8584 = vst.msk [vmem:[%s325 + $0x80] sm:$0xff] %vm8567, %v8504
        %8585 = vst.msk [vmem:[%s325 + $0x88] sm:$0xff] %vm8567, %v8506
        %8586 = vst.msk [vmem:[%s325 + $0x90] sm:$0xff] %vm8567, %v8508
        %8587 = vst.msk [vmem:[%s325 + $0x98] sm:$0xff] %vm8567, %v8510
        %8588 = vst.msk [vmem:[%s325 + $0xa0] sm:$0xff] %vm8567, %v8512
        %8589 = vst.msk [vmem:[%s325 + $0xa8] sm:$0xff] %vm8567, %v8514
        %8590 = vst.msk [vmem:[%s325 + $0xb0] sm:$0xff] %vm8567, %v8516
        %8591 = vst.msk [vmem:[%s325 + $0xb8] sm:$0xff] %vm8567, %v8518
        %8592 = vst.msk [vmem:[%s325 + $0xc0] sm:$0xff] %vm8567, %v8520
        %8593 = vst.msk [vmem:[%s325 + $0xc8] sm:$0xff] %vm8567, %v8522
        %8594 = vst.msk [vmem:[%s325 + $0xd0] sm:$0xff] %vm8567, %v8524
        %8595 = vst.msk [vmem:[%s325 + $0xd8] sm:$0xff] %vm8567, %v8526
        %8596 = vst.msk [vmem:[%s325 + $0xe0] sm:$0xff] %vm8567, %v8528
        %8597 = vst.msk [vmem:[%s325 + $0xe8] sm:$0xff] %vm8567, %v8530
        %8598 = vst.msk [vmem:[%s325 + $0xf0] sm:$0xff] %vm8567, %v8532
        %8599 = vst.msk [vmem:[%s325 + $0xf8] sm:$0xff] %vm8567, %v8534
        %8600 = vst.msk [vmem:[#allocation6] sm:$0xff] %vm371, -3.4028235e+38
        %8601 = vst.msk [vmem:[#allocation6 + $0x8] sm:$0xff] %vm371, -3.4028235e+38
        %8602 = vst.msk [vmem:[#allocation6 + $0x10] sm:$0x3] %vm764, -3.4028235e+38
        %8603 = vst.msk [vmem:[#allocation6 + $0x18] sm:$0xff] %vm371, -3.4028235e+38
        %8604 = vst.msk [vmem:[#allocation6 + $0x20] sm:$0xff] %vm371, -3.4028235e+38
        %8605 = vst.msk [vmem:[#allocation6 + $0x28] sm:$0x3] %vm764, -3.4028235e+38
        %8606 = vst.msk [vmem:[#allocation6 + $0x30] sm:$0xff] %vm371, -3.4028235e+38
        %8607 = vst.msk [vmem:[#allocation6 + $0x38] sm:$0xff] %vm371, -3.4028235e+38
        %8608 = vst.msk [vmem:[#allocation6 + $0x40] sm:$0x3] %vm764, -3.4028235e+38
        %8609 = vst.msk [vmem:[#allocation6 + $0x48] sm:$0xff] %vm371, -3.4028235e+38
        %8610 = vst.msk [vmem:[#allocation6 + $0x50] sm:$0xff] %vm371, -3.4028235e+38
        %8611 = vst.msk [vmem:[#allocation6 + $0x58] sm:$0x3] %vm764, -3.4028235e+38
        %8612 = vst.msk [vmem:[#allocation6 + $0x60] sm:$0xff] %vm371, -3.4028235e+38
        %8613 = vst.msk [vmem:[#allocation6 + $0x68] sm:$0xff] %vm371, -3.4028235e+38
        %8614 = vst.msk [vmem:[#allocation6 + $0x70] sm:$0x3] %vm764, -3.4028235e+38
        %8615 = vst.msk [vmem:[#allocation6 + $0x78] sm:$0xff] %vm371, -3.4028235e+38
        %8616 = vst.msk [vmem:[#allocation6 + $0x80] sm:$0xff] %vm371, -3.4028235e+38
        %8617 = vst.msk [vmem:[#allocation6 + $0x88] sm:$0x3] %vm764, -3.4028235e+38
        %8618 = vst.msk [vmem:[#allocation6 + $0x90] sm:$0xff] %vm371, -3.4028235e+38
        %8619 = vst.msk [vmem:[#allocation6 + $0x98] sm:$0xff] %vm371, -3.4028235e+38
        %8620 = vst.msk [vmem:[#allocation6 + $0xa0] sm:$0x3] %vm764, -3.4028235e+38
        %8621 = vst.msk [vmem:[#allocation6 + $0xa8] sm:$0xff] %vm371, -3.4028235e+38
        %8622 = vst.msk [vmem:[#allocation6 + $0xb0] sm:$0xff] %vm371, -3.4028235e+38
        %8623 = vst.msk [vmem:[#allocation6 + $0xb8] sm:$0x3] %vm764, -3.4028235e+38
        %8624 = vst.msk [vmem:[#allocation6 + $0xc0] sm:$0xff] %vm371, -3.4028235e+38
        %8625 = vst.msk [vmem:[#allocation6 + $0xc8] sm:$0xff] %vm371, -3.4028235e+38
        %8626 = vst.msk [vmem:[#allocation6 + $0xd0] sm:$0x3] %vm764, -3.4028235e+38
        %8627 = vst.msk [vmem:[#allocation6 + $0xd8] sm:$0xff] %vm371, -3.4028235e+38
        %8628 = vst.msk [vmem:[#allocation6 + $0xe0] sm:$0xff] %vm371, -3.4028235e+38
        %8629 = vst.msk [vmem:[#allocation6 + $0xe8] sm:$0x3] %vm764, -3.4028235e+38
        %8630 = vst.msk [vmem:[#allocation6 + $0xf0] sm:$0xff] %vm371, -3.4028235e+38
        %8631 = vst.msk [vmem:[#allocation6 + $0xf8] sm:$0xff] %vm371, -3.4028235e+38
        %8632 = vst.msk [vmem:[#allocation6 + $0x100] sm:$0x3] %vm764, -3.4028235e+38
        %8633 = vst.msk [vmem:[#allocation6 + $0x108] sm:$0xff] %vm371, -3.4028235e+38
        %8634 = vst.msk [vmem:[#allocation6 + $0x110] sm:$0xff] %vm371, -3.4028235e+38
        %8635 = vst.msk [vmem:[#allocation6 + $0x118] sm:$0x3] %vm764, -3.4028235e+38
        %8636 = vst.msk [vmem:[#allocation6 + $0x120] sm:$0xff] %vm371, -3.4028235e+38
        %8637 = vst.msk [vmem:[#allocation6 + $0x128] sm:$0xff] %vm371, -3.4028235e+38
        %8638 = vst.msk [vmem:[#allocation6 + $0x130] sm:$0x3] %vm764, -3.4028235e+38
        %8639 = vst.msk [vmem:[#allocation6 + $0x138] sm:$0xff] %vm371, -3.4028235e+38
        %8640 = vst.msk [vmem:[#allocation6 + $0x140] sm:$0xff] %vm371, -3.4028235e+38
        %8641 = vst.msk [vmem:[#allocation6 + $0x148] sm:$0x3] %vm764, -3.4028235e+38
        %8642 = vst.msk [vmem:[#allocation6 + $0x150] sm:$0xff] %vm371, -3.4028235e+38
        %8643 = vst.msk [vmem:[#allocation6 + $0x158] sm:$0xff] %vm371, -3.4028235e+38
        %8644 = vst.msk [vmem:[#allocation6 + $0x160] sm:$0x3] %vm764, -3.4028235e+38
        %8645 = vst.msk [vmem:[#allocation6 + $0x168] sm:$0xff] %vm371, -3.4028235e+38
        %8646 = vst.msk [vmem:[#allocation6 + $0x170] sm:$0xff] %vm371, -3.4028235e+38
        %8647 = vst.msk [vmem:[#allocation6 + $0x178] sm:$0x3] %vm764, -3.4028235e+38
        %8648 = vst.msk [vmem:[#allocation6 + $0x180] sm:$0xff] %vm371, -3.4028235e+38
        %8649 = vst.msk [vmem:[#allocation6 + $0x188] sm:$0xff] %vm371, -3.4028235e+38
        %8650 = vst.msk [vmem:[#allocation6 + $0x190] sm:$0x3] %vm764, -3.4028235e+38
        %8651 = vst.msk [vmem:[#allocation6 + $0x198] sm:$0xff] %vm371, -3.4028235e+38
        %8652 = vst.msk [vmem:[#allocation6 + $0x1a0] sm:$0xff] %vm371, -3.4028235e+38
        %8653 = vst.msk [vmem:[#allocation6 + $0x1a8] sm:$0x3] %vm764, -3.4028235e+38
        %s8654 = scalar_lea.vmem [#allocation6], 24
        %8655 = vst.msk [vmem:[%s8654 + $0x1] sm:$0xff] %vm371, %v331
        %8656 = vst.msk [vmem:[%s8654 + $0x9] sm:$0xff] %vm371, %v332
        %8657 = vst.msk [vmem:[%s8654 + $0x19] sm:$0xff] %vm371, %v333
        %8658 = vst.msk [vmem:[%s8654 + $0x21] sm:$0xff] %vm371, %v334
        %8659 = vst.msk [vmem:[%s8654 + $0x31] sm:$0xff] %vm371, %v335
        %8660 = vst.msk [vmem:[%s8654 + $0x39] sm:$0xff] %vm371, %v336
        %8661 = vst.msk [vmem:[%s8654 + $0x49] sm:$0xff] %vm371, %v337
        %8662 = vst.msk [vmem:[%s8654 + $0x51] sm:$0xff] %vm371, %v338
        %8663 = vst.msk [vmem:[%s8654 + $0x61] sm:$0xff] %vm371, %v339
        %8664 = vst.msk [vmem:[%s8654 + $0x69] sm:$0xff] %vm371, %v340
        %8665 = vst.msk [vmem:[%s8654 + $0x79] sm:$0xff] %vm371, %v341
        %8666 = vst.msk [vmem:[%s8654 + $0x81] sm:$0xff] %vm371, %v342
        %8667 = vst.msk [vmem:[%s8654 + $0x91] sm:$0xff] %vm371, %v343
        %8668 = vst.msk [vmem:[%s8654 + $0x99] sm:$0xff] %vm371, %v344
        %8669 = vst.msk [vmem:[%s8654 + $0xa9] sm:$0xff] %vm371, %v345
        %8670 = vst.msk [vmem:[%s8654 + $0xb1] sm:$0xff] %vm371, %v346
        %8671 = vst.msk [vmem:[%s8654 + $0xc1] sm:$0xff] %vm371, %v347
        %8672 = vst.msk [vmem:[%s8654 + $0xc9] sm:$0xff] %vm371, %v348
        %8673 = vst.msk [vmem:[%s8654 + $0xd9] sm:$0xff] %vm371, %v349
        %8674 = vst.msk [vmem:[%s8654 + $0xe1] sm:$0xff] %vm371, %v350
        %8675 = vst.msk [vmem:[%s8654 + $0xf1] sm:$0xff] %vm371, %v351
        %8676 = vst.msk [vmem:[%s8654 + $0xf9] sm:$0xff] %vm371, %v352
        %8677 = vst.msk [vmem:[%s8654 + $0x109] sm:$0xff] %vm371, %v353
        %8678 = vst.msk [vmem:[%s8654 + $0x111] sm:$0xff] %vm371, %v354
        %8679 = vst.msk [vmem:[%s8654 + $0x121] sm:$0xff] %vm371, %v355
        %8680 = vst.msk [vmem:[%s8654 + $0x129] sm:$0xff] %vm371, %v356
        %8681 = vst.msk [vmem:[%s8654 + $0x139] sm:$0xff] %vm371, %v357
        %8682 = vst.msk [vmem:[%s8654 + $0x141] sm:$0xff] %vm371, %v358
        %8683 = vst.msk [vmem:[%s8654 + $0x151] sm:$0xff] %vm371, %v359
        %8684 = vst.msk [vmem:[%s8654 + $0x159] sm:$0xff] %vm371, %v360
        %8685 = vst.msk [vmem:[%s8654 + $0x169] sm:$0xff] %vm371, %v361
        %8686 = vst.msk [vmem:[%s8654 + $0x171] sm:$0xff] %vm371, %v362
        %v8687 = vld [vmem:[#allocation6] sm:$0xff]
        %v8688 = vld [vmem:[#allocation6 + $0x8] sm:$0xff]
        %v8689 = vld [vmem:[#allocation6 + $0x18] sm:$0xff]
        %v8690 = vld [vmem:[#allocation6 + $0x20] sm:$0xff]
        %v8691 = vld [vmem:[#allocation6 + $0x30] sm:$0xff]
        %v8692 = vld [vmem:[#allocation6 + $0x38] sm:$0xff]
        %v8693 = vld [vmem:[#allocation6 + $0x48] sm:$0xff]
        %v8694 = vld [vmem:[#allocation6 + $0x50] sm:$0xff]
        %v8695 = vld [vmem:[#allocation6 + $0x60] sm:$0xff]
        %v8696 = vld [vmem:[#allocation6 + $0x68] sm:$0xff]
        %v8697 = vld [vmem:[#allocation6 + $0x78] sm:$0xff]
        %v8698 = vld [vmem:[#allocation6 + $0x80] sm:$0xff]
        %v8699 = vld [vmem:[#allocation6 + $0x90] sm:$0xff]
        %v8700 = vld [vmem:[#allocation6 + $0x98] sm:$0xff]
        %v8701 = vld [vmem:[#allocation6 + $0xa8] sm:$0xff]
        %v8702 = vld [vmem:[#allocation6 + $0xb0] sm:$0xff]
        %v8703 = vld [vmem:[#allocation6 + $0xc0] sm:$0xff]
        %v8704 = vld [vmem:[#allocation6 + $0xc8] sm:$0xff]
        %v8705 = vld [vmem:[#allocation6 + $0xd8] sm:$0xff]
        %v8706 = vld [vmem:[#allocation6 + $0xe0] sm:$0xff]
        %v8707 = vld [vmem:[#allocation6 + $0xf0] sm:$0xff]
        %v8708 = vld [vmem:[#allocation6 + $0xf8] sm:$0xff]
        %v8709 = vld [vmem:[#allocation6 + $0x108] sm:$0xff]
        %v8710 = vld [vmem:[#allocation6 + $0x110] sm:$0xff]
        %v8711 = vld [vmem:[#allocation6 + $0x120] sm:$0xff]
        %v8712 = vld [vmem:[#allocation6 + $0x128] sm:$0xff]
        %v8713 = vld [vmem:[#allocation6 + $0x138] sm:$0xff]
        %v8714 = vld [vmem:[#allocation6 + $0x140] sm:$0xff]
        %v8715 = vld [vmem:[#allocation6 + $0x150] sm:$0xff]
        %v8716 = vld [vmem:[#allocation6 + $0x158] sm:$0xff]
        %v8717 = vld [vmem:[#allocation6 + $0x168] sm:$0xff]
        %v8718 = vld [vmem:[#allocation6 + $0x170] sm:$0xff]
        %v8719 = vld [vmem:[#allocation6 + $0x1] sm:$0xff]
        %v8720 = vld [vmem:[#allocation6 + $0x9] sm:$0xff]
        %v8721 = vld [vmem:[#allocation6 + $0x19] sm:$0xff]
        %v8722 = vld [vmem:[#allocation6 + $0x21] sm:$0xff]
        %v8723 = vld [vmem:[#allocation6 + $0x31] sm:$0xff]
        %v8724 = vld [vmem:[#allocation6 + $0x39] sm:$0xff]
        %v8725 = vld [vmem:[#allocation6 + $0x49] sm:$0xff]
        %v8726 = vld [vmem:[#allocation6 + $0x51] sm:$0xff]
        %v8727 = vld [vmem:[#allocation6 + $0x61] sm:$0xff]
        %v8728 = vld [vmem:[#allocation6 + $0x69] sm:$0xff]
        %v8729 = vld [vmem:[#allocation6 + $0x79] sm:$0xff]
        %v8730 = vld [vmem:[#allocation6 + $0x81] sm:$0xff]
        %v8731 = vld [vmem:[#allocation6 + $0x91] sm:$0xff]
        %v8732 = vld [vmem:[#allocation6 + $0x99] sm:$0xff]
        %v8733 = vld [vmem:[#allocation6 + $0xa9] sm:$0xff]
        %v8734 = vld [vmem:[#allocation6 + $0xb1] sm:$0xff]
        %v8735 = vld [vmem:[#allocation6 + $0xc1] sm:$0xff]
        %v8736 = vld [vmem:[#allocation6 + $0xc9] sm:$0xff]
        %v8737 = vld [vmem:[#allocation6 + $0xd9] sm:$0xff]
        %v8738 = vld [vmem:[#allocation6 + $0xe1] sm:$0xff]
        %v8739 = vld [vmem:[#allocation6 + $0xf1] sm:$0xff]
        %v8740 = vld [vmem:[#allocation6 + $0xf9] sm:$0xff]
        %v8741 = vld [vmem:[#allocation6 + $0x109] sm:$0xff]
        %v8742 = vld [vmem:[#allocation6 + $0x111] sm:$0xff]
        %v8743 = vld [vmem:[#allocation6 + $0x121] sm:$0xff]
        %v8744 = vld [vmem:[#allocation6 + $0x129] sm:$0xff]
        %v8745 = vld [vmem:[#allocation6 + $0x139] sm:$0xff]
        %v8746 = vld [vmem:[#allocation6 + $0x141] sm:$0xff]
        %v8747 = vld [vmem:[#allocation6 + $0x151] sm:$0xff]
        %v8748 = vld [vmem:[#allocation6 + $0x159] sm:$0xff]
        %v8749 = vld [vmem:[#allocation6 + $0x169] sm:$0xff]
        %v8750 = vld [vmem:[#allocation6 + $0x171] sm:$0xff]
        %v8751 = vmax.f32 %v8687, %v8719
        %v8752 = vmax.f32 %v8688, %v8720
        %v8753 = vmax.f32 %v8689, %v8721
        %v8754 = vmax.f32 %v8690, %v8722
        %v8755 = vmax.f32 %v8691, %v8723
        %v8756 = vmax.f32 %v8692, %v8724
        %v8757 = vmax.f32 %v8693, %v8725
        %v8758 = vmax.f32 %v8694, %v8726
        %v8759 = vmax.f32 %v8695, %v8727
        %v8760 = vmax.f32 %v8696, %v8728
        %v8761 = vmax.f32 %v8697, %v8729
        %v8762 = vmax.f32 %v8698, %v8730
        %v8763 = vmax.f32 %v8699, %v8731
        %v8764 = vmax.f32 %v8700, %v8732
        %v8765 = vmax.f32 %v8701, %v8733
        %v8766 = vmax.f32 %v8702, %v8734
        %v8767 = vmax.f32 %v8703, %v8735
        %v8768 = vmax.f32 %v8704, %v8736
        %v8769 = vmax.f32 %v8705, %v8737
        %v8770 = vmax.f32 %v8706, %v8738
        %v8771 = vmax.f32 %v8707, %v8739
        %v8772 = vmax.f32 %v8708, %v8740
        %v8773 = vmax.f32 %v8709, %v8741
        %v8774 = vmax.f32 %v8710, %v8742
        %v8775 = vmax.f32 %v8711, %v8743
        %v8776 = vmax.f32 %v8712, %v8744
        %v8777 = vmax.f32 %v8713, %v8745
        %v8778 = vmax.f32 %v8714, %v8746
        %v8779 = vmax.f32 %v8715, %v8747
        %v8780 = vmax.f32 %v8716, %v8748
        %v8781 = vmax.f32 %v8717, %v8749
        %v8782 = vmax.f32 %v8718, %v8750
        %v8783 = vld [vmem:[#allocation6 + $0x2] sm:$0xff]
        %v8784 = vld [vmem:[#allocation6 + $0xa] sm:$0xff]
        %v8785 = vld [vmem:[#allocation6 + $0x1a] sm:$0xff]
        %v8786 = vld [vmem:[#allocation6 + $0x22] sm:$0xff]
        %v8787 = vld [vmem:[#allocation6 + $0x32] sm:$0xff]
        %v8788 = vld [vmem:[#allocation6 + $0x3a] sm:$0xff]
        %v8789 = vld [vmem:[#allocation6 + $0x4a] sm:$0xff]
        %v8790 = vld [vmem:[#allocation6 + $0x52] sm:$0xff]
        %v8791 = vld [vmem:[#allocation6 + $0x62] sm:$0xff]
        %v8792 = vld [vmem:[#allocation6 + $0x6a] sm:$0xff]
        %v8793 = vld [vmem:[#allocation6 + $0x7a] sm:$0xff]
        %v8794 = vld [vmem:[#allocation6 + $0x82] sm:$0xff]
        %v8795 = vld [vmem:[#allocation6 + $0x92] sm:$0xff]
        %v8796 = vld [vmem:[#allocation6 + $0x9a] sm:$0xff]
        %v8797 = vld [vmem:[#allocation6 + $0xaa] sm:$0xff]
        %v8798 = vld [vmem:[#allocation6 + $0xb2] sm:$0xff]
        %v8799 = vld [vmem:[#allocation6 + $0xc2] sm:$0xff]
        %v8800 = vld [vmem:[#allocation6 + $0xca] sm:$0xff]
        %v8801 = vld [vmem:[#allocation6 + $0xda] sm:$0xff]
        %v8802 = vld [vmem:[#allocation6 + $0xe2] sm:$0xff]
        %v8803 = vld [vmem:[#allocation6 + $0xf2] sm:$0xff]
        %v8804 = vld [vmem:[#allocation6 + $0xfa] sm:$0xff]
        %v8805 = vld [vmem:[#allocation6 + $0x10a] sm:$0xff]
        %v8806 = vld [vmem:[#allocation6 + $0x112] sm:$0xff]
        %v8807 = vld [vmem:[#allocation6 + $0x122] sm:$0xff]
        %v8808 = vld [vmem:[#allocation6 + $0x12a] sm:$0xff]
        %v8809 = vld [vmem:[#allocation6 + $0x13a] sm:$0xff]
        %v8810 = vld [vmem:[#allocation6 + $0x142] sm:$0xff]
        %v8811 = vld [vmem:[#allocation6 + $0x152] sm:$0xff]
        %v8812 = vld [vmem:[#allocation6 + $0x15a] sm:$0xff]
        %v8813 = vld [vmem:[#allocation6 + $0x16a] sm:$0xff]
        %v8814 = vld [vmem:[#allocation6 + $0x172] sm:$0xff]
        %v8815 = vmax.f32 %v8751, %v8783
        %v8816 = vmax.f32 %v8752, %v8784
        %v8817 = vmax.f32 %v8753, %v8785
        %v8818 = vmax.f32 %v8754, %v8786
        %v8819 = vmax.f32 %v8755, %v8787
        %v8820 = vmax.f32 %v8756, %v8788
        %v8821 = vmax.f32 %v8757, %v8789
        %v8822 = vmax.f32 %v8758, %v8790
        %v8823 = vmax.f32 %v8759, %v8791
        %v8824 = vmax.f32 %v8760, %v8792
        %v8825 = vmax.f32 %v8761, %v8793
        %v8826 = vmax.f32 %v8762, %v8794
        %v8827 = vmax.f32 %v8763, %v8795
        %v8828 = vmax.f32 %v8764, %v8796
        %v8829 = vmax.f32 %v8765, %v8797
        %v8830 = vmax.f32 %v8766, %v8798
        %v8831 = vmax.f32 %v8767, %v8799
        %v8832 = vmax.f32 %v8768, %v8800
        %v8833 = vmax.f32 %v8769, %v8801
        %v8834 = vmax.f32 %v8770, %v8802
        %v8835 = vmax.f32 %v8771, %v8803
        %v8836 = vmax.f32 %v8772, %v8804
        %v8837 = vmax.f32 %v8773, %v8805
        %v8838 = vmax.f32 %v8774, %v8806
        %v8839 = vmax.f32 %v8775, %v8807
        %v8840 = vmax.f32 %v8776, %v8808
        %v8841 = vmax.f32 %v8777, %v8809
        %v8842 = vmax.f32 %v8778, %v8810
        %v8843 = vmax.f32 %v8779, %v8811
        %v8844 = vmax.f32 %v8780, %v8812
        %v8845 = vmax.f32 %v8781, %v8813
        %v8846 = vmax.f32 %v8782, %v8814
        %v8847 = vld [vmem:[%s8654] sm:$0xff]
        %v8848 = vld [vmem:[%s8654 + $0x8] sm:$0xff]
        %v8849 = vld [vmem:[%s8654 + $0x18] sm:$0xff]
        %v8850 = vld [vmem:[%s8654 + $0x20] sm:$0xff]
        %v8851 = vld [vmem:[%s8654 + $0x30] sm:$0xff]
        %v8852 = vld [vmem:[%s8654 + $0x38] sm:$0xff]
        %v8853 = vld [vmem:[%s8654 + $0x48] sm:$0xff]
        %v8854 = vld [vmem:[%s8654 + $0x50] sm:$0xff]
        %v8855 = vld [vmem:[%s8654 + $0x60] sm:$0xff]
        %v8856 = vld [vmem:[%s8654 + $0x68] sm:$0xff]
        %v8857 = vld [vmem:[%s8654 + $0x78] sm:$0xff]
        %v8858 = vld [vmem:[%s8654 + $0x80] sm:$0xff]
        %v8859 = vld [vmem:[%s8654 + $0x90] sm:$0xff]
        %v8860 = vld [vmem:[%s8654 + $0x98] sm:$0xff]
        %v8861 = vld [vmem:[%s8654 + $0xa8] sm:$0xff]
        %v8862 = vld [vmem:[%s8654 + $0xb0] sm:$0xff]
        %v8863 = vld [vmem:[%s8654 + $0xc0] sm:$0xff]
        %v8864 = vld [vmem:[%s8654 + $0xc8] sm:$0xff]
        %v8865 = vld [vmem:[%s8654 + $0xd8] sm:$0xff]
        %v8866 = vld [vmem:[%s8654 + $0xe0] sm:$0xff]
        %v8867 = vld [vmem:[%s8654 + $0xf0] sm:$0xff]
        %v8868 = vld [vmem:[%s8654 + $0xf8] sm:$0xff]
        %v8869 = vld [vmem:[%s8654 + $0x108] sm:$0xff]
        %v8870 = vld [vmem:[%s8654 + $0x110] sm:$0xff]
        %v8871 = vld [vmem:[%s8654 + $0x120] sm:$0xff]
        %v8872 = vld [vmem:[%s8654 + $0x128] sm:$0xff]
        %v8873 = vld [vmem:[%s8654 + $0x138] sm:$0xff]
        %v8874 = vld [vmem:[%s8654 + $0x140] sm:$0xff]
        %v8875 = vld [vmem:[%s8654 + $0x150] sm:$0xff]
        %v8876 = vld [vmem:[%s8654 + $0x158] sm:$0xff]
        %v8877 = vld [vmem:[%s8654 + $0x168] sm:$0xff]
        %v8878 = vld [vmem:[%s8654 + $0x170] sm:$0xff]
        %v8879 = vmax.f32 %v8815, %v8847
        %v8880 = vmax.f32 %v8816, %v8848
        %v8881 = vmax.f32 %v8817, %v8849
        %v8882 = vmax.f32 %v8818, %v8850
        %v8883 = vmax.f32 %v8819, %v8851
        %v8884 = vmax.f32 %v8820, %v8852
        %v8885 = vmax.f32 %v8821, %v8853
        %v8886 = vmax.f32 %v8822, %v8854
        %v8887 = vmax.f32 %v8823, %v8855
        %v8888 = vmax.f32 %v8824, %v8856
        %v8889 = vmax.f32 %v8825, %v8857
        %v8890 = vmax.f32 %v8826, %v8858
        %v8891 = vmax.f32 %v8827, %v8859
        %v8892 = vmax.f32 %v8828, %v8860
        %v8893 = vmax.f32 %v8829, %v8861
        %v8894 = vmax.f32 %v8830, %v8862
        %v8895 = vmax.f32 %v8831, %v8863
        %v8896 = vmax.f32 %v8832, %v8864
        %v8897 = vmax.f32 %v8833, %v8865
        %v8898 = vmax.f32 %v8834, %v8866
        %v8899 = vmax.f32 %v8835, %v8867
        %v8900 = vmax.f32 %v8836, %v8868
        %v8901 = vmax.f32 %v8837, %v8869
        %v8902 = vmax.f32 %v8838, %v8870
        %v8903 = vmax.f32 %v8839, %v8871
        %v8904 = vmax.f32 %v8840, %v8872
        %v8905 = vmax.f32 %v8841, %v8873
        %v8906 = vmax.f32 %v8842, %v8874
        %v8907 = vmax.f32 %v8843, %v8875
        %v8908 = vmax.f32 %v8844, %v8876
        %v8909 = vmax.f32 %v8845, %v8877
        %v8910 = vmax.f32 %v8846, %v8878
        %v8911 = vld [vmem:[%s8654 + $0x1] sm:$0xff]
        %v8912 = vld [vmem:[%s8654 + $0x9] sm:$0xff]
        %v8913 = vld [vmem:[%s8654 + $0x19] sm:$0xff]
        %v8914 = vld [vmem:[%s8654 + $0x21] sm:$0xff]
        %v8915 = vld [vmem:[%s8654 + $0x31] sm:$0xff]
        %v8916 = vld [vmem:[%s8654 + $0x39] sm:$0xff]
        %v8917 = vld [vmem:[%s8654 + $0x49] sm:$0xff]
        %v8918 = vld [vmem:[%s8654 + $0x51] sm:$0xff]
        %v8919 = vld [vmem:[%s8654 + $0x61] sm:$0xff]
        %v8920 = vld [vmem:[%s8654 + $0x69] sm:$0xff]
        %v8921 = vld [vmem:[%s8654 + $0x79] sm:$0xff]
        %v8922 = vld [vmem:[%s8654 + $0x81] sm:$0xff]
        %v8923 = vld [vmem:[%s8654 + $0x91] sm:$0xff]
        %v8924 = vld [vmem:[%s8654 + $0x99] sm:$0xff]
        %v8925 = vld [vmem:[%s8654 + $0xa9] sm:$0xff]
        %v8926 = vld [vmem:[%s8654 + $0xb1] sm:$0xff]
        %v8927 = vld [vmem:[%s8654 + $0xc1] sm:$0xff]
        %v8928 = vld [vmem:[%s8654 + $0xc9] sm:$0xff]
        %v8929 = vld [vmem:[%s8654 + $0xd9] sm:$0xff]
        %v8930 = vld [vmem:[%s8654 + $0xe1] sm:$0xff]
        %v8931 = vld [vmem:[%s8654 + $0xf1] sm:$0xff]
        %v8932 = vld [vmem:[%s8654 + $0xf9] sm:$0xff]
        %v8933 = vld [vmem:[%s8654 + $0x109] sm:$0xff]
        %v8934 = vld [vmem:[%s8654 + $0x111] sm:$0xff]
        %v8935 = vld [vmem:[%s8654 + $0x121] sm:$0xff]
        %v8936 = vld [vmem:[%s8654 + $0x129] sm:$0xff]
        %v8937 = vld [vmem:[%s8654 + $0x139] sm:$0xff]
        %v8938 = vld [vmem:[%s8654 + $0x141] sm:$0xff]
        %v8939 = vld [vmem:[%s8654 + $0x151] sm:$0xff]
        %v8940 = vld [vmem:[%s8654 + $0x159] sm:$0xff]
        %v8941 = vld [vmem:[%s8654 + $0x169] sm:$0xff]
        %v8942 = vld [vmem:[%s8654 + $0x171] sm:$0xff]
        %v8943 = vmax.f32 %v8879, %v8911
        %v8944 = vmax.f32 %v8880, %v8912
        %v8945 = vmax.f32 %v8881, %v8913
        %v8946 = vmax.f32 %v8882, %v8914
        %v8947 = vmax.f32 %v8883, %v8915
        %v8948 = vmax.f32 %v8884, %v8916
        %v8949 = vmax.f32 %v8885, %v8917
        %v8950 = vmax.f32 %v8886, %v8918
        %v8951 = vmax.f32 %v8887, %v8919
        %v8952 = vmax.f32 %v8888, %v8920
        %v8953 = vmax.f32 %v8889, %v8921
        %v8954 = vmax.f32 %v8890, %v8922
        %v8955 = vmax.f32 %v8891, %v8923
        %v8956 = vmax.f32 %v8892, %v8924
        %v8957 = vmax.f32 %v8893, %v8925
        %v8958 = vmax.f32 %v8894, %v8926
        %v8959 = vmax.f32 %v8895, %v8927
        %v8960 = vmax.f32 %v8896, %v8928
        %v8961 = vmax.f32 %v8897, %v8929
        %v8962 = vmax.f32 %v8898, %v8930
        %v8963 = vmax.f32 %v8899, %v8931
        %v8964 = vmax.f32 %v8900, %v8932
        %v8965 = vmax.f32 %v8901, %v8933
        %v8966 = vmax.f32 %v8902, %v8934
        %v8967 = vmax.f32 %v8903, %v8935
        %v8968 = vmax.f32 %v8904, %v8936
        %v8969 = vmax.f32 %v8905, %v8937
        %v8970 = vmax.f32 %v8906, %v8938
        %v8971 = vmax.f32 %v8907, %v8939
        %v8972 = vmax.f32 %v8908, %v8940
        %v8973 = vmax.f32 %v8909, %v8941
        %v8974 = vmax.f32 %v8910, %v8942
        %v8975 = vld [vmem:[%s8654 + $0x2] sm:$0xff]
        %v8976 = vld [vmem:[%s8654 + $0xa] sm:$0xff]
        %v8977 = vld [vmem:[%s8654 + $0x1a] sm:$0xff]
        %v8978 = vld [vmem:[%s8654 + $0x22] sm:$0xff]
        %v8979 = vld [vmem:[%s8654 + $0x32] sm:$0xff]
        %v8980 = vld [vmem:[%s8654 + $0x3a] sm:$0xff]
        %v8981 = vld [vmem:[%s8654 + $0x4a] sm:$0xff]
        %v8982 = vld [vmem:[%s8654 + $0x52] sm:$0xff]
        %v8983 = vld [vmem:[%s8654 + $0x62] sm:$0xff]
        %v8984 = vld [vmem:[%s8654 + $0x6a] sm:$0xff]
        %v8985 = vld [vmem:[%s8654 + $0x7a] sm:$0xff]
        %v8986 = vld [vmem:[%s8654 + $0x82] sm:$0xff]
        %v8987 = vld [vmem:[%s8654 + $0x92] sm:$0xff]
        %v8988 = vld [vmem:[%s8654 + $0x9a] sm:$0xff]
        %v8989 = vld [vmem:[%s8654 + $0xaa] sm:$0xff]
        %v8990 = vld [vmem:[%s8654 + $0xb2] sm:$0xff]
        %v8991 = vld [vmem:[%s8654 + $0xc2] sm:$0xff]
        %v8992 = vld [vmem:[%s8654 + $0xca] sm:$0xff]
        %v8993 = vld [vmem:[%s8654 + $0xda] sm:$0xff]
        %v8994 = vld [vmem:[%s8654 + $0xe2] sm:$0xff]
        %v8995 = vld [vmem:[%s8654 + $0xf2] sm:$0xff]
        %v8996 = vld [vmem:[%s8654 + $0xfa] sm:$0xff]
        %v8997 = vld [vmem:[%s8654 + $0x10a] sm:$0xff]
        %v8998 = vld [vmem:[%s8654 + $0x112] sm:$0xff]
        %v8999 = vld [vmem:[%s8654 + $0x122] sm:$0xff]
        %v9000 = vld [vmem:[%s8654 + $0x12a] sm:$0xff]
        %v9001 = vld [vmem:[%s8654 + $0x13a] sm:$0xff]
        %v9002 = vld [vmem:[%s8654 + $0x142] sm:$0xff]
        %v9003 = vld [vmem:[%s8654 + $0x152] sm:$0xff]
        %v9004 = vld [vmem:[%s8654 + $0x15a] sm:$0xff]
        %v9005 = vld [vmem:[%s8654 + $0x16a] sm:$0xff]
        %v9006 = vld [vmem:[%s8654 + $0x172] sm:$0xff]
        %v9007 = vmax.f32 %v8943, %v8975
        %v9008 = vmax.f32 %v8944, %v8976
        %v9009 = vmax.f32 %v8945, %v8977
        %v9010 = vmax.f32 %v8946, %v8978
        %v9011 = vmax.f32 %v8947, %v8979
        %v9012 = vmax.f32 %v8948, %v8980
        %v9013 = vmax.f32 %v8949, %v8981
        %v9014 = vmax.f32 %v8950, %v8982
        %v9015 = vmax.f32 %v8951, %v8983
        %v9016 = vmax.f32 %v8952, %v8984
        %v9017 = vmax.f32 %v8953, %v8985
        %v9018 = vmax.f32 %v8954, %v8986
        %v9019 = vmax.f32 %v8955, %v8987
        %v9020 = vmax.f32 %v8956, %v8988
        %v9021 = vmax.f32 %v8957, %v8989
        %v9022 = vmax.f32 %v8958, %v8990
        %v9023 = vmax.f32 %v8959, %v8991
        %v9024 = vmax.f32 %v8960, %v8992
        %v9025 = vmax.f32 %v8961, %v8993
        %v9026 = vmax.f32 %v8962, %v8994
        %v9027 = vmax.f32 %v8963, %v8995
        %v9028 = vmax.f32 %v8964, %v8996
        %v9029 = vmax.f32 %v8965, %v8997
        %v9030 = vmax.f32 %v8966, %v8998
        %v9031 = vmax.f32 %v8967, %v8999
        %v9032 = vmax.f32 %v8968, %v9000
        %v9033 = vmax.f32 %v8969, %v9001
        %v9034 = vmax.f32 %v8970, %v9002
        %v9035 = vmax.f32 %v8971, %v9003
        %v9036 = vmax.f32 %v8972, %v9004
        %v9037 = vmax.f32 %v8973, %v9005
        %v9038 = vmax.f32 %v8974, %v9006
        %s9039 = scalar_lea.vmem [#allocation6], 48
        %v9040 = vld [vmem:[%s9039] sm:$0xff]
        %v9041 = vld [vmem:[%s9039 + $0x8] sm:$0xff]
        %v9042 = vld [vmem:[%s9039 + $0x18] sm:$0xff]
        %v9043 = vld [vmem:[%s9039 + $0x20] sm:$0xff]
        %v9044 = vld [vmem:[%s9039 + $0x30] sm:$0xff]
        %v9045 = vld [vmem:[%s9039 + $0x38] sm:$0xff]
        %v9046 = vld [vmem:[%s9039 + $0x48] sm:$0xff]
        %v9047 = vld [vmem:[%s9039 + $0x50] sm:$0xff]
        %v9048 = vld [vmem:[%s9039 + $0x60] sm:$0xff]
        %v9049 = vld [vmem:[%s9039 + $0x68] sm:$0xff]
        %v9050 = vld [vmem:[%s9039 + $0x78] sm:$0xff]
        %v9051 = vld [vmem:[%s9039 + $0x80] sm:$0xff]
        %v9052 = vld [vmem:[%s9039 + $0x90] sm:$0xff]
        %v9053 = vld [vmem:[%s9039 + $0x98] sm:$0xff]
        %v9054 = vld [vmem:[%s9039 + $0xa8] sm:$0xff]
        %v9055 = vld [vmem:[%s9039 + $0xb0] sm:$0xff]
        %v9056 = vld [vmem:[%s9039 + $0xc0] sm:$0xff]
        %v9057 = vld [vmem:[%s9039 + $0xc8] sm:$0xff]
        %v9058 = vld [vmem:[%s9039 + $0xd8] sm:$0xff]
        %v9059 = vld [vmem:[%s9039 + $0xe0] sm:$0xff]
        %v9060 = vld [vmem:[%s9039 + $0xf0] sm:$0xff]
        %v9061 = vld [vmem:[%s9039 + $0xf8] sm:$0xff]
        %v9062 = vld [vmem:[%s9039 + $0x108] sm:$0xff]
        %v9063 = vld [vmem:[%s9039 + $0x110] sm:$0xff]
        %v9064 = vld [vmem:[%s9039 + $0x120] sm:$0xff]
        %v9065 = vld [vmem:[%s9039 + $0x128] sm:$0xff]
        %v9066 = vld [vmem:[%s9039 + $0x138] sm:$0xff]
        %v9067 = vld [vmem:[%s9039 + $0x140] sm:$0xff]
        %v9068 = vld [vmem:[%s9039 + $0x150] sm:$0xff]
        %v9069 = vld [vmem:[%s9039 + $0x158] sm:$0xff]
        %v9070 = vld [vmem:[%s9039 + $0x168] sm:$0xff]
        %v9071 = vld [vmem:[%s9039 + $0x170] sm:$0xff]
        %v9072 = vmax.f32 %v9007, %v9040
        %v9073 = vmax.f32 %v9008, %v9041
        %v9074 = vmax.f32 %v9009, %v9042
        %v9075 = vmax.f32 %v9010, %v9043
        %v9076 = vmax.f32 %v9011, %v9044
        %v9077 = vmax.f32 %v9012, %v9045
        %v9078 = vmax.f32 %v9013, %v9046
        %v9079 = vmax.f32 %v9014, %v9047
        %v9080 = vmax.f32 %v9015, %v9048
        %v9081 = vmax.f32 %v9016, %v9049
        %v9082 = vmax.f32 %v9017, %v9050
        %v9083 = vmax.f32 %v9018, %v9051
        %v9084 = vmax.f32 %v9019, %v9052
        %v9085 = vmax.f32 %v9020, %v9053
        %v9086 = vmax.f32 %v9021, %v9054
        %v9087 = vmax.f32 %v9022, %v9055
        %v9088 = vmax.f32 %v9023, %v9056
        %v9089 = vmax.f32 %v9024, %v9057
        %v9090 = vmax.f32 %v9025, %v9058
        %v9091 = vmax.f32 %v9026, %v9059
        %v9092 = vmax.f32 %v9027, %v9060
        %v9093 = vmax.f32 %v9028, %v9061
        %v9094 = vmax.f32 %v9029, %v9062
        %v9095 = vmax.f32 %v9030, %v9063
        %v9096 = vmax.f32 %v9031, %v9064
        %v9097 = vmax.f32 %v9032, %v9065
        %v9098 = vmax.f32 %v9033, %v9066
        %v9099 = vmax.f32 %v9034, %v9067
        %v9100 = vmax.f32 %v9035, %v9068
        %v9101 = vmax.f32 %v9036, %v9069
        %v9102 = vmax.f32 %v9037, %v9070
        %v9103 = vmax.f32 %v9038, %v9071
        %v9104 = vld [vmem:[%s9039 + $0x1] sm:$0xff]
        %v9105 = vld [vmem:[%s9039 + $0x9] sm:$0xff]
        %v9106 = vld [vmem:[%s9039 + $0x19] sm:$0xff]
        %v9107 = vld [vmem:[%s9039 + $0x21] sm:$0xff]
        %v9108 = vld [vmem:[%s9039 + $0x31] sm:$0xff]
        %v9109 = vld [vmem:[%s9039 + $0x39] sm:$0xff]
        %v9110 = vld [vmem:[%s9039 + $0x49] sm:$0xff]
        %v9111 = vld [vmem:[%s9039 + $0x51] sm:$0xff]
        %v9112 = vld [vmem:[%s9039 + $0x61] sm:$0xff]
        %v9113 = vld [vmem:[%s9039 + $0x69] sm:$0xff]
        %v9114 = vld [vmem:[%s9039 + $0x79] sm:$0xff]
        %v9115 = vld [vmem:[%s9039 + $0x81] sm:$0xff]
        %v9116 = vld [vmem:[%s9039 + $0x91] sm:$0xff]
        %v9117 = vld [vmem:[%s9039 + $0x99] sm:$0xff]
        %v9118 = vld [vmem:[%s9039 + $0xa9] sm:$0xff]
        %v9119 = vld [vmem:[%s9039 + $0xb1] sm:$0xff]
        %v9120 = vld [vmem:[%s9039 + $0xc1] sm:$0xff]
        %v9121 = vld [vmem:[%s9039 + $0xc9] sm:$0xff]
        %v9122 = vld [vmem:[%s9039 + $0xd9] sm:$0xff]
        %v9123 = vld [vmem:[%s9039 + $0xe1] sm:$0xff]
        %v9124 = vld [vmem:[%s9039 + $0xf1] sm:$0xff]
        %v9125 = vld [vmem:[%s9039 + $0xf9] sm:$0xff]
        %v9126 = vld [vmem:[%s9039 + $0x109] sm:$0xff]
        %v9127 = vld [vmem:[%s9039 + $0x111] sm:$0xff]
        %v9128 = vld [vmem:[%s9039 + $0x121] sm:$0xff]
        %v9129 = vld [vmem:[%s9039 + $0x129] sm:$0xff]
        %v9130 = vld [vmem:[%s9039 + $0x139] sm:$0xff]
        %v9131 = vld [vmem:[%s9039 + $0x141] sm:$0xff]
        %v9132 = vld [vmem:[%s9039 + $0x151] sm:$0xff]
        %v9133 = vld [vmem:[%s9039 + $0x159] sm:$0xff]
        %v9134 = vld [vmem:[%s9039 + $0x169] sm:$0xff]
        %v9135 = vld [vmem:[%s9039 + $0x171] sm:$0xff]
        %v9136 = vmax.f32 %v9072, %v9104
        %v9137 = vmax.f32 %v9073, %v9105
        %v9138 = vmax.f32 %v9074, %v9106
        %v9139 = vmax.f32 %v9075, %v9107
        %v9140 = vmax.f32 %v9076, %v9108
        %v9141 = vmax.f32 %v9077, %v9109
        %v9142 = vmax.f32 %v9078, %v9110
        %v9143 = vmax.f32 %v9079, %v9111
        %v9144 = vmax.f32 %v9080, %v9112
        %v9145 = vmax.f32 %v9081, %v9113
        %v9146 = vmax.f32 %v9082, %v9114
        %v9147 = vmax.f32 %v9083, %v9115
        %v9148 = vmax.f32 %v9084, %v9116
        %v9149 = vmax.f32 %v9085, %v9117
        %v9150 = vmax.f32 %v9086, %v9118
        %v9151 = vmax.f32 %v9087, %v9119
        %v9152 = vmax.f32 %v9088, %v9120
        %v9153 = vmax.f32 %v9089, %v9121
        %v9154 = vmax.f32 %v9090, %v9122
        %v9155 = vmax.f32 %v9091, %v9123
        %v9156 = vmax.f32 %v9092, %v9124
        %v9157 = vmax.f32 %v9093, %v9125
        %v9158 = vmax.f32 %v9094, %v9126
        %v9159 = vmax.f32 %v9095, %v9127
        %v9160 = vmax.f32 %v9096, %v9128
        %v9161 = vmax.f32 %v9097, %v9129
        %v9162 = vmax.f32 %v9098, %v9130
        %v9163 = vmax.f32 %v9099, %v9131
        %v9164 = vmax.f32 %v9100, %v9132
        %v9165 = vmax.f32 %v9101, %v9133
        %v9166 = vmax.f32 %v9102, %v9134
        %v9167 = vmax.f32 %v9103, %v9135
        %v9168 = vld [vmem:[%s9039 + $0x2] sm:$0xff]
        %v9169 = vld [vmem:[%s9039 + $0xa] sm:$0xff]
        %v9170 = vld [vmem:[%s9039 + $0x1a] sm:$0xff]
        %v9171 = vld [vmem:[%s9039 + $0x22] sm:$0xff]
        %v9172 = vld [vmem:[%s9039 + $0x32] sm:$0xff]
        %v9173 = vld [vmem:[%s9039 + $0x3a] sm:$0xff]
        %v9174 = vld [vmem:[%s9039 + $0x4a] sm:$0xff]
        %v9175 = vld [vmem:[%s9039 + $0x52] sm:$0xff]
        %v9176 = vld [vmem:[%s9039 + $0x62] sm:$0xff]
        %v9177 = vld [vmem:[%s9039 + $0x6a] sm:$0xff]
        %v9178 = vld [vmem:[%s9039 + $0x7a] sm:$0xff]
        %v9179 = vld [vmem:[%s9039 + $0x82] sm:$0xff]
        %v9180 = vld [vmem:[%s9039 + $0x92] sm:$0xff]
        %v9181 = vld [vmem:[%s9039 + $0x9a] sm:$0xff]
        %v9182 = vld [vmem:[%s9039 + $0xaa] sm:$0xff]
        %v9183 = vld [vmem:[%s9039 + $0xb2] sm:$0xff]
        %v9184 = vld [vmem:[%s9039 + $0xc2] sm:$0xff]
        %v9185 = vld [vmem:[%s9039 + $0xca] sm:$0xff]
        %v9186 = vld [vmem:[%s9039 + $0xda] sm:$0xff]
        %v9187 = vld [vmem:[%s9039 + $0xe2] sm:$0xff]
        %v9188 = vld [vmem:[%s9039 + $0xf2] sm:$0xff]
        %v9189 = vld [vmem:[%s9039 + $0xfa] sm:$0xff]
        %v9190 = vld [vmem:[%s9039 + $0x10a] sm:$0xff]
        %v9191 = vld [vmem:[%s9039 + $0x112] sm:$0xff]
        %v9192 = vld [vmem:[%s9039 + $0x122] sm:$0xff]
        %v9193 = vld [vmem:[%s9039 + $0x12a] sm:$0xff]
        %v9194 = vld [vmem:[%s9039 + $0x13a] sm:$0xff]
        %v9195 = vld [vmem:[%s9039 + $0x142] sm:$0xff]
        %v9196 = vld [vmem:[%s9039 + $0x152] sm:$0xff]
        %v9197 = vld [vmem:[%s9039 + $0x15a] sm:$0xff]
        %v9198 = vld [vmem:[%s9039 + $0x16a] sm:$0xff]
        %v9199 = vld [vmem:[%s9039 + $0x172] sm:$0xff]
        %v9200 = vmax.f32 %v9136, %v9168
        %v9201 = vmax.f32 %v9137, %v9169
        %v9202 = vmax.f32 %v9138, %v9170
        %v9203 = vmax.f32 %v9139, %v9171
        %v9204 = vmax.f32 %v9140, %v9172
        %v9205 = vmax.f32 %v9141, %v9173
        %v9206 = vmax.f32 %v9142, %v9174
        %v9207 = vmax.f32 %v9143, %v9175
        %v9208 = vmax.f32 %v9144, %v9176
        %v9209 = vmax.f32 %v9145, %v9177
        %v9210 = vmax.f32 %v9146, %v9178
        %v9211 = vmax.f32 %v9147, %v9179
        %v9212 = vmax.f32 %v9148, %v9180
        %v9213 = vmax.f32 %v9149, %v9181
        %v9214 = vmax.f32 %v9150, %v9182
        %v9215 = vmax.f32 %v9151, %v9183
        %v9216 = vmax.f32 %v9152, %v9184
        %v9217 = vmax.f32 %v9153, %v9185
        %v9218 = vmax.f32 %v9154, %v9186
        %v9219 = vmax.f32 %v9155, %v9187
        %v9220 = vmax.f32 %v9156, %v9188
        %v9221 = vmax.f32 %v9157, %v9189
        %v9222 = vmax.f32 %v9158, %v9190
        %v9223 = vmax.f32 %v9159, %v9191
        %v9224 = vmax.f32 %v9160, %v9192
        %v9225 = vmax.f32 %v9161, %v9193
        %v9226 = vmax.f32 %v9162, %v9194
        %v9227 = vmax.f32 %v9163, %v9195
        %v9228 = vmax.f32 %v9164, %v9196
        %v9229 = vmax.f32 %v9165, %v9197
        %v9230 = vmax.f32 %v9166, %v9198
        %v9231 = vmax.f32 %v9167, %v9199
        %v9232 = vld [vmem:[%s7] sm:$0xf]
        %v9233 = vld [vmem:[%s8] sm:$0x1]
        %v9235 = vlaneseq
        %v9236 = vshrl.u32 %v9235, 7
        %v9237 = vsub.s32 0, %v9236
        %v9238 = vrot.slane %v9233, %v9237
        %v9241 = vsel %vm371, %v9200, 0
        %v9244 = vsel %vm371, %v9201, 0
        %v9247 = vsel %vm371, %v9202, 0
        %v9250 = vsel %vm371, %v9203, 0
        %v9253 = vsel %vm371, %v9204, 0
        %v9256 = vsel %vm371, %v9205, 0
        %v9259 = vsel %vm371, %v9206, 0
        %v9262 = vsel %vm371, %v9207, 0
        %v9265 = vsel %vm371, %v9208, 0
        %v9268 = vsel %vm371, %v9209, 0
        %v9271 = vsel %vm371, %v9210, 0
        %v9274 = vsel %vm371, %v9211, 0
        %v9277 = vsel %vm371, %v9212, 0
        %v9280 = vsel %vm371, %v9213, 0
        %v9283 = vsel %vm371, %v9214, 0
        %v9286 = vsel %vm371, %v9215, 0
        %v9289 = vsel %vm371, %v9216, 0
        %v9292 = vsel %vm371, %v9217, 0
        %v9295 = vsel %vm371, %v9218, 0
        %v9298 = vsel %vm371, %v9219, 0
        %v9301 = vsel %vm371, %v9220, 0
        %v9304 = vsel %vm371, %v9221, 0
        %v9307 = vsel %vm371, %v9222, 0
        %v9310 = vsel %vm371, %v9223, 0
        %v9313 = vsel %vm371, %v9224, 0
        %v9316 = vsel %vm371, %v9225, 0
        %v9319 = vsel %vm371, %v9226, 0
        %v9322 = vsel %vm371, %v9227, 0
        %v9325 = vsel %vm371, %v9228, 0
        %v9328 = vsel %vm371, %v9229, 0
        %v9331 = vsel %vm371, %v9230, 0
        %v9334 = vsel %vm371, %v9231, 0
        %v9337 = vsel %vm468, %v9232, 0
        %9339 = vmatprep.subr.mxu0 0.0
        %9340 = vmatpush1.msra.mxu0 %v9337
        %9341 = vmatprep.subr.mxu0 0.0
        %9342 = vmatpush1.msra.mxu0 0.0
        %9343 = vmatprep.subr.mxu0 0.0
        %9344 = vmatpush1.msra.mxu0 0.0
        %9345 = vmatprep.subr.mxu0 0.0
        %9346 = vmatpush1.msra.mxu0 0.0
        %9347 = vmatprep.subr.mxu0 0.0
        %9348 = vmatpush1.msra.mxu0 0.0
        %9349 = vmatprep.subr.mxu0 0.0
        %9350 = vmatpush1.msra.mxu0 0.0
        %9351 = vmatprep.subr.mxu0 0.0
        %9352 = vmatpush1.msra.mxu0 0.0
        %9353 = vmatprep.subr.mxu0 0.0
        %9354 = vmatpush1.msra.mxu0 0.0
        %9355 = vmatprep.subr.mxu0 0.0
        %9356 = vmatpush1.msra.mxu0 0.0
        %9357 = vmatprep.subr.mxu0 0.0
        %9358 = vmatpush1.msra.mxu0 0.0
        %9359 = vmatprep.subr.mxu0 0.0
        %9360 = vmatpush1.msra.mxu0 0.0
        %9361 = vmatprep.subr.mxu0 0.0
        %9362 = vmatpush1.msra.mxu0 0.0
        %9363 = vmatprep.subr.mxu0 0.0
        %9364 = vmatpush1.msra.mxu0 0.0
        %9365 = vmatprep.subr.mxu0 0.0
        %9366 = vmatpush1.msra.mxu0 0.0
        %9367 = vmatprep.subr.mxu0 0.0
        %9368 = vmatpush1.msra.mxu0 0.0
        %9369 = vmatprep.subr.mxu0 0.0
        %9370 = vmatpush1.msra.mxu0 0.0
        %9371 = vmatprep.subr.mxu0 0.0
        %9372 = vmatpush1.msra.mxu0 0.0
        %9373 = vmatprep.subr.mxu0 0.0
        %9374 = vmatpush1.msra.mxu0 0.0
        %9375 = vmatprep.subr.mxu0 0.0
        %9376 = vmatpush1.msra.mxu0 0.0
        %9377 = vmatprep.subr.mxu0 0.0
        %9378 = vmatpush1.msra.mxu0 0.0
        %9379 = vmatprep.subr.mxu0 0.0
        %9380 = vmatpush1.msra.mxu0 0.0
        %9381 = vmatprep.subr.mxu0 0.0
        %9382 = vmatpush1.msra.mxu0 0.0
        %9383 = vmatprep.subr.mxu0 0.0
        %9384 = vmatpush1.msra.mxu0 0.0
        %9385 = vmatprep.subr.mxu0 0.0
        %9386 = vmatpush1.msra.mxu0 0.0
        %9387 = vmatprep.subr.mxu0 0.0
        %9388 = vmatpush1.msra.mxu0 0.0
        %9389 = vmatprep.subr.mxu0 0.0
        %9390 = vmatpush1.msra.mxu0 0.0
        %9391 = vmatprep.subr.mxu0 0.0
        %9392 = vmatpush1.msra.mxu0 0.0
        %9393 = vmatprep.subr.mxu0 0.0
        %9394 = vmatpush1.msra.mxu0 0.0
        %9395 = vmatprep.subr.mxu0 0.0
        %9396 = vmatpush1.msra.mxu0 0.0
        %9397 = vmatprep.subr.mxu0 0.0
        %9398 = vmatpush1.msra.mxu0 0.0
        %9399 = vmatprep.subr.mxu0 0.0
        %9400 = vmatpush1.msra.mxu0 0.0
        %9401 = vmatprep.subr.mxu0 0.0
        %9402 = vmatpush1.msra.mxu0 0.0
        %9403 = vmatprep.mubr.f32.mxu0 0.0
        %9404 = vmatmul.mubr.f32.gmra.mrb[0].mxu0 %v9241
        %v9405 = vpop.f32.mrb[0].mxu0
        %v9406 = vadd.f32 %v9238, %v9405
        %v9407 = vpop.f32.mrb[0].mxu0
        %9408 = vmatprep.mubr.f32.mxu0 0.0
        %9409 = vmatmul.mubr.f32.gmra.mrb[0].mxu0 %v9244
        %v9410 = vpop.f32.mrb[0].mxu0
        %v9411 = vadd.f32 %v9238, %v9410
        %v9412 = vpop.f32.mrb[0].mxu0
        %9413 = vmatprep.mubr.f32.mxu0 0.0
        %9414 = vmatmul.mubr.f32.gmra.mrb[0].mxu0 %v9247
        %v9415 = vpop.f32.mrb[0].mxu0
        %v9416 = vadd.f32 %v9238, %v9415
        %v9417 = vpop.f32.mrb[0].mxu0
        %9418 = vmatprep.mubr.f32.mxu0 0.0
        %9419 = vmatmul.mubr.f32.gmra.mrb[0].mxu0 %v9250
        %v9420 = vpop.f32.mrb[0].mxu0
        %v9421 = vadd.f32 %v9238, %v9420
        %v9422 = vpop.f32.mrb[0].mxu0
        %9423 = vmatprep.mubr.f32.mxu0 0.0
        %9424 = vmatmul.mubr.f32.gmra.mrb[0].mxu0 %v9253
        %v9425 = vpop.f32.mrb[0].mxu0
        %v9426 = vadd.f32 %v9238, %v9425
        %v9427 = vpop.f32.mrb[0].mxu0
        %9428 = vmatprep.mubr.f32.mxu0 0.0
        %9429 = vmatmul.mubr.f32.gmra.mrb[0].mxu0 %v9256
        %v9430 = vpop.f32.mrb[0].mxu0
        %v9431 = vadd.f32 %v9238, %v9430
        %v9432 = vpop.f32.mrb[0].mxu0
        %9433 = vmatprep.mubr.f32.mxu0 0.0
        %9434 = vmatmul.mubr.f32.gmra.mrb[0].mxu0 %v9259
        %v9435 = vpop.f32.mrb[0].mxu0
        %v9436 = vadd.f32 %v9238, %v9435
        %v9437 = vpop.f32.mrb[0].mxu0
        %9438 = vmatprep.mubr.f32.mxu0 0.0
        %9439 = vmatmul.mubr.f32.gmra.mrb[0].mxu0 %v9262
        %v9440 = vpop.f32.mrb[0].mxu0
        %v9441 = vadd.f32 %v9238, %v9440
        %v9442 = vpop.f32.mrb[0].mxu0
        %9443 = vmatprep.mubr.f32.mxu0 0.0
        %9444 = vmatmul.mubr.f32.gmra.mrb[0].mxu0 %v9265
        %v9445 = vpop.f32.mrb[0].mxu0
        %v9446 = vadd.f32 %v9238, %v9445
        %v9447 = vpop.f32.mrb[0].mxu0
        %9448 = vmatprep.mubr.f32.mxu0 0.0
        %9449 = vmatmul.mubr.f32.gmra.mrb[0].mxu0 %v9268
        %v9450 = vpop.f32.mrb[0].mxu0
        %v9451 = vadd.f32 %v9238, %v9450
        %v9452 = vpop.f32.mrb[0].mxu0
        %9453 = vmatprep.mubr.f32.mxu0 0.0
        %9454 = vmatmul.mubr.f32.gmra.mrb[0].mxu0 %v9271
        %v9455 = vpop.f32.mrb[0].mxu0
        %v9456 = vadd.f32 %v9238, %v9455
        %v9457 = vpop.f32.mrb[0].mxu0
        %9458 = vmatprep.mubr.f32.mxu0 0.0
        %9459 = vmatmul.mubr.f32.gmra.mrb[0].mxu0 %v9274
        %v9460 = vpop.f32.mrb[0].mxu0
        %v9461 = vadd.f32 %v9238, %v9460
        %v9462 = vpop.f32.mrb[0].mxu0
        %9463 = vmatprep.mubr.f32.mxu0 0.0
        %9464 = vmatmul.mubr.f32.gmra.mrb[0].mxu0 %v9277
        %v9465 = vpop.f32.mrb[0].mxu0
        %v9466 = vadd.f32 %v9238, %v9465
        %v9467 = vpop.f32.mrb[0].mxu0
        %9468 = vmatprep.mubr.f32.mxu0 0.0
        %9469 = vmatmul.mubr.f32.gmra.mrb[0].mxu0 %v9280
        %v9470 = vpop.f32.mrb[0].mxu0
        %v9471 = vadd.f32 %v9238, %v9470
        %v9472 = vpop.f32.mrb[0].mxu0
        %9473 = vmatprep.mubr.f32.mxu0 0.0
        %9474 = vmatmul.mubr.f32.gmra.mrb[0].mxu0 %v9283
        %v9475 = vpop.f32.mrb[0].mxu0
        %v9476 = vadd.f32 %v9238, %v9475
        %v9477 = vpop.f32.mrb[0].mxu0
        %9478 = vmatprep.mubr.f32.mxu0 0.0
        %9479 = vmatmul.mubr.f32.gmra.mrb[0].mxu0 %v9286
        %v9480 = vpop.f32.mrb[0].mxu0
        %v9481 = vadd.f32 %v9238, %v9480
        %v9482 = vpop.f32.mrb[0].mxu0
        %9483 = vmatprep.mubr.f32.mxu0 0.0
        %9484 = vmatmul.mubr.f32.gmra.mrb[0].mxu0 %v9289
        %v9485 = vpop.f32.mrb[0].mxu0
        %v9486 = vadd.f32 %v9238, %v9485
        %v9487 = vpop.f32.mrb[0].mxu0
        %9488 = vmatprep.mubr.f32.mxu0 0.0
        %9489 = vmatmul.mubr.f32.gmra.mrb[0].mxu0 %v9292
        %v9490 = vpop.f32.mrb[0].mxu0
        %v9491 = vadd.f32 %v9238, %v9490
        %v9492 = vpop.f32.mrb[0].mxu0
        %9493 = vmatprep.mubr.f32.mxu0 0.0
        %9494 = vmatmul.mubr.f32.gmra.mrb[0].mxu0 %v9295
        %v9495 = vpop.f32.mrb[0].mxu0
        %v9496 = vadd.f32 %v9238, %v9495
        %v9497 = vpop.f32.mrb[0].mxu0
        %9498 = vmatprep.mubr.f32.mxu0 0.0
        %9499 = vmatmul.mubr.f32.gmra.mrb[0].mxu0 %v9298
        %v9500 = vpop.f32.mrb[0].mxu0
        %v9501 = vadd.f32 %v9238, %v9500
        %v9502 = vpop.f32.mrb[0].mxu0
        %9503 = vmatprep.mubr.f32.mxu0 0.0
        %9504 = vmatmul.mubr.f32.gmra.mrb[0].mxu0 %v9301
        %v9505 = vpop.f32.mrb[0].mxu0
        %v9506 = vadd.f32 %v9238, %v9505
        %v9507 = vpop.f32.mrb[0].mxu0
        %9508 = vmatprep.mubr.f32.mxu0 0.0
        %9509 = vmatmul.mubr.f32.gmra.mrb[0].mxu0 %v9304
        %v9510 = vpop.f32.mrb[0].mxu0
        %v9511 = vadd.f32 %v9238, %v9510
        %v9512 = vpop.f32.mrb[0].mxu0
        %9513 = vmatprep.mubr.f32.mxu0 0.0
        %9514 = vmatmul.mubr.f32.gmra.mrb[0].mxu0 %v9307
        %v9515 = vpop.f32.mrb[0].mxu0
        %v9516 = vadd.f32 %v9238, %v9515
        %v9517 = vpop.f32.mrb[0].mxu0
        %9518 = vmatprep.mubr.f32.mxu0 0.0
        %9519 = vmatmul.mubr.f32.gmra.mrb[0].mxu0 %v9310
        %v9520 = vpop.f32.mrb[0].mxu0
        %v9521 = vadd.f32 %v9238, %v9520
        %v9522 = vpop.f32.mrb[0].mxu0
        %9523 = vmatprep.mubr.f32.mxu0 0.0
        %9524 = vmatmul.mubr.f32.gmra.mrb[0].mxu0 %v9313
        %v9525 = vpop.f32.mrb[0].mxu0
        %v9526 = vadd.f32 %v9238, %v9525
        %v9527 = vpop.f32.mrb[0].mxu0
        %9528 = vmatprep.mubr.f32.mxu0 0.0
        %9529 = vmatmul.mubr.f32.gmra.mrb[0].mxu0 %v9316
        %v9530 = vpop.f32.mrb[0].mxu0
        %v9531 = vadd.f32 %v9238, %v9530
        %v9532 = vpop.f32.mrb[0].mxu0
        %9533 = vmatprep.mubr.f32.mxu0 0.0
        %9534 = vmatmul.mubr.f32.gmra.mrb[0].mxu0 %v9319
        %v9535 = vpop.f32.mrb[0].mxu0
        %v9536 = vadd.f32 %v9238, %v9535
        %v9537 = vpop.f32.mrb[0].mxu0
        %9538 = vmatprep.mubr.f32.mxu0 0.0
        %9539 = vmatmul.mubr.f32.gmra.mrb[0].mxu0 %v9322
        %v9540 = vpop.f32.mrb[0].mxu0
        %v9541 = vadd.f32 %v9238, %v9540
        %v9542 = vpop.f32.mrb[0].mxu0
        %9543 = vmatprep.mubr.f32.mxu0 0.0
        %9544 = vmatmul.mubr.f32.gmra.mrb[0].mxu0 %v9325
        %v9545 = vpop.f32.mrb[0].mxu0
        %v9546 = vadd.f32 %v9238, %v9545
        %v9547 = vpop.f32.mrb[0].mxu0
        %9548 = vmatprep.mubr.f32.mxu0 0.0
        %9549 = vmatmul.mubr.f32.gmra.mrb[0].mxu0 %v9328
        %v9550 = vpop.f32.mrb[0].mxu0
        %v9551 = vadd.f32 %v9238, %v9550
        %v9552 = vpop.f32.mrb[0].mxu0
        %9553 = vmatprep.mubr.f32.mxu0 0.0
        %9554 = vmatmul.mubr.f32.gmra.mrb[0].mxu0 %v9331
        %v9555 = vpop.f32.mrb[0].mxu0
        %v9556 = vadd.f32 %v9238, %v9555
        %v9557 = vpop.f32.mrb[0].mxu0
        %9558 = vmatprep.mubr.f32.mxu0 0.0
        %9559 = vmatmul.mubr.f32.gmra.mrb[0].mxu0 %v9334
        %v9560 = vpop.f32.mrb[0].mxu0
        %v9561 = vadd.f32 %v9238, %v9560
        %v9562 = vpop.f32.mrb[0].mxu0
        %9563 = vdwg.mxu0
        %v9564 = vmax.f32 %v9406, 0.0
        %v9565 = vmax.f32 %v9411, 0.0
        %v9566 = vmax.f32 %v9416, 0.0
        %v9567 = vmax.f32 %v9421, 0.0
        %v9568 = vmax.f32 %v9426, 0.0
        %v9569 = vmax.f32 %v9431, 0.0
        %v9570 = vmax.f32 %v9436, 0.0
        %v9571 = vmax.f32 %v9441, 0.0
        %v9572 = vmax.f32 %v9446, 0.0
        %v9573 = vmax.f32 %v9451, 0.0
        %v9574 = vmax.f32 %v9456, 0.0
        %v9575 = vmax.f32 %v9461, 0.0
        %v9576 = vmax.f32 %v9466, 0.0
        %v9577 = vmax.f32 %v9471, 0.0
        %v9578 = vmax.f32 %v9476, 0.0
        %v9579 = vmax.f32 %v9481, 0.0
        %v9580 = vmax.f32 %v9486, 0.0
        %v9581 = vmax.f32 %v9491, 0.0
        %v9582 = vmax.f32 %v9496, 0.0
        %v9583 = vmax.f32 %v9501, 0.0
        %v9584 = vmax.f32 %v9506, 0.0
        %v9585 = vmax.f32 %v9511, 0.0
        %v9586 = vmax.f32 %v9516, 0.0
        %v9587 = vmax.f32 %v9521, 0.0
        %v9588 = vmax.f32 %v9526, 0.0
        %v9589 = vmax.f32 %v9531, 0.0
        %v9590 = vmax.f32 %v9536, 0.0
        %v9591 = vmax.f32 %v9541, 0.0
        %v9592 = vmax.f32 %v9546, 0.0
        %v9593 = vmax.f32 %v9551, 0.0
        %v9594 = vmax.f32 %v9556, 0.0
        %v9595 = vmax.f32 %v9561, 0.0
        %9628 = vrot.lane.b32.xlu0 %v9564, 24
        %v9629 = vpop.permute.xlu0 %9628
        %9630 = vrot.lane.b32.xlu0 %v9565, 24
        %v9631 = vpop.permute.xlu0 %9630
        %9632 = vrot.lane.b32.xlu0 %v9566, 24
        %v9633 = vpop.permute.xlu0 %9632
        %9634 = vrot.lane.b32.xlu0 %v9567, 24
        %v9635 = vpop.permute.xlu0 %9634
        %9636 = vrot.lane.b32.xlu0 %v9568, 24
        %v9637 = vpop.permute.xlu0 %9636
        %9638 = vrot.lane.b32.xlu0 %v9569, 24
        %v9639 = vpop.permute.xlu0 %9638
        %9640 = vrot.lane.b32.xlu0 %v9570, 24
        %v9641 = vpop.permute.xlu0 %9640
        %9642 = vrot.lane.b32.xlu0 %v9571, 24
        %v9643 = vpop.permute.xlu0 %9642
        %9644 = vrot.lane.b32.xlu0 %v9572, 24
        %v9645 = vpop.permute.xlu0 %9644
        %9646 = vrot.lane.b32.xlu0 %v9573, 24
        %v9647 = vpop.permute.xlu0 %9646
        %9648 = vrot.lane.b32.xlu0 %v9574, 24
        %v9649 = vpop.permute.xlu0 %9648
        %9650 = vrot.lane.b32.xlu0 %v9575, 24
        %v9651 = vpop.permute.xlu0 %9650
        %9652 = vrot.lane.b32.xlu0 %v9576, 24
        %v9653 = vpop.permute.xlu0 %9652
        %9654 = vrot.lane.b32.xlu0 %v9577, 24
        %v9655 = vpop.permute.xlu0 %9654
        %9656 = vrot.lane.b32.xlu0 %v9578, 24
        %v9657 = vpop.permute.xlu0 %9656
        %9658 = vrot.lane.b32.xlu0 %v9579, 24
        %v9659 = vpop.permute.xlu0 %9658
        %9660 = vrot.lane.b32.xlu0 %v9580, 24
        %v9661 = vpop.permute.xlu0 %9660
        %9662 = vrot.lane.b32.xlu0 %v9581, 24
        %v9663 = vpop.permute.xlu0 %9662
        %9664 = vrot.lane.b32.xlu0 %v9582, 24
        %v9665 = vpop.permute.xlu0 %9664
        %9666 = vrot.lane.b32.xlu0 %v9583, 24
        %v9667 = vpop.permute.xlu0 %9666
        %9668 = vrot.lane.b32.xlu0 %v9584, 24
        %v9669 = vpop.permute.xlu0 %9668
        %9670 = vrot.lane.b32.xlu0 %v9585, 24
        %v9671 = vpop.permute.xlu0 %9670
        %9672 = vrot.lane.b32.xlu0 %v9586, 24
        %v9673 = vpop.permute.xlu0 %9672
        %9674 = vrot.lane.b32.xlu0 %v9587, 24
        %v9675 = vpop.permute.xlu0 %9674
        %9676 = vrot.lane.b32.xlu0 %v9588, 24
        %v9677 = vpop.permute.xlu0 %9676
        %9678 = vrot.lane.b32.xlu0 %v9589, 24
        %v9679 = vpop.permute.xlu0 %9678
        %9680 = vrot.lane.b32.xlu0 %v9590, 24
        %v9681 = vpop.permute.xlu0 %9680
        %9682 = vrot.lane.b32.xlu0 %v9591, 24
        %v9683 = vpop.permute.xlu0 %9682
        %9684 = vrot.lane.b32.xlu0 %v9592, 24
        %v9685 = vpop.permute.xlu0 %9684
        %9686 = vrot.lane.b32.xlu0 %v9593, 24
        %v9687 = vpop.permute.xlu0 %9686
        %9688 = vrot.lane.b32.xlu0 %v9594, 24
        %v9689 = vpop.permute.xlu0 %9688
        %9690 = vrot.lane.b32.xlu0 %v9595, 24
        %v9691 = vpop.permute.xlu0 %9690
        %vm9724 = vcmask 261312
        %9725 = vst.msk [vmem:[%s325] sm:$0xff] %vm9724, %v9629
        %9726 = vst.msk [vmem:[%s325 + $0x8] sm:$0xff] %vm9724, %v9631
        %9727 = vst.msk [vmem:[%s325 + $0x10] sm:$0xff] %vm9724, %v9633
        %9728 = vst.msk [vmem:[%s325 + $0x18] sm:$0xff] %vm9724, %v9635
        %9729 = vst.msk [vmem:[%s325 + $0x20] sm:$0xff] %vm9724, %v9637
        %9730 = vst.msk [vmem:[%s325 + $0x28] sm:$0xff] %vm9724, %v9639
        %9731 = vst.msk [vmem:[%s325 + $0x30] sm:$0xff] %vm9724, %v9641
        %9732 = vst.msk [vmem:[%s325 + $0x38] sm:$0xff] %vm9724, %v9643
        %9733 = vst.msk [vmem:[%s325 + $0x40] sm:$0xff] %vm9724, %v9645
        %9734 = vst.msk [vmem:[%s325 + $0x48] sm:$0xff] %vm9724, %v9647
        %9735 = vst.msk [vmem:[%s325 + $0x50] sm:$0xff] %vm9724, %v9649
        %9736 = vst.msk [vmem:[%s325 + $0x58] sm:$0xff] %vm9724, %v9651
        %9737 = vst.msk [vmem:[%s325 + $0x60] sm:$0xff] %vm9724, %v9653
        %9738 = vst.msk [vmem:[%s325 + $0x68] sm:$0xff] %vm9724, %v9655
        %9739 = vst.msk [vmem:[%s325 + $0x70] sm:$0xff] %vm9724, %v9657
        %9740 = vst.msk [vmem:[%s325 + $0x78] sm:$0xff] %vm9724, %v9659
        %9741 = vst.msk [vmem:[%s325 + $0x80] sm:$0xff] %vm9724, %v9661
        %9742 = vst.msk [vmem:[%s325 + $0x88] sm:$0xff] %vm9724, %v9663
        %9743 = vst.msk [vmem:[%s325 + $0x90] sm:$0xff] %vm9724, %v9665
        %9744 = vst.msk [vmem:[%s325 + $0x98] sm:$0xff] %vm9724, %v9667
        %9745 = vst.msk [vmem:[%s325 + $0xa0] sm:$0xff] %vm9724, %v9669
        %9746 = vst.msk [vmem:[%s325 + $0xa8] sm:$0xff] %vm9724, %v9671
        %9747 = vst.msk [vmem:[%s325 + $0xb0] sm:$0xff] %vm9724, %v9673
        %9748 = vst.msk [vmem:[%s325 + $0xb8] sm:$0xff] %vm9724, %v9675
        %9749 = vst.msk [vmem:[%s325 + $0xc0] sm:$0xff] %vm9724, %v9677
        %9750 = vst.msk [vmem:[%s325 + $0xc8] sm:$0xff] %vm9724, %v9679
        %9751 = vst.msk [vmem:[%s325 + $0xd0] sm:$0xff] %vm9724, %v9681
        %9752 = vst.msk [vmem:[%s325 + $0xd8] sm:$0xff] %vm9724, %v9683
        %9753 = vst.msk [vmem:[%s325 + $0xe0] sm:$0xff] %vm9724, %v9685
        %9754 = vst.msk [vmem:[%s325 + $0xe8] sm:$0xff] %vm9724, %v9687
        %9755 = vst.msk [vmem:[%s325 + $0xf0] sm:$0xff] %vm9724, %v9689
        %9756 = vst.msk [vmem:[%s325 + $0xf8] sm:$0xff] %vm9724, %v9691
        %s9757 = sand.u32 %s225, 1
        %s9758 = scalar_lea.sflag [#allocation8], %s9757
        %s9759 = sand.u32 %s225, 1
        %s9760 = smul.addr %s9759, 256
        %s9761 = scalar_lea.vmem [#allocation7], %s9760
        // Predicated region
        $region57: #{inception_forward.1} parent=55 // pred_check
          %p9762 = pneg %p235
        $region58: #{inception_forward.1} parent=55 // pred_check_branch
          %9764 = sbr.rel (%p9762) target = $region60
        $region59: #{inception_forward.1} parent=55 // pred_region
          %s9766 = ssub.s32 4096, 4096
          %9767 = vsyncadd %s9758, %s9766
          %s9768 = smul.addr %s23, 32
          %s9769 = smul.addr %s9768, 128
          %s9770 = scalar_lea.hbm %s9, %s9769
          %s9771 = sshll.u32 %s9761, 4
          %s9772 = int_to_ptr.vmem [resolvable:$true] %s9771
          %9777 = dma.vmem_to_hbm [thread:$0]  %s9772, 4096, %s9770, %s9758, 128, 128, 8
        $region60: #{inception_forward.1} parent=55 // pred_fallthru
          _
      $region56: #{inception_forward.1} parent=5 // pred_fallthru
        _
      %p9778 = scmp.le.s32.totalorder 2, %s18
      // Predicated region
      $region61: #{inception_forward.1} parent=5 // pred_check
        %p9779 = pneg %p9778
      $region62: #{inception_forward.1} parent=5 // pred_check_branch
        %9781 = sbr.rel (%p9779) target = $region64
      $region63: #{inception_forward.1} parent=5 // pred_region
        %s9782 = ssub.s32 %s18, 2
        // Predicated region
        $region65: #{inception_forward.1} parent=63 // pred_check
          %p9783 = pneg %p241
        $region66: #{inception_forward.1} parent=63 // pred_check_branch
          %9785 = sbr.rel (%p9783) target = $region68
        $region67: #{inception_forward.1} parent=63 // pred_region
          %s9786 = sand.u32 %s226, 1
          %s9787 = scalar_lea.sflag [#allocation8], %s9786
          %s9788 = sand.u32 %s226, 1
          %s9789 = smul.addr %s9788, 256
          %s9790 = scalar_lea.vmem [#allocation7], %s9789
          %9791 = dma.done %s9787, 4096
        $region68: #{inception_forward.1} parent=63 // pred_fallthru
          _
      $region64: #{inception_forward.1} parent=5 // pred_fallthru
        _
    $region6: #{inception_forward.1} parent=1 // loop_footer
      %s22 = sadd.s32 1, %s18
    $region7: #{inception_forward.1} parent=1 // loop_footer_branch
      %17 = sbr.rel target = $region3
    $region8: #{inception_forward.1} parent=1 // loop_exit
      _
    %9792 = vsyncpa [#allocation8], 1
    %s9793 = scalar_lea.sflag [#allocation8], 1
    %9794 = vsyncpa %s9793, 1

</llo_original>
